<compile_context>
chip_gen: v5e
topology: v5e:2x2
jax: 0.10.0
libtpu: 0.0.40
codegen_flags: <defaults>
</compile_context>

<pallas_src>
import functools
import math

import jax
import jax.numpy as jnp
from jax.experimental import pallas as pl
from jax.experimental.pallas import tpu as pltpu

# ----------------------------- model configuration (scaled down) -----------------------------
STEM = 8                        # full resnet45: 32
PLANES = [8, 8, 16, 16, 32]     # full resnet45: [32, 64, 128, 256, 512]
STRIDES = [2, 1, 2, 1, 1]
LAYER_BLOCKS = [1, 1, 1, 1, 1]  # full resnet45: [3, 4, 6, 6, 3]
D_MODEL = PLANES[-1]            # full: 512
NHEAD = 4                       # full: 8
D_INNER = 64                    # full: 2048
NUM_LAYERS = 3                  # backbone_ln
MAX_LEN = 8 * 32
BN_EPS = 1e-5
LN_EPS = 1e-5

VMEM_LIMIT = 48 * 1024 * 1024   # safe on v5e/v6e (128 MiB phys) and v7x (64 MiB phys)


def _round_up(v, m):
    return (v + m - 1) // m * m


def _batch_block(b):
    """Examples per grid step for the attention / pe-add kernels (amortize step overhead,
    keep >= 2 grid steps so both v7x TensorCores get work)."""
    for bq in (4, 2):
        if b % bq == 0 and b // bq >= 2:
            return bq
    return 1


# ------------------------------ fused, tiled GEMM (the workhorse) ------------------------------
def pallas_matmul(a, b, *, scale=None, shift=None, bias=None, residual=None,
                  ln_gamma=None, ln_beta=None, relu=False, out_dtype=jnp.float32,
                  tm=512, tn=512, tk=512, ln_eps=LN_EPS):
    """y = a @ b with a fused epilogue; per-tile in-kernel bf16 casts, f32 accumulation.

    Epilogue (applied once, on the last K step):
      scale/shift           -> y = y * scale + shift            (folded conv BatchNorm)
      bias                  -> y = y + bias                     (linear layers)
      residual (no LN)      -> y = y + residual
      relu                  -> y = max(y, 0)
      ln_gamma/ln_beta      -> y = LayerNorm(y [+bias] + residual) * gamma + beta
    """
    M, K = a.shape
    Kb, N = b.shape
    assert K == Kb
    fuse_ln = ln_gamma is not None
    has_scale = scale is not None
    has_bias = bias is not None
    has_res = residual is not None

    # Tile sizes: full dim when it fits (no padding), else 128-aligned defaults.
    tm = M if M <= tm else tm
    tn = N if (fuse_ln or N <= tn) else tn
    tk = K if K <= tk else tk
    Mp = M if M % tm == 0 else _round_up(M, tm)
    Np = N if N % tn == 0 else _round_up(N, tn)
    Kp = K if K % tk == 0 else _round_up(K, tk)
    if fuse_ln:
        # Padded columns would corrupt the LayerNorm statistics -> require full-row tiles.
        assert tn == N and Np == N, "fused LayerNorm requires tn == N (no lane padding)"

    a_p = a if (Mp, Kp) == (M, K) else jnp.pad(a, ((0, Mp - M), (0, Kp - K)))
    b_p = b if (Kp, Np) == (K, N) else jnp.pad(b, ((0, Kp - K), (0, Np - N)))

    def row_vec(v):
        v = v.astype(jnp.float32).reshape(1, N)
        return v if Np == N else jnp.pad(v, ((0, 0), (0, Np - N)))

    k_steps = Kp // tk
    if k_steps == 1:
        grid = (Mp // tm, Np // tn)
        a_spec = pl.BlockSpec((tm, tk), lambda i, j: (i, 0))
        b_spec = pl.BlockSpec((tk, tn), lambda i, j: (0, j))
        row_spec = pl.BlockSpec((1, tn), lambda i, j: (0, j))
        tile_spec = pl.BlockSpec((tm, tn), lambda i, j: (i, j))
        dims = ("parallel", "parallel")
        scratch = []
    else:
        grid = (Mp // tm, Np // tn, k_steps)
        a_spec = pl.BlockSpec((tm, tk), lambda i, j, k: (i, k))
        b_spec = pl.BlockSpec((tk, tn), lambda i, j, k: (k, j))
        row_spec = pl.BlockSpec((1, tn), lambda i, j, k: (0, j))
        tile_spec = pl.BlockSpec((tm, tn), lambda i, j, k: (i, j))
        dims = ("parallel", "parallel", "arbitrary")
        scratch = [pltpu.VMEM((tm, tn), jnp.float32)]

    extras, extra_specs = [], []
    if has_scale:
        extras += [row_vec(scale), row_vec(shift)]
        extra_specs += [row_spec, row_spec]
    elif has_bias:
        extras += [row_vec(bias)]
        extra_specs += [row_spec]
    if fuse_ln:
        extras += [row_vec(ln_gamma), row_vec(ln_beta)]
        extra_specs += [row_spec, row_spec]
    if has_res:
        r = residual if (Mp, Np) == (M, N) else jnp.pad(residual, ((0, Mp - M), (0, Np - N)))
        extras += [r]
        extra_specs += [tile_spec]
    n_ext = len(extras)

    def _epilogue(y, ext):
        idx = 0
        if has_scale:
            y = y * ext[idx][...] + ext[idx + 1][...]
            idx += 2
        elif has_bias:
            y = y + ext[idx][...]
            idx += 1
        if fuse_ln:
            g = ext[idx][...]
            bt = ext[idx + 1][...]
            idx += 2
            if has_res:
                y = y + ext[idx][...].astype(jnp.float32)
                idx += 1
            mu = jnp.mean(y, axis=-1, keepdims=True)
            var = jnp.mean((y - mu) ** 2, axis=-1, keepdims=True)
            y = (y - mu) * jax.lax.rsqrt(var + ln_eps) * g + bt
        else:
            if has_res:
                y = y + ext[idx][...].astype(jnp.float32)
                idx += 1
            if relu:
                y = jnp.maximum(y, 0.0)
        return y

    if k_steps == 1:
        # Single-K-step GEMM: no accumulator scratch, no pl.when -- dot + epilogue + store.
        def kernel(a_ref, b_ref, *refs):
            ext = refs[:n_ext]
            o_ref = refs[n_ext]
            y = jnp.dot(a_ref[...].astype(jnp.bfloat16),
                        b_ref[...].astype(jnp.bfloat16),
                        preferred_element_type=jnp.float32)
            o_ref[...] = _epilogue(y, ext).astype(o_ref.dtype)
    else:
        def kernel(a_ref, b_ref, *refs):
            ext = refs[:n_ext]
            o_ref = refs[n_ext]
            acc_ref = refs[n_ext + 1]

            @pl.when(pl.program_id(2) == 0)
            def _():
                acc_ref[...] = jnp.zeros_like(acc_ref)

            acc_ref[...] += jnp.dot(a_ref[...].astype(jnp.bfloat16),
                                    b_ref[...].astype(jnp.bfloat16),
                                    preferred_element_type=jnp.float32)

            @pl.when(pl.program_id(2) == pl.num_programs(2) - 1)
            def _():
                o_ref[...] = _epilogue(acc_ref[...], ext).astype(o_ref.dtype)

    out = pl.pallas_call(
        kernel,
        out_shape=jax.ShapeDtypeStruct((Mp, Np), out_dtype),
        grid=grid,
        in_specs=[a_spec, b_spec] + extra_specs,
        out_specs=tile_spec,
        scratch_shapes=scratch,
        compiler_params=pltpu.CompilerParams(
            dimension_semantics=dims, vmem_limit_bytes=VMEM_LIMIT),
    )(a_p, b_p, *extras)
    if (Mp, Np) != (M, N):
        out = out[:M, :N]
    return out


# --------------------------------------- attention ---------------------------------------
def _attn_kernel(nhead, qkv_ref, o_ref):
    """A few examples per grid step; static example/head loops; per-head operands loaded
    directly from VMEM and per-head outputs stored directly (no lane concat)."""
    bq, _, c3 = qkv_ref.shape
    c = c3 // 3
    dh = c // nhead
    for e in range(bq):
        for h in range(nhead):
            # softmax scale is pre-folded into the Q rows of in_proj_w / in_proj_b.
            q = qkv_ref[e, :, h * dh:(h + 1) * dh]                    # (T, dh) bf16
            k = qkv_ref[e, :, c + h * dh:c + (h + 1) * dh]
            v = qkv_ref[e, :, 2 * c + h * dh:2 * c + (h + 1) * dh]
            s = jax.lax.dot_general(q, k, (((1,), (1,)), ((), ())),
                                    preferred_element_type=jnp.float32)   # (T, T) f32
            m = jnp.max(s, axis=-1, keepdims=True)
            p = jnp.exp(s - m)                                            # softmax in f32
            p = p * pl.reciprocal(jnp.sum(p, axis=-1, keepdims=True), approx=True)
            o = jnp.dot(p.astype(jnp.bfloat16), v, preferred_element_type=jnp.float32)
            o_ref[e, :, h * dh:(h + 1) * dh] = o.astype(o_ref.dtype)


def pallas_attention(qkv, nhead):
    b, t, c3 = qkv.shape
    c = c3 // 3
    bq = _batch_block(b)
    kern = functools.partial(_attn_kernel, nhead)
    return pl.pallas_call(
        kern,
        out_shape=jax.ShapeDtypeStruct((b, t, c), jnp.bfloat16),
        grid=(b // bq,),
        in_specs=[pl.BlockSpec((bq, t, c3), lambda i: (i, 0, 0))],
        out_specs=pl.BlockSpec((bq, t, c), lambda i: (i, 0, 0)),
        compiler_params=pltpu.CompilerParams(dimension_semantics=("parallel",)),
    )(qkv)


# --------------------------------- positional-encoding add ---------------------------------
def _pe_add_kernel(x_ref, pe_ref, o_ref):
    o_ref[...] = x_ref[...].astype(jnp.float32) + pe_ref[...]


def pallas_add_pe(x, pe):
    """x: (B, T, C) bf16, pe: (T, C) f32.  pe block reused across the batch; f32 output."""
    b, t, c = x.shape
    bq = _batch_block(b)
    return pl.pallas_call(
        _pe_add_kernel,
        out_shape=jax.ShapeDtypeStruct((b, t, c), jnp.float32),
        grid=(b // bq,),
        in_specs=[pl.BlockSpec((bq, t, c), lambda i: (i, 0, 0)),
                  pl.BlockSpec((1, t, c), lambda i: (0, 0, 0))],
        out_specs=pl.BlockSpec((bq, t, c), lambda i: (i, 0, 0)),
        compiler_params=pltpu.CompilerParams(dimension_semantics=("parallel",)),
    )(x, pe.reshape(1, t, c))


# ------------------------------------ ResNet45 path ------------------------------------
def _im2col(x, kh, kw, stride, padding):
    """x: NHWC (bf16) -> (N*Ho*Wo, kh*kw*C) patches (tap-major, then channels)."""
    n, h, w, c = x.shape
    xp = jnp.pad(x, ((0, 0), (padding, padding), (padding, padding), (0, 0)))
    ho = (h + 2 * padding - kh) // stride + 1
    wo = (w + 2 * padding - kw) // stride + 1
    cols = []
    for i in range(kh):
        for j in range(kw):
            cols.append(xp[:, i:i + stride * ho:stride, j:j + stride * wo:stride, :])
    patches = jnp.stack(cols, axis=-2)                     # (N, Ho, Wo, kh*kw, C)
    return patches.reshape(n * ho * wo, kh * kw * c), (n, ho, wo)


def conv_bn(x, p, *, relu, residual=None):
    """Conv2d(bias=False) + folded BatchNorm (+ fused residual + ReLU); bf16 in/out.
    p['w'] is the pre-transformed (kh*kw*Cin, Cout) bf16 weight; 1x1 convs skip im2col."""
    kh, kw, stride, pad = p['kh'], p['kw'], p['stride'], p['pad']
    if kh == 1 and kw == 1:
        xs = x[:, ::stride, ::stride, :] if stride > 1 else x
        n, ho, wo, cin = xs.shape
        patches = xs.reshape(n * ho * wo, cin)
    else:
        patches, (n, ho, wo) = _im2col(x, kh, kw, stride, pad)
    cout = p['w'].shape[1]
    res2 = residual.reshape(n * ho * wo, cout) if residual is not None else None
    y = pallas_matmul(patches, p['w'], scale=p['scale'], shift=p['shift'],
                      residual=res2, relu=relu, out_dtype=jnp.bfloat16)
    return y.reshape(n, ho, wo, cout)


def basic_block(x, p):
    out = conv_bn(x, p['conv1'], relu=True)
    if p['down'] is not None:
        residual = conv_bn(x, p['down'], relu=False)
    else:
        residual = x
    # conv2 + BN + residual add + ReLU fused into one GEMM epilogue
    out = conv_bn(out, p['conv2'], relu=True, residual=residual)
    return out


# --------------------------------- Transformer encoder ---------------------------------
def encoder_layer(x, p, nhead):
    """PyTorch TransformerEncoderLayer (post-norm, relu, eval-mode dropout).
    x: (B, T, C) batch-first internally (row-permutation of PyTorch's (T, B, C))."""
    b, t, c = x.shape
    x2 = x.reshape(b * t, c)

    # combined q|k|v in-projection (bias fused, softmax scale pre-folded into Q rows)
    qkv = pallas_matmul(x2, p['in_proj_w'], bias=p['in_proj_b'], out_dtype=jnp.bfloat16)
    attn = pallas_attention(qkv.reshape(b, t, 3 * c), nhead)

    # out_proj GEMM with fused bias + residual + norm1:  src = LN(x + out_proj(attn))
    src = pallas_matmul(attn.reshape(b * t, c), p['out_proj_w'],
                        bias=p['out_proj_b'], residual=x2,
                        ln_gamma=p['ln1_g'], ln_beta=p['ln1_b'])

    # FFN: linear1 (+bias +relu), then linear2 with fused bias + residual + norm2
    h1 = pallas_matmul(src, p['lin1_w'], bias=p['lin1_b'], relu=True,
                       out_dtype=jnp.bfloat16)
    out = pallas_matmul(h1, p['lin2_w'], bias=p['lin2_b'], residual=src,
                        ln_gamma=p['ln2_g'], ln_beta=p['ln2_b'])
    return out.reshape(b, t, c)


# -------------------------------------- forward --------------------------------------
def res_transformer_forward(params, images):
    # images: (N, 3, H, W)  (NCHW, PyTorch convention)
    x = jnp.transpose(images, (0, 2, 3, 1)).astype(jnp.bfloat16)   # NHWC, bf16 conv chain
    x = conv_bn(x, params['conv1'], relu=True)
    for blk in params['blocks']:
        x = basic_block(x, blk)

    n, h, w, c = x.shape
    t = h * w
    # feature.view(n, c, -1).permute(2, 0, 1) in PyTorch gives (T, N, C); internally we use the
    # batch-first (N, T, C) row permutation (identical math for per-row ops and attention).
    feat = x.reshape(n, t, c)
    feat = pallas_add_pe(feat, params['pe'][:t])          # x + pe[:T], f32 out

    for lyr in params['layers']:
        feat = encoder_layer(feat, lyr, nhead=NHEAD)

    # feature.permute(1, 2, 0).view(n, c, h, w)
    return jnp.transpose(feat, (0, 2, 1)).reshape(n, c, h, w)


# ----------------------------------- parameter init -----------------------------------
def init_params(key):
    cnt = [0]

    def nk():
        cnt[0] += 1
        return jax.random.fold_in(key, cnt[0])

    def w_init(shape, scale=0.1):
        return scale * jax.random.normal(nk(), shape, dtype=jnp.float32)

    def bn_fold(c):
        gamma = 1.0 + 0.05 * jax.random.normal(nk(), (c,), jnp.float32)
        beta = 0.05 * jax.random.normal(nk(), (c,), jnp.float32)
        mean = 0.05 * jax.random.normal(nk(), (c,), jnp.float32)
        var = 1.0 + 0.05 * jnp.abs(jax.random.normal(nk(), (c,), jnp.float32))
        scale = gamma / jnp.sqrt(var + BN_EPS)
        shift = beta - mean * scale
        return scale, shift

    def conv_params(cout, cin, kh, kw, stride, pad):
        w = w_init((cout, cin, kh, kw))                       # PyTorch layout
        w2 = jnp.transpose(w, (2, 3, 1, 0)).reshape(kh * kw * cin, cout).astype(jnp.bfloat16)
        scale, shift = bn_fold(cout)
        return {'w': w2, 'kh': kh, 'kw': kw, 'stride': stride, 'pad': pad,
                'scale': scale, 'shift': shift}

    params = {'conv1': conv_params(STEM, 3, 3, 3, 1, 1)}

    blocks = []
    inplanes = STEM
    for planes, stride, nblocks in zip(PLANES, STRIDES, LAYER_BLOCKS):
        for bi in range(nblocks):
            s = stride if bi == 0 else 1
            blk = {
                'conv1': conv_params(planes, inplanes, 1, 1, 1, 0),
                'conv2': conv_params(planes, planes, 3, 3, s, 1),
                'down': (conv_params(planes, inplanes, 1, 1, s, 0)
                         if (s != 1 or inplanes != planes) else None),
            }
            blocks.append(blk)
            inplanes = planes
    params['blocks'] = blocks

    # sinusoidal positional encoding table, (max_len, d_model), interleaved sin/cos
    position = jnp.arange(MAX_LEN, dtype=jnp.float32)[:, None]
    div_term = jnp.exp(jnp.arange(0, D_MODEL, 2, dtype=jnp.float32) *
                       (-math.log(10000.0) / D_MODEL))
    pe = jnp.stack([jnp.sin(position * div_term), jnp.cos(position * div_term)],
                   axis=-1).reshape(MAX_LEN, D_MODEL)
    params['pe'] = pe

    dh = D_MODEL // NHEAD
    qscale = 1.0 / math.sqrt(dh)
    layers = []
    for _ in range(NUM_LAYERS):
        in_w = w_init((3 * D_MODEL, D_MODEL))                 # PyTorch (3C, C)
        in_b = w_init((3 * D_MODEL,), 0.02)
        # fold softmax 1/sqrt(dh) into the Q rows, then store transposed + bf16
        in_w = in_w.at[:D_MODEL].multiply(qscale)
        in_b = in_b.at[:D_MODEL].multiply(qscale)
        layers.append({
            'in_proj_w': in_w.T.astype(jnp.bfloat16),
            'in_proj_b': in_b,
            'out_proj_w': w_init((D_MODEL, D_MODEL)).T.astype(jnp.bfloat16),
            'out_proj_b': w_init((D_MODEL,), 0.02),
            'ln1_g': 1.0 + 0.05 * jax.random.normal(nk(), (D_MODEL,), jnp.float32),
            'ln1_b': 0.05 * jax.random.normal(nk(), (D_MODEL,), jnp.float32),
            'lin1_w': w_init((D_INNER, D_MODEL)).T.astype(jnp.bfloat16),
            'lin1_b': w_init((D_INNER,), 0.02),
            'lin2_w': w_init((D_MODEL, D_INNER)).T.astype(jnp.bfloat16),
            'lin2_b': w_init((D_MODEL,), 0.02),
            'ln2_g': 1.0 + 0.05 * jax.random.normal(nk(), (D_MODEL,), jnp.float32),
            'ln2_b': 0.05 * jax.random.normal(nk(), (D_MODEL,), jnp.float32),
        })
    params['layers'] = layers
    return params


# --------------------------------------- main ---------------------------------------
if __name__ == "__main__":
    key = jax.random.PRNGKey(0)
    params = init_params(jax.random.fold_in(key, 123))
    images = jax.random.normal(jax.random.fold_in(key, 7), (2, 3, 16, 16), dtype=jnp.float32)

    fwd = jax.jit(lambda imgs: res_transformer_forward(params, imgs))
    out = fwd(images)
    out = jax.block_until_ready(out)

    # resnet45-style downsampling: 16x16 -> (stride 2) 8x8 -> (stride 2) 4x4, C = d_model
    assert out.shape == (2, D_MODEL, 4, 4), out.shape
    assert bool(jnp.all(jnp.isfinite(out)))
    print("KERNEL_OK")
</pallas_src>

<mosaic_0001>
module attributes {stable_mosaic.version = 11 : i64} {
  func.func @kernel(%arg0: i32, %arg1: i32, %arg2: memref<512x27xbf16, #tpu.memory_space<vmem>>, %arg3: memref<27x8xbf16, #tpu.memory_space<vmem>>, %arg4: memref<1x8xf32, #tpu.memory_space<vmem>>, %arg5: memref<1x8xf32, #tpu.memory_space<vmem>>, %arg6: memref<512x8xbf16, #tpu.memory_space<vmem>>) attributes {dimension_semantics = [#tpu.dimension_semantics<parallel>, #tpu.dimension_semantics<parallel>], iteration_bounds = array<i64: 1, 1>, scalar_prefetch = 0 : i64, scratch_operands = 0 : i64, tpu.core_type = #tpu.core_type<tc>, window_params = [{transform_indices = @transform_0, window_bounds = array<i64: 512, 27>}, {transform_indices = @transform_1, window_bounds = array<i64: 27, 8>}, {transform_indices = @transform_2, window_bounds = array<i64: 1, 8>}, {transform_indices = @transform_3, window_bounds = array<i64: 1, 8>}, {transform_indices = @transform_4, window_bounds = array<i64: 512, 8>}]} {
    %c0 = arith.constant 0 : index
    %c0_0 = arith.constant 0 : index
    %0 = vector.load %arg2[%c0, %c0_0] : memref<512x27xbf16, #tpu.memory_space<vmem>>, vector<512x27xbf16>
    %c0_1 = arith.constant 0 : index
    %c0_2 = arith.constant 0 : index
    %1 = vector.load %arg3[%c0_1, %c0_2] : memref<27x8xbf16, #tpu.memory_space<vmem>>, vector<27x8xbf16>
    %cst = arith.constant dense<0.000000e+00> : vector<512x8xf32>
    %2 = tpu.matmul %0, %1, %cst {dimension_numbers = #tpu.dot_dimension_numbers<[1], [0], [0], [1], [0, 0, 1, 1], [], []>} : vector<512x27xbf16>, vector<27x8xbf16>, vector<512x8xf32> -> vector<512x8xf32>
    %c0_3 = arith.constant 0 : index
    %c0_4 = arith.constant 0 : index
    %3 = vector.load %arg4[%c0_3, %c0_4] : memref<1x8xf32, #tpu.memory_space<vmem>>, vector<1x8xf32>
    %4 = vector.broadcast %3 : vector<1x8xf32> to vector<512x8xf32>
    %5 = arith.mulf %2, %4 : vector<512x8xf32>
    %c0_5 = arith.constant 0 : index
    %c0_6 = arith.constant 0 : index
    %6 = vector.load %arg5[%c0_5, %c0_6] : memref<1x8xf32, #tpu.memory_space<vmem>>, vector<1x8xf32>
    %7 = vector.broadcast %6 : vector<1x8xf32> to vector<512x8xf32>
    %8 = arith.addf %5, %7 : vector<512x8xf32>
    %cst_7 = arith.constant 0.000000e+00 : f32
    %9 = vector.broadcast %cst_7 : f32 to vector<512x8xf32>
    %10 = arith.maximumf %8, %9 : vector<512x8xf32>
    %11 = arith.truncf %10 : vector<512x8xf32> to vector<512x8xbf16>
    %c0_8 = arith.constant 0 : index
    %c0_9 = arith.constant 0 : index
    %12 = vector.load %arg6[%c0_8, %c0_9] : memref<512x8xbf16, #tpu.memory_space<vmem>>, vector<512x8xbf16>
    tpu.vector_store %arg6[%c0_8, %c0_9], %11 {strides = array<i32>} : memref<512x8xbf16, #tpu.memory_space<vmem>>, vector<512x8xbf16>,
    return
  }
  func.func @transform_0(%arg0: i32, %arg1: i32) -> (i32, i32) {
    %c0_i32 = arith.constant 0 : i32
    %c0_i32_0 = arith.constant 0 : i32
    return %arg0, %c0_i32 : i32, i32
  }
  func.func @transform_1(%arg0: i32, %arg1: i32) -> (i32, i32) {
    %c0_i32 = arith.constant 0 : i32
    %c0_i32_0 = arith.constant 0 : i32
    return %c0_i32, %arg1 : i32, i32
  }
  func.func @transform_2(%arg0: i32, %arg1: i32) -> (i32, i32) {
    %c0_i32 = arith.constant 0 : i32
    %c0_i32_0 = arith.constant 0 : i32
    return %c0_i32, %arg1 : i32, i32
  }
  func.func @transform_3(%arg0: i32, %arg1: i32) -> (i32, i32) {
    %c0_i32 = arith.constant 0 : i32
    %c0_i32_0 = arith.constant 0 : i32
    return %c0_i32, %arg1 : i32, i32
  }
  func.func @transform_4(%arg0: i32, %arg1: i32) -> (i32, i32) {
    %c0_i32 = arith.constant 0 : i32
    return %arg0, %arg1 : i32, i32
  }
}

module attributes {stable_mosaic.version = 11 : i64} {
  func.func @kernel(%arg0: i32, %arg1: i32, %arg2: memref<128x8xbf16, #tpu.memory_space<vmem>>, %arg3: memref<8x8xbf16, #tpu.memory_space<vmem>>, %arg4: memref<1x8xf32, #tpu.memory_space<vmem>>, %arg5: memref<1x8xf32, #tpu.memory_space<vmem>>, %arg6: memref<128x8xbf16, #tpu.memory_space<vmem>>) attributes {dimension_semantics = [#tpu.dimension_semantics<parallel>, #tpu.dimension_semantics<parallel>], iteration_bounds = array<i64: 1, 1>, scalar_prefetch = 0 : i64, scratch_operands = 0 : i64, tpu.core_type = #tpu.core_type<tc>, window_params = [{transform_indices = @transform_0, window_bounds = array<i64: 128, 8>}, {transform_indices = @transform_1, window_bounds = array<i64: 8, 8>}, {transform_indices = @transform_2, window_bounds = array<i64: 1, 8>}, {transform_indices = @transform_3, window_bounds = array<i64: 1, 8>}, {transform_indices = @transform_4, window_bounds = array<i64: 128, 8>}]} {
    %c0 = arith.constant 0 : index
    %c0_0 = arith.constant 0 : index
    %0 = vector.load %arg2[%c0, %c0_0] : memref<128x8xbf16, #tpu.memory_space<vmem>>, vector<128x8xbf16>
    %c0_1 = arith.constant 0 : index
    %c0_2 = arith.constant 0 : index
    %1 = vector.load %arg3[%c0_1, %c0_2] : memref<8x8xbf16, #tpu.memory_space<vmem>>, vector<8x8xbf16>
    %cst = arith.constant dense<0.000000e+00> : vector<128x8xf32>
    %2 = tpu.matmul %0, %1, %cst {dimension_numbers = #tpu.dot_dimension_numbers<[1], [0], [0], [1], [0, 0, 1, 1], [], []>} : vector<128x8xbf16>, vector<8x8xbf16>, vector<128x8xf32> -> vector<128x8xf32>
    %c0_3 = arith.constant 0 : index
    %c0_4 = arith.constant 0 : index
    %3 = vector.load %arg4[%c0_3, %c0_4] : memref<1x8xf32, #tpu.memory_space<vmem>>, vector<1x8xf32>
    %4 = vector.broadcast %3 : vector<1x8xf32> to vector<128x8xf32>
    %5 = arith.mulf %2, %4 : vector<128x8xf32>
    %c0_5 = arith.constant 0 : index
    %c0_6 = arith.constant 0 : index
    %6 = vector.load %arg5[%c0_5, %c0_6] : memref<1x8xf32, #tpu.memory_space<vmem>>, vector<1x8xf32>
    %7 = vector.broadcast %6 : vector<1x8xf32> to vector<128x8xf32>
    %8 = arith.addf %5, %7 : vector<128x8xf32>
    %9 = arith.truncf %8 : vector<128x8xf32> to vector<128x8xbf16>
    %c0_7 = arith.constant 0 : index
    %c0_8 = arith.constant 0 : index
    %10 = vector.load %arg6[%c0_7, %c0_8] : memref<128x8xbf16, #tpu.memory_space<vmem>>, vector<128x8xbf16>
    tpu.vector_store %arg6[%c0_7, %c0_8], %9 {strides = array<i32>} : memref<128x8xbf16, #tpu.memory_space<vmem>>, vector<128x8xbf16>,
    return
  }
  func.func @transform_0(%arg0: i32, %arg1: i32) -> (i32, i32) {
    %c0_i32 = arith.constant 0 : i32
    %c0_i32_0 = arith.constant 0 : i32
    return %arg0, %c0_i32 : i32, i32
  }
  func.func @transform_1(%arg0: i32, %arg1: i32) -> (i32, i32) {
    %c0_i32 = arith.constant 0 : i32
    %c0_i32_0 = arith.constant 0 : i32
    return %c0_i32, %arg1 : i32, i32
  }
  func.func @transform_2(%arg0: i32, %arg1: i32) -> (i32, i32) {
    %c0_i32 = arith.constant 0 : i32
    %c0_i32_0 = arith.constant 0 : i32
    return %c0_i32, %arg1 : i32, i32
  }
  func.func @transform_3(%arg0: i32, %arg1: i32) -> (i32, i32) {
    %c0_i32 = arith.constant 0 : i32
    %c0_i32_0 = arith.constant 0 : i32
    return %c0_i32, %arg1 : i32, i32
  }
  func.func @transform_4(%arg0: i32, %arg1: i32) -> (i32, i32) {
    %c0_i32 = arith.constant 0 : i32
    return %arg0, %arg1 : i32, i32
  }
}

module attributes {stable_mosaic.version = 11 : i64} {
  func.func @kernel(%arg0: i32, %arg1: i32, %arg2: memref<512x8xbf16, #tpu.memory_space<vmem>>, %arg3: memref<8x8xbf16, #tpu.memory_space<vmem>>, %arg4: memref<1x8xf32, #tpu.memory_space<vmem>>, %arg5: memref<1x8xf32, #tpu.memory_space<vmem>>, %arg6: memref<512x8xbf16, #tpu.memory_space<vmem>>) attributes {dimension_semantics = [#tpu.dimension_semantics<parallel>, #tpu.dimension_semantics<parallel>], iteration_bounds = array<i64: 1, 1>, scalar_prefetch = 0 : i64, scratch_operands = 0 : i64, tpu.core_type = #tpu.core_type<tc>, window_params = [{transform_indices = @transform_0, window_bounds = array<i64: 512, 8>}, {transform_indices = @transform_1, window_bounds = array<i64: 8, 8>}, {transform_indices = @transform_2, window_bounds = array<i64: 1, 8>}, {transform_indices = @transform_3, window_bounds = array<i64: 1, 8>}, {transform_indices = @transform_4, window_bounds = array<i64: 512, 8>}]} {
    %c0 = arith.constant 0 : index
    %c0_0 = arith.constant 0 : index
    %0 = vector.load %arg2[%c0, %c0_0] : memref<512x8xbf16, #tpu.memory_space<vmem>>, vector<512x8xbf16>
    %c0_1 = arith.constant 0 : index
    %c0_2 = arith.constant 0 : index
    %1 = vector.load %arg3[%c0_1, %c0_2] : memref<8x8xbf16, #tpu.memory_space<vmem>>, vector<8x8xbf16>
    %cst = arith.constant dense<0.000000e+00> : vector<512x8xf32>
    %2 = tpu.matmul %0, %1, %cst {dimension_numbers = #tpu.dot_dimension_numbers<[1], [0], [0], [1], [0, 0, 1, 1], [], []>} : vector<512x8xbf16>, vector<8x8xbf16>, vector<512x8xf32> -> vector<512x8xf32>
    %c0_3 = arith.constant 0 : index
    %c0_4 = arith.constant 0 : index
    %3 = vector.load %arg4[%c0_3, %c0_4] : memref<1x8xf32, #tpu.memory_space<vmem>>, vector<1x8xf32>
    %4 = vector.broadcast %3 : vector<1x8xf32> to vector<512x8xf32>
    %5 = arith.mulf %2, %4 : vector<512x8xf32>
    %c0_5 = arith.constant 0 : index
    %c0_6 = arith.constant 0 : index
    %6 = vector.load %arg5[%c0_5, %c0_6] : memref<1x8xf32, #tpu.memory_space<vmem>>, vector<1x8xf32>
    %7 = vector.broadcast %6 : vector<1x8xf32> to vector<512x8xf32>
    %8 = arith.addf %5, %7 : vector<512x8xf32>
    %cst_7 = arith.constant 0.000000e+00 : f32
    %9 = vector.broadcast %cst_7 : f32 to vector<512x8xf32>
    %10 = arith.maximumf %8, %9 : vector<512x8xf32>
    %11 = arith.truncf %10 : vector<512x8xf32> to vector<512x8xbf16>
    %c0_8 = arith.constant 0 : index
    %c0_9 = arith.constant 0 : index
    %12 = vector.load %arg6[%c0_8, %c0_9] : memref<512x8xbf16, #tpu.memory_space<vmem>>, vector<512x8xbf16>
    tpu.vector_store %arg6[%c0_8, %c0_9], %11 {strides = array<i32>} : memref<512x8xbf16, #tpu.memory_space<vmem>>, vector<512x8xbf16>,
    return
  }
  func.func @transform_0(%arg0: i32, %arg1: i32) -> (i32, i32) {
    %c0_i32 = arith.constant 0 : i32
    %c0_i32_0 = arith.constant 0 : i32
    return %arg0, %c0_i32 : i32, i32
  }
  func.func @transform_1(%arg0: i32, %arg1: i32) -> (i32, i32) {
    %c0_i32 = arith.constant 0 : i32
    %c0_i32_0 = arith.constant 0 : i32
    return %c0_i32, %arg1 : i32, i32
  }
  func.func @transform_2(%arg0: i32, %arg1: i32) -> (i32, i32) {
    %c0_i32 = arith.constant 0 : i32
    %c0_i32_0 = arith.constant 0 : i32
    return %c0_i32, %arg1 : i32, i32
  }
  func.func @transform_3(%arg0: i32, %arg1: i32) -> (i32, i32) {
    %c0_i32 = arith.constant 0 : i32
    %c0_i32_0 = arith.constant 0 : i32
    return %c0_i32, %arg1 : i32, i32
  }
  func.func @transform_4(%arg0: i32, %arg1: i32) -> (i32, i32) {
    %c0_i32 = arith.constant 0 : i32
    return %arg0, %arg1 : i32, i32
  }
}

module attributes {stable_mosaic.version = 11 : i64} {
  func.func @kernel(%arg0: i32, %arg1: i32, %arg2: memref<128x72xbf16, #tpu.memory_space<vmem>>, %arg3: memref<72x8xbf16, #tpu.memory_space<vmem>>, %arg4: memref<1x8xf32, #tpu.memory_space<vmem>>, %arg5: memref<1x8xf32, #tpu.memory_space<vmem>>, %arg6: memref<128x8xbf16, #tpu.memory_space<vmem>>, %arg7: memref<128x8xbf16, #tpu.memory_space<vmem>>) attributes {dimension_semantics = [#tpu.dimension_semantics<parallel>, #tpu.dimension_semantics<parallel>], iteration_bounds = array<i64: 1, 1>, scalar_prefetch = 0 : i64, scratch_operands = 0 : i64, tpu.core_type = #tpu.core_type<tc>, window_params = [{transform_indices = @transform_0, window_bounds = array<i64: 128, 72>}, {transform_indices = @transform_1, window_bounds = array<i64: 72, 8>}, {transform_indices = @transform_2, window_bounds = array<i64: 1, 8>}, {transform_indices = @transform_3, window_bounds = array<i64: 1, 8>}, {transform_indices = @transform_4, window_bounds = array<i64: 128, 8>}, {transform_indices = @transform_5, window_bounds = array<i64: 128, 8>}]} {
    %c0 = arith.constant 0 : index
    %c0_0 = arith.constant 0 : index
    %0 = vector.load %arg2[%c0, %c0_0] : memref<128x72xbf16, #tpu.memory_space<vmem>>, vector<128x72xbf16>
    %c0_1 = arith.constant 0 : index
    %c0_2 = arith.constant 0 : index
    %1 = vector.load %arg3[%c0_1, %c0_2] : memref<72x8xbf16, #tpu.memory_space<vmem>>, vector<72x8xbf16>
    %cst = arith.constant dense<0.000000e+00> : vector<128x8xf32>
    %2 = tpu.matmul %0, %1, %cst {dimension_numbers = #tpu.dot_dimension_numbers<[1], [0], [0], [1], [0, 0, 1, 1], [], []>} : vector<128x72xbf16>, vector<72x8xbf16>, vector<128x8xf32> -> vector<128x8xf32>
    %c0_3 = arith.constant 0 : index
    %c0_4 = arith.constant 0 : index
    %3 = vector.load %arg4[%c0_3, %c0_4] : memref<1x8xf32, #tpu.memory_space<vmem>>, vector<1x8xf32>
    %4 = vector.broadcast %3 : vector<1x8xf32> to vector<128x8xf32>
    %5 = arith.mulf %2, %4 : vector<128x8xf32>
    %c0_5 = arith.constant 0 : index
    %c0_6 = arith.constant 0 : index
    %6 = vector.load %arg5[%c0_5, %c0_6] : memref<1x8xf32, #tpu.memory_space<vmem>>, vector<1x8xf32>
    %7 = vector.broadcast %6 : vector<1x8xf32> to vector<128x8xf32>
    %8 = arith.addf %5, %7 : vector<128x8xf32>
    %c0_7 = arith.constant 0 : index
    %c0_8 = arith.constant 0 : index
    %9 = vector.load %arg6[%c0_7, %c0_8] : memref<128x8xbf16, #tpu.memory_space<vmem>>, vector<128x8xbf16>
    %10 = arith.extf %9 : vector<128x8xbf16> to vector<128x8xf32>
    %11 = arith.addf %8, %10 : vector<128x8xf32>
    %cst_9 = arith.constant 0.000000e+00 : f32
    %12 = vector.broadcast %cst_9 : f32 to vector<128x8xf32>
    %13 = arith.maximumf %11, %12 : vector<128x8xf32>
    %14 = arith.truncf %13 : vector<128x8xf32> to vector<128x8xbf16>
    %c0_10 = arith.constant 0 : index
    %c0_11 = arith.constant 0 : index
    %15 = vector.load %arg7[%c0_10, %c0_11] : memref<128x8xbf16, #tpu.memory_space<vmem>>, vector<128x8xbf16>
    tpu.vector_store %arg7[%c0_10, %c0_11], %14 {strides = array<i32>} : memref<128x8xbf16, #tpu.memory_space<vmem>>, vector<128x8xbf16>,
    return
  }
  func.func @transform_0(%arg0: i32, %arg1: i32) -> (i32, i32) {
    %c0_i32 = arith.constant 0 : i32
    %c0_i32_0 = arith.constant 0 : i32
    return %arg0, %c0_i32 : i32, i32
  }
  func.func @transform_1(%arg0: i32, %arg1: i32) -> (i32, i32) {
    %c0_i32 = arith.constant 0 : i32
    %c0_i32_0 = arith.constant 0 : i32
    return %c0_i32, %arg1 : i32, i32
  }
  func.func @transform_2(%arg0: i32, %arg1: i32) -> (i32, i32) {
    %c0_i32 = arith.constant 0 : i32
    %c0_i32_0 = arith.constant 0 : i32
    return %c0_i32, %arg1 : i32, i32
  }
  func.func @transform_3(%arg0: i32, %arg1: i32) -> (i32, i32) {
    %c0_i32 = arith.constant 0 : i32
    %c0_i32_0 = arith.constant 0 : i32
    return %c0_i32, %arg1 : i32, i32
  }
  func.func @transform_4(%arg0: i32, %arg1: i32) -> (i32, i32) {
    %c0_i32 = arith.constant 0 : i32
    return %arg0, %arg1 : i32, i32
  }
  func.func @transform_5(%arg0: i32, %arg1: i32) -> (i32, i32) {
    %c0_i32 = arith.constant 0 : i32
    return %arg0, %arg1 : i32, i32
  }
}

module attributes {stable_mosaic.version = 11 : i64} {
  func.func @kernel(%arg0: i32, %arg1: i32, %arg2: memref<128x8xbf16, #tpu.memory_space<vmem>>, %arg3: memref<8x8xbf16, #tpu.memory_space<vmem>>, %arg4: memref<1x8xf32, #tpu.memory_space<vmem>>, %arg5: memref<1x8xf32, #tpu.memory_space<vmem>>, %arg6: memref<128x8xbf16, #tpu.memory_space<vmem>>) attributes {dimension_semantics = [#tpu.dimension_semantics<parallel>, #tpu.dimension_semantics<parallel>], iteration_bounds = array<i64: 1, 1>, scalar_prefetch = 0 : i64, scratch_operands = 0 : i64, tpu.core_type = #tpu.core_type<tc>, window_params = [{transform_indices = @transform_0, window_bounds = array<i64: 128, 8>}, {transform_indices = @transform_1, window_bounds = array<i64: 8, 8>}, {transform_indices = @transform_2, window_bounds = array<i64: 1, 8>}, {transform_indices = @transform_3, window_bounds = array<i64: 1, 8>}, {transform_indices = @transform_4, window_bounds = array<i64: 128, 8>}]} {
    %c0 = arith.constant 0 : index
    %c0_0 = arith.constant 0 : index
    %0 = vector.load %arg2[%c0, %c0_0] : memref<128x8xbf16, #tpu.memory_space<vmem>>, vector<128x8xbf16>
    %c0_1 = arith.constant 0 : index
    %c0_2 = arith.constant 0 : index
    %1 = vector.load %arg3[%c0_1, %c0_2] : memref<8x8xbf16, #tpu.memory_space<vmem>>, vector<8x8xbf16>
    %cst = arith.constant dense<0.000000e+00> : vector<128x8xf32>
    %2 = tpu.matmul %0, %1, %cst {dimension_numbers = #tpu.dot_dimension_numbers<[1], [0], [0], [1], [0, 0, 1, 1], [], []>} : vector<128x8xbf16>, vector<8x8xbf16>, vector<128x8xf32> -> vector<128x8xf32>
    %c0_3 = arith.constant 0 : index
    %c0_4 = arith.constant 0 : index
    %3 = vector.load %arg4[%c0_3, %c0_4] : memref<1x8xf32, #tpu.memory_space<vmem>>, vector<1x8xf32>
    %4 = vector.broadcast %3 : vector<1x8xf32> to vector<128x8xf32>
    %5 = arith.mulf %2, %4 : vector<128x8xf32>
    %c0_5 = arith.constant 0 : index
    %c0_6 = arith.constant 0 : index
    %6 = vector.load %arg5[%c0_5, %c0_6] : memref<1x8xf32, #tpu.memory_space<vmem>>, vector<1x8xf32>
    %7 = vector.broadcast %6 : vector<1x8xf32> to vector<128x8xf32>
    %8 = arith.addf %5, %7 : vector<128x8xf32>
    %cst_7 = arith.constant 0.000000e+00 : f32
    %9 = vector.broadcast %cst_7 : f32 to vector<128x8xf32>
    %10 = arith.maximumf %8, %9 : vector<128x8xf32>
    %11 = arith.truncf %10 : vector<128x8xf32> to vector<128x8xbf16>
    %c0_8 = arith.constant 0 : index
    %c0_9 = arith.constant 0 : index
    %12 = vector.load %arg6[%c0_8, %c0_9] : memref<128x8xbf16, #tpu.memory_space<vmem>>, vector<128x8xbf16>
    tpu.vector_store %arg6[%c0_8, %c0_9], %11 {strides = array<i32>} : memref<128x8xbf16, #tpu.memory_space<vmem>>, vector<128x8xbf16>,
    return
  }
  func.func @transform_0(%arg0: i32, %arg1: i32) -> (i32, i32) {
    %c0_i32 = arith.constant 0 : i32
    %c0_i32_0 = arith.constant 0 : i32
    return %arg0, %c0_i32 : i32, i32
  }
  func.func @transform_1(%arg0: i32, %arg1: i32) -> (i32, i32) {
    %c0_i32 = arith.constant 0 : i32
    %c0_i32_0 = arith.constant 0 : i32
    return %c0_i32, %arg1 : i32, i32
  }
  func.func @transform_2(%arg0: i32, %arg1: i32) -> (i32, i32) {
    %c0_i32 = arith.constant 0 : i32
    %c0_i32_0 = arith.constant 0 : i32
    return %c0_i32, %arg1 : i32, i32
  }
  func.func @transform_3(%arg0: i32, %arg1: i32) -> (i32, i32) {
    %c0_i32 = arith.constant 0 : i32
    %c0_i32_0 = arith.constant 0 : i32
    return %c0_i32, %arg1 : i32, i32
  }
  func.func @transform_4(%arg0: i32, %arg1: i32) -> (i32, i32) {
    %c0_i32 = arith.constant 0 : i32
    return %arg0, %arg1 : i32, i32
  }
}

module attributes {stable_mosaic.version = 11 : i64} {
  func.func @kernel(%arg0: i32, %arg1: i32, %arg2: memref<32x8xbf16, #tpu.memory_space<vmem>>, %arg3: memref<8x16xbf16, #tpu.memory_space<vmem>>, %arg4: memref<1x16xf32, #tpu.memory_space<vmem>>, %arg5: memref<1x16xf32, #tpu.memory_space<vmem>>, %arg6: memref<32x16xbf16, #tpu.memory_space<vmem>>) attributes {dimension_semantics = [#tpu.dimension_semantics<parallel>, #tpu.dimension_semantics<parallel>], iteration_bounds = array<i64: 1, 1>, scalar_prefetch = 0 : i64, scratch_operands = 0 : i64, tpu.core_type = #tpu.core_type<tc>, window_params = [{transform_indices = @transform_0, window_bounds = array<i64: 32, 8>}, {transform_indices = @transform_1, window_bounds = array<i64: 8, 16>}, {transform_indices = @transform_2, window_bounds = array<i64: 1, 16>}, {transform_indices = @transform_3, window_bounds = array<i64: 1, 16>}, {transform_indices = @transform_4, window_bounds = array<i64: 32, 16>}]} {
    %c0 = arith.constant 0 : index
    %c0_0 = arith.constant 0 : index
    %0 = vector.load %arg2[%c0, %c0_0] : memref<32x8xbf16, #tpu.memory_space<vmem>>, vector<32x8xbf16>
    %c0_1 = arith.constant 0 : index
    %c0_2 = arith.constant 0 : index
    %1 = vector.load %arg3[%c0_1, %c0_2] : memref<8x16xbf16, #tpu.memory_space<vmem>>, vector<8x16xbf16>
    %cst = arith.constant dense<0.000000e+00> : vector<32x16xf32>
    %2 = tpu.matmul %0, %1, %cst {dimension_numbers = #tpu.dot_dimension_numbers<[1], [0], [0], [1], [0, 0, 1, 1], [], []>} : vector<32x8xbf16>, vector<8x16xbf16>, vector<32x16xf32> -> vector<32x16xf32>
    %c0_3 = arith.constant 0 : index
    %c0_4 = arith.constant 0 : index
    %3 = vector.load %arg4[%c0_3, %c0_4] : memref<1x16xf32, #tpu.memory_space<vmem>>, vector<1x16xf32>
    %4 = vector.broadcast %3 : vector<1x16xf32> to vector<32x16xf32>
    %5 = arith.mulf %2, %4 : vector<32x16xf32>
    %c0_5 = arith.constant 0 : index
    %c0_6 = arith.constant 0 : index
    %6 = vector.load %arg5[%c0_5, %c0_6] : memref<1x16xf32, #tpu.memory_space<vmem>>, vector<1x16xf32>
    %7 = vector.broadcast %6 : vector<1x16xf32> to vector<32x16xf32>
    %8 = arith.addf %5, %7 : vector<32x16xf32>
    %9 = arith.truncf %8 : vector<32x16xf32> to vector<32x16xbf16>
    %c0_7 = arith.constant 0 : index
    %c0_8 = arith.constant 0 : index
    %10 = vector.load %arg6[%c0_7, %c0_8] : memref<32x16xbf16, #tpu.memory_space<vmem>>, vector<32x16xbf16>
    tpu.vector_store %arg6[%c0_7, %c0_8], %9 {strides = array<i32>} : memref<32x16xbf16, #tpu.memory_space<vmem>>, vector<32x16xbf16>,
    return
  }
  func.func @transform_0(%arg0: i32, %arg1: i32) -> (i32, i32) {
    %c0_i32 = arith.constant 0 : i32
    %c0_i32_0 = arith.constant 0 : i32
    return %arg0, %c0_i32 : i32, i32
  }
  func.func @transform_1(%arg0: i32, %arg1: i32) -> (i32, i32) {
    %c0_i32 = arith.constant 0 : i32
    %c0_i32_0 = arith.constant 0 : i32
    return %c0_i32, %arg1 : i32, i32
  }
  func.func @transform_2(%arg0: i32, %arg1: i32) -> (i32, i32) {
    %c0_i32 = arith.constant 0 : i32
    %c0_i32_0 = arith.constant 0 : i32
    return %c0_i32, %arg1 : i32, i32
  }
  func.func @transform_3(%arg0: i32, %arg1: i32) -> (i32, i32) {
    %c0_i32 = arith.constant 0 : i32
    %c0_i32_0 = arith.constant 0 : i32
    return %c0_i32, %arg1 : i32, i32
  }
  func.func @transform_4(%arg0: i32, %arg1: i32) -> (i32, i32) {
    %c0_i32 = arith.constant 0 : i32
    return %arg0, %arg1 : i32, i32
  }
}

module attributes {stable_mosaic.version = 11 : i64} {
  func.func @kernel(%arg0: i32, %arg1: i32, %arg2: memref<128x8xbf16, #tpu.memory_space<vmem>>, %arg3: memref<8x16xbf16, #tpu.memory_space<vmem>>, %arg4: memref<1x16xf32, #tpu.memory_space<vmem>>, %arg5: memref<1x16xf32, #tpu.memory_space<vmem>>, %arg6: memref<128x16xbf16, #tpu.memory_space<vmem>>) attributes {dimension_semantics = [#tpu.dimension_semantics<parallel>, #tpu.dimension_semantics<parallel>], iteration_bounds = array<i64: 1, 1>, scalar_prefetch = 0 : i64, scratch_operands = 0 : i64, tpu.core_type = #tpu.core_type<tc>, window_params = [{transform_indices = @transform_0, window_bounds = array<i64: 128, 8>}, {transform_indices = @transform_1, window_bounds = array<i64: 8, 16>}, {transform_indices = @transform_2, window_bounds = array<i64: 1, 16>}, {transform_indices = @transform_3, window_bounds = array<i64: 1, 16>}, {transform_indices = @transform_4, window_bounds = array<i64: 128, 16>}]} {
    %c0 = arith.constant 0 : index
    %c0_0 = arith.constant 0 : index
    %0 = vector.load %arg2[%c0, %c0_0] : memref<128x8xbf16, #tpu.memory_space<vmem>>, vector<128x8xbf16>
    %c0_1 = arith.constant 0 : index
    %c0_2 = arith.constant 0 : index
    %1 = vector.load %arg3[%c0_1, %c0_2] : memref<8x16xbf16, #tpu.memory_space<vmem>>, vector<8x16xbf16>
    %cst = arith.constant dense<0.000000e+00> : vector<128x16xf32>
    %2 = tpu.matmul %0, %1, %cst {dimension_numbers = #tpu.dot_dimension_numbers<[1], [0], [0], [1], [0, 0, 1, 1], [], []>} : vector<128x8xbf16>, vector<8x16xbf16>, vector<128x16xf32> -> vector<128x16xf32>
    %c0_3 = arith.constant 0 : index
    %c0_4 = arith.constant 0 : index
    %3 = vector.load %arg4[%c0_3, %c0_4] : memref<1x16xf32, #tpu.memory_space<vmem>>, vector<1x16xf32>
    %4 = vector.broadcast %3 : vector<1x16xf32> to vector<128x16xf32>
    %5 = arith.mulf %2, %4 : vector<128x16xf32>
    %c0_5 = arith.constant 0 : index
    %c0_6 = arith.constant 0 : index
    %6 = vector.load %arg5[%c0_5, %c0_6] : memref<1x16xf32, #tpu.memory_space<vmem>>, vector<1x16xf32>
    %7 = vector.broadcast %6 : vector<1x16xf32> to vector<128x16xf32>
    %8 = arith.addf %5, %7 : vector<128x16xf32>
    %cst_7 = arith.constant 0.000000e+00 : f32
    %9 = vector.broadcast %cst_7 : f32 to vector<128x16xf32>
    %10 = arith.maximumf %8, %9 : vector<128x16xf32>
    %11 = arith.truncf %10 : vector<128x16xf32> to vector<128x16xbf16>
    %c0_8 = arith.constant 0 : index
    %c0_9 = arith.constant 0 : index
    %12 = vector.load %arg6[%c0_8, %c0_9] : memref<128x16xbf16, #tpu.memory_space<vmem>>, vector<128x16xbf16>
    tpu.vector_store %arg6[%c0_8, %c0_9], %11 {strides = array<i32>} : memref<128x16xbf16, #tpu.memory_space<vmem>>, vector<128x16xbf16>,
    return
  }
  func.func @transform_0(%arg0: i32, %arg1: i32) -> (i32, i32) {
    %c0_i32 = arith.constant 0 : i32
    %c0_i32_0 = arith.constant 0 : i32
    return %arg0, %c0_i32 : i32, i32
  }
  func.func @transform_1(%arg0: i32, %arg1: i32) -> (i32, i32) {
    %c0_i32 = arith.constant 0 : i32
    %c0_i32_0 = arith.constant 0 : i32
    return %c0_i32, %arg1 : i32, i32
  }
  func.func @transform_2(%arg0: i32, %arg1: i32) -> (i32, i32) {
    %c0_i32 = arith.constant 0 : i32
    %c0_i32_0 = arith.constant 0 : i32
    return %c0_i32, %arg1 : i32, i32
  }
  func.func @transform_3(%arg0: i32, %arg1: i32) -> (i32, i32) {
    %c0_i32 = arith.constant 0 : i32
    %c0_i32_0 = arith.constant 0 : i32
    return %c0_i32, %arg1 : i32, i32
  }
  func.func @transform_4(%arg0: i32, %arg1: i32) -> (i32, i32) {
    %c0_i32 = arith.constant 0 : i32
    return %arg0, %arg1 : i32, i32
  }
}

module attributes {stable_mosaic.version = 11 : i64} {
  func.func @kernel(%arg0: i32, %arg1: i32, %arg2: memref<32x16xbf16, #tpu.memory_space<vmem>>, %arg3: memref<16x16xbf16, #tpu.memory_space<vmem>>, %arg4: memref<1x16xf32, #tpu.memory_space<vmem>>, %arg5: memref<1x16xf32, #tpu.memory_space<vmem>>, %arg6: memref<32x16xbf16, #tpu.memory_space<vmem>>) attributes {dimension_semantics = [#tpu.dimension_semantics<parallel>, #tpu.dimension_semantics<parallel>], iteration_bounds = array<i64: 1, 1>, scalar_prefetch = 0 : i64, scratch_operands = 0 : i64, tpu.core_type = #tpu.core_type<tc>, window_params = [{transform_indices = @transform_0, window_bounds = array<i64: 32, 16>}, {transform_indices = @transform_1, window_bounds = array<i64: 16, 16>}, {transform_indices = @transform_2, window_bounds = array<i64: 1, 16>}, {transform_indices = @transform_3, window_bounds = array<i64: 1, 16>}, {transform_indices = @transform_4, window_bounds = array<i64: 32, 16>}]} {
    %c0 = arith.constant 0 : index
    %c0_0 = arith.constant 0 : index
    %0 = vector.load %arg2[%c0, %c0_0] : memref<32x16xbf16, #tpu.memory_space<vmem>>, vector<32x16xbf16>
    %c0_1 = arith.constant 0 : index
    %c0_2 = arith.constant 0 : index
    %1 = vector.load %arg3[%c0_1, %c0_2] : memref<16x16xbf16, #tpu.memory_space<vmem>>, vector<16x16xbf16>
    %cst = arith.constant dense<0.000000e+00> : vector<32x16xf32>
    %2 = tpu.matmul %0, %1, %cst {dimension_numbers = #tpu.dot_dimension_numbers<[1], [0], [0], [1], [0, 0, 1, 1], [], []>} : vector<32x16xbf16>, vector<16x16xbf16>, vector<32x16xf32> -> vector<32x16xf32>
    %c0_3 = arith.constant 0 : index
    %c0_4 = arith.constant 0 : index
    %3 = vector.load %arg4[%c0_3, %c0_4] : memref<1x16xf32, #tpu.memory_space<vmem>>, vector<1x16xf32>
    %4 = vector.broadcast %3 : vector<1x16xf32> to vector<32x16xf32>
    %5 = arith.mulf %2, %4 : vector<32x16xf32>
    %c0_5 = arith.constant 0 : index
    %c0_6 = arith.constant 0 : index
    %6 = vector.load %arg5[%c0_5, %c0_6] : memref<1x16xf32, #tpu.memory_space<vmem>>, vector<1x16xf32>
    %7 = vector.broadcast %6 : vector<1x16xf32> to vector<32x16xf32>
    %8 = arith.addf %5, %7 : vector<32x16xf32>
    %cst_7 = arith.constant 0.000000e+00 : f32
    %9 = vector.broadcast %cst_7 : f32 to vector<32x16xf32>
    %10 = arith.maximumf %8, %9 : vector<32x16xf32>
    %11 = arith.truncf %10 : vector<32x16xf32> to vector<32x16xbf16>
    %c0_8 = arith.constant 0 : index
    %c0_9 = arith.constant 0 : index
    %12 = vector.load %arg6[%c0_8, %c0_9] : memref<32x16xbf16, #tpu.memory_space<vmem>>, vector<32x16xbf16>
    tpu.vector_store %arg6[%c0_8, %c0_9], %11 {strides = array<i32>} : memref<32x16xbf16, #tpu.memory_space<vmem>>, vector<32x16xbf16>,
    return
  }
  func.func @transform_0(%arg0: i32, %arg1: i32) -> (i32, i32) {
    %c0_i32 = arith.constant 0 : i32
    %c0_i32_0 = arith.constant 0 : i32
    return %arg0, %c0_i32 : i32, i32
  }
  func.func @transform_1(%arg0: i32, %arg1: i32) -> (i32, i32) {
    %c0_i32 = arith.constant 0 : i32
    %c0_i32_0 = arith.constant 0 : i32
    return %c0_i32, %arg1 : i32, i32
  }
  func.func @transform_2(%arg0: i32, %arg1: i32) -> (i32, i32) {
    %c0_i32 = arith.constant 0 : i32
    %c0_i32_0 = arith.constant 0 : i32
    return %c0_i32, %arg1 : i32, i32
  }
  func.func @transform_3(%arg0: i32, %arg1: i32) -> (i32, i32) {
    %c0_i32 = arith.constant 0 : i32
    %c0_i32_0 = arith.constant 0 : i32
    return %c0_i32, %arg1 : i32, i32
  }
  func.func @transform_4(%arg0: i32, %arg1: i32) -> (i32, i32) {
    %c0_i32 = arith.constant 0 : i32
    return %arg0, %arg1 : i32, i32
  }
}

module attributes {stable_mosaic.version = 11 : i64} {
  func.func @kernel(%arg0: i32, %arg1: i32, %arg2: memref<32x144xbf16, #tpu.memory_space<vmem>>, %arg3: memref<144x16xbf16, #tpu.memory_space<vmem>>, %arg4: memref<1x16xf32, #tpu.memory_space<vmem>>, %arg5: memref<1x16xf32, #tpu.memory_space<vmem>>, %arg6: memref<32x16xbf16, #tpu.memory_space<vmem>>, %arg7: memref<32x16xbf16, #tpu.memory_space<vmem>>) attributes {dimension_semantics = [#tpu.dimension_semantics<parallel>, #tpu.dimension_semantics<parallel>], iteration_bounds = array<i64: 1, 1>, scalar_prefetch = 0 : i64, scratch_operands = 0 : i64, tpu.core_type = #tpu.core_type<tc>, window_params = [{transform_indices = @transform_0, window_bounds = array<i64: 32, 144>}, {transform_indices = @transform_1, window_bounds = array<i64: 144, 16>}, {transform_indices = @transform_2, window_bounds = array<i64: 1, 16>}, {transform_indices = @transform_3, window_bounds = array<i64: 1, 16>}, {transform_indices = @transform_4, window_bounds = array<i64: 32, 16>}, {transform_indices = @transform_5, window_bounds = array<i64: 32, 16>}]} {
    %c0 = arith.constant 0 : index
    %c0_0 = arith.constant 0 : index
    %0 = vector.load %arg2[%c0, %c0_0] : memref<32x144xbf16, #tpu.memory_space<vmem>>, vector<32x144xbf16>
    %c0_1 = arith.constant 0 : index
    %c0_2 = arith.constant 0 : index
    %1 = vector.load %arg3[%c0_1, %c0_2] : memref<144x16xbf16, #tpu.memory_space<vmem>>, vector<144x16xbf16>
    %cst = arith.constant dense<0.000000e+00> : vector<32x16xf32>
    %2 = tpu.matmul %0, %1, %cst {dimension_numbers = #tpu.dot_dimension_numbers<[1], [0], [0], [1], [0, 0, 1, 1], [], []>} : vector<32x144xbf16>, vector<144x16xbf16>, vector<32x16xf32> -> vector<32x16xf32>
    %c0_3 = arith.constant 0 : index
    %c0_4 = arith.constant 0 : index
    %3 = vector.load %arg4[%c0_3, %c0_4] : memref<1x16xf32, #tpu.memory_space<vmem>>, vector<1x16xf32>
    %4 = vector.broadcast %3 : vector<1x16xf32> to vector<32x16xf32>
    %5 = arith.mulf %2, %4 : vector<32x16xf32>
    %c0_5 = arith.constant 0 : index
    %c0_6 = arith.constant 0 : index
    %6 = vector.load %arg5[%c0_5, %c0_6] : memref<1x16xf32, #tpu.memory_space<vmem>>, vector<1x16xf32>
    %7 = vector.broadcast %6 : vector<1x16xf32> to vector<32x16xf32>
    %8 = arith.addf %5, %7 : vector<32x16xf32>
    %c0_7 = arith.constant 0 : index
    %c0_8 = arith.constant 0 : index
    %9 = vector.load %arg6[%c0_7, %c0_8] : memref<32x16xbf16, #tpu.memory_space<vmem>>, vector<32x16xbf16>
    %10 = arith.extf %9 : vector<32x16xbf16> to vector<32x16xf32>
    %11 = arith.addf %8, %10 : vector<32x16xf32>
    %cst_9 = arith.constant 0.000000e+00 : f32
    %12 = vector.broadcast %cst_9 : f32 to vector<32x16xf32>
    %13 = arith.maximumf %11, %12 : vector<32x16xf32>
    %14 = arith.truncf %13 : vector<32x16xf32> to vector<32x16xbf16>
    %c0_10 = arith.constant 0 : index
    %c0_11 = arith.constant 0 : index
    %15 = vector.load %arg7[%c0_10, %c0_11] : memref<32x16xbf16, #tpu.memory_space<vmem>>, vector<32x16xbf16>
    tpu.vector_store %arg7[%c0_10, %c0_11], %14 {strides = array<i32>} : memref<32x16xbf16, #tpu.memory_space<vmem>>, vector<32x16xbf16>,
    return
  }
  func.func @transform_0(%arg0: i32, %arg1: i32) -> (i32, i32) {
    %c0_i32 = arith.constant 0 : i32
    %c0_i32_0 = arith.constant 0 : i32
    return %arg0, %c0_i32 : i32, i32
  }
  func.func @transform_1(%arg0: i32, %arg1: i32) -> (i32, i32) {
    %c0_i32 = arith.constant 0 : i32
    %c0_i32_0 = arith.constant 0 : i32
    return %c0_i32, %arg1 : i32, i32
  }
  func.func @transform_2(%arg0: i32, %arg1: i32) -> (i32, i32) {
    %c0_i32 = arith.constant 0 : i32
    %c0_i32_0 = arith.constant 0 : i32
    return %c0_i32, %arg1 : i32, i32
  }
  func.func @transform_3(%arg0: i32, %arg1: i32) -> (i32, i32) {
    %c0_i32 = arith.constant 0 : i32
    %c0_i32_0 = arith.constant 0 : i32
    return %c0_i32, %arg1 : i32, i32
  }
  func.func @transform_4(%arg0: i32, %arg1: i32) -> (i32, i32) {
    %c0_i32 = arith.constant 0 : i32
    return %arg0, %arg1 : i32, i32
  }
  func.func @transform_5(%arg0: i32, %arg1: i32) -> (i32, i32) {
    %c0_i32 = arith.constant 0 : i32
    return %arg0, %arg1 : i32, i32
  }
}

module attributes {stable_mosaic.version = 11 : i64} {
  func.func @kernel(%arg0: i32, %arg1: i32, %arg2: memref<32x16xbf16, #tpu.memory_space<vmem>>, %arg3: memref<16x32xbf16, #tpu.memory_space<vmem>>, %arg4: memref<1x32xf32, #tpu.memory_space<vmem>>, %arg5: memref<1x32xf32, #tpu.memory_space<vmem>>, %arg6: memref<32x32xbf16, #tpu.memory_space<vmem>>) attributes {dimension_semantics = [#tpu.dimension_semantics<parallel>, #tpu.dimension_semantics<parallel>], iteration_bounds = array<i64: 1, 1>, scalar_prefetch = 0 : i64, scratch_operands = 0 : i64, tpu.core_type = #tpu.core_type<tc>, window_params = [{transform_indices = @transform_0, window_bounds = array<i64: 32, 16>}, {transform_indices = @transform_1, window_bounds = array<i64: 16, 32>}, {transform_indices = @transform_2, window_bounds = array<i64: 1, 32>}, {transform_indices = @transform_3, window_bounds = array<i64: 1, 32>}, {transform_indices = @transform_4, window_bounds = array<i64: 32, 32>}]} {
    %c0 = arith.constant 0 : index
    %c0_0 = arith.constant 0 : index
    %0 = vector.load %arg2[%c0, %c0_0] : memref<32x16xbf16, #tpu.memory_space<vmem>>, vector<32x16xbf16>
    %c0_1 = arith.constant 0 : index
    %c0_2 = arith.constant 0 : index
    %1 = vector.load %arg3[%c0_1, %c0_2] : memref<16x32xbf16, #tpu.memory_space<vmem>>, vector<16x32xbf16>
    %cst = arith.constant dense<0.000000e+00> : vector<32x32xf32>
    %2 = tpu.matmul %0, %1, %cst {dimension_numbers = #tpu.dot_dimension_numbers<[1], [0], [0], [1], [0, 0, 1, 1], [], []>} : vector<32x16xbf16>, vector<16x32xbf16>, vector<32x32xf32> -> vector<32x32xf32>
    %c0_3 = arith.constant 0 : index
    %c0_4 = arith.constant 0 : index
    %3 = vector.load %arg4[%c0_3, %c0_4] : memref<1x32xf32, #tpu.memory_space<vmem>>, vector<1x32xf32>
    %4 = vector.broadcast %3 : vector<1x32xf32> to vector<32x32xf32>
    %5 = arith.mulf %2, %4 : vector<32x32xf32>
    %c0_5 = arith.constant 0 : index
    %c0_6 = arith.constant 0 : index
    %6 = vector.load %arg5[%c0_5, %c0_6] : memref<1x32xf32, #tpu.memory_space<vmem>>, vector<1x32xf32>
    %7 = vector.broadcast %6 : vector<1x32xf32> to vector<32x32xf32>
    %8 = arith.addf %5, %7 : vector<32x32xf32>
    %9 = arith.truncf %8 : vector<32x32xf32> to vector<32x32xbf16>
    %c0_7 = arith.constant 0 : index
    %c0_8 = arith.constant 0 : index
    %10 = vector.load %arg6[%c0_7, %c0_8] : memref<32x32xbf16, #tpu.memory_space<vmem>>, vector<32x32xbf16>
    tpu.vector_store %arg6[%c0_7, %c0_8], %9 {strides = array<i32>} : memref<32x32xbf16, #tpu.memory_space<vmem>>, vector<32x32xbf16>,
    return
  }
  func.func @transform_0(%arg0: i32, %arg1: i32) -> (i32, i32) {
    %c0_i32 = arith.constant 0 : i32
    %c0_i32_0 = arith.constant 0 : i32
    return %arg0, %c0_i32 : i32, i32
  }
  func.func @transform_1(%arg0: i32, %arg1: i32) -> (i32, i32) {
    %c0_i32 = arith.constant 0 : i32
    %c0_i32_0 = arith.constant 0 : i32
    return %c0_i32, %arg1 : i32, i32
  }
  func.func @transform_2(%arg0: i32, %arg1: i32) -> (i32, i32) {
    %c0_i32 = arith.constant 0 : i32
    %c0_i32_0 = arith.constant 0 : i32
    return %c0_i32, %arg1 : i32, i32
  }
  func.func @transform_3(%arg0: i32, %arg1: i32) -> (i32, i32) {
    %c0_i32 = arith.constant 0 : i32
    %c0_i32_0 = arith.constant 0 : i32
    return %c0_i32, %arg1 : i32, i32
  }
  func.func @transform_4(%arg0: i32, %arg1: i32) -> (i32, i32) {
    %c0_i32 = arith.constant 0 : i32
    return %arg0, %arg1 : i32, i32
  }
}

module attributes {stable_mosaic.version = 11 : i64} {
  func.func @kernel(%arg0: i32, %arg1: i32, %arg2: memref<32x16xbf16, #tpu.memory_space<vmem>>, %arg3: memref<16x32xbf16, #tpu.memory_space<vmem>>, %arg4: memref<1x32xf32, #tpu.memory_space<vmem>>, %arg5: memref<1x32xf32, #tpu.memory_space<vmem>>, %arg6: memref<32x32xbf16, #tpu.memory_space<vmem>>) attributes {dimension_semantics = [#tpu.dimension_semantics<parallel>, #tpu.dimension_semantics<parallel>], iteration_bounds = array<i64: 1, 1>, scalar_prefetch = 0 : i64, scratch_operands = 0 : i64, tpu.core_type = #tpu.core_type<tc>, window_params = [{transform_indices = @transform_0, window_bounds = array<i64: 32, 16>}, {transform_indices = @transform_1, window_bounds = array<i64: 16, 32>}, {transform_indices = @transform_2, window_bounds = array<i64: 1, 32>}, {transform_indices = @transform_3, window_bounds = array<i64: 1, 32>}, {transform_indices = @transform_4, window_bounds = array<i64: 32, 32>}]} {
    %c0 = arith.constant 0 : index
    %c0_0 = arith.constant 0 : index
    %0 = vector.load %arg2[%c0, %c0_0] : memref<32x16xbf16, #tpu.memory_space<vmem>>, vector<32x16xbf16>
    %c0_1 = arith.constant 0 : index
    %c0_2 = arith.constant 0 : index
    %1 = vector.load %arg3[%c0_1, %c0_2] : memref<16x32xbf16, #tpu.memory_space<vmem>>, vector<16x32xbf16>
    %cst = arith.constant dense<0.000000e+00> : vector<32x32xf32>
    %2 = tpu.matmul %0, %1, %cst {dimension_numbers = #tpu.dot_dimension_numbers<[1], [0], [0], [1], [0, 0, 1, 1], [], []>} : vector<32x16xbf16>, vector<16x32xbf16>, vector<32x32xf32> -> vector<32x32xf32>
    %c0_3 = arith.constant 0 : index
    %c0_4 = arith.constant 0 : index
    %3 = vector.load %arg4[%c0_3, %c0_4] : memref<1x32xf32, #tpu.memory_space<vmem>>, vector<1x32xf32>
    %4 = vector.broadcast %3 : vector<1x32xf32> to vector<32x32xf32>
    %5 = arith.mulf %2, %4 : vector<32x32xf32>
    %c0_5 = arith.constant 0 : index
    %c0_6 = arith.constant 0 : index
    %6 = vector.load %arg5[%c0_5, %c0_6] : memref<1x32xf32, #tpu.memory_space<vmem>>, vector<1x32xf32>
    %7 = vector.broadcast %6 : vector<1x32xf32> to vector<32x32xf32>
    %8 = arith.addf %5, %7 : vector<32x32xf32>
    %cst_7 = arith.constant 0.000000e+00 : f32
    %9 = vector.broadcast %cst_7 : f32 to vector<32x32xf32>
    %10 = arith.maximumf %8, %9 : vector<32x32xf32>
    %11 = arith.truncf %10 : vector<32x32xf32> to vector<32x32xbf16>
    %c0_8 = arith.constant 0 : index
    %c0_9 = arith.constant 0 : index
    %12 = vector.load %arg6[%c0_8, %c0_9] : memref<32x32xbf16, #tpu.memory_space<vmem>>, vector<32x32xbf16>
    tpu.vector_store %arg6[%c0_8, %c0_9], %11 {strides = array<i32>} : memref<32x32xbf16, #tpu.memory_space<vmem>>, vector<32x32xbf16>,
    return
  }
  func.func @transform_0(%arg0: i32, %arg1: i32) -> (i32, i32) {
    %c0_i32 = arith.constant 0 : i32
    %c0_i32_0 = arith.constant 0 : i32
    return %arg0, %c0_i32 : i32, i32
  }
  func.func @transform_1(%arg0: i32, %arg1: i32) -> (i32, i32) {
    %c0_i32 = arith.constant 0 : i32
    %c0_i32_0 = arith.constant 0 : i32
    return %c0_i32, %arg1 : i32, i32
  }
  func.func @transform_2(%arg0: i32, %arg1: i32) -> (i32, i32) {
    %c0_i32 = arith.constant 0 : i32
    %c0_i32_0 = arith.constant 0 : i32
    return %c0_i32, %arg1 : i32, i32
  }
  func.func @transform_3(%arg0: i32, %arg1: i32) -> (i32, i32) {
    %c0_i32 = arith.constant 0 : i32
    %c0_i32_0 = arith.constant 0 : i32
    return %c0_i32, %arg1 : i32, i32
  }
  func.func @transform_4(%arg0: i32, %arg1: i32) -> (i32, i32) {
    %c0_i32 = arith.constant 0 : i32
    return %arg0, %arg1 : i32, i32
  }
}

module attributes {stable_mosaic.version = 11 : i64} {
  func.func @kernel(%arg0: i32, %arg1: i32, %arg2: memref<32x288xbf16, #tpu.memory_space<vmem>>, %arg3: memref<288x32xbf16, #tpu.memory_space<vmem>>, %arg4: memref<1x32xf32, #tpu.memory_space<vmem>>, %arg5: memref<1x32xf32, #tpu.memory_space<vmem>>, %arg6: memref<32x32xbf16, #tpu.memory_space<vmem>>, %arg7: memref<32x32xbf16, #tpu.memory_space<vmem>>) attributes {dimension_semantics = [#tpu.dimension_semantics<parallel>, #tpu.dimension_semantics<parallel>], iteration_bounds = array<i64: 1, 1>, scalar_prefetch = 0 : i64, scratch_operands = 0 : i64, tpu.core_type = #tpu.core_type<tc>, window_params = [{transform_indices = @transform_0, window_bounds = array<i64: 32, 288>}, {transform_indices = @transform_1, window_bounds = array<i64: 288, 32>}, {transform_indices = @transform_2, window_bounds = array<i64: 1, 32>}, {transform_indices = @transform_3, window_bounds = array<i64: 1, 32>}, {transform_indices = @transform_4, window_bounds = array<i64: 32, 32>}, {transform_indices = @transform_5, window_bounds = array<i64: 32, 32>}]} {
    %c0 = arith.constant 0 : index
    %c0_0 = arith.constant 0 : index
    %0 = vector.load %arg2[%c0, %c0_0] : memref<32x288xbf16, #tpu.memory_space<vmem>>, vector<32x288xbf16>
    %c0_1 = arith.constant 0 : index
    %c0_2 = arith.constant 0 : index
    %1 = vector.load %arg3[%c0_1, %c0_2] : memref<288x32xbf16, #tpu.memory_space<vmem>>, vector<288x32xbf16>
    %cst = arith.constant dense<0.000000e+00> : vector<32x32xf32>
    %2 = tpu.matmul %0, %1, %cst {dimension_numbers = #tpu.dot_dimension_numbers<[1], [0], [0], [1], [0, 0, 1, 1], [], []>} : vector<32x288xbf16>, vector<288x32xbf16>, vector<32x32xf32> -> vector<32x32xf32>
    %c0_3 = arith.constant 0 : index
    %c0_4 = arith.constant 0 : index
    %3 = vector.load %arg4[%c0_3, %c0_4] : memref<1x32xf32, #tpu.memory_space<vmem>>, vector<1x32xf32>
    %4 = vector.broadcast %3 : vector<1x32xf32> to vector<32x32xf32>
    %5 = arith.mulf %2, %4 : vector<32x32xf32>
    %c0_5 = arith.constant 0 : index
    %c0_6 = arith.constant 0 : index
    %6 = vector.load %arg5[%c0_5, %c0_6] : memref<1x32xf32, #tpu.memory_space<vmem>>, vector<1x32xf32>
    %7 = vector.broadcast %6 : vector<1x32xf32> to vector<32x32xf32>
    %8 = arith.addf %5, %7 : vector<32x32xf32>
    %c0_7 = arith.constant 0 : index
    %c0_8 = arith.constant 0 : index
    %9 = vector.load %arg6[%c0_7, %c0_8] : memref<32x32xbf16, #tpu.memory_space<vmem>>, vector<32x32xbf16>
    %10 = arith.extf %9 : vector<32x32xbf16> to vector<32x32xf32>
    %11 = arith.addf %8, %10 : vector<32x32xf32>
    %cst_9 = arith.constant 0.000000e+00 : f32
    %12 = vector.broadcast %cst_9 : f32 to vector<32x32xf32>
    %13 = arith.maximumf %11, %12 : vector<32x32xf32>
    %14 = arith.truncf %13 : vector<32x32xf32> to vector<32x32xbf16>
    %c0_10 = arith.constant 0 : index
    %c0_11 = arith.constant 0 : index
    %15 = vector.load %arg7[%c0_10, %c0_11] : memref<32x32xbf16, #tpu.memory_space<vmem>>, vector<32x32xbf16>
    tpu.vector_store %arg7[%c0_10, %c0_11], %14 {strides = array<i32>} : memref<32x32xbf16, #tpu.memory_space<vmem>>, vector<32x32xbf16>,
    return
  }
  func.func @transform_0(%arg0: i32, %arg1: i32) -> (i32, i32) {
    %c0_i32 = arith.constant 0 : i32
    %c0_i32_0 = arith.constant 0 : i32
    return %arg0, %c0_i32 : i32, i32
  }
  func.func @transform_1(%arg0: i32, %arg1: i32) -> (i32, i32) {
    %c0_i32 = arith.constant 0 : i32
    %c0_i32_0 = arith.constant 0 : i32
    return %c0_i32, %arg1 : i32, i32
  }
  func.func @transform_2(%arg0: i32, %arg1: i32) -> (i32, i32) {
    %c0_i32 = arith.constant 0 : i32
    %c0_i32_0 = arith.constant 0 : i32
    return %c0_i32, %arg1 : i32, i32
  }
  func.func @transform_3(%arg0: i32, %arg1: i32) -> (i32, i32) {
    %c0_i32 = arith.constant 0 : i32
    %c0_i32_0 = arith.constant 0 : i32
    return %c0_i32, %arg1 : i32, i32
  }
  func.func @transform_4(%arg0: i32, %arg1: i32) -> (i32, i32) {
    %c0_i32 = arith.constant 0 : i32
    return %arg0, %arg1 : i32, i32
  }
  func.func @transform_5(%arg0: i32, %arg1: i32) -> (i32, i32) {
    %c0_i32 = arith.constant 0 : i32
    return %arg0, %arg1 : i32, i32
  }
}

module attributes {stable_mosaic.version = 11 : i64} {
  func.func @_pe_add_kernel(%arg0: i32, %arg1: memref<1x16x32xbf16, #tpu.memory_space<vmem>>, %arg2: memref<1x16x32xf32, #tpu.memory_space<vmem>>, %arg3: memref<1x16x32xf32, #tpu.memory_space<vmem>>) attributes {dimension_semantics = [#tpu.dimension_semantics<parallel>], iteration_bounds = array<i64: 2>, scalar_prefetch = 0 : i64, scratch_operands = 0 : i64, tpu.core_type = #tpu.core_type<tc>, window_params = [{transform_indices = @transform_0, window_bounds = array<i64: 1, 16, 32>}, {pipeline_mode = #tpu.pipeline_mode<synchronous>, transform_indices = @transform_1, window_bounds = array<i64: 1, 16, 32>}, {transform_indices = @transform_2, window_bounds = array<i64: 1, 16, 32>}]} {
    %c0 = arith.constant 0 : index
    %c0_0 = arith.constant 0 : index
    %c0_1 = arith.constant 0 : index
    %0 = vector.load %arg1[%c0, %c0_0, %c0_1] : memref<1x16x32xbf16, #tpu.memory_space<vmem>>, vector<1x16x32xbf16>
    %1 = arith.extf %0 : vector<1x16x32xbf16> to vector<1x16x32xf32>
    %c0_2 = arith.constant 0 : index
    %c0_3 = arith.constant 0 : index
    %c0_4 = arith.constant 0 : index
    %2 = vector.load %arg2[%c0_2, %c0_3, %c0_4] : memref<1x16x32xf32, #tpu.memory_space<vmem>>, vector<1x16x32xf32>
    %3 = arith.addf %1, %2 : vector<1x16x32xf32>
    %c0_5 = arith.constant 0 : index
    %c0_6 = arith.constant 0 : index
    %c0_7 = arith.constant 0 : index
    %4 = vector.load %arg3[%c0_5, %c0_6, %c0_7] : memref<1x16x32xf32, #tpu.memory_space<vmem>>, vector<1x16x32xf32>
    tpu.vector_store %arg3[%c0_5, %c0_6, %c0_7], %3 {strides = array<i32>} : memref<1x16x32xf32, #tpu.memory_space<vmem>>, vector<1x16x32xf32>,
    return
  }
  func.func @transform_0(%arg0: i32) -> (i32, i32, i32) {
    %c0_i32 = arith.constant 0 : i32
    %c0_i32_0 = arith.constant 0 : i32
    %c0_i32_1 = arith.constant 0 : i32
    return %arg0, %c0_i32, %c0_i32_0 : i32, i32, i32
  }
  func.func @transform_1(%arg0: i32) -> (i32, i32, i32) {
    %c0_i32 = arith.constant 0 : i32
    %c0_i32_0 = arith.constant 0 : i32
    %c0_i32_1 = arith.constant 0 : i32
    %c0_i32_2 = arith.constant 0 : i32
    return %c0_i32, %c0_i32_0, %c0_i32_1 : i32, i32, i32
  }
  func.func @transform_2(%arg0: i32) -> (i32, i32, i32) {
    %c0_i32 = arith.constant 0 : i32
    %c0_i32_0 = arith.constant 0 : i32
    %c0_i32_1 = arith.constant 0 : i32
    return %arg0, %c0_i32, %c0_i32_0 : i32, i32, i32
  }
}

module attributes {stable_mosaic.version = 11 : i64} {
  func.func @kernel(%arg0: i32, %arg1: i32, %arg2: memref<32x32xf32, #tpu.memory_space<vmem>>, %arg3: memref<32x96xbf16, #tpu.memory_space<vmem>>, %arg4: memref<1x96xf32, #tpu.memory_space<vmem>>, %arg5: memref<32x96xbf16, #tpu.memory_space<vmem>>) attributes {dimension_semantics = [#tpu.dimension_semantics<parallel>, #tpu.dimension_semantics<parallel>], iteration_bounds = array<i64: 1, 1>, scalar_prefetch = 0 : i64, scratch_operands = 0 : i64, tpu.core_type = #tpu.core_type<tc>, window_params = [{transform_indices = @transform_0, window_bounds = array<i64: 32, 32>}, {transform_indices = @transform_1, window_bounds = array<i64: 32, 96>}, {transform_indices = @transform_2, window_bounds = array<i64: 1, 96>}, {transform_indices = @transform_3, window_bounds = array<i64: 32, 96>}]} {
    %c0 = arith.constant 0 : index
    %c0_0 = arith.constant 0 : index
    %0 = vector.load %arg2[%c0, %c0_0] : memref<32x32xf32, #tpu.memory_space<vmem>>, vector<32x32xf32>
    %1 = arith.truncf %0 : vector<32x32xf32> to vector<32x32xbf16>
    %c0_1 = arith.constant 0 : index
    %c0_2 = arith.constant 0 : index
    %2 = vector.load %arg3[%c0_1, %c0_2] : memref<32x96xbf16, #tpu.memory_space<vmem>>, vector<32x96xbf16>
    %cst = arith.constant dense<0.000000e+00> : vector<32x96xf32>
    %3 = tpu.matmul %1, %2, %cst {dimension_numbers = #tpu.dot_dimension_numbers<[1], [0], [0], [1], [0, 0, 1, 1], [], []>} : vector<32x32xbf16>, vector<32x96xbf16>, vector<32x96xf32> -> vector<32x96xf32>
    %c0_3 = arith.constant 0 : index
    %c0_4 = arith.constant 0 : index
    %4 = vector.load %arg4[%c0_3, %c0_4] : memref<1x96xf32, #tpu.memory_space<vmem>>, vector<1x96xf32>
    %5 = vector.broadcast %4 : vector<1x96xf32> to vector<32x96xf32>
    %6 = arith.addf %3, %5 : vector<32x96xf32>
    %7 = arith.truncf %6 : vector<32x96xf32> to vector<32x96xbf16>
    %c0_5 = arith.constant 0 : index
    %c0_6 = arith.constant 0 : index
    %8 = vector.load %arg5[%c0_5, %c0_6] : memref<32x96xbf16, #tpu.memory_space<vmem>>, vector<32x96xbf16>
    tpu.vector_store %arg5[%c0_5, %c0_6], %7 {strides = array<i32>} : memref<32x96xbf16, #tpu.memory_space<vmem>>, vector<32x96xbf16>,
    return
  }
  func.func @transform_0(%arg0: i32, %arg1: i32) -> (i32, i32) {
    %c0_i32 = arith.constant 0 : i32
    %c0_i32_0 = arith.constant 0 : i32
    return %arg0, %c0_i32 : i32, i32
  }
  func.func @transform_1(%arg0: i32, %arg1: i32) -> (i32, i32) {
    %c0_i32 = arith.constant 0 : i32
    %c0_i32_0 = arith.constant 0 : i32
    return %c0_i32, %arg1 : i32, i32
  }
  func.func @transform_2(%arg0: i32, %arg1: i32) -> (i32, i32) {
    %c0_i32 = arith.constant 0 : i32
    %c0_i32_0 = arith.constant 0 : i32
    return %c0_i32, %arg1 : i32, i32
  }
  func.func @transform_3(%arg0: i32, %arg1: i32) -> (i32, i32) {
    %c0_i32 = arith.constant 0 : i32
    return %arg0, %arg1 : i32, i32
  }
}

module attributes {stable_mosaic.version = 11 : i64} {
  func.func @_attn_kernel(%arg0: i32, %arg1: memref<1x16x96xbf16, #tpu.memory_space<vmem>>, %arg2: memref<1x16x32xbf16, #tpu.memory_space<vmem>>) attributes {dimension_semantics = [#tpu.dimension_semantics<parallel>], iteration_bounds = array<i64: 2>, scalar_prefetch = 0 : i64, scratch_operands = 0 : i64, tpu.core_type = #tpu.core_type<tc>, window_params = [{transform_indices = @transform_0, window_bounds = array<i64: 1, 16, 96>}, {transform_indices = @transform_1, window_bounds = array<i64: 1, 16, 32>}]} {
    %c0 = arith.constant 0 : index
    %c0_0 = arith.constant 0 : index
    %c0_1 = arith.constant 0 : index
    %0 = vector.load %arg1[%c0, %c0_0, %c0_1] : memref<1x16x96xbf16, #tpu.memory_space<vmem>>, vector<1x16x8xbf16>
    %1 = vector.shape_cast %0 : vector<1x16x8xbf16> to vector<16x8xbf16>
    %c0_2 = arith.constant 0 : index
    %c0_3 = arith.constant 0 : index
    %c32 = arith.constant 32 : index
    %2 = vector.load %arg1[%c0_2, %c0_3, %c32] : memref<1x16x96xbf16, #tpu.memory_space<vmem>>, vector<1x16x8xbf16>
    %3 = vector.shape_cast %2 : vector<1x16x8xbf16> to vector<16x8xbf16>
    %c0_4 = arith.constant 0 : index
    %c0_5 = arith.constant 0 : index
    %c64 = arith.constant 64 : index
    %4 = vector.load %arg1[%c0_4, %c0_5, %c64] : memref<1x16x96xbf16, #tpu.memory_space<vmem>>, vector<1x16x8xbf16>
    %5 = vector.shape_cast %4 : vector<1x16x8xbf16> to vector<16x8xbf16>
    %cst = arith.constant dense<0.000000e+00> : vector<16x16xf32>
    %6 = tpu.matmul %1, %3, %cst {dimension_numbers = #tpu.dot_dimension_numbers<[1], [1], [0], [0], [0, 0, 1, 0], [], []>} : vector<16x8xbf16>, vector<16x8xbf16>, vector<16x16xf32> -> vector<16x16xf32>
    %cst_6 = arith.constant dense<0xFF800000> : vector<16xf32>
    %7 = vector.multi_reduction <maximumf>, %6, %cst_6 [1] : vector<16x16xf32> to vector<16xf32>
    %8 = vector.shape_cast %7 : vector<16xf32> to vector<16x1xf32>
    %9 = vector.broadcast %8 : vector<16x1xf32> to vector<16x16xf32>
    %10 = arith.subf %6, %9 : vector<16x16xf32>
    %11 = math.exp %10 : vector<16x16xf32>
    %cst_7 = arith.constant dense<0.000000e+00> : vector<16xf32>
    %12 = vector.multi_reduction <add>, %11, %cst_7 [1] : vector<16x16xf32> to vector<16xf32>
    %13 = vector.shape_cast %12 : vector<16xf32> to vector<16x1xf32>
    %14 = tpu.reciprocal %13 {approx = true} : vector<16x1xf32> -> vector<16x1xf32>
    %15 = vector.broadcast %14 : vector<16x1xf32> to vector<16x16xf32>
    %16 = arith.mulf %11, %15 : vector<16x16xf32>
    %17 = arith.truncf %16 : vector<16x16xf32> to vector<16x16xbf16>
    %cst_8 = arith.constant dense<0.000000e+00> : vector<16x8xf32>
    %18 = tpu.matmul %17, %5, %cst_8 {dimension_numbers = #tpu.dot_dimension_numbers<[1], [0], [0], [1], [0, 0, 1, 1], [], []>} : vector<16x16xbf16>, vector<16x8xbf16>, vector<16x8xf32> -> vector<16x8xf32>
    %19 = arith.truncf %18 : vector<16x8xf32> to vector<16x8xbf16>
    %c0_9 = arith.constant 0 : index
    %c0_10 = arith.constant 0 : index
    %c0_11 = arith.constant 0 : index
    %20 = vector.load %arg2[%c0_9, %c0_10, %c0_11] : memref<1x16x32xbf16, #tpu.memory_space<vmem>>, vector<1x16x8xbf16>
    %21 = vector.shape_cast %20 : vector<1x16x8xbf16> to vector<16x8xbf16>
    %22 = vector.shape_cast %19 : vector<16x8xbf16> to vector<1x16x8xbf16>
    tpu.vector_store %arg2[%c0_9, %c0_10, %c0_11], %22 {strides = array<i32>} : memref<1x16x32xbf16, #tpu.memory_space<vmem>>, vector<1x16x8xbf16>,
    %c0_12 = arith.constant 0 : index
    %c0_13 = arith.constant 0 : index
    %c8 = arith.constant 8 : index
    %23 = vector.load %arg1[%c0_12, %c0_13, %c8] : memref<1x16x96xbf16, #tpu.memory_space<vmem>>, vector<1x16x8xbf16>
    %24 = vector.shape_cast %23 : vector<1x16x8xbf16> to vector<16x8xbf16>
    %c0_14 = arith.constant 0 : index
    %c0_15 = arith.constant 0 : index
    %c40 = arith.constant 40 : index
    %25 = vector.load %arg1[%c0_14, %c0_15, %c40] : memref<1x16x96xbf16, #tpu.memory_space<vmem>>, vector<1x16x8xbf16>
    %26 = vector.shape_cast %25 : vector<1x16x8xbf16> to vector<16x8xbf16>
    %c0_16 = arith.constant 0 : index
    %c0_17 = arith.constant 0 : index
    %c72 = arith.constant 72 : index
    %27 = vector.load %arg1[%c0_16, %c0_17, %c72] : memref<1x16x96xbf16, #tpu.memory_space<vmem>>, vector<1x16x8xbf16>
    %28 = vector.shape_cast %27 : vector<1x16x8xbf16> to vector<16x8xbf16>
    %cst_18 = arith.constant dense<0.000000e+00> : vector<16x16xf32>
    %29 = tpu.matmul %24, %26, %cst_18 {dimension_numbers = #tpu.dot_dimension_numbers<[1], [1], [0], [0], [0, 0, 1, 0], [], []>} : vector<16x8xbf16>, vector<16x8xbf16>, vector<16x16xf32> -> vector<16x16xf32>
    %cst_19 = arith.constant dense<0xFF800000> : vector<16xf32>
    %30 = vector.multi_reduction <maximumf>, %29, %cst_19 [1] : vector<16x16xf32> to vector<16xf32>
    %31 = vector.shape_cast %30 : vector<16xf32> to vector<16x1xf32>
    %32 = vector.broadcast %31 : vector<16x1xf32> to vector<16x16xf32>
    %33 = arith.subf %29, %32 : vector<16x16xf32>
    %34 = math.exp %33 : vector<16x16xf32>
    %cst_20 = arith.constant dense<0.000000e+00> : vector<16xf32>
    %35 = vector.multi_reduction <add>, %34, %cst_20 [1] : vector<16x16xf32> to vector<16xf32>
    %36 = vector.shape_cast %35 : vector<16xf32> to vector<16x1xf32>
    %37 = tpu.reciprocal %36 {approx = true} : vector<16x1xf32> -> vector<16x1xf32>
    %38 = vector.broadcast %37 : vector<16x1xf32> to vector<16x16xf32>
    %39 = arith.mulf %34, %38 : vector<16x16xf32>
    %40 = arith.truncf %39 : vector<16x16xf32> to vector<16x16xbf16>
    %cst_21 = arith.constant dense<0.000000e+00> : vector<16x8xf32>
    %41 = tpu.matmul %40, %28, %cst_21 {dimension_numbers = #tpu.dot_dimension_numbers<[1], [0], [0], [1], [0, 0, 1, 1], [], []>} : vector<16x16xbf16>, vector<16x8xbf16>, vector<16x8xf32> -> vector<16x8xf32>
    %42 = arith.truncf %41 : vector<16x8xf32> to vector<16x8xbf16>
    %c0_22 = arith.constant 0 : index
    %c0_23 = arith.constant 0 : index
    %c8_24 = arith.constant 8 : index
    %43 = vector.load %arg2[%c0_22, %c0_23, %c8_24] : memref<1x16x32xbf16, #tpu.memory_space<vmem>>, vector<1x16x8xbf16>
    %44 = vector.shape_cast %43 : vector<1x16x8xbf16> to vector<16x8xbf16>
    %45 = vector.shape_cast %42 : vector<16x8xbf16> to vector<1x16x8xbf16>
    tpu.vector_store %arg2[%c0_22, %c0_23, %c8_24], %45 {strides = array<i32>} : memref<1x16x32xbf16, #tpu.memory_space<vmem>>, vector<1x16x8xbf16>,
    %c0_25 = arith.constant 0 : index
    %c0_26 = arith.constant 0 : index
    %c16 = arith.constant 16 : index
    %46 = vector.load %arg1[%c0_25, %c0_26, %c16] : memref<1x16x96xbf16, #tpu.memory_space<vmem>>, vector<1x16x8xbf16>
    %47 = vector.shape_cast %46 : vector<1x16x8xbf16> to vector<16x8xbf16>
    %c0_27 = arith.constant 0 : index
    %c0_28 = arith.constant 0 : index
    %c48 = arith.constant 48 : index
    %48 = vector.load %arg1[%c0_27, %c0_28, %c48] : memref<1x16x96xbf16, #tpu.memory_space<vmem>>, vector<1x16x8xbf16>
    %49 = vector.shape_cast %48 : vector<1x16x8xbf16> to vector<16x8xbf16>
    %c0_29 = arith.constant 0 : index
    %c0_30 = arith.constant 0 : index
    %c80 = arith.constant 80 : index
    %50 = vector.load %arg1[%c0_29, %c0_30, %c80] : memref<1x16x96xbf16, #tpu.memory_space<vmem>>, vector<1x16x8xbf16>
    %51 = vector.shape_cast %50 : vector<1x16x8xbf16> to vector<16x8xbf16>
    %cst_31 = arith.constant dense<0.000000e+00> : vector<16x16xf32>
    %52 = tpu.matmul %47, %49, %cst_31 {dimension_numbers = #tpu.dot_dimension_numbers<[1], [1], [0], [0], [0, 0, 1, 0], [], []>} : vector<16x8xbf16>, vector<16x8xbf16>, vector<16x16xf32> -> vector<16x16xf32>
    %cst_32 = arith.constant dense<0xFF800000> : vector<16xf32>
    %53 = vector.multi_reduction <maximumf>, %52, %cst_32 [1] : vector<16x16xf32> to vector<16xf32>
    %54 = vector.shape_cast %53 : vector<16xf32> to vector<16x1xf32>
    %55 = vector.broadcast %54 : vector<16x1xf32> to vector<16x16xf32>
    %56 = arith.subf %52, %55 : vector<16x16xf32>
    %57 = math.exp %56 : vector<16x16xf32>
    %cst_33 = arith.constant dense<0.000000e+00> : vector<16xf32>
    %58 = vector.multi_reduction <add>, %57, %cst_33 [1] : vector<16x16xf32> to vector<16xf32>
    %59 = vector.shape_cast %58 : vector<16xf32> to vector<16x1xf32>
    %60 = tpu.reciprocal %59 {approx = true} : vector<16x1xf32> -> vector<16x1xf32>
    %61 = vector.broadcast %60 : vector<16x1xf32> to vector<16x16xf32>
    %62 = arith.mulf %57, %61 : vector<16x16xf32>
    %63 = arith.truncf %62 : vector<16x16xf32> to vector<16x16xbf16>
    %cst_34 = arith.constant dense<0.000000e+00> : vector<16x8xf32>
    %64 = tpu.matmul %63, %51, %cst_34 {dimension_numbers = #tpu.dot_dimension_numbers<[1], [0], [0], [1], [0, 0, 1, 1], [], []>} : vector<16x16xbf16>, vector<16x8xbf16>, vector<16x8xf32> -> vector<16x8xf32>
    %65 = arith.truncf %64 : vector<16x8xf32> to vector<16x8xbf16>
    %c0_35 = arith.constant 0 : index
    %c0_36 = arith.constant 0 : index
    %c16_37 = arith.constant 16 : index
    %66 = vector.load %arg2[%c0_35, %c0_36, %c16_37] : memref<1x16x32xbf16, #tpu.memory_space<vmem>>, vector<1x16x8xbf16>
    %67 = vector.shape_cast %66 : vector<1x16x8xbf16> to vector<16x8xbf16>
    %68 = vector.shape_cast %65 : vector<16x8xbf16> to vector<1x16x8xbf16>
    tpu.vector_store %arg2[%c0_35, %c0_36, %c16_37], %68 {strides = array<i32>} : memref<1x16x32xbf16, #tpu.memory_space<vmem>>, vector<1x16x8xbf16>,
    %c0_38 = arith.constant 0 : index
    %c0_39 = arith.constant 0 : index
    %c24 = arith.constant 24 : index
    %69 = vector.load %arg1[%c0_38, %c0_39, %c24] : memref<1x16x96xbf16, #tpu.memory_space<vmem>>, vector<1x16x8xbf16>
    %70 = vector.shape_cast %69 : vector<1x16x8xbf16> to vector<16x8xbf16>
    %c0_40 = arith.constant 0 : index
    %c0_41 = arith.constant 0 : index
    %c56 = arith.constant 56 : index
    %71 = vector.load %arg1[%c0_40, %c0_41, %c56] : memref<1x16x96xbf16, #tpu.memory_space<vmem>>, vector<1x16x8xbf16>
    %72 = vector.shape_cast %71 : vector<1x16x8xbf16> to vector<16x8xbf16>
    %c0_42 = arith.constant 0 : index
    %c0_43 = arith.constant 0 : index
    %c88 = arith.constant 88 : index
    %73 = vector.load %arg1[%c0_42, %c0_43, %c88] : memref<1x16x96xbf16, #tpu.memory_space<vmem>>, vector<1x16x8xbf16>
    %74 = vector.shape_cast %73 : vector<1x16x8xbf16> to vector<16x8xbf16>
    %cst_44 = arith.constant dense<0.000000e+00> : vector<16x16xf32>
    %75 = tpu.matmul %70, %72, %cst_44 {dimension_numbers = #tpu.dot_dimension_numbers<[1], [1], [0], [0], [0, 0, 1, 0], [], []>} : vector<16x8xbf16>, vector<16x8xbf16>, vector<16x16xf32> -> vector<16x16xf32>
    %cst_45 = arith.constant dense<0xFF800000> : vector<16xf32>
    %76 = vector.multi_reduction <maximumf>, %75, %cst_45 [1] : vector<16x16xf32> to vector<16xf32>
    %77 = vector.shape_cast %76 : vector<16xf32> to vector<16x1xf32>
    %78 = vector.broadcast %77 : vector<16x1xf32> to vector<16x16xf32>
    %79 = arith.subf %75, %78 : vector<16x16xf32>
    %80 = math.exp %79 : vector<16x16xf32>
    %cst_46 = arith.constant dense<0.000000e+00> : vector<16xf32>
    %81 = vector.multi_reduction <add>, %80, %cst_46 [1] : vector<16x16xf32> to vector<16xf32>
    %82 = vector.shape_cast %81 : vector<16xf32> to vector<16x1xf32>
    %83 = tpu.reciprocal %82 {approx = true} : vector<16x1xf32> -> vector<16x1xf32>
    %84 = vector.broadcast %83 : vector<16x1xf32> to vector<16x16xf32>
    %85 = arith.mulf %80, %84 : vector<16x16xf32>
    %86 = arith.truncf %85 : vector<16x16xf32> to vector<16x16xbf16>
    %cst_47 = arith.constant dense<0.000000e+00> : vector<16x8xf32>
    %87 = tpu.matmul %86, %74, %cst_47 {dimension_numbers = #tpu.dot_dimension_numbers<[1], [0], [0], [1], [0, 0, 1, 1], [], []>} : vector<16x16xbf16>, vector<16x8xbf16>, vector<16x8xf32> -> vector<16x8xf32>
    %88 = arith.truncf %87 : vector<16x8xf32> to vector<16x8xbf16>
    %c0_48 = arith.constant 0 : index
    %c0_49 = arith.constant 0 : index
    %c24_50 = arith.constant 24 : index
    %89 = vector.load %arg2[%c0_48, %c0_49, %c24_50] : memref<1x16x32xbf16, #tpu.memory_space<vmem>>, vector<1x16x8xbf16>
    %90 = vector.shape_cast %89 : vector<1x16x8xbf16> to vector<16x8xbf16>
    %91 = vector.shape_cast %88 : vector<16x8xbf16> to vector<1x16x8xbf16>
    tpu.vector_store %arg2[%c0_48, %c0_49, %c24_50], %91 {strides = array<i32>} : memref<1x16x32xbf16, #tpu.memory_space<vmem>>, vector<1x16x8xbf16>,
    return
  }
  func.func @transform_0(%arg0: i32) -> (i32, i32, i32) {
    %c0_i32 = arith.constant 0 : i32
    %c0_i32_0 = arith.constant 0 : i32
    %c0_i32_1 = arith.constant 0 : i32
    return %arg0, %c0_i32, %c0_i32_0 : i32, i32, i32
  }
  func.func @transform_1(%arg0: i32) -> (i32, i32, i32) {
    %c0_i32 = arith.constant 0 : i32
    %c0_i32_0 = arith.constant 0 : i32
    %c0_i32_1 = arith.constant 0 : i32
    return %arg0, %c0_i32, %c0_i32_0 : i32, i32, i32
  }
}

module attributes {stable_mosaic.version = 11 : i64} {
  func.func @kernel(%arg0: i32, %arg1: i32, %arg2: memref<32x32xbf16, #tpu.memory_space<vmem>>, %arg3: memref<32x32xbf16, #tpu.memory_space<vmem>>, %arg4: memref<1x32xf32, #tpu.memory_space<vmem>>, %arg5: memref<1x32xf32, #tpu.memory_space<vmem>>, %arg6: memref<1x32xf32, #tpu.memory_space<vmem>>, %arg7: memref<32x32xf32, #tpu.memory_space<vmem>>, %arg8: memref<32x32xf32, #tpu.memory_space<vmem>>) attributes {dimension_semantics = [#tpu.dimension_semantics<parallel>, #tpu.dimension_semantics<parallel>], iteration_bounds = array<i64: 1, 1>, scalar_prefetch = 0 : i64, scratch_operands = 0 : i64, tpu.core_type = #tpu.core_type<tc>, window_params = [{transform_indices = @transform_0, window_bounds = array<i64: 32, 32>}, {transform_indices = @transform_1, window_bounds = array<i64: 32, 32>}, {transform_indices = @transform_2, window_bounds = array<i64: 1, 32>}, {transform_indices = @transform_3, window_bounds = array<i64: 1, 32>}, {transform_indices = @transform_4, window_bounds = array<i64: 1, 32>}, {transform_indices = @transform_5, window_bounds = array<i64: 32, 32>}, {transform_indices = @transform_6, window_bounds = array<i64: 32, 32>}]} {
    %c0 = arith.constant 0 : index
    %c0_0 = arith.constant 0 : index
    %0 = vector.load %arg2[%c0, %c0_0] : memref<32x32xbf16, #tpu.memory_space<vmem>>, vector<32x32xbf16>
    %c0_1 = arith.constant 0 : index
    %c0_2 = arith.constant 0 : index
    %1 = vector.load %arg3[%c0_1, %c0_2] : memref<32x32xbf16, #tpu.memory_space<vmem>>, vector<32x32xbf16>
    %cst = arith.constant dense<0.000000e+00> : vector<32x32xf32>
    %2 = tpu.matmul %0, %1, %cst {dimension_numbers = #tpu.dot_dimension_numbers<[1], [0], [0], [1], [0, 0, 1, 1], [], []>} : vector<32x32xbf16>, vector<32x32xbf16>, vector<32x32xf32> -> vector<32x32xf32>
    %c0_3 = arith.constant 0 : index
    %c0_4 = arith.constant 0 : index
    %3 = vector.load %arg4[%c0_3, %c0_4] : memref<1x32xf32, #tpu.memory_space<vmem>>, vector<1x32xf32>
    %4 = vector.broadcast %3 : vector<1x32xf32> to vector<32x32xf32>
    %5 = arith.addf %2, %4 : vector<32x32xf32>
    %c0_5 = arith.constant 0 : index
    %c0_6 = arith.constant 0 : index
    %6 = vector.load %arg5[%c0_5, %c0_6] : memref<1x32xf32, #tpu.memory_space<vmem>>, vector<1x32xf32>
    %c0_7 = arith.constant 0 : index
    %c0_8 = arith.constant 0 : index
    %7 = vector.load %arg6[%c0_7, %c0_8] : memref<1x32xf32, #tpu.memory_space<vmem>>, vector<1x32xf32>
    %c0_9 = arith.constant 0 : index
    %c0_10 = arith.constant 0 : index
    %8 = vector.load %arg7[%c0_9, %c0_10] : memref<32x32xf32, #tpu.memory_space<vmem>>, vector<32x32xf32>
    %9 = arith.addf %5, %8 : vector<32x32xf32>
    %cst_11 = arith.constant dense<0.000000e+00> : vector<32xf32>
    %10 = vector.multi_reduction <add>, %9, %cst_11 [1] : vector<32x32xf32> to vector<32xf32>
    %11 = vector.shape_cast %10 : vector<32xf32> to vector<32x1xf32>
    %cst_12 = arith.constant 3.200000e+01 : f32
    %12 = vector.broadcast %cst_12 : f32 to vector<32x1xf32>
    %13 = arith.divf %11, %12 : vector<32x1xf32>
    %14 = vector.broadcast %13 : vector<32x1xf32> to vector<32x32xf32>
    %15 = arith.subf %9, %14 : vector<32x32xf32>
    %16 = arith.mulf %15, %15 : vector<32x32xf32>
    %cst_13 = arith.constant dense<0.000000e+00> : vector<32xf32>
    %17 = vector.multi_reduction <add>, %16, %cst_13 [1] : vector<32x32xf32> to vector<32xf32>
    %18 = vector.shape_cast %17 : vector<32xf32> to vector<32x1xf32>
    %cst_14 = arith.constant 3.200000e+01 : f32
    %19 = vector.broadcast %cst_14 : f32 to vector<32x1xf32>
    %20 = arith.divf %18, %19 : vector<32x1xf32>
    %21 = vector.broadcast %13 : vector<32x1xf32> to vector<32x32xf32>
    %22 = arith.subf %9, %21 : vector<32x32xf32>
    %cst_15 = arith.constant 9.99999974E-6 : f32
    %23 = vector.broadcast %cst_15 : f32 to vector<32x1xf32>
    %24 = arith.addf %20, %23 : vector<32x1xf32>
    %25 = math.rsqrt %24 : vector<32x1xf32>
    %26 = vector.broadcast %25 : vector<32x1xf32> to vector<32x32xf32>
    %27 = arith.mulf %22, %26 : vector<32x32xf32>
    %28 = vector.broadcast %6 : vector<1x32xf32> to vector<32x32xf32>
    %29 = arith.mulf %27, %28 : vector<32x32xf32>
    %30 = vector.broadcast %7 : vector<1x32xf32> to vector<32x32xf32>
    %31 = arith.addf %29, %30 : vector<32x32xf32>
    %c0_16 = arith.constant 0 : index
    %c0_17 = arith.constant 0 : index
    %32 = vector.load %arg8[%c0_16, %c0_17] : memref<32x32xf32, #tpu.memory_space<vmem>>, vector<32x32xf32>
    tpu.vector_store %arg8[%c0_16, %c0_17], %31 {strides = array<i32>} : memref<32x32xf32, #tpu.memory_space<vmem>>, vector<32x32xf32>,
    return
  }
  func.func @transform_0(%arg0: i32, %arg1: i32) -> (i32, i32) {
    %c0_i32 = arith.constant 0 : i32
    %c0_i32_0 = arith.constant 0 : i32
    return %arg0, %c0_i32 : i32, i32
  }
  func.func @transform_1(%arg0: i32, %arg1: i32) -> (i32, i32) {
    %c0_i32 = arith.constant 0 : i32
    %c0_i32_0 = arith.constant 0 : i32
    return %c0_i32, %arg1 : i32, i32
  }
  func.func @transform_2(%arg0: i32, %arg1: i32) -> (i32, i32) {
    %c0_i32 = arith.constant 0 : i32
    %c0_i32_0 = arith.constant 0 : i32
    return %c0_i32, %arg1 : i32, i32
  }
  func.func @transform_3(%arg0: i32, %arg1: i32) -> (i32, i32) {
    %c0_i32 = arith.constant 0 : i32
    %c0_i32_0 = arith.constant 0 : i32
    return %c0_i32, %arg1 : i32, i32
  }
  func.func @transform_4(%arg0: i32, %arg1: i32) -> (i32, i32) {
    %c0_i32 = arith.constant 0 : i32
    %c0_i32_0 = arith.constant 0 : i32
    return %c0_i32, %arg1 : i32, i32
  }
  func.func @transform_5(%arg0: i32, %arg1: i32) -> (i32, i32) {
    %c0_i32 = arith.constant 0 : i32
    return %arg0, %arg1 : i32, i32
  }
  func.func @transform_6(%arg0: i32, %arg1: i32) -> (i32, i32) {
    %c0_i32 = arith.constant 0 : i32
    return %arg0, %arg1 : i32, i32
  }
}

module attributes {stable_mosaic.version = 11 : i64} {
  func.func @kernel(%arg0: i32, %arg1: i32, %arg2: memref<32x64xbf16, #tpu.memory_space<vmem>>, %arg3: memref<64x32xbf16, #tpu.memory_space<vmem>>, %arg4: memref<1x32xf32, #tpu.memory_space<vmem>>, %arg5: memref<1x32xf32, #tpu.memory_space<vmem>>, %arg6: memref<1x32xf32, #tpu.memory_space<vmem>>, %arg7: memref<32x32xf32, #tpu.memory_space<vmem>>, %arg8: memref<32x32xf32, #tpu.memory_space<vmem>>) attributes {dimension_semantics = [#tpu.dimension_semantics<parallel>, #tpu.dimension_semantics<parallel>], iteration_bounds = array<i64: 1, 1>, scalar_prefetch = 0 : i64, scratch_operands = 0 : i64, tpu.core_type = #tpu.core_type<tc>, window_params = [{transform_indices = @transform_0, window_bounds = array<i64: 32, 64>}, {transform_indices = @transform_1, window_bounds = array<i64: 64, 32>}, {transform_indices = @transform_2, window_bounds = array<i64: 1, 32>}, {transform_indices = @transform_3, window_bounds = array<i64: 1, 32>}, {transform_indices = @transform_4, window_bounds = array<i64: 1, 32>}, {transform_indices = @transform_5, window_bounds = array<i64: 32, 32>}, {transform_indices = @transform_6, window_bounds = array<i64: 32, 32>}]} {
    %c0 = arith.constant 0 : index
    %c0_0 = arith.constant 0 : index
    %0 = vector.load %arg2[%c0, %c0_0] : memref<32x64xbf16, #tpu.memory_space<vmem>>, vector<32x64xbf16>
    %c0_1 = arith.constant 0 : index
    %c0_2 = arith.constant 0 : index
    %1 = vector.load %arg3[%c0_1, %c0_2] : memref<64x32xbf16, #tpu.memory_space<vmem>>, vector<64x32xbf16>
    %cst = arith.constant dense<0.000000e+00> : vector<32x32xf32>
    %2 = tpu.matmul %0, %1, %cst {dimension_numbers = #tpu.dot_dimension_numbers<[1], [0], [0], [1], [0, 0, 1, 1], [], []>} : vector<32x64xbf16>, vector<64x32xbf16>, vector<32x32xf32> -> vector<32x32xf32>
    %c0_3 = arith.constant 0 : index
    %c0_4 = arith.constant 0 : index
    %3 = vector.load %arg4[%c0_3, %c0_4] : memref<1x32xf32, #tpu.memory_space<vmem>>, vector<1x32xf32>
    %4 = vector.broadcast %3 : vector<1x32xf32> to vector<32x32xf32>
    %5 = arith.addf %2, %4 : vector<32x32xf32>
    %c0_5 = arith.constant 0 : index
    %c0_6 = arith.constant 0 : index
    %6 = vector.load %arg5[%c0_5, %c0_6] : memref<1x32xf32, #tpu.memory_space<vmem>>, vector<1x32xf32>
    %c0_7 = arith.constant 0 : index
    %c0_8 = arith.constant 0 : index
    %7 = vector.load %arg6[%c0_7, %c0_8] : memref<1x32xf32, #tpu.memory_space<vmem>>, vector<1x32xf32>
    %c0_9 = arith.constant 0 : index
    %c0_10 = arith.constant 0 : index
    %8 = vector.load %arg7[%c0_9, %c0_10] : memref<32x32xf32, #tpu.memory_space<vmem>>, vector<32x32xf32>
    %9 = arith.addf %5, %8 : vector<32x32xf32>
    %cst_11 = arith.constant dense<0.000000e+00> : vector<32xf32>
    %10 = vector.multi_reduction <add>, %9, %cst_11 [1] : vector<32x32xf32> to vector<32xf32>
    %11 = vector.shape_cast %10 : vector<32xf32> to vector<32x1xf32>
    %cst_12 = arith.constant 3.200000e+01 : f32
    %12 = vector.broadcast %cst_12 : f32 to vector<32x1xf32>
    %13 = arith.divf %11, %12 : vector<32x1xf32>
    %14 = vector.broadcast %13 : vector<32x1xf32> to vector<32x32xf32>
    %15 = arith.subf %9, %14 : vector<32x32xf32>
    %16 = arith.mulf %15, %15 : vector<32x32xf32>
    %cst_13 = arith.constant dense<0.000000e+00> : vector<32xf32>
    %17 = vector.multi_reduction <add>, %16, %cst_13 [1] : vector<32x32xf32> to vector<32xf32>
    %18 = vector.shape_cast %17 : vector<32xf32> to vector<32x1xf32>
    %cst_14 = arith.constant 3.200000e+01 : f32
    %19 = vector.broadcast %cst_14 : f32 to vector<32x1xf32>
    %20 = arith.divf %18, %19 : vector<32x1xf32>
    %21 = vector.broadcast %13 : vector<32x1xf32> to vector<32x32xf32>
    %22 = arith.subf %9, %21 : vector<32x32xf32>
    %cst_15 = arith.constant 9.99999974E-6 : f32
    %23 = vector.broadcast %cst_15 : f32 to vector<32x1xf32>
    %24 = arith.addf %20, %23 : vector<32x1xf32>
    %25 = math.rsqrt %24 : vector<32x1xf32>
    %26 = vector.broadcast %25 : vector<32x1xf32> to vector<32x32xf32>
    %27 = arith.mulf %22, %26 : vector<32x32xf32>
    %28 = vector.broadcast %6 : vector<1x32xf32> to vector<32x32xf32>
    %29 = arith.mulf %27, %28 : vector<32x32xf32>
    %30 = vector.broadcast %7 : vector<1x32xf32> to vector<32x32xf32>
    %31 = arith.addf %29, %30 : vector<32x32xf32>
    %c0_16 = arith.constant 0 : index
    %c0_17 = arith.constant 0 : index
    %32 = vector.load %arg8[%c0_16, %c0_17] : memref<32x32xf32, #tpu.memory_space<vmem>>, vector<32x32xf32>
    tpu.vector_store %arg8[%c0_16, %c0_17], %31 {strides = array<i32>} : memref<32x32xf32, #tpu.memory_space<vmem>>, vector<32x32xf32>,
    return
  }
  func.func @transform_0(%arg0: i32, %arg1: i32) -> (i32, i32) {
    %c0_i32 = arith.constant 0 : i32
    %c0_i32_0 = arith.constant 0 : i32
    return %arg0, %c0_i32 : i32, i32
  }
  func.func @transform_1(%arg0: i32, %arg1: i32) -> (i32, i32) {
    %c0_i32 = arith.constant 0 : i32
    %c0_i32_0 = arith.constant 0 : i32
    return %c0_i32, %arg1 : i32, i32
  }
  func.func @transform_2(%arg0: i32, %arg1: i32) -> (i32, i32) {
    %c0_i32 = arith.constant 0 : i32
    %c0_i32_0 = arith.constant 0 : i32
    return %c0_i32, %arg1 : i32, i32
  }
  func.func @transform_3(%arg0: i32, %arg1: i32) -> (i32, i32) {
    %c0_i32 = arith.constant 0 : i32
    %c0_i32_0 = arith.constant 0 : i32
    return %c0_i32, %arg1 : i32, i32
  }
  func.func @transform_4(%arg0: i32, %arg1: i32) -> (i32, i32) {
    %c0_i32 = arith.constant 0 : i32
    %c0_i32_0 = arith.constant 0 : i32
    return %c0_i32, %arg1 : i32, i32
  }
  func.func @transform_5(%arg0: i32, %arg1: i32) -> (i32, i32) {
    %c0_i32 = arith.constant 0 : i32
    return %arg0, %arg1 : i32, i32
  }
  func.func @transform_6(%arg0: i32, %arg1: i32) -> (i32, i32) {
    %c0_i32 = arith.constant 0 : i32
    return %arg0, %arg1 : i32, i32
  }
}

module attributes {stable_mosaic.version = 11 : i64} {
  func.func @kernel(%arg0: i32, %arg1: i32, %arg2: memref<32x32xf32, #tpu.memory_space<vmem>>, %arg3: memref<32x64xbf16, #tpu.memory_space<vmem>>, %arg4: memref<1x64xf32, #tpu.memory_space<vmem>>, %arg5: memref<32x64xbf16, #tpu.memory_space<vmem>>) attributes {dimension_semantics = [#tpu.dimension_semantics<parallel>, #tpu.dimension_semantics<parallel>], iteration_bounds = array<i64: 1, 1>, scalar_prefetch = 0 : i64, scratch_operands = 0 : i64, tpu.core_type = #tpu.core_type<tc>, window_params = [{transform_indices = @transform_0, window_bounds = array<i64: 32, 32>}, {transform_indices = @transform_1, window_bounds = array<i64: 32, 64>}, {transform_indices = @transform_2, window_bounds = array<i64: 1, 64>}, {transform_indices = @transform_3, window_bounds = array<i64: 32, 64>}]} {
    %c0 = arith.constant 0 : index
    %c0_0 = arith.constant 0 : index
    %0 = vector.load %arg2[%c0, %c0_0] : memref<32x32xf32, #tpu.memory_space<vmem>>, vector<32x32xf32>
    %1 = arith.truncf %0 : vector<32x32xf32> to vector<32x32xbf16>
    %c0_1 = arith.constant 0 : index
    %c0_2 = arith.constant 0 : index
    %2 = vector.load %arg3[%c0_1, %c0_2] : memref<32x64xbf16, #tpu.memory_space<vmem>>, vector<32x64xbf16>
    %cst = arith.constant dense<0.000000e+00> : vector<32x64xf32>
    %3 = tpu.matmul %1, %2, %cst {dimension_numbers = #tpu.dot_dimension_numbers<[1], [0], [0], [1], [0, 0, 1, 1], [], []>} : vector<32x32xbf16>, vector<32x64xbf16>, vector<32x64xf32> -> vector<32x64xf32>
    %c0_3 = arith.constant 0 : index
    %c0_4 = arith.constant 0 : index
    %4 = vector.load %arg4[%c0_3, %c0_4] : memref<1x64xf32, #tpu.memory_space<vmem>>, vector<1x64xf32>
    %5 = vector.broadcast %4 : vector<1x64xf32> to vector<32x64xf32>
    %6 = arith.addf %3, %5 : vector<32x64xf32>
    %cst_5 = arith.constant 0.000000e+00 : f32
    %7 = vector.broadcast %cst_5 : f32 to vector<32x64xf32>
    %8 = arith.maximumf %6, %7 : vector<32x64xf32>
    %9 = arith.truncf %8 : vector<32x64xf32> to vector<32x64xbf16>
    %c0_6 = arith.constant 0 : index
    %c0_7 = arith.constant 0 : index
    %10 = vector.load %arg5[%c0_6, %c0_7] : memref<32x64xbf16, #tpu.memory_space<vmem>>, vector<32x64xbf16>
    tpu.vector_store %arg5[%c0_6, %c0_7], %9 {strides = array<i32>} : memref<32x64xbf16, #tpu.memory_space<vmem>>, vector<32x64xbf16>,
    return
  }
  func.func @transform_0(%arg0: i32, %arg1: i32) -> (i32, i32) {
    %c0_i32 = arith.constant 0 : i32
    %c0_i32_0 = arith.constant 0 : i32
    return %arg0, %c0_i32 : i32, i32
  }
  func.func @transform_1(%arg0: i32, %arg1: i32) -> (i32, i32) {
    %c0_i32 = arith.constant 0 : i32
    %c0_i32_0 = arith.constant 0 : i32
    return %c0_i32, %arg1 : i32, i32
  }
  func.func @transform_2(%arg0: i32, %arg1: i32) -> (i32, i32) {
    %c0_i32 = arith.constant 0 : i32
    %c0_i32_0 = arith.constant 0 : i32
    return %c0_i32, %arg1 : i32, i32
  }
  func.func @transform_3(%arg0: i32, %arg1: i32) -> (i32, i32) {
    %c0_i32 = arith.constant 0 : i32
    return %arg0, %arg1 : i32, i32
  }
}

module attributes {stable_mosaic.version = 11 : i64} {
  func.func @kernel(%arg0: i32, %arg1: i32, %arg2: memref<32x64xbf16, #tpu.memory_space<vmem>>, %arg3: memref<64x32xbf16, #tpu.memory_space<vmem>>, %arg4: memref<1x32xf32, #tpu.memory_space<vmem>>, %arg5: memref<1x32xf32, #tpu.memory_space<vmem>>, %arg6: memref<1x32xf32, #tpu.memory_space<vmem>>, %arg7: memref<32x32xf32, #tpu.memory_space<vmem>>, %arg8: memref<32x32xf32, #tpu.memory_space<vmem>>) attributes {dimension_semantics = [#tpu.dimension_semantics<parallel>, #tpu.dimension_semantics<parallel>], iteration_bounds = array<i64: 1, 1>, scalar_prefetch = 0 : i64, scratch_operands = 0 : i64, tpu.core_type = #tpu.core_type<tc>, window_params = [{transform_indices = @transform_0, window_bounds = array<i64: 32, 64>}, {transform_indices = @transform_1, window_bounds = array<i64: 64, 32>}, {transform_indices = @transform_2, window_bounds = array<i64: 1, 32>}, {transform_indices = @transform_3, window_bounds = array<i64: 1, 32>}, {transform_indices = @transform_4, window_bounds = array<i64: 1, 32>}, {transform_indices = @transform_5, window_bounds = array<i64: 32, 32>}, {transform_indices = @transform_6, window_bounds = array<i64: 32, 32>}]} {
    %c0 = arith.constant 0 : index
    %c0_0 = arith.constant 0 : index
    %0 = vector.load %arg2[%c0, %c0_0] : memref<32x64xbf16, #tpu.memory_space<vmem>>, vector<32x64xbf16>
    %c0_1 = arith.constant 0 : index
    %c0_2 = arith.constant 0 : index
    %1 = vector.load %arg3[%c0_1, %c0_2] : memref<64x32xbf16, #tpu.memory_space<vmem>>, vector<64x32xbf16>
    %cst = arith.constant dense<0.000000e+00> : vector<32x32xf32>
    %2 = tpu.matmul %0, %1, %cst {dimension_numbers = #tpu.dot_dimension_numbers<[1], [0], [0], [1], [0, 0, 1, 1], [], []>} : vector<32x64xbf16>, vector<64x32xbf16>, vector<32x32xf32> -> vector<32x32xf32>
    %c0_3 = arith.constant 0 : index
    %c0_4 = arith.constant 0 : index
    %3 = vector.load %arg4[%c0_3, %c0_4] : memref<1x32xf32, #tpu.memory_space<vmem>>, vector<1x32xf32>
    %4 = vector.broadcast %3 : vector<1x32xf32> to vector<32x32xf32>
    %5 = arith.addf %2, %4 : vector<32x32xf32>
    %c0_5 = arith.constant 0 : index
    %c0_6 = arith.constant 0 : index
    %6 = vector.load %arg5[%c0_5, %c0_6] : memref<1x32xf32, #tpu.memory_space<vmem>>, vector<1x32xf32>
    %c0_7 = arith.constant 0 : index
    %c0_8 = arith.constant 0 : index
    %7 = vector.load %arg6[%c0_7, %c0_8] : memref<1x32xf32, #tpu.memory_space<vmem>>, vector<1x32xf32>
    %c0_9 = arith.constant 0 : index
    %c0_10 = arith.constant 0 : index
    %8 = vector.load %arg7[%c0_9, %c0_10] : memref<32x32xf32, #tpu.memory_space<vmem>>, vector<32x32xf32>
    %9 = arith.addf %5, %8 : vector<32x32xf32>
    %cst_11 = arith.constant dense<0.000000e+00> : vector<32xf32>
    %10 = vector.multi_reduction <add>, %9, %cst_11 [1] : vector<32x32xf32> to vector<32xf32>
    %11 = vector.shape_cast %10 : vector<32xf32> to vector<32x1xf32>
    %cst_12 = arith.constant 3.200000e+01 : f32
    %12 = vector.broadcast %cst_12 : f32 to vector<32x1xf32>
    %13 = arith.divf %11, %12 : vector<32x1xf32>
    %14 = vector.broadcast %13 : vector<32x1xf32> to vector<32x32xf32>
    %15 = arith.subf %9, %14 : vector<32x32xf32>
    %16 = arith.mulf %15, %15 : vector<32x32xf32>
    %cst_13 = arith.constant dense<0.000000e+00> : vector<32xf32>
    %17 = vector.multi_reduction <add>, %16, %cst_13 [1] : vector<32x32xf32> to vector<32xf32>
    %18 = vector.shape_cast %17 : vector<32xf32> to vector<32x1xf32>
    %cst_14 = arith.constant 3.200000e+01 : f32
    %19 = vector.broadcast %cst_14 : f32 to vector<32x1xf32>
    %20 = arith.divf %18, %19 : vector<32x1xf32>
    %21 = vector.broadcast %13 : vector<32x1xf32> to vector<32x32xf32>
    %22 = arith.subf %9, %21 : vector<32x32xf32>
    %cst_15 = arith.constant 9.99999974E-6 : f32
    %23 = vector.broadcast %cst_15 : f32 to vector<32x1xf32>
    %24 = arith.addf %20, %23 : vector<32x1xf32>
    %25 = math.rsqrt %24 : vector<32x1xf32>
    %26 = vector.broadcast %25 : vector<32x1xf32> to vector<32x32xf32>
    %27 = arith.mulf %22, %26 : vector<32x32xf32>
    %28 = vector.broadcast %6 : vector<1x32xf32> to vector<32x32xf32>
    %29 = arith.mulf %27, %28 : vector<32x32xf32>
    %30 = vector.broadcast %7 : vector<1x32xf32> to vector<32x32xf32>
    %31 = arith.addf %29, %30 : vector<32x32xf32>
    %c0_16 = arith.constant 0 : index
    %c0_17 = arith.constant 0 : index
    %32 = vector.load %arg8[%c0_16, %c0_17] : memref<32x32xf32, #tpu.memory_space<vmem>>, vector<32x32xf32>
    tpu.vector_store %arg8[%c0_16, %c0_17], %31 {strides = array<i32>} : memref<32x32xf32, #tpu.memory_space<vmem>>, vector<32x32xf32>,
    return
  }
  func.func @transform_0(%arg0: i32, %arg1: i32) -> (i32, i32) {
    %c0_i32 = arith.constant 0 : i32
    %c0_i32_0 = arith.constant 0 : i32
    return %arg0, %c0_i32 : i32, i32
  }
  func.func @transform_1(%arg0: i32, %arg1: i32) -> (i32, i32) {
    %c0_i32 = arith.constant 0 : i32
    %c0_i32_0 = arith.constant 0 : i32
    return %c0_i32, %arg1 : i32, i32
  }
  func.func @transform_2(%arg0: i32, %arg1: i32) -> (i32, i32) {
    %c0_i32 = arith.constant 0 : i32
    %c0_i32_0 = arith.constant 0 : i32
    return %c0_i32, %arg1 : i32, i32
  }
  func.func @transform_3(%arg0: i32, %arg1: i32) -> (i32, i32) {
    %c0_i32 = arith.constant 0 : i32
    %c0_i32_0 = arith.constant 0 : i32
    return %c0_i32, %arg1 : i32, i32
  }
  func.func @transform_4(%arg0: i32, %arg1: i32) -> (i32, i32) {
    %c0_i32 = arith.constant 0 : i32
    %c0_i32_0 = arith.constant 0 : i32
    return %c0_i32, %arg1 : i32, i32
  }
  func.func @transform_5(%arg0: i32, %arg1: i32) -> (i32, i32) {
    %c0_i32 = arith.constant 0 : i32
    return %arg0, %arg1 : i32, i32
  }
  func.func @transform_6(%arg0: i32, %arg1: i32) -> (i32, i32) {
    %c0_i32 = arith.constant 0 : i32
    return %arg0, %arg1 : i32, i32
  }
}

</mosaic_0001>

<llo_original>
// kernel: _lambda_.32
$region0: #{_lambda_.32}
  #allocation0 [shape = 'u32[]', space=smem, size = 0x4, offset = 0x4, fixed_abs, tag = 'smem constant byte address 0x4 - core index']
  #allocation1 [shape = 'u32[72,128]{1,0:T(1,128)}', space=vmem, size = 0x9000, scoped, tag = 'internal scratch']
  %s0 = inlined_call_operand.vmem [shape: bf16[128,8], index: 0, kind: input, shape index: {}]
  %s1 = inlined_call_operand.vmem [shape: bf16[8,8], index: 1, kind: input, shape index: {}]
  %s2 = inlined_call_operand.vmem [shape: f32[1,8], index: 2, kind: input, shape index: {}]
  %s3 = inlined_call_operand.vmem [shape: f32[1,8], index: 3, kind: input, shape index: {}]
  %s4 = inlined_call_operand.vmem [shape: bf16[128,8], index: 4, kind: output, shape index: {}]
  %s5 = sld [smem:[#allocation0]]
  $region26: #{_lambda_.32} parent=0
    _
  %s7 = ssub.s32 1, %s5
  %s8 = scalar_select 0, %s7, %s5
  // Predicated region
  $region2: #{_lambda_.32} parent=0 // pred_check
    _
  $region3: #{_lambda_.32} parent=0 // pred_check_branch
    %10 = sbr.rel (0) target = $region5
  $region4: #{_lambda_.32} parent=0 // pred_region
    _
  $region5: #{_lambda_.32} parent=0 // pred_fallthru
    _
  // Predicated region
  $region6: #{_lambda_.32} parent=0 // pred_check
    _
  $region7: #{_lambda_.32} parent=0 // pred_check_branch
    %12 = sbr.rel (0) target = $region9
  $region8: #{_lambda_.32} parent=0 // pred_region
    _
  $region9: #{_lambda_.32} parent=0 // pred_fallthru
    _
  // Predicated region
  $region10: #{_lambda_.32} parent=0 // pred_check
    _
  $region11: #{_lambda_.32} parent=0 // pred_check_branch
    %14 = sbr.rel (0) target = $region13
  $region12: #{_lambda_.32} parent=0 // pred_region
    _
  $region13: #{_lambda_.32} parent=0 // pred_fallthru
    _
  // Predicated region
  $region14: #{_lambda_.32} parent=0 // pred_check
    _
  $region15: #{_lambda_.32} parent=0 // pred_check_branch
    %16 = sbr.rel (0) target = $region17
  $region16: #{_lambda_.32} parent=0 // pred_region
    _
  $region17: #{_lambda_.32} parent=0 // pred_fallthru
    _
  %v18 = vld [vmem:[%s0] sm:$0xf]
  %v19 = vld [vmem:[%s0 + $0x4] sm:$0xf]
  %v20 = vld [vmem:[%s0 + $0x8] sm:$0xf]
  %v21 = vld [vmem:[%s0 + $0xc] sm:$0xf]
  %v22 = vld [vmem:[%s0 + $0x10] sm:$0xf]
  %v23 = vld [vmem:[%s0 + $0x14] sm:$0xf]
  %v24 = vld [vmem:[%s0 + $0x18] sm:$0xf]
  %v25 = vld [vmem:[%s0 + $0x1c] sm:$0xf]
  %v26 = vld [vmem:[%s0 + $0x20] sm:$0xf]
  %v27 = vld [vmem:[%s0 + $0x24] sm:$0xf]
  %v28 = vld [vmem:[%s0 + $0x28] sm:$0xf]
  %v29 = vld [vmem:[%s0 + $0x2c] sm:$0xf]
  %v30 = vld [vmem:[%s0 + $0x30] sm:$0xf]
  %v31 = vld [vmem:[%s0 + $0x34] sm:$0xf]
  %v32 = vld [vmem:[%s0 + $0x38] sm:$0xf]
  %v33 = vld [vmem:[%s0 + $0x3c] sm:$0xf]
  %v34 = vld [vmem:[%s1] sm:$0xf]
  %v51 = vunpack.c.l.b16 %v18
  %v52 = vunpack.c.l.b16 %v19
  %v53 = vunpack.c.l.b16 %v20
  %v54 = vunpack.c.l.b16 %v21
  %v55 = vunpack.c.l.b16 %v22
  %v56 = vunpack.c.l.b16 %v23
  %v57 = vunpack.c.l.b16 %v24
  %v58 = vunpack.c.l.b16 %v25
  %v59 = vunpack.c.l.b16 %v26
  %v60 = vunpack.c.l.b16 %v27
  %v61 = vunpack.c.l.b16 %v28
  %v62 = vunpack.c.l.b16 %v29
  %v63 = vunpack.c.l.b16 %v30
  %v64 = vunpack.c.l.b16 %v31
  %v65 = vunpack.c.l.b16 %v32
  %v66 = vunpack.c.l.b16 %v33
  %v67 = vpack.c.b16 %v52, %v51
  %v68 = vpack.c.b16 %v54, %v53
  %v69 = vpack.c.b16 %v56, %v55
  %v70 = vpack.c.b16 %v58, %v57
  %v71 = vpack.c.b16 %v60, %v59
  %v72 = vpack.c.b16 %v62, %v61
  %v73 = vpack.c.b16 %v64, %v63
  %v74 = vpack.c.b16 %v66, %v65
  %vm75 = vcmask 64512
  %v77 = vsel %vm75, %v67, 0
  %v80 = vsel %vm75, %v68, 0
  %v83 = vsel %vm75, %v69, 0
  %v86 = vsel %vm75, %v70, 0
  %v89 = vsel %vm75, %v71, 0
  %v92 = vsel %vm75, %v72, 0
  %v95 = vsel %vm75, %v73, 0
  %v98 = vsel %vm75, %v74, 0
  %vm100 = vcmask 1043456
  %v102 = vsel %vm100, %v34, 0
  %104 = vmatpush.bf16.msra.mxu0 0
  %105 = vmatpush.bf16.msra.mxu0 0
  %106 = vmatpush.bf16.msra.mxu0 0
  %107 = vmatpush.bf16.msra.mxu0 0
  %108 = vmatpush.bf16.msra.mxu0 0
  %109 = vmatpush.bf16.msra.mxu0 0
  %110 = vmatpush.bf16.msra.mxu0 0
  %111 = vmatpush.bf16.msra.mxu0 %v102
  %112 = vmatmul.bf16.gmra.mxu0 %v77
  %v113 = vpop.f32.mrf.mxu0
  %v114 = vadd.f32 0.0, %v113
  %v115 = vpop.f32.mrf.mxu0
  %v116 = vadd.f32 0.0, %v115
  %117 = vmatmul.bf16.gmra.mxu0 %v80
  %v118 = vpop.f32.mrf.mxu0
  %v119 = vadd.f32 0.0, %v118
  %v120 = vpop.f32.mrf.mxu0
  %v121 = vadd.f32 0.0, %v120
  %122 = vmatmul.bf16.gmra.mxu0 %v83
  %v123 = vpop.f32.mrf.mxu0
  %v124 = vadd.f32 0.0, %v123
  %v125 = vpop.f32.mrf.mxu0
  %v126 = vadd.f32 0.0, %v125
  %127 = vmatmul.bf16.gmra.mxu0 %v86
  %v128 = vpop.f32.mrf.mxu0
  %v129 = vadd.f32 0.0, %v128
  %v130 = vpop.f32.mrf.mxu0
  %v131 = vadd.f32 0.0, %v130
  %132 = vmatmul.bf16.gmra.mxu0 %v89
  %v133 = vpop.f32.mrf.mxu0
  %v134 = vadd.f32 0.0, %v133
  %v135 = vpop.f32.mrf.mxu0
  %v136 = vadd.f32 0.0, %v135
  %137 = vmatmul.bf16.gmra.mxu0 %v92
  %v138 = vpop.f32.mrf.mxu0
  %v139 = vadd.f32 0.0, %v138
  %v140 = vpop.f32.mrf.mxu0
  %v141 = vadd.f32 0.0, %v140
  %142 = vmatmul.bf16.gmra.mxu0 %v95
  %v143 = vpop.f32.mrf.mxu0
  %v144 = vadd.f32 0.0, %v143
  %v145 = vpop.f32.mrf.mxu0
  %v146 = vadd.f32 0.0, %v145
  %147 = vmatmul.bf16.gmra.mxu0 %v98
  %v148 = vpop.f32.mrf.mxu0
  %v149 = vadd.f32 0.0, %v148
  %v150 = vpop.f32.mrf.mxu0
  %v151 = vadd.f32 0.0, %v150
  %152 = vdwg.mxu0
  %v153 = vld [vmem:[%s2] sm:$0x1]
  %v155 = vperm.slane %v153, 0
  %v157 = vmul.f32 %v114, %v155
  %v158 = vmul.f32 %v116, %v155
  %v159 = vmul.f32 %v119, %v155
  %v160 = vmul.f32 %v121, %v155
  %v161 = vmul.f32 %v124, %v155
  %v162 = vmul.f32 %v126, %v155
  %v163 = vmul.f32 %v129, %v155
  %v164 = vmul.f32 %v131, %v155
  %v165 = vmul.f32 %v134, %v155
  %v166 = vmul.f32 %v136, %v155
  %v167 = vmul.f32 %v139, %v155
  %v168 = vmul.f32 %v141, %v155
  %v169 = vmul.f32 %v144, %v155
  %v170 = vmul.f32 %v146, %v155
  %v171 = vmul.f32 %v149, %v155
  %v172 = vmul.f32 %v151, %v155
  %v173 = vld [vmem:[%s3] sm:$0x1]
  %v175 = vperm.slane %v173, 0
  %v177 = vadd.f32 %v157, %v175
  %v178 = vadd.f32 %v158, %v175
  %v179 = vadd.f32 %v159, %v175
  %v180 = vadd.f32 %v160, %v175
  %v181 = vadd.f32 %v161, %v175
  %v182 = vadd.f32 %v162, %v175
  %v183 = vadd.f32 %v163, %v175
  %v184 = vadd.f32 %v164, %v175
  %v185 = vadd.f32 %v165, %v175
  %v186 = vadd.f32 %v166, %v175
  %v187 = vadd.f32 %v167, %v175
  %v188 = vadd.f32 %v168, %v175
  %v189 = vadd.f32 %v169, %v175
  %v190 = vadd.f32 %v170, %v175
  %v191 = vadd.f32 %v171, %v175
  %v192 = vadd.f32 %v172, %v175
  %v193 = vpack.c.bf16 %v177, %v177
  %v194 = vpack.c.bf16 %v178, %v178
  %v195 = vpack.c.bf16 %v179, %v179
  %v196 = vpack.c.bf16 %v180, %v180
  %v197 = vpack.c.bf16 %v181, %v181
  %v198 = vpack.c.bf16 %v182, %v182
  %v199 = vpack.c.bf16 %v183, %v183
  %v200 = vpack.c.bf16 %v184, %v184
  %v201 = vpack.c.bf16 %v185, %v185
  %v202 = vpack.c.bf16 %v186, %v186
  %v203 = vpack.c.bf16 %v187, %v187
  %v204 = vpack.c.bf16 %v188, %v188
  %v205 = vpack.c.bf16 %v189, %v189
  %v206 = vpack.c.bf16 %v190, %v190
  %v207 = vpack.c.bf16 %v191, %v191
  %v208 = vpack.c.bf16 %v192, %v192
  %vm209 = vcmask 60416
  %210 = vst.msk [vmem:[%s4] sm:$0xf] %vm209, %v193
  %211 = vst.msk [vmem:[%s4 + $0x4] sm:$0xf] %vm209, %v194
  %212 = vst.msk [vmem:[%s4 + $0x8] sm:$0xf] %vm209, %v195
  %213 = vst.msk [vmem:[%s4 + $0xc] sm:$0xf] %vm209, %v196
  %214 = vst.msk [vmem:[%s4 + $0x10] sm:$0xf] %vm209, %v197
  %215 = vst.msk [vmem:[%s4 + $0x14] sm:$0xf] %vm209, %v198
  %216 = vst.msk [vmem:[%s4 + $0x18] sm:$0xf] %vm209, %v199
  %217 = vst.msk [vmem:[%s4 + $0x1c] sm:$0xf] %vm209, %v200
  %218 = vst.msk [vmem:[%s4 + $0x20] sm:$0xf] %vm209, %v201
  %219 = vst.msk [vmem:[%s4 + $0x24] sm:$0xf] %vm209, %v202
  %220 = vst.msk [vmem:[%s4 + $0x28] sm:$0xf] %vm209, %v203
  %221 = vst.msk [vmem:[%s4 + $0x2c] sm:$0xf] %vm209, %v204
  %222 = vst.msk [vmem:[%s4 + $0x30] sm:$0xf] %vm209, %v205
  %223 = vst.msk [vmem:[%s4 + $0x34] sm:$0xf] %vm209, %v206
  %224 = vst.msk [vmem:[%s4 + $0x38] sm:$0xf] %vm209, %v207
  %225 = vst.msk [vmem:[%s4 + $0x3c] sm:$0xf] %vm209, %v208
  // Predicated region
  $region18: #{_lambda_.32} parent=0 // pred_check
    _
  $region19: #{_lambda_.32} parent=0 // pred_check_branch
    %227 = sbr.rel (0) target = $region21
  $region20: #{_lambda_.32} parent=0 // pred_region
    _
  $region21: #{_lambda_.32} parent=0 // pred_fallthru
    _
  // Predicated region
  $region22: #{_lambda_.32} parent=0 // pred_check
    _
  $region23: #{_lambda_.32} parent=0 // pred_check_branch
    %229 = sbr.rel (0) target = $region25
  $region24: #{_lambda_.32} parent=0 // pred_region
    _
  $region25: #{_lambda_.32} parent=0 // pred_fallthru
    _

// kernel: _lambda_.30
$region0: #{_lambda_.30}
  #allocation0 [shape = 'u32[]', space=smem, size = 0x4, offset = 0x4, fixed_abs, tag = 'smem constant byte address 0x4 - core index']
  #allocation1 [shape = 'u32[72,128]{1,0:T(1,128)}', space=vmem, size = 0x9000, scoped, tag = 'internal scratch']
  %s0 = inlined_call_operand.vmem [shape: bf16[512,27], index: 0, kind: input, shape index: {}]
  %s1 = inlined_call_operand.vmem [shape: bf16[27,8], index: 1, kind: input, shape index: {}]
  %s2 = inlined_call_operand.vmem [shape: f32[1,8], index: 2, kind: input, shape index: {}]
  %s3 = inlined_call_operand.vmem [shape: f32[1,8], index: 3, kind: input, shape index: {}]
  %s4 = inlined_call_operand.vmem [shape: bf16[512,8], index: 4, kind: output, shape index: {}]
  %s5 = sld [smem:[#allocation0]]
  $region26: #{_lambda_.30} parent=0
    _
  %s7 = ssub.s32 1, %s5
  %s8 = scalar_select 0, %s7, %s5
  // Predicated region
  $region2: #{_lambda_.30} parent=0 // pred_check
    _
  $region3: #{_lambda_.30} parent=0 // pred_check_branch
    %10 = sbr.rel (0) target = $region5
  $region4: #{_lambda_.30} parent=0 // pred_region
    _
  $region5: #{_lambda_.30} parent=0 // pred_fallthru
    _
  // Predicated region
  $region6: #{_lambda_.30} parent=0 // pred_check
    _
  $region7: #{_lambda_.30} parent=0 // pred_check_branch
    %12 = sbr.rel (0) target = $region9
  $region8: #{_lambda_.30} parent=0 // pred_region
    _
  $region9: #{_lambda_.30} parent=0 // pred_fallthru
    _
  // Predicated region
  $region10: #{_lambda_.30} parent=0 // pred_check
    _
  $region11: #{_lambda_.30} parent=0 // pred_check_branch
    %14 = sbr.rel (0) target = $region13
  $region12: #{_lambda_.30} parent=0 // pred_region
    _
  $region13: #{_lambda_.30} parent=0 // pred_fallthru
    _
  // Predicated region
  $region14: #{_lambda_.30} parent=0 // pred_check
    _
  $region15: #{_lambda_.30} parent=0 // pred_check_branch
    %16 = sbr.rel (0) target = $region17
  $region16: #{_lambda_.30} parent=0 // pred_region
    _
  $region17: #{_lambda_.30} parent=0 // pred_fallthru
    _
  %v18 = vld [vmem:[%s0] sm:$0xf]
  %v19 = vld [vmem:[%s0 + $0x4] sm:$0xf]
  %v20 = vld [vmem:[%s0 + $0x8] sm:$0xf]
  %v21 = vld [vmem:[%s0 + $0xc] sm:$0xf]
  %v22 = vld [vmem:[%s0 + $0x10] sm:$0xf]
  %v23 = vld [vmem:[%s0 + $0x14] sm:$0xf]
  %v24 = vld [vmem:[%s0 + $0x18] sm:$0xf]
  %v25 = vld [vmem:[%s0 + $0x1c] sm:$0xf]
  %v26 = vld [vmem:[%s0 + $0x20] sm:$0xf]
  %v27 = vld [vmem:[%s0 + $0x24] sm:$0xf]
  %v28 = vld [vmem:[%s0 + $0x28] sm:$0xf]
  %v29 = vld [vmem:[%s0 + $0x2c] sm:$0xf]
  %v30 = vld [vmem:[%s0 + $0x30] sm:$0xf]
  %v31 = vld [vmem:[%s0 + $0x34] sm:$0xf]
  %v32 = vld [vmem:[%s0 + $0x38] sm:$0xf]
  %v33 = vld [vmem:[%s0 + $0x3c] sm:$0xf]
  %v34 = vld [vmem:[%s0 + $0x40] sm:$0xf]
  %v35 = vld [vmem:[%s0 + $0x44] sm:$0xf]
  %v36 = vld [vmem:[%s0 + $0x48] sm:$0xf]
  %v37 = vld [vmem:[%s0 + $0x4c] sm:$0xf]
  %v38 = vld [vmem:[%s0 + $0x50] sm:$0xf]
  %v39 = vld [vmem:[%s0 + $0x54] sm:$0xf]
  %v40 = vld [vmem:[%s0 + $0x58] sm:$0xf]
  %v41 = vld [vmem:[%s0 + $0x5c] sm:$0xf]
  %v42 = vld [vmem:[%s0 + $0x60] sm:$0xf]
  %v43 = vld [vmem:[%s0 + $0x64] sm:$0xf]
  %v44 = vld [vmem:[%s0 + $0x68] sm:$0xf]
  %v45 = vld [vmem:[%s0 + $0x6c] sm:$0xf]
  %v46 = vld [vmem:[%s0 + $0x70] sm:$0xf]
  %v47 = vld [vmem:[%s0 + $0x74] sm:$0xf]
  %v48 = vld [vmem:[%s0 + $0x78] sm:$0xf]
  %v49 = vld [vmem:[%s0 + $0x7c] sm:$0xf]
  %v50 = vld [vmem:[%s0 + $0x80] sm:$0xf]
  %v51 = vld [vmem:[%s0 + $0x84] sm:$0xf]
  %v52 = vld [vmem:[%s0 + $0x88] sm:$0xf]
  %v53 = vld [vmem:[%s0 + $0x8c] sm:$0xf]
  %v54 = vld [vmem:[%s0 + $0x90] sm:$0xf]
  %v55 = vld [vmem:[%s0 + $0x94] sm:$0xf]
  %v56 = vld [vmem:[%s0 + $0x98] sm:$0xf]
  %v57 = vld [vmem:[%s0 + $0x9c] sm:$0xf]
  %v58 = vld [vmem:[%s0 + $0xa0] sm:$0xf]
  %v59 = vld [vmem:[%s0 + $0xa4] sm:$0xf]
  %v60 = vld [vmem:[%s0 + $0xa8] sm:$0xf]
  %v61 = vld [vmem:[%s0 + $0xac] sm:$0xf]
  %v62 = vld [vmem:[%s0 + $0xb0] sm:$0xf]
  %v63 = vld [vmem:[%s0 + $0xb4] sm:$0xf]
  %v64 = vld [vmem:[%s0 + $0xb8] sm:$0xf]
  %v65 = vld [vmem:[%s0 + $0xbc] sm:$0xf]
  %v66 = vld [vmem:[%s0 + $0xc0] sm:$0xf]
  %v67 = vld [vmem:[%s0 + $0xc4] sm:$0xf]
  %v68 = vld [vmem:[%s0 + $0xc8] sm:$0xf]
  %v69 = vld [vmem:[%s0 + $0xcc] sm:$0xf]
  %v70 = vld [vmem:[%s0 + $0xd0] sm:$0xf]
  %v71 = vld [vmem:[%s0 + $0xd4] sm:$0xf]
  %v72 = vld [vmem:[%s0 + $0xd8] sm:$0xf]
  %v73 = vld [vmem:[%s0 + $0xdc] sm:$0xf]
  %v74 = vld [vmem:[%s0 + $0xe0] sm:$0xf]
  %v75 = vld [vmem:[%s0 + $0xe4] sm:$0xf]
  %v76 = vld [vmem:[%s0 + $0xe8] sm:$0xf]
  %v77 = vld [vmem:[%s0 + $0xec] sm:$0xf]
  %v78 = vld [vmem:[%s0 + $0xf0] sm:$0xf]
  %v79 = vld [vmem:[%s0 + $0xf4] sm:$0xf]
  %v80 = vld [vmem:[%s0 + $0xf8] sm:$0xf]
  %v81 = vld [vmem:[%s0 + $0xfc] sm:$0xf]
  %v82 = vld [vmem:[%s1] sm:$0xf]
  %v83 = vld [vmem:[%s1 + $0x4] sm:$0xf]
  %v84 = vld [vmem:[%s1 + $0x8] sm:$0xf]
  %v85 = vld [vmem:[%s1 + $0xc] sm:$0x3]
  %v150 = vunpack.c.l.b16 %v18
  %v151 = vunpack.c.l.b16 %v19
  %v152 = vunpack.c.l.b16 %v20
  %v153 = vunpack.c.l.b16 %v21
  %v154 = vunpack.c.l.b16 %v22
  %v155 = vunpack.c.l.b16 %v23
  %v156 = vunpack.c.l.b16 %v24
  %v157 = vunpack.c.l.b16 %v25
  %v158 = vunpack.c.l.b16 %v26
  %v159 = vunpack.c.l.b16 %v27
  %v160 = vunpack.c.l.b16 %v28
  %v161 = vunpack.c.l.b16 %v29
  %v162 = vunpack.c.l.b16 %v30
  %v163 = vunpack.c.l.b16 %v31
  %v164 = vunpack.c.l.b16 %v32
  %v165 = vunpack.c.l.b16 %v33
  %v166 = vunpack.c.l.b16 %v34
  %v167 = vunpack.c.l.b16 %v35
  %v168 = vunpack.c.l.b16 %v36
  %v169 = vunpack.c.l.b16 %v37
  %v170 = vunpack.c.l.b16 %v38
  %v171 = vunpack.c.l.b16 %v39
  %v172 = vunpack.c.l.b16 %v40
  %v173 = vunpack.c.l.b16 %v41
  %v174 = vunpack.c.l.b16 %v42
  %v175 = vunpack.c.l.b16 %v43
  %v176 = vunpack.c.l.b16 %v44
  %v177 = vunpack.c.l.b16 %v45
  %v178 = vunpack.c.l.b16 %v46
  %v179 = vunpack.c.l.b16 %v47
  %v180 = vunpack.c.l.b16 %v48
  %v181 = vunpack.c.l.b16 %v49
  %v182 = vunpack.c.l.b16 %v50
  %v183 = vunpack.c.l.b16 %v51
  %v184 = vunpack.c.l.b16 %v52
  %v185 = vunpack.c.l.b16 %v53
  %v186 = vunpack.c.l.b16 %v54
  %v187 = vunpack.c.l.b16 %v55
  %v188 = vunpack.c.l.b16 %v56
  %v189 = vunpack.c.l.b16 %v57
  %v190 = vunpack.c.l.b16 %v58
  %v191 = vunpack.c.l.b16 %v59
  %v192 = vunpack.c.l.b16 %v60
  %v193 = vunpack.c.l.b16 %v61
  %v194 = vunpack.c.l.b16 %v62
  %v195 = vunpack.c.l.b16 %v63
  %v196 = vunpack.c.l.b16 %v64
  %v197 = vunpack.c.l.b16 %v65
  %v198 = vunpack.c.l.b16 %v66
  %v199 = vunpack.c.l.b16 %v67
  %v200 = vunpack.c.l.b16 %v68
  %v201 = vunpack.c.l.b16 %v69
  %v202 = vunpack.c.l.b16 %v70
  %v203 = vunpack.c.l.b16 %v71
  %v204 = vunpack.c.l.b16 %v72
  %v205 = vunpack.c.l.b16 %v73
  %v206 = vunpack.c.l.b16 %v74
  %v207 = vunpack.c.l.b16 %v75
  %v208 = vunpack.c.l.b16 %v76
  %v209 = vunpack.c.l.b16 %v77
  %v210 = vunpack.c.l.b16 %v78
  %v211 = vunpack.c.l.b16 %v79
  %v212 = vunpack.c.l.b16 %v80
  %v213 = vunpack.c.l.b16 %v81
  %v214 = vpack.c.b16 %v151, %v150
  %v215 = vpack.c.b16 %v153, %v152
  %v216 = vpack.c.b16 %v155, %v154
  %v217 = vpack.c.b16 %v157, %v156
  %v218 = vpack.c.b16 %v159, %v158
  %v219 = vpack.c.b16 %v161, %v160
  %v220 = vpack.c.b16 %v163, %v162
  %v221 = vpack.c.b16 %v165, %v164
  %v222 = vpack.c.b16 %v167, %v166
  %v223 = vpack.c.b16 %v169, %v168
  %v224 = vpack.c.b16 %v171, %v170
  %v225 = vpack.c.b16 %v173, %v172
  %v226 = vpack.c.b16 %v175, %v174
  %v227 = vpack.c.b16 %v177, %v176
  %v228 = vpack.c.b16 %v179, %v178
  %v229 = vpack.c.b16 %v181, %v180
  %v230 = vpack.c.b16 %v183, %v182
  %v231 = vpack.c.b16 %v185, %v184
  %v232 = vpack.c.b16 %v187, %v186
  %v233 = vpack.c.b16 %v189, %v188
  %v234 = vpack.c.b16 %v191, %v190
  %v235 = vpack.c.b16 %v193, %v192
  %v236 = vpack.c.b16 %v195, %v194
  %v237 = vpack.c.b16 %v197, %v196
  %v238 = vpack.c.b16 %v199, %v198
  %v239 = vpack.c.b16 %v201, %v200
  %v240 = vpack.c.b16 %v203, %v202
  %v241 = vpack.c.b16 %v205, %v204
  %v242 = vpack.c.b16 %v207, %v206
  %v243 = vpack.c.b16 %v209, %v208
  %v244 = vpack.c.b16 %v211, %v210
  %v245 = vpack.c.b16 %v213, %v212
  %v250 = vunpack.c.l.b16 %v82
  %v251 = vunpack.c.l.b16 %v83
  %v252 = vunpack.c.l.b16 %v84
  %v253 = vunpack.c.l.b16 %v85
  %v254 = vpack.c.b16 %v251, %v250
  %v255 = vpack.c.b16 %v253, %v252
  %vm257 = vcmask 220160
  %v259 = vsel %vm257, %v214, 0
  %v262 = vsel %vm257, %v215, 0
  %v265 = vsel %vm257, %v216, 0
  %v268 = vsel %vm257, %v217, 0
  %v271 = vsel %vm257, %v218, 0
  %v274 = vsel %vm257, %v219, 0
  %v277 = vsel %vm257, %v220, 0
  %v280 = vsel %vm257, %v221, 0
  %v283 = vsel %vm257, %v222, 0
  %v286 = vsel %vm257, %v223, 0
  %v289 = vsel %vm257, %v224, 0
  %v292 = vsel %vm257, %v225, 0
  %v295 = vsel %vm257, %v226, 0
  %v298 = vsel %vm257, %v227, 0
  %v301 = vsel %vm257, %v228, 0
  %v304 = vsel %vm257, %v229, 0
  %v307 = vsel %vm257, %v230, 0
  %v310 = vsel %vm257, %v231, 0
  %v313 = vsel %vm257, %v232, 0
  %v316 = vsel %vm257, %v233, 0
  %v319 = vsel %vm257, %v234, 0
  %v322 = vsel %vm257, %v235, 0
  %v325 = vsel %vm257, %v236, 0
  %v328 = vsel %vm257, %v237, 0
  %v331 = vsel %vm257, %v238, 0
  %v334 = vsel %vm257, %v239, 0
  %v337 = vsel %vm257, %v240, 0
  %v340 = vsel %vm257, %v241, 0
  %v343 = vsel %vm257, %v242, 0
  %v346 = vsel %vm257, %v243, 0
  %v349 = vsel %vm257, %v244, 0
  %v352 = vsel %vm257, %v245, 0
  %vm354 = vcmask 1044480
  %vm355 = vcmask 1045504
  %v356 = vsel %vm354, 4294967295, 65535
  %v357 = vsel %vm355, %v356, 0
  %v359 = vand.u32 %v255, %v357
  %361 = vmatpush.bf16.msra.mxu0 0
  %362 = vmatpush.bf16.msra.mxu0 0
  %363 = vmatpush.bf16.msra.mxu0 0
  %364 = vmatpush.bf16.msra.mxu0 0
  %365 = vmatpush.bf16.msra.mxu0 0
  %366 = vmatpush.bf16.msra.mxu0 0
  %367 = vmatpush.bf16.msra.mxu0 %v359
  %368 = vmatpush.bf16.msra.mxu0 %v254
  %369 = vmatmul.bf16.gmra.mxu0 %v259
  %v370 = vpop.f32.mrf.mxu0
  %v371 = vadd.f32 0.0, %v370
  %v372 = vpop.f32.mrf.mxu0
  %v373 = vadd.f32 0.0, %v372
  %374 = vmatmul.bf16.gmra.mxu0 %v262
  %v375 = vpop.f32.mrf.mxu0
  %v376 = vadd.f32 0.0, %v375
  %v377 = vpop.f32.mrf.mxu0
  %v378 = vadd.f32 0.0, %v377
  %379 = vmatmul.bf16.gmra.mxu0 %v265
  %v380 = vpop.f32.mrf.mxu0
  %v381 = vadd.f32 0.0, %v380
  %v382 = vpop.f32.mrf.mxu0
  %v383 = vadd.f32 0.0, %v382
  %384 = vmatmul.bf16.gmra.mxu0 %v268
  %v385 = vpop.f32.mrf.mxu0
  %v386 = vadd.f32 0.0, %v385
  %v387 = vpop.f32.mrf.mxu0
  %v388 = vadd.f32 0.0, %v387
  %389 = vmatmul.bf16.gmra.mxu0 %v271
  %v390 = vpop.f32.mrf.mxu0
  %v391 = vadd.f32 0.0, %v390
  %v392 = vpop.f32.mrf.mxu0
  %v393 = vadd.f32 0.0, %v392
  %394 = vmatmul.bf16.gmra.mxu0 %v274
  %v395 = vpop.f32.mrf.mxu0
  %v396 = vadd.f32 0.0, %v395
  %v397 = vpop.f32.mrf.mxu0
  %v398 = vadd.f32 0.0, %v397
  %399 = vmatmul.bf16.gmra.mxu0 %v277
  %v400 = vpop.f32.mrf.mxu0
  %v401 = vadd.f32 0.0, %v400
  %v402 = vpop.f32.mrf.mxu0
  %v403 = vadd.f32 0.0, %v402
  %404 = vmatmul.bf16.gmra.mxu0 %v280
  %v405 = vpop.f32.mrf.mxu0
  %v406 = vadd.f32 0.0, %v405
  %v407 = vpop.f32.mrf.mxu0
  %v408 = vadd.f32 0.0, %v407
  %409 = vmatmul.bf16.gmra.mxu0 %v283
  %v410 = vpop.f32.mrf.mxu0
  %v411 = vadd.f32 0.0, %v410
  %v412 = vpop.f32.mrf.mxu0
  %v413 = vadd.f32 0.0, %v412
  %414 = vmatmul.bf16.gmra.mxu0 %v286
  %v415 = vpop.f32.mrf.mxu0
  %v416 = vadd.f32 0.0, %v415
  %v417 = vpop.f32.mrf.mxu0
  %v418 = vadd.f32 0.0, %v417
  %419 = vmatmul.bf16.gmra.mxu0 %v289
  %v420 = vpop.f32.mrf.mxu0
  %v421 = vadd.f32 0.0, %v420
  %v422 = vpop.f32.mrf.mxu0
  %v423 = vadd.f32 0.0, %v422
  %424 = vmatmul.bf16.gmra.mxu0 %v292
  %v425 = vpop.f32.mrf.mxu0
  %v426 = vadd.f32 0.0, %v425
  %v427 = vpop.f32.mrf.mxu0
  %v428 = vadd.f32 0.0, %v427
  %429 = vmatmul.bf16.gmra.mxu0 %v295
  %v430 = vpop.f32.mrf.mxu0
  %v431 = vadd.f32 0.0, %v430
  %v432 = vpop.f32.mrf.mxu0
  %v433 = vadd.f32 0.0, %v432
  %434 = vmatmul.bf16.gmra.mxu0 %v298
  %v435 = vpop.f32.mrf.mxu0
  %v436 = vadd.f32 0.0, %v435
  %v437 = vpop.f32.mrf.mxu0
  %v438 = vadd.f32 0.0, %v437
  %439 = vmatmul.bf16.gmra.mxu0 %v301
  %v440 = vpop.f32.mrf.mxu0
  %v441 = vadd.f32 0.0, %v440
  %v442 = vpop.f32.mrf.mxu0
  %v443 = vadd.f32 0.0, %v442
  %444 = vmatmul.bf16.gmra.mxu0 %v304
  %v445 = vpop.f32.mrf.mxu0
  %v446 = vadd.f32 0.0, %v445
  %v447 = vpop.f32.mrf.mxu0
  %v448 = vadd.f32 0.0, %v447
  %449 = vmatmul.bf16.gmra.mxu0 %v307
  %v450 = vpop.f32.mrf.mxu0
  %v451 = vadd.f32 0.0, %v450
  %v452 = vpop.f32.mrf.mxu0
  %v453 = vadd.f32 0.0, %v452
  %454 = vmatmul.bf16.gmra.mxu0 %v310
  %v455 = vpop.f32.mrf.mxu0
  %v456 = vadd.f32 0.0, %v455
  %v457 = vpop.f32.mrf.mxu0
  %v458 = vadd.f32 0.0, %v457
  %459 = vmatmul.bf16.gmra.mxu0 %v313
  %v460 = vpop.f32.mrf.mxu0
  %v461 = vadd.f32 0.0, %v460
  %v462 = vpop.f32.mrf.mxu0
  %v463 = vadd.f32 0.0, %v462
  %464 = vmatmul.bf16.gmra.mxu0 %v316
  %v465 = vpop.f32.mrf.mxu0
  %v466 = vadd.f32 0.0, %v465
  %v467 = vpop.f32.mrf.mxu0
  %v468 = vadd.f32 0.0, %v467
  %469 = vmatmul.bf16.gmra.mxu0 %v319
  %v470 = vpop.f32.mrf.mxu0
  %v471 = vadd.f32 0.0, %v470
  %v472 = vpop.f32.mrf.mxu0
  %v473 = vadd.f32 0.0, %v472
  %474 = vmatmul.bf16.gmra.mxu0 %v322
  %v475 = vpop.f32.mrf.mxu0
  %v476 = vadd.f32 0.0, %v475
  %v477 = vpop.f32.mrf.mxu0
  %v478 = vadd.f32 0.0, %v477
  %479 = vmatmul.bf16.gmra.mxu0 %v325
  %v480 = vpop.f32.mrf.mxu0
  %v481 = vadd.f32 0.0, %v480
  %v482 = vpop.f32.mrf.mxu0
  %v483 = vadd.f32 0.0, %v482
  %484 = vmatmul.bf16.gmra.mxu0 %v328
  %v485 = vpop.f32.mrf.mxu0
  %v486 = vadd.f32 0.0, %v485
  %v487 = vpop.f32.mrf.mxu0
  %v488 = vadd.f32 0.0, %v487
  %489 = vmatmul.bf16.gmra.mxu0 %v331
  %v490 = vpop.f32.mrf.mxu0
  %v491 = vadd.f32 0.0, %v490
  %v492 = vpop.f32.mrf.mxu0
  %v493 = vadd.f32 0.0, %v492
  %494 = vmatmul.bf16.gmra.mxu0 %v334
  %v495 = vpop.f32.mrf.mxu0
  %v496 = vadd.f32 0.0, %v495
  %v497 = vpop.f32.mrf.mxu0
  %v498 = vadd.f32 0.0, %v497
  %499 = vmatmul.bf16.gmra.mxu0 %v337
  %v500 = vpop.f32.mrf.mxu0
  %v501 = vadd.f32 0.0, %v500
  %v502 = vpop.f32.mrf.mxu0
  %v503 = vadd.f32 0.0, %v502
  %504 = vmatmul.bf16.gmra.mxu0 %v340
  %v505 = vpop.f32.mrf.mxu0
  %v506 = vadd.f32 0.0, %v505
  %v507 = vpop.f32.mrf.mxu0
  %v508 = vadd.f32 0.0, %v507
  %509 = vmatmul.bf16.gmra.mxu0 %v343
  %v510 = vpop.f32.mrf.mxu0
  %v511 = vadd.f32 0.0, %v510
  %v512 = vpop.f32.mrf.mxu0
  %v513 = vadd.f32 0.0, %v512
  %514 = vmatmul.bf16.gmra.mxu0 %v346
  %v515 = vpop.f32.mrf.mxu0
  %v516 = vadd.f32 0.0, %v515
  %v517 = vpop.f32.mrf.mxu0
  %v518 = vadd.f32 0.0, %v517
  %519 = vmatmul.bf16.gmra.mxu0 %v349
  %v520 = vpop.f32.mrf.mxu0
  %v521 = vadd.f32 0.0, %v520
  %v522 = vpop.f32.mrf.mxu0
  %v523 = vadd.f32 0.0, %v522
  %524 = vmatmul.bf16.gmra.mxu0 %v352
  %v525 = vpop.f32.mrf.mxu0
  %v526 = vadd.f32 0.0, %v525
  %v527 = vpop.f32.mrf.mxu0
  %v528 = vadd.f32 0.0, %v527
  %529 = vdwg.mxu0
  %v530 = vld [vmem:[%s2] sm:$0x1]
  %v532 = vperm.slane %v530, 0
  %v534 = vmul.f32 %v371, %v532
  %v535 = vmul.f32 %v373, %v532
  %v536 = vmul.f32 %v376, %v532
  %v537 = vmul.f32 %v378, %v532
  %v538 = vmul.f32 %v381, %v532
  %v539 = vmul.f32 %v383, %v532
  %v540 = vmul.f32 %v386, %v532
  %v541 = vmul.f32 %v388, %v532
  %v542 = vmul.f32 %v391, %v532
  %v543 = vmul.f32 %v393, %v532
  %v544 = vmul.f32 %v396, %v532
  %v545 = vmul.f32 %v398, %v532
  %v546 = vmul.f32 %v401, %v532
  %v547 = vmul.f32 %v403, %v532
  %v548 = vmul.f32 %v406, %v532
  %v549 = vmul.f32 %v408, %v532
  %v550 = vmul.f32 %v411, %v532
  %v551 = vmul.f32 %v413, %v532
  %v552 = vmul.f32 %v416, %v532
  %v553 = vmul.f32 %v418, %v532
  %v554 = vmul.f32 %v421, %v532
  %v555 = vmul.f32 %v423, %v532
  %v556 = vmul.f32 %v426, %v532
  %v557 = vmul.f32 %v428, %v532
  %v558 = vmul.f32 %v431, %v532
  %v559 = vmul.f32 %v433, %v532
  %v560 = vmul.f32 %v436, %v532
  %v561 = vmul.f32 %v438, %v532
  %v562 = vmul.f32 %v441, %v532
  %v563 = vmul.f32 %v443, %v532
  %v564 = vmul.f32 %v446, %v532
  %v565 = vmul.f32 %v448, %v532
  %v566 = vmul.f32 %v451, %v532
  %v567 = vmul.f32 %v453, %v532
  %v568 = vmul.f32 %v456, %v532
  %v569 = vmul.f32 %v458, %v532
  %v570 = vmul.f32 %v461, %v532
  %v571 = vmul.f32 %v463, %v532
  %v572 = vmul.f32 %v466, %v532
  %v573 = vmul.f32 %v468, %v532
  %v574 = vmul.f32 %v471, %v532
  %v575 = vmul.f32 %v473, %v532
  %v576 = vmul.f32 %v476, %v532
  %v577 = vmul.f32 %v478, %v532
  %v578 = vmul.f32 %v481, %v532
  %v579 = vmul.f32 %v483, %v532
  %v580 = vmul.f32 %v486, %v532
  %v581 = vmul.f32 %v488, %v532
  %v582 = vmul.f32 %v491, %v532
  %v583 = vmul.f32 %v493, %v532
  %v584 = vmul.f32 %v496, %v532
  %v585 = vmul.f32 %v498, %v532
  %v586 = vmul.f32 %v501, %v532
  %v587 = vmul.f32 %v503, %v532
  %v588 = vmul.f32 %v506, %v532
  %v589 = vmul.f32 %v508, %v532
  %v590 = vmul.f32 %v511, %v532
  %v591 = vmul.f32 %v513, %v532
  %v592 = vmul.f32 %v516, %v532
  %v593 = vmul.f32 %v518, %v532
  %v594 = vmul.f32 %v521, %v532
  %v595 = vmul.f32 %v523, %v532
  %v596 = vmul.f32 %v526, %v532
  %v597 = vmul.f32 %v528, %v532
  %v598 = vld [vmem:[%s3] sm:$0x1]
  %v600 = vperm.slane %v598, 0
  %v602 = vadd.f32 %v534, %v600
  %v603 = vadd.f32 %v535, %v600
  %v604 = vadd.f32 %v536, %v600
  %v605 = vadd.f32 %v537, %v600
  %v606 = vadd.f32 %v538, %v600
  %v607 = vadd.f32 %v539, %v600
  %v608 = vadd.f32 %v540, %v600
  %v609 = vadd.f32 %v541, %v600
  %v610 = vadd.f32 %v542, %v600
  %v611 = vadd.f32 %v543, %v600
  %v612 = vadd.f32 %v544, %v600
  %v613 = vadd.f32 %v545, %v600
  %v614 = vadd.f32 %v546, %v600
  %v615 = vadd.f32 %v547, %v600
  %v616 = vadd.f32 %v548, %v600
  %v617 = vadd.f32 %v549, %v600
  %v618 = vadd.f32 %v550, %v600
  %v619 = vadd.f32 %v551, %v600
  %v620 = vadd.f32 %v552, %v600
  %v621 = vadd.f32 %v553, %v600
  %v622 = vadd.f32 %v554, %v600
  %v623 = vadd.f32 %v555, %v600
  %v624 = vadd.f32 %v556, %v600
  %v625 = vadd.f32 %v557, %v600
  %v626 = vadd.f32 %v558, %v600
  %v627 = vadd.f32 %v559, %v600
  %v628 = vadd.f32 %v560, %v600
  %v629 = vadd.f32 %v561, %v600
  %v630 = vadd.f32 %v562, %v600
  %v631 = vadd.f32 %v563, %v600
  %v632 = vadd.f32 %v564, %v600
  %v633 = vadd.f32 %v565, %v600
  %v634 = vadd.f32 %v566, %v600
  %v635 = vadd.f32 %v567, %v600
  %v636 = vadd.f32 %v568, %v600
  %v637 = vadd.f32 %v569, %v600
  %v638 = vadd.f32 %v570, %v600
  %v639 = vadd.f32 %v571, %v600
  %v640 = vadd.f32 %v572, %v600
  %v641 = vadd.f32 %v573, %v600
  %v642 = vadd.f32 %v574, %v600
  %v643 = vadd.f32 %v575, %v600
  %v644 = vadd.f32 %v576, %v600
  %v645 = vadd.f32 %v577, %v600
  %v646 = vadd.f32 %v578, %v600
  %v647 = vadd.f32 %v579, %v600
  %v648 = vadd.f32 %v580, %v600
  %v649 = vadd.f32 %v581, %v600
  %v650 = vadd.f32 %v582, %v600
  %v651 = vadd.f32 %v583, %v600
  %v652 = vadd.f32 %v584, %v600
  %v653 = vadd.f32 %v585, %v600
  %v654 = vadd.f32 %v586, %v600
  %v655 = vadd.f32 %v587, %v600
  %v656 = vadd.f32 %v588, %v600
  %v657 = vadd.f32 %v589, %v600
  %v658 = vadd.f32 %v590, %v600
  %v659 = vadd.f32 %v591, %v600
  %v660 = vadd.f32 %v592, %v600
  %v661 = vadd.f32 %v593, %v600
  %v662 = vadd.f32 %v594, %v600
  %v663 = vadd.f32 %v595, %v600
  %v664 = vadd.f32 %v596, %v600
  %v665 = vadd.f32 %v597, %v600
  %v666 = vmax.f32 %v602, 0.0
  %v667 = vmax.f32 %v603, 0.0
  %v668 = vmax.f32 %v604, 0.0
  %v669 = vmax.f32 %v605, 0.0
  %v670 = vmax.f32 %v606, 0.0
  %v671 = vmax.f32 %v607, 0.0
  %v672 = vmax.f32 %v608, 0.0
  %v673 = vmax.f32 %v609, 0.0
  %v674 = vmax.f32 %v610, 0.0
  %v675 = vmax.f32 %v611, 0.0
  %v676 = vmax.f32 %v612, 0.0
  %v677 = vmax.f32 %v613, 0.0
  %v678 = vmax.f32 %v614, 0.0
  %v679 = vmax.f32 %v615, 0.0
  %v680 = vmax.f32 %v616, 0.0
  %v681 = vmax.f32 %v617, 0.0
  %v682 = vmax.f32 %v618, 0.0
  %v683 = vmax.f32 %v619, 0.0
  %v684 = vmax.f32 %v620, 0.0
  %v685 = vmax.f32 %v621, 0.0
  %v686 = vmax.f32 %v622, 0.0
  %v687 = vmax.f32 %v623, 0.0
  %v688 = vmax.f32 %v624, 0.0
  %v689 = vmax.f32 %v625, 0.0
  %v690 = vmax.f32 %v626, 0.0
  %v691 = vmax.f32 %v627, 0.0
  %v692 = vmax.f32 %v628, 0.0
  %v693 = vmax.f32 %v629, 0.0
  %v694 = vmax.f32 %v630, 0.0
  %v695 = vmax.f32 %v631, 0.0
  %v696 = vmax.f32 %v632, 0.0
  %v697 = vmax.f32 %v633, 0.0
  %v698 = vmax.f32 %v634, 0.0
  %v699 = vmax.f32 %v635, 0.0
  %v700 = vmax.f32 %v636, 0.0
  %v701 = vmax.f32 %v637, 0.0
  %v702 = vmax.f32 %v638, 0.0
  %v703 = vmax.f32 %v639, 0.0
  %v704 = vmax.f32 %v640, 0.0
  %v705 = vmax.f32 %v641, 0.0
  %v706 = vmax.f32 %v642, 0.0
  %v707 = vmax.f32 %v643, 0.0
  %v708 = vmax.f32 %v644, 0.0
  %v709 = vmax.f32 %v645, 0.0
  %v710 = vmax.f32 %v646, 0.0
  %v711 = vmax.f32 %v647, 0.0
  %v712 = vmax.f32 %v648, 0.0
  %v713 = vmax.f32 %v649, 0.0
  %v714 = vmax.f32 %v650, 0.0
  %v715 = vmax.f32 %v651, 0.0
  %v716 = vmax.f32 %v652, 0.0
  %v717 = vmax.f32 %v653, 0.0
  %v718 = vmax.f32 %v654, 0.0
  %v719 = vmax.f32 %v655, 0.0
  %v720 = vmax.f32 %v656, 0.0
  %v721 = vmax.f32 %v657, 0.0
  %v722 = vmax.f32 %v658, 0.0
  %v723 = vmax.f32 %v659, 0.0
  %v724 = vmax.f32 %v660, 0.0
  %v725 = vmax.f32 %v661, 0.0
  %v726 = vmax.f32 %v662, 0.0
  %v727 = vmax.f32 %v663, 0.0
  %v728 = vmax.f32 %v664, 0.0
  %v729 = vmax.f32 %v665, 0.0
  %v730 = vpack.c.bf16 %v666, %v666
  %v731 = vpack.c.bf16 %v667, %v667
  %v732 = vpack.c.bf16 %v668, %v668
  %v733 = vpack.c.bf16 %v669, %v669
  %v734 = vpack.c.bf16 %v670, %v670
  %v735 = vpack.c.bf16 %v671, %v671
  %v736 = vpack.c.bf16 %v672, %v672
  %v737 = vpack.c.bf16 %v673, %v673
  %v738 = vpack.c.bf16 %v674, %v674
  %v739 = vpack.c.bf16 %v675, %v675
  %v740 = vpack.c.bf16 %v676, %v676
  %v741 = vpack.c.bf16 %v677, %v677
  %v742 = vpack.c.bf16 %v678, %v678
  %v743 = vpack.c.bf16 %v679, %v679
  %v744 = vpack.c.bf16 %v680, %v680
  %v745 = vpack.c.bf16 %v681, %v681
  %v746 = vpack.c.bf16 %v682, %v682
  %v747 = vpack.c.bf16 %v683, %v683
  %v748 = vpack.c.bf16 %v684, %v684
  %v749 = vpack.c.bf16 %v685, %v685
  %v750 = vpack.c.bf16 %v686, %v686
  %v751 = vpack.c.bf16 %v687, %v687
  %v752 = vpack.c.bf16 %v688, %v688
  %v753 = vpack.c.bf16 %v689, %v689
  %v754 = vpack.c.bf16 %v690, %v690
  %v755 = vpack.c.bf16 %v691, %v691
  %v756 = vpack.c.bf16 %v692, %v692
  %v757 = vpack.c.bf16 %v693, %v693
  %v758 = vpack.c.bf16 %v694, %v694
  %v759 = vpack.c.bf16 %v695, %v695
  %v760 = vpack.c.bf16 %v696, %v696
  %v761 = vpack.c.bf16 %v697, %v697
  %v762 = vpack.c.bf16 %v698, %v698
  %v763 = vpack.c.bf16 %v699, %v699
  %v764 = vpack.c.bf16 %v700, %v700
  %v765 = vpack.c.bf16 %v701, %v701
  %v766 = vpack.c.bf16 %v702, %v702
  %v767 = vpack.c.bf16 %v703, %v703
  %v768 = vpack.c.bf16 %v704, %v704
  %v769 = vpack.c.bf16 %v705, %v705
  %v770 = vpack.c.bf16 %v706, %v706
  %v771 = vpack.c.bf16 %v707, %v707
  %v772 = vpack.c.bf16 %v708, %v708
  %v773 = vpack.c.bf16 %v709, %v709
  %v774 = vpack.c.bf16 %v710, %v710
  %v775 = vpack.c.bf16 %v711, %v711
  %v776 = vpack.c.bf16 %v712, %v712
  %v777 = vpack.c.bf16 %v713, %v713
  %v778 = vpack.c.bf16 %v714, %v714
  %v779 = vpack.c.bf16 %v715, %v715
  %v780 = vpack.c.bf16 %v716, %v716
  %v781 = vpack.c.bf16 %v717, %v717
  %v782 = vpack.c.bf16 %v718, %v718
  %v783 = vpack.c.bf16 %v719, %v719
  %v784 = vpack.c.bf16 %v720, %v720
  %v785 = vpack.c.bf16 %v721, %v721
  %v786 = vpack.c.bf16 %v722, %v722
  %v787 = vpack.c.bf16 %v723, %v723
  %v788 = vpack.c.bf16 %v724, %v724
  %v789 = vpack.c.bf16 %v725, %v725
  %v790 = vpack.c.bf16 %v726, %v726
  %v791 = vpack.c.bf16 %v727, %v727
  %v792 = vpack.c.bf16 %v728, %v728
  %v793 = vpack.c.bf16 %v729, %v729
  %vm794 = vcmask 60416
  %795 = vst.msk [vmem:[%s4] sm:$0xf] %vm794, %v730
  %796 = vst.msk [vmem:[%s4 + $0x4] sm:$0xf] %vm794, %v731
  %797 = vst.msk [vmem:[%s4 + $0x8] sm:$0xf] %vm794, %v732
  %798 = vst.msk [vmem:[%s4 + $0xc] sm:$0xf] %vm794, %v733
  %799 = vst.msk [vmem:[%s4 + $0x10] sm:$0xf] %vm794, %v734
  %800 = vst.msk [vmem:[%s4 + $0x14] sm:$0xf] %vm794, %v735
  %801 = vst.msk [vmem:[%s4 + $0x18] sm:$0xf] %vm794, %v736
  %802 = vst.msk [vmem:[%s4 + $0x1c] sm:$0xf] %vm794, %v737
  %803 = vst.msk [vmem:[%s4 + $0x20] sm:$0xf] %vm794, %v738
  %804 = vst.msk [vmem:[%s4 + $0x24] sm:$0xf] %vm794, %v739
  %805 = vst.msk [vmem:[%s4 + $0x28] sm:$0xf] %vm794, %v740
  %806 = vst.msk [vmem:[%s4 + $0x2c] sm:$0xf] %vm794, %v741
  %807 = vst.msk [vmem:[%s4 + $0x30] sm:$0xf] %vm794, %v742
  %808 = vst.msk [vmem:[%s4 + $0x34] sm:$0xf] %vm794, %v743
  %809 = vst.msk [vmem:[%s4 + $0x38] sm:$0xf] %vm794, %v744
  %810 = vst.msk [vmem:[%s4 + $0x3c] sm:$0xf] %vm794, %v745
  %811 = vst.msk [vmem:[%s4 + $0x40] sm:$0xf] %vm794, %v746
  %812 = vst.msk [vmem:[%s4 + $0x44] sm:$0xf] %vm794, %v747
  %813 = vst.msk [vmem:[%s4 + $0x48] sm:$0xf] %vm794, %v748
  %814 = vst.msk [vmem:[%s4 + $0x4c] sm:$0xf] %vm794, %v749
  %815 = vst.msk [vmem:[%s4 + $0x50] sm:$0xf] %vm794, %v750
  %816 = vst.msk [vmem:[%s4 + $0x54] sm:$0xf] %vm794, %v751
  %817 = vst.msk [vmem:[%s4 + $0x58] sm:$0xf] %vm794, %v752
  %818 = vst.msk [vmem:[%s4 + $0x5c] sm:$0xf] %vm794, %v753
  %819 = vst.msk [vmem:[%s4 + $0x60] sm:$0xf] %vm794, %v754
  %820 = vst.msk [vmem:[%s4 + $0x64] sm:$0xf] %vm794, %v755
  %821 = vst.msk [vmem:[%s4 + $0x68] sm:$0xf] %vm794, %v756
  %822 = vst.msk [vmem:[%s4 + $0x6c] sm:$0xf] %vm794, %v757
  %823 = vst.msk [vmem:[%s4 + $0x70] sm:$0xf] %vm794, %v758
  %824 = vst.msk [vmem:[%s4 + $0x74] sm:$0xf] %vm794, %v759
  %825 = vst.msk [vmem:[%s4 + $0x78] sm:$0xf] %vm794, %v760
  %826 = vst.msk [vmem:[%s4 + $0x7c] sm:$0xf] %vm794, %v761
  %827 = vst.msk [vmem:[%s4 + $0x80] sm:$0xf] %vm794, %v762
  %828 = vst.msk [vmem:[%s4 + $0x84] sm:$0xf] %vm794, %v763
  %829 = vst.msk [vmem:[%s4 + $0x88] sm:$0xf] %vm794, %v764
  %830 = vst.msk [vmem:[%s4 + $0x8c] sm:$0xf] %vm794, %v765
  %831 = vst.msk [vmem:[%s4 + $0x90] sm:$0xf] %vm794, %v766
  %832 = vst.msk [vmem:[%s4 + $0x94] sm:$0xf] %vm794, %v767
  %833 = vst.msk [vmem:[%s4 + $0x98] sm:$0xf] %vm794, %v768
  %834 = vst.msk [vmem:[%s4 + $0x9c] sm:$0xf] %vm794, %v769
  %835 = vst.msk [vmem:[%s4 + $0xa0] sm:$0xf] %vm794, %v770
  %836 = vst.msk [vmem:[%s4 + $0xa4] sm:$0xf] %vm794, %v771
  %837 = vst.msk [vmem:[%s4 + $0xa8] sm:$0xf] %vm794, %v772
  %838 = vst.msk [vmem:[%s4 + $0xac] sm:$0xf] %vm794, %v773
  %839 = vst.msk [vmem:[%s4 + $0xb0] sm:$0xf] %vm794, %v774
  %840 = vst.msk [vmem:[%s4 + $0xb4] sm:$0xf] %vm794, %v775
  %841 = vst.msk [vmem:[%s4 + $0xb8] sm:$0xf] %vm794, %v776
  %842 = vst.msk [vmem:[%s4 + $0xbc] sm:$0xf] %vm794, %v777
  %843 = vst.msk [vmem:[%s4 + $0xc0] sm:$0xf] %vm794, %v778
  %844 = vst.msk [vmem:[%s4 + $0xc4] sm:$0xf] %vm794, %v779
  %845 = vst.msk [vmem:[%s4 + $0xc8] sm:$0xf] %vm794, %v780
  %846 = vst.msk [vmem:[%s4 + $0xcc] sm:$0xf] %vm794, %v781
  %847 = vst.msk [vmem:[%s4 + $0xd0] sm:$0xf] %vm794, %v782
  %848 = vst.msk [vmem:[%s4 + $0xd4] sm:$0xf] %vm794, %v783
  %849 = vst.msk [vmem:[%s4 + $0xd8] sm:$0xf] %vm794, %v784
  %850 = vst.msk [vmem:[%s4 + $0xdc] sm:$0xf] %vm794, %v785
  %851 = vst.msk [vmem:[%s4 + $0xe0] sm:$0xf] %vm794, %v786
  %852 = vst.msk [vmem:[%s4 + $0xe4] sm:$0xf] %vm794, %v787
  %853 = vst.msk [vmem:[%s4 + $0xe8] sm:$0xf] %vm794, %v788
  %854 = vst.msk [vmem:[%s4 + $0xec] sm:$0xf] %vm794, %v789
  %855 = vst.msk [vmem:[%s4 + $0xf0] sm:$0xf] %vm794, %v790
  %856 = vst.msk [vmem:[%s4 + $0xf4] sm:$0xf] %vm794, %v791
  %857 = vst.msk [vmem:[%s4 + $0xf8] sm:$0xf] %vm794, %v792
  %858 = vst.msk [vmem:[%s4 + $0xfc] sm:$0xf] %vm794, %v793
  // Predicated region
  $region18: #{_lambda_.30} parent=0 // pred_check
    _
  $region19: #{_lambda_.30} parent=0 // pred_check_branch
    %860 = sbr.rel (0) target = $region21
  $region20: #{_lambda_.30} parent=0 // pred_region
    _
  $region21: #{_lambda_.30} parent=0 // pred_fallthru
    _
  // Predicated region
  $region22: #{_lambda_.30} parent=0 // pred_check
    _
  $region23: #{_lambda_.30} parent=0 // pred_check_branch
    %862 = sbr.rel (0) target = $region25
  $region24: #{_lambda_.30} parent=0 // pred_region
    _
  $region25: #{_lambda_.30} parent=0 // pred_fallthru
    _

// kernel: _lambda_.31
$region0: #{_lambda_.31}
  #allocation0 [shape = 'u32[]', space=smem, size = 0x4, offset = 0x4, fixed_abs, tag = 'smem constant byte address 0x4 - core index']
  #allocation1 [shape = 'u32[72,128]{1,0:T(1,128)}', space=vmem, size = 0x9000, scoped, tag = 'internal scratch']
  %s0 = inlined_call_operand.vmem [shape: bf16[512,8], index: 0, kind: input, shape index: {}]
  %s1 = inlined_call_operand.vmem [shape: bf16[8,8], index: 1, kind: input, shape index: {}]
  %s2 = inlined_call_operand.vmem [shape: f32[1,8], index: 2, kind: input, shape index: {}]
  %s3 = inlined_call_operand.vmem [shape: f32[1,8], index: 3, kind: input, shape index: {}]
  %s4 = inlined_call_operand.vmem [shape: bf16[512,8], index: 4, kind: output, shape index: {}]
  %s5 = sld [smem:[#allocation0]]
  $region26: #{_lambda_.31} parent=0
    _
  %s7 = ssub.s32 1, %s5
  %s8 = scalar_select 0, %s7, %s5
  // Predicated region
  $region2: #{_lambda_.31} parent=0 // pred_check
    _
  $region3: #{_lambda_.31} parent=0 // pred_check_branch
    %10 = sbr.rel (0) target = $region5
  $region4: #{_lambda_.31} parent=0 // pred_region
    _
  $region5: #{_lambda_.31} parent=0 // pred_fallthru
    _
  // Predicated region
  $region6: #{_lambda_.31} parent=0 // pred_check
    _
  $region7: #{_lambda_.31} parent=0 // pred_check_branch
    %12 = sbr.rel (0) target = $region9
  $region8: #{_lambda_.31} parent=0 // pred_region
    _
  $region9: #{_lambda_.31} parent=0 // pred_fallthru
    _
  // Predicated region
  $region10: #{_lambda_.31} parent=0 // pred_check
    _
  $region11: #{_lambda_.31} parent=0 // pred_check_branch
    %14 = sbr.rel (0) target = $region13
  $region12: #{_lambda_.31} parent=0 // pred_region
    _
  $region13: #{_lambda_.31} parent=0 // pred_fallthru
    _
  // Predicated region
  $region14: #{_lambda_.31} parent=0 // pred_check
    _
  $region15: #{_lambda_.31} parent=0 // pred_check_branch
    %16 = sbr.rel (0) target = $region17
  $region16: #{_lambda_.31} parent=0 // pred_region
    _
  $region17: #{_lambda_.31} parent=0 // pred_fallthru
    _
  %v18 = vld [vmem:[%s0] sm:$0xf]
  %v19 = vld [vmem:[%s0 + $0x4] sm:$0xf]
  %v20 = vld [vmem:[%s0 + $0x8] sm:$0xf]
  %v21 = vld [vmem:[%s0 + $0xc] sm:$0xf]
  %v22 = vld [vmem:[%s0 + $0x10] sm:$0xf]
  %v23 = vld [vmem:[%s0 + $0x14] sm:$0xf]
  %v24 = vld [vmem:[%s0 + $0x18] sm:$0xf]
  %v25 = vld [vmem:[%s0 + $0x1c] sm:$0xf]
  %v26 = vld [vmem:[%s0 + $0x20] sm:$0xf]
  %v27 = vld [vmem:[%s0 + $0x24] sm:$0xf]
  %v28 = vld [vmem:[%s0 + $0x28] sm:$0xf]
  %v29 = vld [vmem:[%s0 + $0x2c] sm:$0xf]
  %v30 = vld [vmem:[%s0 + $0x30] sm:$0xf]
  %v31 = vld [vmem:[%s0 + $0x34] sm:$0xf]
  %v32 = vld [vmem:[%s0 + $0x38] sm:$0xf]
  %v33 = vld [vmem:[%s0 + $0x3c] sm:$0xf]
  %v34 = vld [vmem:[%s0 + $0x40] sm:$0xf]
  %v35 = vld [vmem:[%s0 + $0x44] sm:$0xf]
  %v36 = vld [vmem:[%s0 + $0x48] sm:$0xf]
  %v37 = vld [vmem:[%s0 + $0x4c] sm:$0xf]
  %v38 = vld [vmem:[%s0 + $0x50] sm:$0xf]
  %v39 = vld [vmem:[%s0 + $0x54] sm:$0xf]
  %v40 = vld [vmem:[%s0 + $0x58] sm:$0xf]
  %v41 = vld [vmem:[%s0 + $0x5c] sm:$0xf]
  %v42 = vld [vmem:[%s0 + $0x60] sm:$0xf]
  %v43 = vld [vmem:[%s0 + $0x64] sm:$0xf]
  %v44 = vld [vmem:[%s0 + $0x68] sm:$0xf]
  %v45 = vld [vmem:[%s0 + $0x6c] sm:$0xf]
  %v46 = vld [vmem:[%s0 + $0x70] sm:$0xf]
  %v47 = vld [vmem:[%s0 + $0x74] sm:$0xf]
  %v48 = vld [vmem:[%s0 + $0x78] sm:$0xf]
  %v49 = vld [vmem:[%s0 + $0x7c] sm:$0xf]
  %v50 = vld [vmem:[%s0 + $0x80] sm:$0xf]
  %v51 = vld [vmem:[%s0 + $0x84] sm:$0xf]
  %v52 = vld [vmem:[%s0 + $0x88] sm:$0xf]
  %v53 = vld [vmem:[%s0 + $0x8c] sm:$0xf]
  %v54 = vld [vmem:[%s0 + $0x90] sm:$0xf]
  %v55 = vld [vmem:[%s0 + $0x94] sm:$0xf]
  %v56 = vld [vmem:[%s0 + $0x98] sm:$0xf]
  %v57 = vld [vmem:[%s0 + $0x9c] sm:$0xf]
  %v58 = vld [vmem:[%s0 + $0xa0] sm:$0xf]
  %v59 = vld [vmem:[%s0 + $0xa4] sm:$0xf]
  %v60 = vld [vmem:[%s0 + $0xa8] sm:$0xf]
  %v61 = vld [vmem:[%s0 + $0xac] sm:$0xf]
  %v62 = vld [vmem:[%s0 + $0xb0] sm:$0xf]
  %v63 = vld [vmem:[%s0 + $0xb4] sm:$0xf]
  %v64 = vld [vmem:[%s0 + $0xb8] sm:$0xf]
  %v65 = vld [vmem:[%s0 + $0xbc] sm:$0xf]
  %v66 = vld [vmem:[%s0 + $0xc0] sm:$0xf]
  %v67 = vld [vmem:[%s0 + $0xc4] sm:$0xf]
  %v68 = vld [vmem:[%s0 + $0xc8] sm:$0xf]
  %v69 = vld [vmem:[%s0 + $0xcc] sm:$0xf]
  %v70 = vld [vmem:[%s0 + $0xd0] sm:$0xf]
  %v71 = vld [vmem:[%s0 + $0xd4] sm:$0xf]
  %v72 = vld [vmem:[%s0 + $0xd8] sm:$0xf]
  %v73 = vld [vmem:[%s0 + $0xdc] sm:$0xf]
  %v74 = vld [vmem:[%s0 + $0xe0] sm:$0xf]
  %v75 = vld [vmem:[%s0 + $0xe4] sm:$0xf]
  %v76 = vld [vmem:[%s0 + $0xe8] sm:$0xf]
  %v77 = vld [vmem:[%s0 + $0xec] sm:$0xf]
  %v78 = vld [vmem:[%s0 + $0xf0] sm:$0xf]
  %v79 = vld [vmem:[%s0 + $0xf4] sm:$0xf]
  %v80 = vld [vmem:[%s0 + $0xf8] sm:$0xf]
  %v81 = vld [vmem:[%s0 + $0xfc] sm:$0xf]
  %v82 = vld [vmem:[%s1] sm:$0xf]
  %v147 = vunpack.c.l.b16 %v18
  %v148 = vunpack.c.l.b16 %v19
  %v149 = vunpack.c.l.b16 %v20
  %v150 = vunpack.c.l.b16 %v21
  %v151 = vunpack.c.l.b16 %v22
  %v152 = vunpack.c.l.b16 %v23
  %v153 = vunpack.c.l.b16 %v24
  %v154 = vunpack.c.l.b16 %v25
  %v155 = vunpack.c.l.b16 %v26
  %v156 = vunpack.c.l.b16 %v27
  %v157 = vunpack.c.l.b16 %v28
  %v158 = vunpack.c.l.b16 %v29
  %v159 = vunpack.c.l.b16 %v30
  %v160 = vunpack.c.l.b16 %v31
  %v161 = vunpack.c.l.b16 %v32
  %v162 = vunpack.c.l.b16 %v33
  %v163 = vunpack.c.l.b16 %v34
  %v164 = vunpack.c.l.b16 %v35
  %v165 = vunpack.c.l.b16 %v36
  %v166 = vunpack.c.l.b16 %v37
  %v167 = vunpack.c.l.b16 %v38
  %v168 = vunpack.c.l.b16 %v39
  %v169 = vunpack.c.l.b16 %v40
  %v170 = vunpack.c.l.b16 %v41
  %v171 = vunpack.c.l.b16 %v42
  %v172 = vunpack.c.l.b16 %v43
  %v173 = vunpack.c.l.b16 %v44
  %v174 = vunpack.c.l.b16 %v45
  %v175 = vunpack.c.l.b16 %v46
  %v176 = vunpack.c.l.b16 %v47
  %v177 = vunpack.c.l.b16 %v48
  %v178 = vunpack.c.l.b16 %v49
  %v179 = vunpack.c.l.b16 %v50
  %v180 = vunpack.c.l.b16 %v51
  %v181 = vunpack.c.l.b16 %v52
  %v182 = vunpack.c.l.b16 %v53
  %v183 = vunpack.c.l.b16 %v54
  %v184 = vunpack.c.l.b16 %v55
  %v185 = vunpack.c.l.b16 %v56
  %v186 = vunpack.c.l.b16 %v57
  %v187 = vunpack.c.l.b16 %v58
  %v188 = vunpack.c.l.b16 %v59
  %v189 = vunpack.c.l.b16 %v60
  %v190 = vunpack.c.l.b16 %v61
  %v191 = vunpack.c.l.b16 %v62
  %v192 = vunpack.c.l.b16 %v63
  %v193 = vunpack.c.l.b16 %v64
  %v194 = vunpack.c.l.b16 %v65
  %v195 = vunpack.c.l.b16 %v66
  %v196 = vunpack.c.l.b16 %v67
  %v197 = vunpack.c.l.b16 %v68
  %v198 = vunpack.c.l.b16 %v69
  %v199 = vunpack.c.l.b16 %v70
  %v200 = vunpack.c.l.b16 %v71
  %v201 = vunpack.c.l.b16 %v72
  %v202 = vunpack.c.l.b16 %v73
  %v203 = vunpack.c.l.b16 %v74
  %v204 = vunpack.c.l.b16 %v75
  %v205 = vunpack.c.l.b16 %v76
  %v206 = vunpack.c.l.b16 %v77
  %v207 = vunpack.c.l.b16 %v78
  %v208 = vunpack.c.l.b16 %v79
  %v209 = vunpack.c.l.b16 %v80
  %v210 = vunpack.c.l.b16 %v81
  %v211 = vpack.c.b16 %v148, %v147
  %v212 = vpack.c.b16 %v150, %v149
  %v213 = vpack.c.b16 %v152, %v151
  %v214 = vpack.c.b16 %v154, %v153
  %v215 = vpack.c.b16 %v156, %v155
  %v216 = vpack.c.b16 %v158, %v157
  %v217 = vpack.c.b16 %v160, %v159
  %v218 = vpack.c.b16 %v162, %v161
  %v219 = vpack.c.b16 %v164, %v163
  %v220 = vpack.c.b16 %v166, %v165
  %v221 = vpack.c.b16 %v168, %v167
  %v222 = vpack.c.b16 %v170, %v169
  %v223 = vpack.c.b16 %v172, %v171
  %v224 = vpack.c.b16 %v174, %v173
  %v225 = vpack.c.b16 %v176, %v175
  %v226 = vpack.c.b16 %v178, %v177
  %v227 = vpack.c.b16 %v180, %v179
  %v228 = vpack.c.b16 %v182, %v181
  %v229 = vpack.c.b16 %v184, %v183
  %v230 = vpack.c.b16 %v186, %v185
  %v231 = vpack.c.b16 %v188, %v187
  %v232 = vpack.c.b16 %v190, %v189
  %v233 = vpack.c.b16 %v192, %v191
  %v234 = vpack.c.b16 %v194, %v193
  %v235 = vpack.c.b16 %v196, %v195
  %v236 = vpack.c.b16 %v198, %v197
  %v237 = vpack.c.b16 %v200, %v199
  %v238 = vpack.c.b16 %v202, %v201
  %v239 = vpack.c.b16 %v204, %v203
  %v240 = vpack.c.b16 %v206, %v205
  %v241 = vpack.c.b16 %v208, %v207
  %v242 = vpack.c.b16 %v210, %v209
  %vm243 = vcmask 64512
  %v245 = vsel %vm243, %v211, 0
  %v248 = vsel %vm243, %v212, 0
  %v251 = vsel %vm243, %v213, 0
  %v254 = vsel %vm243, %v214, 0
  %v257 = vsel %vm243, %v215, 0
  %v260 = vsel %vm243, %v216, 0
  %v263 = vsel %vm243, %v217, 0
  %v266 = vsel %vm243, %v218, 0
  %v269 = vsel %vm243, %v219, 0
  %v272 = vsel %vm243, %v220, 0
  %v275 = vsel %vm243, %v221, 0
  %v278 = vsel %vm243, %v222, 0
  %v281 = vsel %vm243, %v223, 0
  %v284 = vsel %vm243, %v224, 0
  %v287 = vsel %vm243, %v225, 0
  %v290 = vsel %vm243, %v226, 0
  %v293 = vsel %vm243, %v227, 0
  %v296 = vsel %vm243, %v228, 0
  %v299 = vsel %vm243, %v229, 0
  %v302 = vsel %vm243, %v230, 0
  %v305 = vsel %vm243, %v231, 0
  %v308 = vsel %vm243, %v232, 0
  %v311 = vsel %vm243, %v233, 0
  %v314 = vsel %vm243, %v234, 0
  %v317 = vsel %vm243, %v235, 0
  %v320 = vsel %vm243, %v236, 0
  %v323 = vsel %vm243, %v237, 0
  %v326 = vsel %vm243, %v238, 0
  %v329 = vsel %vm243, %v239, 0
  %v332 = vsel %vm243, %v240, 0
  %v335 = vsel %vm243, %v241, 0
  %v338 = vsel %vm243, %v242, 0
  %vm340 = vcmask 1043456
  %v342 = vsel %vm340, %v82, 0
  %344 = vmatpush.bf16.msra.mxu0 0
  %345 = vmatpush.bf16.msra.mxu0 0
  %346 = vmatpush.bf16.msra.mxu0 0
  %347 = vmatpush.bf16.msra.mxu0 0
  %348 = vmatpush.bf16.msra.mxu0 0
  %349 = vmatpush.bf16.msra.mxu0 0
  %350 = vmatpush.bf16.msra.mxu0 0
  %351 = vmatpush.bf16.msra.mxu0 %v342
  %352 = vmatmul.bf16.gmra.mxu0 %v245
  %v353 = vpop.f32.mrf.mxu0
  %v354 = vadd.f32 0.0, %v353
  %v355 = vpop.f32.mrf.mxu0
  %v356 = vadd.f32 0.0, %v355
  %357 = vmatmul.bf16.gmra.mxu0 %v248
  %v358 = vpop.f32.mrf.mxu0
  %v359 = vadd.f32 0.0, %v358
  %v360 = vpop.f32.mrf.mxu0
  %v361 = vadd.f32 0.0, %v360
  %362 = vmatmul.bf16.gmra.mxu0 %v251
  %v363 = vpop.f32.mrf.mxu0
  %v364 = vadd.f32 0.0, %v363
  %v365 = vpop.f32.mrf.mxu0
  %v366 = vadd.f32 0.0, %v365
  %367 = vmatmul.bf16.gmra.mxu0 %v254
  %v368 = vpop.f32.mrf.mxu0
  %v369 = vadd.f32 0.0, %v368
  %v370 = vpop.f32.mrf.mxu0
  %v371 = vadd.f32 0.0, %v370
  %372 = vmatmul.bf16.gmra.mxu0 %v257
  %v373 = vpop.f32.mrf.mxu0
  %v374 = vadd.f32 0.0, %v373
  %v375 = vpop.f32.mrf.mxu0
  %v376 = vadd.f32 0.0, %v375
  %377 = vmatmul.bf16.gmra.mxu0 %v260
  %v378 = vpop.f32.mrf.mxu0
  %v379 = vadd.f32 0.0, %v378
  %v380 = vpop.f32.mrf.mxu0
  %v381 = vadd.f32 0.0, %v380
  %382 = vmatmul.bf16.gmra.mxu0 %v263
  %v383 = vpop.f32.mrf.mxu0
  %v384 = vadd.f32 0.0, %v383
  %v385 = vpop.f32.mrf.mxu0
  %v386 = vadd.f32 0.0, %v385
  %387 = vmatmul.bf16.gmra.mxu0 %v266
  %v388 = vpop.f32.mrf.mxu0
  %v389 = vadd.f32 0.0, %v388
  %v390 = vpop.f32.mrf.mxu0
  %v391 = vadd.f32 0.0, %v390
  %392 = vmatmul.bf16.gmra.mxu0 %v269
  %v393 = vpop.f32.mrf.mxu0
  %v394 = vadd.f32 0.0, %v393
  %v395 = vpop.f32.mrf.mxu0
  %v396 = vadd.f32 0.0, %v395
  %397 = vmatmul.bf16.gmra.mxu0 %v272
  %v398 = vpop.f32.mrf.mxu0
  %v399 = vadd.f32 0.0, %v398
  %v400 = vpop.f32.mrf.mxu0
  %v401 = vadd.f32 0.0, %v400
  %402 = vmatmul.bf16.gmra.mxu0 %v275
  %v403 = vpop.f32.mrf.mxu0
  %v404 = vadd.f32 0.0, %v403
  %v405 = vpop.f32.mrf.mxu0
  %v406 = vadd.f32 0.0, %v405
  %407 = vmatmul.bf16.gmra.mxu0 %v278
  %v408 = vpop.f32.mrf.mxu0
  %v409 = vadd.f32 0.0, %v408
  %v410 = vpop.f32.mrf.mxu0
  %v411 = vadd.f32 0.0, %v410
  %412 = vmatmul.bf16.gmra.mxu0 %v281
  %v413 = vpop.f32.mrf.mxu0
  %v414 = vadd.f32 0.0, %v413
  %v415 = vpop.f32.mrf.mxu0
  %v416 = vadd.f32 0.0, %v415
  %417 = vmatmul.bf16.gmra.mxu0 %v284
  %v418 = vpop.f32.mrf.mxu0
  %v419 = vadd.f32 0.0, %v418
  %v420 = vpop.f32.mrf.mxu0
  %v421 = vadd.f32 0.0, %v420
  %422 = vmatmul.bf16.gmra.mxu0 %v287
  %v423 = vpop.f32.mrf.mxu0
  %v424 = vadd.f32 0.0, %v423
  %v425 = vpop.f32.mrf.mxu0
  %v426 = vadd.f32 0.0, %v425
  %427 = vmatmul.bf16.gmra.mxu0 %v290
  %v428 = vpop.f32.mrf.mxu0
  %v429 = vadd.f32 0.0, %v428
  %v430 = vpop.f32.mrf.mxu0
  %v431 = vadd.f32 0.0, %v430
  %432 = vmatmul.bf16.gmra.mxu0 %v293
  %v433 = vpop.f32.mrf.mxu0
  %v434 = vadd.f32 0.0, %v433
  %v435 = vpop.f32.mrf.mxu0
  %v436 = vadd.f32 0.0, %v435
  %437 = vmatmul.bf16.gmra.mxu0 %v296
  %v438 = vpop.f32.mrf.mxu0
  %v439 = vadd.f32 0.0, %v438
  %v440 = vpop.f32.mrf.mxu0
  %v441 = vadd.f32 0.0, %v440
  %442 = vmatmul.bf16.gmra.mxu0 %v299
  %v443 = vpop.f32.mrf.mxu0
  %v444 = vadd.f32 0.0, %v443
  %v445 = vpop.f32.mrf.mxu0
  %v446 = vadd.f32 0.0, %v445
  %447 = vmatmul.bf16.gmra.mxu0 %v302
  %v448 = vpop.f32.mrf.mxu0
  %v449 = vadd.f32 0.0, %v448
  %v450 = vpop.f32.mrf.mxu0
  %v451 = vadd.f32 0.0, %v450
  %452 = vmatmul.bf16.gmra.mxu0 %v305
  %v453 = vpop.f32.mrf.mxu0
  %v454 = vadd.f32 0.0, %v453
  %v455 = vpop.f32.mrf.mxu0
  %v456 = vadd.f32 0.0, %v455
  %457 = vmatmul.bf16.gmra.mxu0 %v308
  %v458 = vpop.f32.mrf.mxu0
  %v459 = vadd.f32 0.0, %v458
  %v460 = vpop.f32.mrf.mxu0
  %v461 = vadd.f32 0.0, %v460
  %462 = vmatmul.bf16.gmra.mxu0 %v311
  %v463 = vpop.f32.mrf.mxu0
  %v464 = vadd.f32 0.0, %v463
  %v465 = vpop.f32.mrf.mxu0
  %v466 = vadd.f32 0.0, %v465
  %467 = vmatmul.bf16.gmra.mxu0 %v314
  %v468 = vpop.f32.mrf.mxu0
  %v469 = vadd.f32 0.0, %v468
  %v470 = vpop.f32.mrf.mxu0
  %v471 = vadd.f32 0.0, %v470
  %472 = vmatmul.bf16.gmra.mxu0 %v317
  %v473 = vpop.f32.mrf.mxu0
  %v474 = vadd.f32 0.0, %v473
  %v475 = vpop.f32.mrf.mxu0
  %v476 = vadd.f32 0.0, %v475
  %477 = vmatmul.bf16.gmra.mxu0 %v320
  %v478 = vpop.f32.mrf.mxu0
  %v479 = vadd.f32 0.0, %v478
  %v480 = vpop.f32.mrf.mxu0
  %v481 = vadd.f32 0.0, %v480
  %482 = vmatmul.bf16.gmra.mxu0 %v323
  %v483 = vpop.f32.mrf.mxu0
  %v484 = vadd.f32 0.0, %v483
  %v485 = vpop.f32.mrf.mxu0
  %v486 = vadd.f32 0.0, %v485
  %487 = vmatmul.bf16.gmra.mxu0 %v326
  %v488 = vpop.f32.mrf.mxu0
  %v489 = vadd.f32 0.0, %v488
  %v490 = vpop.f32.mrf.mxu0
  %v491 = vadd.f32 0.0, %v490
  %492 = vmatmul.bf16.gmra.mxu0 %v329
  %v493 = vpop.f32.mrf.mxu0
  %v494 = vadd.f32 0.0, %v493
  %v495 = vpop.f32.mrf.mxu0
  %v496 = vadd.f32 0.0, %v495
  %497 = vmatmul.bf16.gmra.mxu0 %v332
  %v498 = vpop.f32.mrf.mxu0
  %v499 = vadd.f32 0.0, %v498
  %v500 = vpop.f32.mrf.mxu0
  %v501 = vadd.f32 0.0, %v500
  %502 = vmatmul.bf16.gmra.mxu0 %v335
  %v503 = vpop.f32.mrf.mxu0
  %v504 = vadd.f32 0.0, %v503
  %v505 = vpop.f32.mrf.mxu0
  %v506 = vadd.f32 0.0, %v505
  %507 = vmatmul.bf16.gmra.mxu0 %v338
  %v508 = vpop.f32.mrf.mxu0
  %v509 = vadd.f32 0.0, %v508
  %v510 = vpop.f32.mrf.mxu0
  %v511 = vadd.f32 0.0, %v510
  %512 = vdwg.mxu0
  %v513 = vld [vmem:[%s2] sm:$0x1]
  %v515 = vperm.slane %v513, 0
  %v517 = vmul.f32 %v354, %v515
  %v518 = vmul.f32 %v356, %v515
  %v519 = vmul.f32 %v359, %v515
  %v520 = vmul.f32 %v361, %v515
  %v521 = vmul.f32 %v364, %v515
  %v522 = vmul.f32 %v366, %v515
  %v523 = vmul.f32 %v369, %v515
  %v524 = vmul.f32 %v371, %v515
  %v525 = vmul.f32 %v374, %v515
  %v526 = vmul.f32 %v376, %v515
  %v527 = vmul.f32 %v379, %v515
  %v528 = vmul.f32 %v381, %v515
  %v529 = vmul.f32 %v384, %v515
  %v530 = vmul.f32 %v386, %v515
  %v531 = vmul.f32 %v389, %v515
  %v532 = vmul.f32 %v391, %v515
  %v533 = vmul.f32 %v394, %v515
  %v534 = vmul.f32 %v396, %v515
  %v535 = vmul.f32 %v399, %v515
  %v536 = vmul.f32 %v401, %v515
  %v537 = vmul.f32 %v404, %v515
  %v538 = vmul.f32 %v406, %v515
  %v539 = vmul.f32 %v409, %v515
  %v540 = vmul.f32 %v411, %v515
  %v541 = vmul.f32 %v414, %v515
  %v542 = vmul.f32 %v416, %v515
  %v543 = vmul.f32 %v419, %v515
  %v544 = vmul.f32 %v421, %v515
  %v545 = vmul.f32 %v424, %v515
  %v546 = vmul.f32 %v426, %v515
  %v547 = vmul.f32 %v429, %v515
  %v548 = vmul.f32 %v431, %v515
  %v549 = vmul.f32 %v434, %v515
  %v550 = vmul.f32 %v436, %v515
  %v551 = vmul.f32 %v439, %v515
  %v552 = vmul.f32 %v441, %v515
  %v553 = vmul.f32 %v444, %v515
  %v554 = vmul.f32 %v446, %v515
  %v555 = vmul.f32 %v449, %v515
  %v556 = vmul.f32 %v451, %v515
  %v557 = vmul.f32 %v454, %v515
  %v558 = vmul.f32 %v456, %v515
  %v559 = vmul.f32 %v459, %v515
  %v560 = vmul.f32 %v461, %v515
  %v561 = vmul.f32 %v464, %v515
  %v562 = vmul.f32 %v466, %v515
  %v563 = vmul.f32 %v469, %v515
  %v564 = vmul.f32 %v471, %v515
  %v565 = vmul.f32 %v474, %v515
  %v566 = vmul.f32 %v476, %v515
  %v567 = vmul.f32 %v479, %v515
  %v568 = vmul.f32 %v481, %v515
  %v569 = vmul.f32 %v484, %v515
  %v570 = vmul.f32 %v486, %v515
  %v571 = vmul.f32 %v489, %v515
  %v572 = vmul.f32 %v491, %v515
  %v573 = vmul.f32 %v494, %v515
  %v574 = vmul.f32 %v496, %v515
  %v575 = vmul.f32 %v499, %v515
  %v576 = vmul.f32 %v501, %v515
  %v577 = vmul.f32 %v504, %v515
  %v578 = vmul.f32 %v506, %v515
  %v579 = vmul.f32 %v509, %v515
  %v580 = vmul.f32 %v511, %v515
  %v581 = vld [vmem:[%s3] sm:$0x1]
  %v583 = vperm.slane %v581, 0
  %v585 = vadd.f32 %v517, %v583
  %v586 = vadd.f32 %v518, %v583
  %v587 = vadd.f32 %v519, %v583
  %v588 = vadd.f32 %v520, %v583
  %v589 = vadd.f32 %v521, %v583
  %v590 = vadd.f32 %v522, %v583
  %v591 = vadd.f32 %v523, %v583
  %v592 = vadd.f32 %v524, %v583
  %v593 = vadd.f32 %v525, %v583
  %v594 = vadd.f32 %v526, %v583
  %v595 = vadd.f32 %v527, %v583
  %v596 = vadd.f32 %v528, %v583
  %v597 = vadd.f32 %v529, %v583
  %v598 = vadd.f32 %v530, %v583
  %v599 = vadd.f32 %v531, %v583
  %v600 = vadd.f32 %v532, %v583
  %v601 = vadd.f32 %v533, %v583
  %v602 = vadd.f32 %v534, %v583
  %v603 = vadd.f32 %v535, %v583
  %v604 = vadd.f32 %v536, %v583
  %v605 = vadd.f32 %v537, %v583
  %v606 = vadd.f32 %v538, %v583
  %v607 = vadd.f32 %v539, %v583
  %v608 = vadd.f32 %v540, %v583
  %v609 = vadd.f32 %v541, %v583
  %v610 = vadd.f32 %v542, %v583
  %v611 = vadd.f32 %v543, %v583
  %v612 = vadd.f32 %v544, %v583
  %v613 = vadd.f32 %v545, %v583
  %v614 = vadd.f32 %v546, %v583
  %v615 = vadd.f32 %v547, %v583
  %v616 = vadd.f32 %v548, %v583
  %v617 = vadd.f32 %v549, %v583
  %v618 = vadd.f32 %v550, %v583
  %v619 = vadd.f32 %v551, %v583
  %v620 = vadd.f32 %v552, %v583
  %v621 = vadd.f32 %v553, %v583
  %v622 = vadd.f32 %v554, %v583
  %v623 = vadd.f32 %v555, %v583
  %v624 = vadd.f32 %v556, %v583
  %v625 = vadd.f32 %v557, %v583
  %v626 = vadd.f32 %v558, %v583
  %v627 = vadd.f32 %v559, %v583
  %v628 = vadd.f32 %v560, %v583
  %v629 = vadd.f32 %v561, %v583
  %v630 = vadd.f32 %v562, %v583
  %v631 = vadd.f32 %v563, %v583
  %v632 = vadd.f32 %v564, %v583
  %v633 = vadd.f32 %v565, %v583
  %v634 = vadd.f32 %v566, %v583
  %v635 = vadd.f32 %v567, %v583
  %v636 = vadd.f32 %v568, %v583
  %v637 = vadd.f32 %v569, %v583
  %v638 = vadd.f32 %v570, %v583
  %v639 = vadd.f32 %v571, %v583
  %v640 = vadd.f32 %v572, %v583
  %v641 = vadd.f32 %v573, %v583
  %v642 = vadd.f32 %v574, %v583
  %v643 = vadd.f32 %v575, %v583
  %v644 = vadd.f32 %v576, %v583
  %v645 = vadd.f32 %v577, %v583
  %v646 = vadd.f32 %v578, %v583
  %v647 = vadd.f32 %v579, %v583
  %v648 = vadd.f32 %v580, %v583
  %v649 = vmax.f32 %v585, 0.0
  %v650 = vmax.f32 %v586, 0.0
  %v651 = vmax.f32 %v587, 0.0
  %v652 = vmax.f32 %v588, 0.0
  %v653 = vmax.f32 %v589, 0.0
  %v654 = vmax.f32 %v590, 0.0
  %v655 = vmax.f32 %v591, 0.0
  %v656 = vmax.f32 %v592, 0.0
  %v657 = vmax.f32 %v593, 0.0
  %v658 = vmax.f32 %v594, 0.0
  %v659 = vmax.f32 %v595, 0.0
  %v660 = vmax.f32 %v596, 0.0
  %v661 = vmax.f32 %v597, 0.0
  %v662 = vmax.f32 %v598, 0.0
  %v663 = vmax.f32 %v599, 0.0
  %v664 = vmax.f32 %v600, 0.0
  %v665 = vmax.f32 %v601, 0.0
  %v666 = vmax.f32 %v602, 0.0
  %v667 = vmax.f32 %v603, 0.0
  %v668 = vmax.f32 %v604, 0.0
  %v669 = vmax.f32 %v605, 0.0
  %v670 = vmax.f32 %v606, 0.0
  %v671 = vmax.f32 %v607, 0.0
  %v672 = vmax.f32 %v608, 0.0
  %v673 = vmax.f32 %v609, 0.0
  %v674 = vmax.f32 %v610, 0.0
  %v675 = vmax.f32 %v611, 0.0
  %v676 = vmax.f32 %v612, 0.0
  %v677 = vmax.f32 %v613, 0.0
  %v678 = vmax.f32 %v614, 0.0
  %v679 = vmax.f32 %v615, 0.0
  %v680 = vmax.f32 %v616, 0.0
  %v681 = vmax.f32 %v617, 0.0
  %v682 = vmax.f32 %v618, 0.0
  %v683 = vmax.f32 %v619, 0.0
  %v684 = vmax.f32 %v620, 0.0
  %v685 = vmax.f32 %v621, 0.0
  %v686 = vmax.f32 %v622, 0.0
  %v687 = vmax.f32 %v623, 0.0
  %v688 = vmax.f32 %v624, 0.0
  %v689 = vmax.f32 %v625, 0.0
  %v690 = vmax.f32 %v626, 0.0
  %v691 = vmax.f32 %v627, 0.0
  %v692 = vmax.f32 %v628, 0.0
  %v693 = vmax.f32 %v629, 0.0
  %v694 = vmax.f32 %v630, 0.0
  %v695 = vmax.f32 %v631, 0.0
  %v696 = vmax.f32 %v632, 0.0
  %v697 = vmax.f32 %v633, 0.0
  %v698 = vmax.f32 %v634, 0.0
  %v699 = vmax.f32 %v635, 0.0
  %v700 = vmax.f32 %v636, 0.0
  %v701 = vmax.f32 %v637, 0.0
  %v702 = vmax.f32 %v638, 0.0
  %v703 = vmax.f32 %v639, 0.0
  %v704 = vmax.f32 %v640, 0.0
  %v705 = vmax.f32 %v641, 0.0
  %v706 = vmax.f32 %v642, 0.0
  %v707 = vmax.f32 %v643, 0.0
  %v708 = vmax.f32 %v644, 0.0
  %v709 = vmax.f32 %v645, 0.0
  %v710 = vmax.f32 %v646, 0.0
  %v711 = vmax.f32 %v647, 0.0
  %v712 = vmax.f32 %v648, 0.0
  %v713 = vpack.c.bf16 %v649, %v649
  %v714 = vpack.c.bf16 %v650, %v650
  %v715 = vpack.c.bf16 %v651, %v651
  %v716 = vpack.c.bf16 %v652, %v652
  %v717 = vpack.c.bf16 %v653, %v653
  %v718 = vpack.c.bf16 %v654, %v654
  %v719 = vpack.c.bf16 %v655, %v655
  %v720 = vpack.c.bf16 %v656, %v656
  %v721 = vpack.c.bf16 %v657, %v657
  %v722 = vpack.c.bf16 %v658, %v658
  %v723 = vpack.c.bf16 %v659, %v659
  %v724 = vpack.c.bf16 %v660, %v660
  %v725 = vpack.c.bf16 %v661, %v661
  %v726 = vpack.c.bf16 %v662, %v662
  %v727 = vpack.c.bf16 %v663, %v663
  %v728 = vpack.c.bf16 %v664, %v664
  %v729 = vpack.c.bf16 %v665, %v665
  %v730 = vpack.c.bf16 %v666, %v666
  %v731 = vpack.c.bf16 %v667, %v667
  %v732 = vpack.c.bf16 %v668, %v668
  %v733 = vpack.c.bf16 %v669, %v669
  %v734 = vpack.c.bf16 %v670, %v670
  %v735 = vpack.c.bf16 %v671, %v671
  %v736 = vpack.c.bf16 %v672, %v672
  %v737 = vpack.c.bf16 %v673, %v673
  %v738 = vpack.c.bf16 %v674, %v674
  %v739 = vpack.c.bf16 %v675, %v675
  %v740 = vpack.c.bf16 %v676, %v676
  %v741 = vpack.c.bf16 %v677, %v677
  %v742 = vpack.c.bf16 %v678, %v678
  %v743 = vpack.c.bf16 %v679, %v679
  %v744 = vpack.c.bf16 %v680, %v680
  %v745 = vpack.c.bf16 %v681, %v681
  %v746 = vpack.c.bf16 %v682, %v682
  %v747 = vpack.c.bf16 %v683, %v683
  %v748 = vpack.c.bf16 %v684, %v684
  %v749 = vpack.c.bf16 %v685, %v685
  %v750 = vpack.c.bf16 %v686, %v686
  %v751 = vpack.c.bf16 %v687, %v687
  %v752 = vpack.c.bf16 %v688, %v688
  %v753 = vpack.c.bf16 %v689, %v689
  %v754 = vpack.c.bf16 %v690, %v690
  %v755 = vpack.c.bf16 %v691, %v691
  %v756 = vpack.c.bf16 %v692, %v692
  %v757 = vpack.c.bf16 %v693, %v693
  %v758 = vpack.c.bf16 %v694, %v694
  %v759 = vpack.c.bf16 %v695, %v695
  %v760 = vpack.c.bf16 %v696, %v696
  %v761 = vpack.c.bf16 %v697, %v697
  %v762 = vpack.c.bf16 %v698, %v698
  %v763 = vpack.c.bf16 %v699, %v699
  %v764 = vpack.c.bf16 %v700, %v700
  %v765 = vpack.c.bf16 %v701, %v701
  %v766 = vpack.c.bf16 %v702, %v702
  %v767 = vpack.c.bf16 %v703, %v703
  %v768 = vpack.c.bf16 %v704, %v704
  %v769 = vpack.c.bf16 %v705, %v705
  %v770 = vpack.c.bf16 %v706, %v706
  %v771 = vpack.c.bf16 %v707, %v707
  %v772 = vpack.c.bf16 %v708, %v708
  %v773 = vpack.c.bf16 %v709, %v709
  %v774 = vpack.c.bf16 %v710, %v710
  %v775 = vpack.c.bf16 %v711, %v711
  %v776 = vpack.c.bf16 %v712, %v712
  %vm777 = vcmask 60416
  %778 = vst.msk [vmem:[%s4] sm:$0xf] %vm777, %v713
  %779 = vst.msk [vmem:[%s4 + $0x4] sm:$0xf] %vm777, %v714
  %780 = vst.msk [vmem:[%s4 + $0x8] sm:$0xf] %vm777, %v715
  %781 = vst.msk [vmem:[%s4 + $0xc] sm:$0xf] %vm777, %v716
  %782 = vst.msk [vmem:[%s4 + $0x10] sm:$0xf] %vm777, %v717
  %783 = vst.msk [vmem:[%s4 + $0x14] sm:$0xf] %vm777, %v718
  %784 = vst.msk [vmem:[%s4 + $0x18] sm:$0xf] %vm777, %v719
  %785 = vst.msk [vmem:[%s4 + $0x1c] sm:$0xf] %vm777, %v720
  %786 = vst.msk [vmem:[%s4 + $0x20] sm:$0xf] %vm777, %v721
  %787 = vst.msk [vmem:[%s4 + $0x24] sm:$0xf] %vm777, %v722
  %788 = vst.msk [vmem:[%s4 + $0x28] sm:$0xf] %vm777, %v723
  %789 = vst.msk [vmem:[%s4 + $0x2c] sm:$0xf] %vm777, %v724
  %790 = vst.msk [vmem:[%s4 + $0x30] sm:$0xf] %vm777, %v725
  %791 = vst.msk [vmem:[%s4 + $0x34] sm:$0xf] %vm777, %v726
  %792 = vst.msk [vmem:[%s4 + $0x38] sm:$0xf] %vm777, %v727
  %793 = vst.msk [vmem:[%s4 + $0x3c] sm:$0xf] %vm777, %v728
  %794 = vst.msk [vmem:[%s4 + $0x40] sm:$0xf] %vm777, %v729
  %795 = vst.msk [vmem:[%s4 + $0x44] sm:$0xf] %vm777, %v730
  %796 = vst.msk [vmem:[%s4 + $0x48] sm:$0xf] %vm777, %v731
  %797 = vst.msk [vmem:[%s4 + $0x4c] sm:$0xf] %vm777, %v732
  %798 = vst.msk [vmem:[%s4 + $0x50] sm:$0xf] %vm777, %v733
  %799 = vst.msk [vmem:[%s4 + $0x54] sm:$0xf] %vm777, %v734
  %800 = vst.msk [vmem:[%s4 + $0x58] sm:$0xf] %vm777, %v735
  %801 = vst.msk [vmem:[%s4 + $0x5c] sm:$0xf] %vm777, %v736
  %802 = vst.msk [vmem:[%s4 + $0x60] sm:$0xf] %vm777, %v737
  %803 = vst.msk [vmem:[%s4 + $0x64] sm:$0xf] %vm777, %v738
  %804 = vst.msk [vmem:[%s4 + $0x68] sm:$0xf] %vm777, %v739
  %805 = vst.msk [vmem:[%s4 + $0x6c] sm:$0xf] %vm777, %v740
  %806 = vst.msk [vmem:[%s4 + $0x70] sm:$0xf] %vm777, %v741
  %807 = vst.msk [vmem:[%s4 + $0x74] sm:$0xf] %vm777, %v742
  %808 = vst.msk [vmem:[%s4 + $0x78] sm:$0xf] %vm777, %v743
  %809 = vst.msk [vmem:[%s4 + $0x7c] sm:$0xf] %vm777, %v744
  %810 = vst.msk [vmem:[%s4 + $0x80] sm:$0xf] %vm777, %v745
  %811 = vst.msk [vmem:[%s4 + $0x84] sm:$0xf] %vm777, %v746
  %812 = vst.msk [vmem:[%s4 + $0x88] sm:$0xf] %vm777, %v747
  %813 = vst.msk [vmem:[%s4 + $0x8c] sm:$0xf] %vm777, %v748
  %814 = vst.msk [vmem:[%s4 + $0x90] sm:$0xf] %vm777, %v749
  %815 = vst.msk [vmem:[%s4 + $0x94] sm:$0xf] %vm777, %v750
  %816 = vst.msk [vmem:[%s4 + $0x98] sm:$0xf] %vm777, %v751
  %817 = vst.msk [vmem:[%s4 + $0x9c] sm:$0xf] %vm777, %v752
  %818 = vst.msk [vmem:[%s4 + $0xa0] sm:$0xf] %vm777, %v753
  %819 = vst.msk [vmem:[%s4 + $0xa4] sm:$0xf] %vm777, %v754
  %820 = vst.msk [vmem:[%s4 + $0xa8] sm:$0xf] %vm777, %v755
  %821 = vst.msk [vmem:[%s4 + $0xac] sm:$0xf] %vm777, %v756
  %822 = vst.msk [vmem:[%s4 + $0xb0] sm:$0xf] %vm777, %v757
  %823 = vst.msk [vmem:[%s4 + $0xb4] sm:$0xf] %vm777, %v758
  %824 = vst.msk [vmem:[%s4 + $0xb8] sm:$0xf] %vm777, %v759
  %825 = vst.msk [vmem:[%s4 + $0xbc] sm:$0xf] %vm777, %v760
  %826 = vst.msk [vmem:[%s4 + $0xc0] sm:$0xf] %vm777, %v761
  %827 = vst.msk [vmem:[%s4 + $0xc4] sm:$0xf] %vm777, %v762
  %828 = vst.msk [vmem:[%s4 + $0xc8] sm:$0xf] %vm777, %v763
  %829 = vst.msk [vmem:[%s4 + $0xcc] sm:$0xf] %vm777, %v764
  %830 = vst.msk [vmem:[%s4 + $0xd0] sm:$0xf] %vm777, %v765
  %831 = vst.msk [vmem:[%s4 + $0xd4] sm:$0xf] %vm777, %v766
  %832 = vst.msk [vmem:[%s4 + $0xd8] sm:$0xf] %vm777, %v767
  %833 = vst.msk [vmem:[%s4 + $0xdc] sm:$0xf] %vm777, %v768
  %834 = vst.msk [vmem:[%s4 + $0xe0] sm:$0xf] %vm777, %v769
  %835 = vst.msk [vmem:[%s4 + $0xe4] sm:$0xf] %vm777, %v770
  %836 = vst.msk [vmem:[%s4 + $0xe8] sm:$0xf] %vm777, %v771
  %837 = vst.msk [vmem:[%s4 + $0xec] sm:$0xf] %vm777, %v772
  %838 = vst.msk [vmem:[%s4 + $0xf0] sm:$0xf] %vm777, %v773
  %839 = vst.msk [vmem:[%s4 + $0xf4] sm:$0xf] %vm777, %v774
  %840 = vst.msk [vmem:[%s4 + $0xf8] sm:$0xf] %vm777, %v775
  %841 = vst.msk [vmem:[%s4 + $0xfc] sm:$0xf] %vm777, %v776
  // Predicated region
  $region18: #{_lambda_.31} parent=0 // pred_check
    _
  $region19: #{_lambda_.31} parent=0 // pred_check_branch
    %843 = sbr.rel (0) target = $region21
  $region20: #{_lambda_.31} parent=0 // pred_region
    _
  $region21: #{_lambda_.31} parent=0 // pred_fallthru
    _
  // Predicated region
  $region22: #{_lambda_.31} parent=0 // pred_check
    _
  $region23: #{_lambda_.31} parent=0 // pred_check_branch
    %845 = sbr.rel (0) target = $region25
  $region24: #{_lambda_.31} parent=0 // pred_region
    _
  $region25: #{_lambda_.31} parent=0 // pred_fallthru
    _

// kernel: _lambda_.34
$region0: #{_lambda_.34}
  #allocation0 [shape = 'u32[]', space=smem, size = 0x4, offset = 0x4, fixed_abs, tag = 'smem constant byte address 0x4 - core index']
  #allocation1 [shape = 'u32[72,128]{1,0:T(1,128)}', space=vmem, size = 0x9000, scoped, tag = 'internal scratch']
  %s0 = inlined_call_operand.vmem [shape: bf16[128,8], index: 0, kind: input, shape index: {}]
  %s1 = inlined_call_operand.vmem [shape: bf16[8,8], index: 1, kind: input, shape index: {}]
  %s2 = inlined_call_operand.vmem [shape: f32[1,8], index: 2, kind: input, shape index: {}]
  %s3 = inlined_call_operand.vmem [shape: f32[1,8], index: 3, kind: input, shape index: {}]
  %s4 = inlined_call_operand.vmem [shape: bf16[128,8], index: 4, kind: output, shape index: {}]
  %s5 = sld [smem:[#allocation0]]
  $region26: #{_lambda_.34} parent=0
    _
  %s7 = ssub.s32 1, %s5
  %s8 = scalar_select 0, %s7, %s5
  // Predicated region
  $region2: #{_lambda_.34} parent=0 // pred_check
    _
  $region3: #{_lambda_.34} parent=0 // pred_check_branch
    %10 = sbr.rel (0) target = $region5
  $region4: #{_lambda_.34} parent=0 // pred_region
    _
  $region5: #{_lambda_.34} parent=0 // pred_fallthru
    _
  // Predicated region
  $region6: #{_lambda_.34} parent=0 // pred_check
    _
  $region7: #{_lambda_.34} parent=0 // pred_check_branch
    %12 = sbr.rel (0) target = $region9
  $region8: #{_lambda_.34} parent=0 // pred_region
    _
  $region9: #{_lambda_.34} parent=0 // pred_fallthru
    _
  // Predicated region
  $region10: #{_lambda_.34} parent=0 // pred_check
    _
  $region11: #{_lambda_.34} parent=0 // pred_check_branch
    %14 = sbr.rel (0) target = $region13
  $region12: #{_lambda_.34} parent=0 // pred_region
    _
  $region13: #{_lambda_.34} parent=0 // pred_fallthru
    _
  // Predicated region
  $region14: #{_lambda_.34} parent=0 // pred_check
    _
  $region15: #{_lambda_.34} parent=0 // pred_check_branch
    %16 = sbr.rel (0) target = $region17
  $region16: #{_lambda_.34} parent=0 // pred_region
    _
  $region17: #{_lambda_.34} parent=0 // pred_fallthru
    _
  %v18 = vld [vmem:[%s0] sm:$0xf]
  %v19 = vld [vmem:[%s0 + $0x4] sm:$0xf]
  %v20 = vld [vmem:[%s0 + $0x8] sm:$0xf]
  %v21 = vld [vmem:[%s0 + $0xc] sm:$0xf]
  %v22 = vld [vmem:[%s0 + $0x10] sm:$0xf]
  %v23 = vld [vmem:[%s0 + $0x14] sm:$0xf]
  %v24 = vld [vmem:[%s0 + $0x18] sm:$0xf]
  %v25 = vld [vmem:[%s0 + $0x1c] sm:$0xf]
  %v26 = vld [vmem:[%s0 + $0x20] sm:$0xf]
  %v27 = vld [vmem:[%s0 + $0x24] sm:$0xf]
  %v28 = vld [vmem:[%s0 + $0x28] sm:$0xf]
  %v29 = vld [vmem:[%s0 + $0x2c] sm:$0xf]
  %v30 = vld [vmem:[%s0 + $0x30] sm:$0xf]
  %v31 = vld [vmem:[%s0 + $0x34] sm:$0xf]
  %v32 = vld [vmem:[%s0 + $0x38] sm:$0xf]
  %v33 = vld [vmem:[%s0 + $0x3c] sm:$0xf]
  %v34 = vld [vmem:[%s1] sm:$0xf]
  %v51 = vunpack.c.l.b16 %v18
  %v52 = vunpack.c.l.b16 %v19
  %v53 = vunpack.c.l.b16 %v20
  %v54 = vunpack.c.l.b16 %v21
  %v55 = vunpack.c.l.b16 %v22
  %v56 = vunpack.c.l.b16 %v23
  %v57 = vunpack.c.l.b16 %v24
  %v58 = vunpack.c.l.b16 %v25
  %v59 = vunpack.c.l.b16 %v26
  %v60 = vunpack.c.l.b16 %v27
  %v61 = vunpack.c.l.b16 %v28
  %v62 = vunpack.c.l.b16 %v29
  %v63 = vunpack.c.l.b16 %v30
  %v64 = vunpack.c.l.b16 %v31
  %v65 = vunpack.c.l.b16 %v32
  %v66 = vunpack.c.l.b16 %v33
  %v67 = vpack.c.b16 %v52, %v51
  %v68 = vpack.c.b16 %v54, %v53
  %v69 = vpack.c.b16 %v56, %v55
  %v70 = vpack.c.b16 %v58, %v57
  %v71 = vpack.c.b16 %v60, %v59
  %v72 = vpack.c.b16 %v62, %v61
  %v73 = vpack.c.b16 %v64, %v63
  %v74 = vpack.c.b16 %v66, %v65
  %vm75 = vcmask 64512
  %v77 = vsel %vm75, %v67, 0
  %v80 = vsel %vm75, %v68, 0
  %v83 = vsel %vm75, %v69, 0
  %v86 = vsel %vm75, %v70, 0
  %v89 = vsel %vm75, %v71, 0
  %v92 = vsel %vm75, %v72, 0
  %v95 = vsel %vm75, %v73, 0
  %v98 = vsel %vm75, %v74, 0
  %vm100 = vcmask 1043456
  %v102 = vsel %vm100, %v34, 0
  %104 = vmatpush.bf16.msra.mxu0 0
  %105 = vmatpush.bf16.msra.mxu0 0
  %106 = vmatpush.bf16.msra.mxu0 0
  %107 = vmatpush.bf16.msra.mxu0 0
  %108 = vmatpush.bf16.msra.mxu0 0
  %109 = vmatpush.bf16.msra.mxu0 0
  %110 = vmatpush.bf16.msra.mxu0 0
  %111 = vmatpush.bf16.msra.mxu0 %v102
  %112 = vmatmul.bf16.gmra.mxu0 %v77
  %v113 = vpop.f32.mrf.mxu0
  %v114 = vadd.f32 0.0, %v113
  %v115 = vpop.f32.mrf.mxu0
  %v116 = vadd.f32 0.0, %v115
  %117 = vmatmul.bf16.gmra.mxu0 %v80
  %v118 = vpop.f32.mrf.mxu0
  %v119 = vadd.f32 0.0, %v118
  %v120 = vpop.f32.mrf.mxu0
  %v121 = vadd.f32 0.0, %v120
  %122 = vmatmul.bf16.gmra.mxu0 %v83
  %v123 = vpop.f32.mrf.mxu0
  %v124 = vadd.f32 0.0, %v123
  %v125 = vpop.f32.mrf.mxu0
  %v126 = vadd.f32 0.0, %v125
  %127 = vmatmul.bf16.gmra.mxu0 %v86
  %v128 = vpop.f32.mrf.mxu0
  %v129 = vadd.f32 0.0, %v128
  %v130 = vpop.f32.mrf.mxu0
  %v131 = vadd.f32 0.0, %v130
  %132 = vmatmul.bf16.gmra.mxu0 %v89
  %v133 = vpop.f32.mrf.mxu0
  %v134 = vadd.f32 0.0, %v133
  %v135 = vpop.f32.mrf.mxu0
  %v136 = vadd.f32 0.0, %v135
  %137 = vmatmul.bf16.gmra.mxu0 %v92
  %v138 = vpop.f32.mrf.mxu0
  %v139 = vadd.f32 0.0, %v138
  %v140 = vpop.f32.mrf.mxu0
  %v141 = vadd.f32 0.0, %v140
  %142 = vmatmul.bf16.gmra.mxu0 %v95
  %v143 = vpop.f32.mrf.mxu0
  %v144 = vadd.f32 0.0, %v143
  %v145 = vpop.f32.mrf.mxu0
  %v146 = vadd.f32 0.0, %v145
  %147 = vmatmul.bf16.gmra.mxu0 %v98
  %v148 = vpop.f32.mrf.mxu0
  %v149 = vadd.f32 0.0, %v148
  %v150 = vpop.f32.mrf.mxu0
  %v151 = vadd.f32 0.0, %v150
  %152 = vdwg.mxu0
  %v153 = vld [vmem:[%s2] sm:$0x1]
  %v155 = vperm.slane %v153, 0
  %v157 = vmul.f32 %v114, %v155
  %v158 = vmul.f32 %v116, %v155
  %v159 = vmul.f32 %v119, %v155
  %v160 = vmul.f32 %v121, %v155
  %v161 = vmul.f32 %v124, %v155
  %v162 = vmul.f32 %v126, %v155
  %v163 = vmul.f32 %v129, %v155
  %v164 = vmul.f32 %v131, %v155
  %v165 = vmul.f32 %v134, %v155
  %v166 = vmul.f32 %v136, %v155
  %v167 = vmul.f32 %v139, %v155
  %v168 = vmul.f32 %v141, %v155
  %v169 = vmul.f32 %v144, %v155
  %v170 = vmul.f32 %v146, %v155
  %v171 = vmul.f32 %v149, %v155
  %v172 = vmul.f32 %v151, %v155
  %v173 = vld [vmem:[%s3] sm:$0x1]
  %v175 = vperm.slane %v173, 0
  %v177 = vadd.f32 %v157, %v175
  %v178 = vadd.f32 %v158, %v175
  %v179 = vadd.f32 %v159, %v175
  %v180 = vadd.f32 %v160, %v175
  %v181 = vadd.f32 %v161, %v175
  %v182 = vadd.f32 %v162, %v175
  %v183 = vadd.f32 %v163, %v175
  %v184 = vadd.f32 %v164, %v175
  %v185 = vadd.f32 %v165, %v175
  %v186 = vadd.f32 %v166, %v175
  %v187 = vadd.f32 %v167, %v175
  %v188 = vadd.f32 %v168, %v175
  %v189 = vadd.f32 %v169, %v175
  %v190 = vadd.f32 %v170, %v175
  %v191 = vadd.f32 %v171, %v175
  %v192 = vadd.f32 %v172, %v175
  %v193 = vmax.f32 %v177, 0.0
  %v194 = vmax.f32 %v178, 0.0
  %v195 = vmax.f32 %v179, 0.0
  %v196 = vmax.f32 %v180, 0.0
  %v197 = vmax.f32 %v181, 0.0
  %v198 = vmax.f32 %v182, 0.0
  %v199 = vmax.f32 %v183, 0.0
  %v200 = vmax.f32 %v184, 0.0
  %v201 = vmax.f32 %v185, 0.0
  %v202 = vmax.f32 %v186, 0.0
  %v203 = vmax.f32 %v187, 0.0
  %v204 = vmax.f32 %v188, 0.0
  %v205 = vmax.f32 %v189, 0.0
  %v206 = vmax.f32 %v190, 0.0
  %v207 = vmax.f32 %v191, 0.0
  %v208 = vmax.f32 %v192, 0.0
  %v209 = vpack.c.bf16 %v193, %v193
  %v210 = vpack.c.bf16 %v194, %v194
  %v211 = vpack.c.bf16 %v195, %v195
  %v212 = vpack.c.bf16 %v196, %v196
  %v213 = vpack.c.bf16 %v197, %v197
  %v214 = vpack.c.bf16 %v198, %v198
  %v215 = vpack.c.bf16 %v199, %v199
  %v216 = vpack.c.bf16 %v200, %v200
  %v217 = vpack.c.bf16 %v201, %v201
  %v218 = vpack.c.bf16 %v202, %v202
  %v219 = vpack.c.bf16 %v203, %v203
  %v220 = vpack.c.bf16 %v204, %v204
  %v221 = vpack.c.bf16 %v205, %v205
  %v222 = vpack.c.bf16 %v206, %v206
  %v223 = vpack.c.bf16 %v207, %v207
  %v224 = vpack.c.bf16 %v208, %v208
  %vm225 = vcmask 60416
  %226 = vst.msk [vmem:[%s4] sm:$0xf] %vm225, %v209
  %227 = vst.msk [vmem:[%s4 + $0x4] sm:$0xf] %vm225, %v210
  %228 = vst.msk [vmem:[%s4 + $0x8] sm:$0xf] %vm225, %v211
  %229 = vst.msk [vmem:[%s4 + $0xc] sm:$0xf] %vm225, %v212
  %230 = vst.msk [vmem:[%s4 + $0x10] sm:$0xf] %vm225, %v213
  %231 = vst.msk [vmem:[%s4 + $0x14] sm:$0xf] %vm225, %v214
  %232 = vst.msk [vmem:[%s4 + $0x18] sm:$0xf] %vm225, %v215
  %233 = vst.msk [vmem:[%s4 + $0x1c] sm:$0xf] %vm225, %v216
  %234 = vst.msk [vmem:[%s4 + $0x20] sm:$0xf] %vm225, %v217
  %235 = vst.msk [vmem:[%s4 + $0x24] sm:$0xf] %vm225, %v218
  %236 = vst.msk [vmem:[%s4 + $0x28] sm:$0xf] %vm225, %v219
  %237 = vst.msk [vmem:[%s4 + $0x2c] sm:$0xf] %vm225, %v220
  %238 = vst.msk [vmem:[%s4 + $0x30] sm:$0xf] %vm225, %v221
  %239 = vst.msk [vmem:[%s4 + $0x34] sm:$0xf] %vm225, %v222
  %240 = vst.msk [vmem:[%s4 + $0x38] sm:$0xf] %vm225, %v223
  %241 = vst.msk [vmem:[%s4 + $0x3c] sm:$0xf] %vm225, %v224
  // Predicated region
  $region18: #{_lambda_.34} parent=0 // pred_check
    _
  $region19: #{_lambda_.34} parent=0 // pred_check_branch
    %243 = sbr.rel (0) target = $region21
  $region20: #{_lambda_.34} parent=0 // pred_region
    _
  $region21: #{_lambda_.34} parent=0 // pred_fallthru
    _
  // Predicated region
  $region22: #{_lambda_.34} parent=0 // pred_check
    _
  $region23: #{_lambda_.34} parent=0 // pred_check_branch
    %245 = sbr.rel (0) target = $region25
  $region24: #{_lambda_.34} parent=0 // pred_region
    _
  $region25: #{_lambda_.34} parent=0 // pred_fallthru
    _

// kernel: _lambda_.33
$region0: #{_lambda_.33}
  #allocation0 [shape = 'u32[]', space=smem, size = 0x4, offset = 0x4, fixed_abs, tag = 'smem constant byte address 0x4 - core index']
  #allocation1 [shape = 'u32[72,128]{1,0:T(1,128)}', space=vmem, size = 0x9000, scoped, tag = 'internal scratch']
  %s0 = inlined_call_operand.vmem [shape: bf16[128,72], index: 0, kind: input, shape index: {}]
  %s1 = inlined_call_operand.vmem [shape: bf16[72,8], index: 1, kind: input, shape index: {}]
  %s2 = inlined_call_operand.vmem [shape: f32[1,8], index: 2, kind: input, shape index: {}]
  %s3 = inlined_call_operand.vmem [shape: f32[1,8], index: 3, kind: input, shape index: {}]
  %s4 = inlined_call_operand.vmem [shape: bf16[128,8], index: 4, kind: input, shape index: {}]
  %s5 = inlined_call_operand.vmem [shape: bf16[128,8], index: 5, kind: output, shape index: {}]
  %s6 = sld [smem:[#allocation0]]
  $region30: #{_lambda_.33} parent=0
    _
  %s8 = ssub.s32 1, %s6
  %s9 = scalar_select 0, %s8, %s6
  // Predicated region
  $region2: #{_lambda_.33} parent=0 // pred_check
    _
  $region3: #{_lambda_.33} parent=0 // pred_check_branch
    %11 = sbr.rel (0) target = $region5
  $region4: #{_lambda_.33} parent=0 // pred_region
    _
  $region5: #{_lambda_.33} parent=0 // pred_fallthru
    _
  // Predicated region
  $region6: #{_lambda_.33} parent=0 // pred_check
    _
  $region7: #{_lambda_.33} parent=0 // pred_check_branch
    %13 = sbr.rel (0) target = $region9
  $region8: #{_lambda_.33} parent=0 // pred_region
    _
  $region9: #{_lambda_.33} parent=0 // pred_fallthru
    _
  // Predicated region
  $region10: #{_lambda_.33} parent=0 // pred_check
    _
  $region11: #{_lambda_.33} parent=0 // pred_check_branch
    %15 = sbr.rel (0) target = $region13
  $region12: #{_lambda_.33} parent=0 // pred_region
    _
  $region13: #{_lambda_.33} parent=0 // pred_fallthru
    _
  // Predicated region
  $region14: #{_lambda_.33} parent=0 // pred_check
    _
  $region15: #{_lambda_.33} parent=0 // pred_check_branch
    %17 = sbr.rel (0) target = $region17
  $region16: #{_lambda_.33} parent=0 // pred_region
    _
  $region17: #{_lambda_.33} parent=0 // pred_fallthru
    _
  // Predicated region
  $region18: #{_lambda_.33} parent=0 // pred_check
    _
  $region19: #{_lambda_.33} parent=0 // pred_check_branch
    %19 = sbr.rel (0) target = $region21
  $region20: #{_lambda_.33} parent=0 // pred_region
    _
  $region21: #{_lambda_.33} parent=0 // pred_fallthru
    _
  %v21 = vld [vmem:[%s0] sm:$0xf]
  %v22 = vld [vmem:[%s0 + $0x4] sm:$0xf]
  %v23 = vld [vmem:[%s0 + $0x8] sm:$0xf]
  %v24 = vld [vmem:[%s0 + $0xc] sm:$0xf]
  %v25 = vld [vmem:[%s0 + $0x10] sm:$0xf]
  %v26 = vld [vmem:[%s0 + $0x14] sm:$0xf]
  %v27 = vld [vmem:[%s0 + $0x18] sm:$0xf]
  %v28 = vld [vmem:[%s0 + $0x1c] sm:$0xf]
  %v29 = vld [vmem:[%s0 + $0x20] sm:$0xf]
  %v30 = vld [vmem:[%s0 + $0x24] sm:$0xf]
  %v31 = vld [vmem:[%s0 + $0x28] sm:$0xf]
  %v32 = vld [vmem:[%s0 + $0x2c] sm:$0xf]
  %v33 = vld [vmem:[%s0 + $0x30] sm:$0xf]
  %v34 = vld [vmem:[%s0 + $0x34] sm:$0xf]
  %v35 = vld [vmem:[%s0 + $0x38] sm:$0xf]
  %v36 = vld [vmem:[%s0 + $0x3c] sm:$0xf]
  %v37 = vld [vmem:[%s1] sm:$0xf]
  %v38 = vld [vmem:[%s1 + $0x4] sm:$0xf]
  %v39 = vld [vmem:[%s1 + $0x8] sm:$0xf]
  %v40 = vld [vmem:[%s1 + $0xc] sm:$0xf]
  %v41 = vld [vmem:[%s1 + $0x10] sm:$0xf]
  %v42 = vld [vmem:[%s1 + $0x14] sm:$0xf]
  %v43 = vld [vmem:[%s1 + $0x18] sm:$0xf]
  %v44 = vld [vmem:[%s1 + $0x1c] sm:$0xf]
  %v45 = vld [vmem:[%s1 + $0x20] sm:$0xf]
  %v62 = vunpack.c.l.b16 %v21
  %v63 = vunpack.c.l.b16 %v22
  %v64 = vunpack.c.l.b16 %v23
  %v65 = vunpack.c.l.b16 %v24
  %v66 = vunpack.c.l.b16 %v25
  %v67 = vunpack.c.l.b16 %v26
  %v68 = vunpack.c.l.b16 %v27
  %v69 = vunpack.c.l.b16 %v28
  %v70 = vunpack.c.l.b16 %v29
  %v71 = vunpack.c.l.b16 %v30
  %v72 = vunpack.c.l.b16 %v31
  %v73 = vunpack.c.l.b16 %v32
  %v74 = vunpack.c.l.b16 %v33
  %v75 = vunpack.c.l.b16 %v34
  %v76 = vunpack.c.l.b16 %v35
  %v77 = vunpack.c.l.b16 %v36
  %v78 = vpack.c.b16 %v63, %v62
  %v79 = vpack.c.b16 %v65, %v64
  %v80 = vpack.c.b16 %v67, %v66
  %v81 = vpack.c.b16 %v69, %v68
  %v82 = vpack.c.b16 %v71, %v70
  %v83 = vpack.c.b16 %v73, %v72
  %v84 = vpack.c.b16 %v75, %v74
  %v85 = vpack.c.b16 %v77, %v76
  %v95 = vunpack.c.l.b16 %v37
  %v96 = vunpack.c.l.b16 %v38
  %v97 = vunpack.c.l.b16 %v39
  %v98 = vunpack.c.l.b16 %v40
  %v99 = vunpack.c.l.b16 %v41
  %v100 = vunpack.c.l.b16 %v42
  %v101 = vunpack.c.l.b16 %v43
  %v102 = vunpack.c.l.b16 %v44
  %v103 = vunpack.c.l.b16 %v45
  %v104 = vpack.c.b16 %v96, %v95
  %v105 = vpack.c.b16 %v98, %v97
  %v106 = vpack.c.b16 %v100, %v99
  %v107 = vpack.c.b16 %v102, %v101
  %v108 = vpack.c.b16 %v103, %v103
  %vm113 = vcmask 588800
  %v115 = vsel %vm113, %v78, 0
  %v118 = vsel %vm113, %v79, 0
  %v121 = vsel %vm113, %v80, 0
  %v124 = vsel %vm113, %v81, 0
  %v127 = vsel %vm113, %v82, 0
  %v130 = vsel %vm113, %v83, 0
  %v133 = vsel %vm113, %v84, 0
  %v136 = vsel %vm113, %v85, 0
  %vm138 = vcmask 1043456
  %v140 = vsel %vm138, %v108, 0
  %142 = vmatpush.bf16.msra.mxu0 0
  %143 = vmatpush.bf16.msra.mxu0 0
  %144 = vmatpush.bf16.msra.mxu0 0
  %145 = vmatpush.bf16.msra.mxu0 %v140
  %146 = vmatpush.bf16.msra.mxu0 %v107
  %147 = vmatpush.bf16.msra.mxu0 %v106
  %148 = vmatpush.bf16.msra.mxu0 %v105
  %149 = vmatpush.bf16.msra.mxu0 %v104
  %150 = vmatmul.bf16.gmra.mxu0 %v115
  %v151 = vpop.f32.mrf.mxu0
  %v152 = vadd.f32 0.0, %v151
  %v153 = vpop.f32.mrf.mxu0
  %v154 = vadd.f32 0.0, %v153
  %155 = vmatmul.bf16.gmra.mxu0 %v118
  %v156 = vpop.f32.mrf.mxu0
  %v157 = vadd.f32 0.0, %v156
  %v158 = vpop.f32.mrf.mxu0
  %v159 = vadd.f32 0.0, %v158
  %160 = vmatmul.bf16.gmra.mxu0 %v121
  %v161 = vpop.f32.mrf.mxu0
  %v162 = vadd.f32 0.0, %v161
  %v163 = vpop.f32.mrf.mxu0
  %v164 = vadd.f32 0.0, %v163
  %165 = vmatmul.bf16.gmra.mxu0 %v124
  %v166 = vpop.f32.mrf.mxu0
  %v167 = vadd.f32 0.0, %v166
  %v168 = vpop.f32.mrf.mxu0
  %v169 = vadd.f32 0.0, %v168
  %170 = vmatmul.bf16.gmra.mxu0 %v127
  %v171 = vpop.f32.mrf.mxu0
  %v172 = vadd.f32 0.0, %v171
  %v173 = vpop.f32.mrf.mxu0
  %v174 = vadd.f32 0.0, %v173
  %175 = vmatmul.bf16.gmra.mxu0 %v130
  %v176 = vpop.f32.mrf.mxu0
  %v177 = vadd.f32 0.0, %v176
  %v178 = vpop.f32.mrf.mxu0
  %v179 = vadd.f32 0.0, %v178
  %180 = vmatmul.bf16.gmra.mxu0 %v133
  %v181 = vpop.f32.mrf.mxu0
  %v182 = vadd.f32 0.0, %v181
  %v183 = vpop.f32.mrf.mxu0
  %v184 = vadd.f32 0.0, %v183
  %185 = vmatmul.bf16.gmra.mxu0 %v136
  %v186 = vpop.f32.mrf.mxu0
  %v187 = vadd.f32 0.0, %v186
  %v188 = vpop.f32.mrf.mxu0
  %v189 = vadd.f32 0.0, %v188
  %190 = vdwg.mxu0
  %v191 = vld [vmem:[%s2] sm:$0x1]
  %v193 = vperm.slane %v191, 0
  %v195 = vmul.f32 %v152, %v193
  %v196 = vmul.f32 %v154, %v193
  %v197 = vmul.f32 %v157, %v193
  %v198 = vmul.f32 %v159, %v193
  %v199 = vmul.f32 %v162, %v193
  %v200 = vmul.f32 %v164, %v193
  %v201 = vmul.f32 %v167, %v193
  %v202 = vmul.f32 %v169, %v193
  %v203 = vmul.f32 %v172, %v193
  %v204 = vmul.f32 %v174, %v193
  %v205 = vmul.f32 %v177, %v193
  %v206 = vmul.f32 %v179, %v193
  %v207 = vmul.f32 %v182, %v193
  %v208 = vmul.f32 %v184, %v193
  %v209 = vmul.f32 %v187, %v193
  %v210 = vmul.f32 %v189, %v193
  %v211 = vld [vmem:[%s3] sm:$0x1]
  %v213 = vperm.slane %v211, 0
  %v215 = vadd.f32 %v195, %v213
  %v216 = vadd.f32 %v196, %v213
  %v217 = vadd.f32 %v197, %v213
  %v218 = vadd.f32 %v198, %v213
  %v219 = vadd.f32 %v199, %v213
  %v220 = vadd.f32 %v200, %v213
  %v221 = vadd.f32 %v201, %v213
  %v222 = vadd.f32 %v202, %v213
  %v223 = vadd.f32 %v203, %v213
  %v224 = vadd.f32 %v204, %v213
  %v225 = vadd.f32 %v205, %v213
  %v226 = vadd.f32 %v206, %v213
  %v227 = vadd.f32 %v207, %v213
  %v228 = vadd.f32 %v208, %v213
  %v229 = vadd.f32 %v209, %v213
  %v230 = vadd.f32 %v210, %v213
  %v231 = vld [vmem:[%s4] sm:$0xf]
  %v232 = vld [vmem:[%s4 + $0x4] sm:$0xf]
  %v233 = vld [vmem:[%s4 + $0x8] sm:$0xf]
  %v234 = vld [vmem:[%s4 + $0xc] sm:$0xf]
  %v235 = vld [vmem:[%s4 + $0x10] sm:$0xf]
  %v236 = vld [vmem:[%s4 + $0x14] sm:$0xf]
  %v237 = vld [vmem:[%s4 + $0x18] sm:$0xf]
  %v238 = vld [vmem:[%s4 + $0x1c] sm:$0xf]
  %v239 = vld [vmem:[%s4 + $0x20] sm:$0xf]
  %v240 = vld [vmem:[%s4 + $0x24] sm:$0xf]
  %v241 = vld [vmem:[%s4 + $0x28] sm:$0xf]
  %v242 = vld [vmem:[%s4 + $0x2c] sm:$0xf]
  %v243 = vld [vmem:[%s4 + $0x30] sm:$0xf]
  %v244 = vld [vmem:[%s4 + $0x34] sm:$0xf]
  %v245 = vld [vmem:[%s4 + $0x38] sm:$0xf]
  %v246 = vld [vmem:[%s4 + $0x3c] sm:$0xf]
  %v247 = vunpack.c.l.bf16 %v231
  %v248 = vunpack.c.l.bf16 %v232
  %v249 = vunpack.c.l.bf16 %v233
  %v250 = vunpack.c.l.bf16 %v234
  %v251 = vunpack.c.l.bf16 %v235
  %v252 = vunpack.c.l.bf16 %v236
  %v253 = vunpack.c.l.bf16 %v237
  %v254 = vunpack.c.l.bf16 %v238
  %v255 = vunpack.c.l.bf16 %v239
  %v256 = vunpack.c.l.bf16 %v240
  %v257 = vunpack.c.l.bf16 %v241
  %v258 = vunpack.c.l.bf16 %v242
  %v259 = vunpack.c.l.bf16 %v243
  %v260 = vunpack.c.l.bf16 %v244
  %v261 = vunpack.c.l.bf16 %v245
  %v262 = vunpack.c.l.bf16 %v246
  %v263 = vadd.f32 %v215, %v247
  %v264 = vadd.f32 %v216, %v248
  %v265 = vadd.f32 %v217, %v249
  %v266 = vadd.f32 %v218, %v250
  %v267 = vadd.f32 %v219, %v251
  %v268 = vadd.f32 %v220, %v252
  %v269 = vadd.f32 %v221, %v253
  %v270 = vadd.f32 %v222, %v254
  %v271 = vadd.f32 %v223, %v255
  %v272 = vadd.f32 %v224, %v256
  %v273 = vadd.f32 %v225, %v257
  %v274 = vadd.f32 %v226, %v258
  %v275 = vadd.f32 %v227, %v259
  %v276 = vadd.f32 %v228, %v260
  %v277 = vadd.f32 %v229, %v261
  %v278 = vadd.f32 %v230, %v262
  %v279 = vmax.f32 %v263, 0.0
  %v280 = vmax.f32 %v264, 0.0
  %v281 = vmax.f32 %v265, 0.0
  %v282 = vmax.f32 %v266, 0.0
  %v283 = vmax.f32 %v267, 0.0
  %v284 = vmax.f32 %v268, 0.0
  %v285 = vmax.f32 %v269, 0.0
  %v286 = vmax.f32 %v270, 0.0
  %v287 = vmax.f32 %v271, 0.0
  %v288 = vmax.f32 %v272, 0.0
  %v289 = vmax.f32 %v273, 0.0
  %v290 = vmax.f32 %v274, 0.0
  %v291 = vmax.f32 %v275, 0.0
  %v292 = vmax.f32 %v276, 0.0
  %v293 = vmax.f32 %v277, 0.0
  %v294 = vmax.f32 %v278, 0.0
  %v295 = vpack.c.bf16 %v279, %v279
  %v296 = vpack.c.bf16 %v280, %v280
  %v297 = vpack.c.bf16 %v281, %v281
  %v298 = vpack.c.bf16 %v282, %v282
  %v299 = vpack.c.bf16 %v283, %v283
  %v300 = vpack.c.bf16 %v284, %v284
  %v301 = vpack.c.bf16 %v285, %v285
  %v302 = vpack.c.bf16 %v286, %v286
  %v303 = vpack.c.bf16 %v287, %v287
  %v304 = vpack.c.bf16 %v288, %v288
  %v305 = vpack.c.bf16 %v289, %v289
  %v306 = vpack.c.bf16 %v290, %v290
  %v307 = vpack.c.bf16 %v291, %v291
  %v308 = vpack.c.bf16 %v292, %v292
  %v309 = vpack.c.bf16 %v293, %v293
  %v310 = vpack.c.bf16 %v294, %v294
  %vm311 = vcmask 60416
  %312 = vst.msk [vmem:[%s5] sm:$0xf] %vm311, %v295
  %313 = vst.msk [vmem:[%s5 + $0x4] sm:$0xf] %vm311, %v296
  %314 = vst.msk [vmem:[%s5 + $0x8] sm:$0xf] %vm311, %v297
  %315 = vst.msk [vmem:[%s5 + $0xc] sm:$0xf] %vm311, %v298
  %316 = vst.msk [vmem:[%s5 + $0x10] sm:$0xf] %vm311, %v299
  %317 = vst.msk [vmem:[%s5 + $0x14] sm:$0xf] %vm311, %v300
  %318 = vst.msk [vmem:[%s5 + $0x18] sm:$0xf] %vm311, %v301
  %319 = vst.msk [vmem:[%s5 + $0x1c] sm:$0xf] %vm311, %v302
  %320 = vst.msk [vmem:[%s5 + $0x20] sm:$0xf] %vm311, %v303
  %321 = vst.msk [vmem:[%s5 + $0x24] sm:$0xf] %vm311, %v304
  %322 = vst.msk [vmem:[%s5 + $0x28] sm:$0xf] %vm311, %v305
  %323 = vst.msk [vmem:[%s5 + $0x2c] sm:$0xf] %vm311, %v306
  %324 = vst.msk [vmem:[%s5 + $0x30] sm:$0xf] %vm311, %v307
  %325 = vst.msk [vmem:[%s5 + $0x34] sm:$0xf] %vm311, %v308
  %326 = vst.msk [vmem:[%s5 + $0x38] sm:$0xf] %vm311, %v309
  %327 = vst.msk [vmem:[%s5 + $0x3c] sm:$0xf] %vm311, %v310
  // Predicated region
  $region22: #{_lambda_.33} parent=0 // pred_check
    _
  $region23: #{_lambda_.33} parent=0 // pred_check_branch
    %329 = sbr.rel (0) target = $region25
  $region24: #{_lambda_.33} parent=0 // pred_region
    _
  $region25: #{_lambda_.33} parent=0 // pred_fallthru
    _
  // Predicated region
  $region26: #{_lambda_.33} parent=0 // pred_check
    _
  $region27: #{_lambda_.33} parent=0 // pred_check_branch
    %331 = sbr.rel (0) target = $region29
  $region28: #{_lambda_.33} parent=0 // pred_region
    _
  $region29: #{_lambda_.33} parent=0 // pred_fallthru
    _

// kernel: _lambda_.37
$region0: #{_lambda_.37}
  #allocation0 [shape = 'u32[]', space=smem, size = 0x4, offset = 0x4, fixed_abs, tag = 'smem constant byte address 0x4 - core index']
  #allocation1 [shape = 'u32[72,128]{1,0:T(1,128)}', space=vmem, size = 0x9000, scoped, tag = 'internal scratch']
  %s0 = inlined_call_operand.vmem [shape: bf16[32,8], index: 0, kind: input, shape index: {}]
  %s1 = inlined_call_operand.vmem [shape: bf16[8,16], index: 1, kind: input, shape index: {}]
  %s2 = inlined_call_operand.vmem [shape: f32[1,16], index: 2, kind: input, shape index: {}]
  %s3 = inlined_call_operand.vmem [shape: f32[1,16], index: 3, kind: input, shape index: {}]
  %s4 = inlined_call_operand.vmem [shape: bf16[32,16], index: 4, kind: output, shape index: {}]
  %s5 = sld [smem:[#allocation0]]
  $region26: #{_lambda_.37} parent=0
    _
  %s7 = ssub.s32 1, %s5
  %s8 = scalar_select 0, %s7, %s5
  // Predicated region
  $region2: #{_lambda_.37} parent=0 // pred_check
    _
  $region3: #{_lambda_.37} parent=0 // pred_check_branch
    %10 = sbr.rel (0) target = $region5
  $region4: #{_lambda_.37} parent=0 // pred_region
    _
  $region5: #{_lambda_.37} parent=0 // pred_fallthru
    _
  // Predicated region
  $region6: #{_lambda_.37} parent=0 // pred_check
    _
  $region7: #{_lambda_.37} parent=0 // pred_check_branch
    %12 = sbr.rel (0) target = $region9
  $region8: #{_lambda_.37} parent=0 // pred_region
    _
  $region9: #{_lambda_.37} parent=0 // pred_fallthru
    _
  // Predicated region
  $region10: #{_lambda_.37} parent=0 // pred_check
    _
  $region11: #{_lambda_.37} parent=0 // pred_check_branch
    %14 = sbr.rel (0) target = $region13
  $region12: #{_lambda_.37} parent=0 // pred_region
    _
  $region13: #{_lambda_.37} parent=0 // pred_fallthru
    _
  // Predicated region
  $region14: #{_lambda_.37} parent=0 // pred_check
    _
  $region15: #{_lambda_.37} parent=0 // pred_check_branch
    %16 = sbr.rel (0) target = $region17
  $region16: #{_lambda_.37} parent=0 // pred_region
    _
  $region17: #{_lambda_.37} parent=0 // pred_fallthru
    _
  %v18 = vld [vmem:[%s0] sm:$0xf]
  %v19 = vld [vmem:[%s0 + $0x4] sm:$0xf]
  %v20 = vld [vmem:[%s0 + $0x8] sm:$0xf]
  %v21 = vld [vmem:[%s0 + $0xc] sm:$0xf]
  %v22 = vld [vmem:[%s1] sm:$0xf]
  %v27 = vunpack.c.l.b16 %v18
  %v28 = vunpack.c.l.b16 %v19
  %v29 = vunpack.c.l.b16 %v20
  %v30 = vunpack.c.l.b16 %v21
  %v31 = vpack.c.b16 %v28, %v27
  %v32 = vpack.c.b16 %v30, %v29
  %vm33 = vcmask 64512
  %v35 = vsel %vm33, %v31, 0
  %v38 = vsel %vm33, %v32, 0
  %vm40 = vcmask 1043456
  %v42 = vsel %vm40, %v22, 0
  %44 = vmatpush.bf16.msra.mxu0 0
  %45 = vmatpush.bf16.msra.mxu0 0
  %46 = vmatpush.bf16.msra.mxu0 0
  %47 = vmatpush.bf16.msra.mxu0 0
  %48 = vmatpush.bf16.msra.mxu0 0
  %49 = vmatpush.bf16.msra.mxu0 0
  %50 = vmatpush.bf16.msra.mxu0 0
  %51 = vmatpush.bf16.msra.mxu0 %v42
  %52 = vmatmul.bf16.gmra.mxu0 %v35
  %v53 = vpop.f32.mrf.mxu0
  %v54 = vadd.f32 0.0, %v53
  %v55 = vpop.f32.mrf.mxu0
  %v56 = vadd.f32 0.0, %v55
  %57 = vmatmul.bf16.gmra.mxu0 %v38
  %v58 = vpop.f32.mrf.mxu0
  %v59 = vadd.f32 0.0, %v58
  %v60 = vpop.f32.mrf.mxu0
  %v61 = vadd.f32 0.0, %v60
  %62 = vdwg.mxu0
  %v63 = vld [vmem:[%s2] sm:$0x1]
  %v65 = vperm.slane %v63, 0
  %v67 = vmul.f32 %v54, %v65
  %v68 = vmul.f32 %v56, %v65
  %v69 = vmul.f32 %v59, %v65
  %v70 = vmul.f32 %v61, %v65
  %v71 = vld [vmem:[%s3] sm:$0x1]
  %v73 = vperm.slane %v71, 0
  %v75 = vadd.f32 %v67, %v73
  %v76 = vadd.f32 %v68, %v73
  %v77 = vadd.f32 %v69, %v73
  %v78 = vadd.f32 %v70, %v73
  %v79 = vpack.c.bf16 %v75, %v75
  %v80 = vpack.c.bf16 %v76, %v76
  %v81 = vpack.c.bf16 %v77, %v77
  %v82 = vpack.c.bf16 %v78, %v78
  %vm83 = vcmask 125952
  %84 = vst.msk [vmem:[%s4] sm:$0xf] %vm83, %v79
  %85 = vst.msk [vmem:[%s4 + $0x4] sm:$0xf] %vm83, %v80
  %86 = vst.msk [vmem:[%s4 + $0x8] sm:$0xf] %vm83, %v81
  %87 = vst.msk [vmem:[%s4 + $0xc] sm:$0xf] %vm83, %v82
  // Predicated region
  $region18: #{_lambda_.37} parent=0 // pred_check
    _
  $region19: #{_lambda_.37} parent=0 // pred_check_branch
    %89 = sbr.rel (0) target = $region21
  $region20: #{_lambda_.37} parent=0 // pred_region
    _
  $region21: #{_lambda_.37} parent=0 // pred_fallthru
    _
  // Predicated region
  $region22: #{_lambda_.37} parent=0 // pred_check
    _
  $region23: #{_lambda_.37} parent=0 // pred_check_branch
    %91 = sbr.rel (0) target = $region25
  $region24: #{_lambda_.37} parent=0 // pred_region
    _
  $region25: #{_lambda_.37} parent=0 // pred_fallthru
    _

// kernel: _lambda_.36
$region0: #{_lambda_.36}
  #allocation0 [shape = 'u32[]', space=smem, size = 0x4, offset = 0x4, fixed_abs, tag = 'smem constant byte address 0x4 - core index']
  #allocation1 [shape = 'u32[72,128]{1,0:T(1,128)}', space=vmem, size = 0x9000, scoped, tag = 'internal scratch']
  %s0 = inlined_call_operand.vmem [shape: bf16[128,8], index: 0, kind: input, shape index: {}]
  %s1 = inlined_call_operand.vmem [shape: bf16[8,16], index: 1, kind: input, shape index: {}]
  %s2 = inlined_call_operand.vmem [shape: f32[1,16], index: 2, kind: input, shape index: {}]
  %s3 = inlined_call_operand.vmem [shape: f32[1,16], index: 3, kind: input, shape index: {}]
  %s4 = inlined_call_operand.vmem [shape: bf16[128,16], index: 4, kind: output, shape index: {}]
  %s5 = sld [smem:[#allocation0]]
  $region26: #{_lambda_.36} parent=0
    _
  %s7 = ssub.s32 1, %s5
  %s8 = scalar_select 0, %s7, %s5
  // Predicated region
  $region2: #{_lambda_.36} parent=0 // pred_check
    _
  $region3: #{_lambda_.36} parent=0 // pred_check_branch
    %10 = sbr.rel (0) target = $region5
  $region4: #{_lambda_.36} parent=0 // pred_region
    _
  $region5: #{_lambda_.36} parent=0 // pred_fallthru
    _
  // Predicated region
  $region6: #{_lambda_.36} parent=0 // pred_check
    _
  $region7: #{_lambda_.36} parent=0 // pred_check_branch
    %12 = sbr.rel (0) target = $region9
  $region8: #{_lambda_.36} parent=0 // pred_region
    _
  $region9: #{_lambda_.36} parent=0 // pred_fallthru
    _
  // Predicated region
  $region10: #{_lambda_.36} parent=0 // pred_check
    _
  $region11: #{_lambda_.36} parent=0 // pred_check_branch
    %14 = sbr.rel (0) target = $region13
  $region12: #{_lambda_.36} parent=0 // pred_region
    _
  $region13: #{_lambda_.36} parent=0 // pred_fallthru
    _
  // Predicated region
  $region14: #{_lambda_.36} parent=0 // pred_check
    _
  $region15: #{_lambda_.36} parent=0 // pred_check_branch
    %16 = sbr.rel (0) target = $region17
  $region16: #{_lambda_.36} parent=0 // pred_region
    _
  $region17: #{_lambda_.36} parent=0 // pred_fallthru
    _
  %v18 = vld [vmem:[%s0] sm:$0xf]
  %v19 = vld [vmem:[%s0 + $0x4] sm:$0xf]
  %v20 = vld [vmem:[%s0 + $0x8] sm:$0xf]
  %v21 = vld [vmem:[%s0 + $0xc] sm:$0xf]
  %v22 = vld [vmem:[%s0 + $0x10] sm:$0xf]
  %v23 = vld [vmem:[%s0 + $0x14] sm:$0xf]
  %v24 = vld [vmem:[%s0 + $0x18] sm:$0xf]
  %v25 = vld [vmem:[%s0 + $0x1c] sm:$0xf]
  %v26 = vld [vmem:[%s0 + $0x20] sm:$0xf]
  %v27 = vld [vmem:[%s0 + $0x24] sm:$0xf]
  %v28 = vld [vmem:[%s0 + $0x28] sm:$0xf]
  %v29 = vld [vmem:[%s0 + $0x2c] sm:$0xf]
  %v30 = vld [vmem:[%s0 + $0x30] sm:$0xf]
  %v31 = vld [vmem:[%s0 + $0x34] sm:$0xf]
  %v32 = vld [vmem:[%s0 + $0x38] sm:$0xf]
  %v33 = vld [vmem:[%s0 + $0x3c] sm:$0xf]
  %v34 = vld [vmem:[%s1] sm:$0xf]
  %v51 = vunpack.c.l.b16 %v18
  %v52 = vunpack.c.l.b16 %v19
  %v53 = vunpack.c.l.b16 %v20
  %v54 = vunpack.c.l.b16 %v21
  %v55 = vunpack.c.l.b16 %v22
  %v56 = vunpack.c.l.b16 %v23
  %v57 = vunpack.c.l.b16 %v24
  %v58 = vunpack.c.l.b16 %v25
  %v59 = vunpack.c.l.b16 %v26
  %v60 = vunpack.c.l.b16 %v27
  %v61 = vunpack.c.l.b16 %v28
  %v62 = vunpack.c.l.b16 %v29
  %v63 = vunpack.c.l.b16 %v30
  %v64 = vunpack.c.l.b16 %v31
  %v65 = vunpack.c.l.b16 %v32
  %v66 = vunpack.c.l.b16 %v33
  %v67 = vpack.c.b16 %v52, %v51
  %v68 = vpack.c.b16 %v54, %v53
  %v69 = vpack.c.b16 %v56, %v55
  %v70 = vpack.c.b16 %v58, %v57
  %v71 = vpack.c.b16 %v60, %v59
  %v72 = vpack.c.b16 %v62, %v61
  %v73 = vpack.c.b16 %v64, %v63
  %v74 = vpack.c.b16 %v66, %v65
  %vm75 = vcmask 64512
  %v77 = vsel %vm75, %v67, 0
  %v80 = vsel %vm75, %v68, 0
  %v83 = vsel %vm75, %v69, 0
  %v86 = vsel %vm75, %v70, 0
  %v89 = vsel %vm75, %v71, 0
  %v92 = vsel %vm75, %v72, 0
  %v95 = vsel %vm75, %v73, 0
  %v98 = vsel %vm75, %v74, 0
  %vm100 = vcmask 1043456
  %v102 = vsel %vm100, %v34, 0
  %104 = vmatpush.bf16.msra.mxu0 0
  %105 = vmatpush.bf16.msra.mxu0 0
  %106 = vmatpush.bf16.msra.mxu0 0
  %107 = vmatpush.bf16.msra.mxu0 0
  %108 = vmatpush.bf16.msra.mxu0 0
  %109 = vmatpush.bf16.msra.mxu0 0
  %110 = vmatpush.bf16.msra.mxu0 0
  %111 = vmatpush.bf16.msra.mxu0 %v102
  %112 = vmatmul.bf16.gmra.mxu0 %v77
  %v113 = vpop.f32.mrf.mxu0
  %v114 = vadd.f32 0.0, %v113
  %v115 = vpop.f32.mrf.mxu0
  %v116 = vadd.f32 0.0, %v115
  %117 = vmatmul.bf16.gmra.mxu0 %v80
  %v118 = vpop.f32.mrf.mxu0
  %v119 = vadd.f32 0.0, %v118
  %v120 = vpop.f32.mrf.mxu0
  %v121 = vadd.f32 0.0, %v120
  %122 = vmatmul.bf16.gmra.mxu0 %v83
  %v123 = vpop.f32.mrf.mxu0
  %v124 = vadd.f32 0.0, %v123
  %v125 = vpop.f32.mrf.mxu0
  %v126 = vadd.f32 0.0, %v125
  %127 = vmatmul.bf16.gmra.mxu0 %v86
  %v128 = vpop.f32.mrf.mxu0
  %v129 = vadd.f32 0.0, %v128
  %v130 = vpop.f32.mrf.mxu0
  %v131 = vadd.f32 0.0, %v130
  %132 = vmatmul.bf16.gmra.mxu0 %v89
  %v133 = vpop.f32.mrf.mxu0
  %v134 = vadd.f32 0.0, %v133
  %v135 = vpop.f32.mrf.mxu0
  %v136 = vadd.f32 0.0, %v135
  %137 = vmatmul.bf16.gmra.mxu0 %v92
  %v138 = vpop.f32.mrf.mxu0
  %v139 = vadd.f32 0.0, %v138
  %v140 = vpop.f32.mrf.mxu0
  %v141 = vadd.f32 0.0, %v140
  %142 = vmatmul.bf16.gmra.mxu0 %v95
  %v143 = vpop.f32.mrf.mxu0
  %v144 = vadd.f32 0.0, %v143
  %v145 = vpop.f32.mrf.mxu0
  %v146 = vadd.f32 0.0, %v145
  %147 = vmatmul.bf16.gmra.mxu0 %v98
  %v148 = vpop.f32.mrf.mxu0
  %v149 = vadd.f32 0.0, %v148
  %v150 = vpop.f32.mrf.mxu0
  %v151 = vadd.f32 0.0, %v150
  %152 = vdwg.mxu0
  %v153 = vld [vmem:[%s2] sm:$0x1]
  %v155 = vperm.slane %v153, 0
  %v157 = vmul.f32 %v114, %v155
  %v158 = vmul.f32 %v116, %v155
  %v159 = vmul.f32 %v119, %v155
  %v160 = vmul.f32 %v121, %v155
  %v161 = vmul.f32 %v124, %v155
  %v162 = vmul.f32 %v126, %v155
  %v163 = vmul.f32 %v129, %v155
  %v164 = vmul.f32 %v131, %v155
  %v165 = vmul.f32 %v134, %v155
  %v166 = vmul.f32 %v136, %v155
  %v167 = vmul.f32 %v139, %v155
  %v168 = vmul.f32 %v141, %v155
  %v169 = vmul.f32 %v144, %v155
  %v170 = vmul.f32 %v146, %v155
  %v171 = vmul.f32 %v149, %v155
  %v172 = vmul.f32 %v151, %v155
  %v173 = vld [vmem:[%s3] sm:$0x1]
  %v175 = vperm.slane %v173, 0
  %v177 = vadd.f32 %v157, %v175
  %v178 = vadd.f32 %v158, %v175
  %v179 = vadd.f32 %v159, %v175
  %v180 = vadd.f32 %v160, %v175
  %v181 = vadd.f32 %v161, %v175
  %v182 = vadd.f32 %v162, %v175
  %v183 = vadd.f32 %v163, %v175
  %v184 = vadd.f32 %v164, %v175
  %v185 = vadd.f32 %v165, %v175
  %v186 = vadd.f32 %v166, %v175
  %v187 = vadd.f32 %v167, %v175
  %v188 = vadd.f32 %v168, %v175
  %v189 = vadd.f32 %v169, %v175
  %v190 = vadd.f32 %v170, %v175
  %v191 = vadd.f32 %v171, %v175
  %v192 = vadd.f32 %v172, %v175
  %v193 = vmax.f32 %v177, 0.0
  %v194 = vmax.f32 %v178, 0.0
  %v195 = vmax.f32 %v179, 0.0
  %v196 = vmax.f32 %v180, 0.0
  %v197 = vmax.f32 %v181, 0.0
  %v198 = vmax.f32 %v182, 0.0
  %v199 = vmax.f32 %v183, 0.0
  %v200 = vmax.f32 %v184, 0.0
  %v201 = vmax.f32 %v185, 0.0
  %v202 = vmax.f32 %v186, 0.0
  %v203 = vmax.f32 %v187, 0.0
  %v204 = vmax.f32 %v188, 0.0
  %v205 = vmax.f32 %v189, 0.0
  %v206 = vmax.f32 %v190, 0.0
  %v207 = vmax.f32 %v191, 0.0
  %v208 = vmax.f32 %v192, 0.0
  %v209 = vpack.c.bf16 %v193, %v193
  %v210 = vpack.c.bf16 %v194, %v194
  %v211 = vpack.c.bf16 %v195, %v195
  %v212 = vpack.c.bf16 %v196, %v196
  %v213 = vpack.c.bf16 %v197, %v197
  %v214 = vpack.c.bf16 %v198, %v198
  %v215 = vpack.c.bf16 %v199, %v199
  %v216 = vpack.c.bf16 %v200, %v200
  %v217 = vpack.c.bf16 %v201, %v201
  %v218 = vpack.c.bf16 %v202, %v202
  %v219 = vpack.c.bf16 %v203, %v203
  %v220 = vpack.c.bf16 %v204, %v204
  %v221 = vpack.c.bf16 %v205, %v205
  %v222 = vpack.c.bf16 %v206, %v206
  %v223 = vpack.c.bf16 %v207, %v207
  %v224 = vpack.c.bf16 %v208, %v208
  %vm225 = vcmask 125952
  %226 = vst.msk [vmem:[%s4] sm:$0xf] %vm225, %v209
  %227 = vst.msk [vmem:[%s4 + $0x4] sm:$0xf] %vm225, %v210
  %228 = vst.msk [vmem:[%s4 + $0x8] sm:$0xf] %vm225, %v211
  %229 = vst.msk [vmem:[%s4 + $0xc] sm:$0xf] %vm225, %v212
  %230 = vst.msk [vmem:[%s4 + $0x10] sm:$0xf] %vm225, %v213
  %231 = vst.msk [vmem:[%s4 + $0x14] sm:$0xf] %vm225, %v214
  %232 = vst.msk [vmem:[%s4 + $0x18] sm:$0xf] %vm225, %v215
  %233 = vst.msk [vmem:[%s4 + $0x1c] sm:$0xf] %vm225, %v216
  %234 = vst.msk [vmem:[%s4 + $0x20] sm:$0xf] %vm225, %v217
  %235 = vst.msk [vmem:[%s4 + $0x24] sm:$0xf] %vm225, %v218
  %236 = vst.msk [vmem:[%s4 + $0x28] sm:$0xf] %vm225, %v219
  %237 = vst.msk [vmem:[%s4 + $0x2c] sm:$0xf] %vm225, %v220
  %238 = vst.msk [vmem:[%s4 + $0x30] sm:$0xf] %vm225, %v221
  %239 = vst.msk [vmem:[%s4 + $0x34] sm:$0xf] %vm225, %v222
  %240 = vst.msk [vmem:[%s4 + $0x38] sm:$0xf] %vm225, %v223
  %241 = vst.msk [vmem:[%s4 + $0x3c] sm:$0xf] %vm225, %v224
  // Predicated region
  $region18: #{_lambda_.36} parent=0 // pred_check
    _
  $region19: #{_lambda_.36} parent=0 // pred_check_branch
    %243 = sbr.rel (0) target = $region21
  $region20: #{_lambda_.36} parent=0 // pred_region
    _
  $region21: #{_lambda_.36} parent=0 // pred_fallthru
    _
  // Predicated region
  $region22: #{_lambda_.36} parent=0 // pred_check
    _
  $region23: #{_lambda_.36} parent=0 // pred_check_branch
    %245 = sbr.rel (0) target = $region25
  $region24: #{_lambda_.36} parent=0 // pred_region
    _
  $region25: #{_lambda_.36} parent=0 // pred_fallthru
    _

// kernel: _lambda_.39
$region0: #{_lambda_.39}
  #allocation0 [shape = 'u32[]', space=smem, size = 0x4, offset = 0x4, fixed_abs, tag = 'smem constant byte address 0x4 - core index']
  #allocation1 [shape = 'u32[72,128]{1,0:T(1,128)}', space=vmem, size = 0x9000, scoped, tag = 'internal scratch']
  %s0 = inlined_call_operand.vmem [shape: bf16[32,16], index: 0, kind: input, shape index: {}]
  %s1 = inlined_call_operand.vmem [shape: bf16[16,16], index: 1, kind: input, shape index: {}]
  %s2 = inlined_call_operand.vmem [shape: f32[1,16], index: 2, kind: input, shape index: {}]
  %s3 = inlined_call_operand.vmem [shape: f32[1,16], index: 3, kind: input, shape index: {}]
  %s4 = inlined_call_operand.vmem [shape: bf16[32,16], index: 4, kind: output, shape index: {}]
  %s5 = sld [smem:[#allocation0]]
  $region26: #{_lambda_.39} parent=0
    _
  %s7 = ssub.s32 1, %s5
  %s8 = scalar_select 0, %s7, %s5
  // Predicated region
  $region2: #{_lambda_.39} parent=0 // pred_check
    _
  $region3: #{_lambda_.39} parent=0 // pred_check_branch
    %10 = sbr.rel (0) target = $region5
  $region4: #{_lambda_.39} parent=0 // pred_region
    _
  $region5: #{_lambda_.39} parent=0 // pred_fallthru
    _
  // Predicated region
  $region6: #{_lambda_.39} parent=0 // pred_check
    _
  $region7: #{_lambda_.39} parent=0 // pred_check_branch
    %12 = sbr.rel (0) target = $region9
  $region8: #{_lambda_.39} parent=0 // pred_region
    _
  $region9: #{_lambda_.39} parent=0 // pred_fallthru
    _
  // Predicated region
  $region10: #{_lambda_.39} parent=0 // pred_check
    _
  $region11: #{_lambda_.39} parent=0 // pred_check_branch
    %14 = sbr.rel (0) target = $region13
  $region12: #{_lambda_.39} parent=0 // pred_region
    _
  $region13: #{_lambda_.39} parent=0 // pred_fallthru
    _
  // Predicated region
  $region14: #{_lambda_.39} parent=0 // pred_check
    _
  $region15: #{_lambda_.39} parent=0 // pred_check_branch
    %16 = sbr.rel (0) target = $region17
  $region16: #{_lambda_.39} parent=0 // pred_region
    _
  $region17: #{_lambda_.39} parent=0 // pred_fallthru
    _
  %v18 = vld [vmem:[%s0] sm:$0xf]
  %v19 = vld [vmem:[%s0 + $0x4] sm:$0xf]
  %v20 = vld [vmem:[%s0 + $0x8] sm:$0xf]
  %v21 = vld [vmem:[%s0 + $0xc] sm:$0xf]
  %v22 = vld [vmem:[%s1] sm:$0xf]
  %v23 = vld [vmem:[%s1 + $0x4] sm:$0xf]
  %v28 = vunpack.c.l.b16 %v18
  %v29 = vunpack.c.l.b16 %v19
  %v30 = vunpack.c.l.b16 %v20
  %v31 = vunpack.c.l.b16 %v21
  %v32 = vpack.c.b16 %v29, %v28
  %v33 = vpack.c.b16 %v31, %v30
  %v36 = vunpack.c.l.b16 %v22
  %v37 = vunpack.c.l.b16 %v23
  %v38 = vpack.c.b16 %v37, %v36
  %vm40 = vcmask 130048
  %v42 = vsel %vm40, %v32, 0
  %v45 = vsel %vm40, %v33, 0
  %47 = vmatpush.bf16.msra.mxu0 0
  %48 = vmatpush.bf16.msra.mxu0 0
  %49 = vmatpush.bf16.msra.mxu0 0
  %50 = vmatpush.bf16.msra.mxu0 0
  %51 = vmatpush.bf16.msra.mxu0 0
  %52 = vmatpush.bf16.msra.mxu0 0
  %53 = vmatpush.bf16.msra.mxu0 0
  %54 = vmatpush.bf16.msra.mxu0 %v38
  %55 = vmatmul.bf16.gmra.mxu0 %v42
  %v56 = vpop.f32.mrf.mxu0
  %v57 = vadd.f32 0.0, %v56
  %v58 = vpop.f32.mrf.mxu0
  %v59 = vadd.f32 0.0, %v58
  %60 = vmatmul.bf16.gmra.mxu0 %v45
  %v61 = vpop.f32.mrf.mxu0
  %v62 = vadd.f32 0.0, %v61
  %v63 = vpop.f32.mrf.mxu0
  %v64 = vadd.f32 0.0, %v63
  %65 = vdwg.mxu0
  %v66 = vld [vmem:[%s2] sm:$0x1]
  %v68 = vperm.slane %v66, 0
  %v70 = vmul.f32 %v57, %v68
  %v71 = vmul.f32 %v59, %v68
  %v72 = vmul.f32 %v62, %v68
  %v73 = vmul.f32 %v64, %v68
  %v74 = vld [vmem:[%s3] sm:$0x1]
  %v76 = vperm.slane %v74, 0
  %v78 = vadd.f32 %v70, %v76
  %v79 = vadd.f32 %v71, %v76
  %v80 = vadd.f32 %v72, %v76
  %v81 = vadd.f32 %v73, %v76
  %v82 = vmax.f32 %v78, 0.0
  %v83 = vmax.f32 %v79, 0.0
  %v84 = vmax.f32 %v80, 0.0
  %v85 = vmax.f32 %v81, 0.0
  %v86 = vpack.c.bf16 %v82, %v82
  %v87 = vpack.c.bf16 %v83, %v83
  %v88 = vpack.c.bf16 %v84, %v84
  %v89 = vpack.c.bf16 %v85, %v85
  %vm90 = vcmask 125952
  %91 = vst.msk [vmem:[%s4] sm:$0xf] %vm90, %v86
  %92 = vst.msk [vmem:[%s4 + $0x4] sm:$0xf] %vm90, %v87
  %93 = vst.msk [vmem:[%s4 + $0x8] sm:$0xf] %vm90, %v88
  %94 = vst.msk [vmem:[%s4 + $0xc] sm:$0xf] %vm90, %v89
  // Predicated region
  $region18: #{_lambda_.39} parent=0 // pred_check
    _
  $region19: #{_lambda_.39} parent=0 // pred_check_branch
    %96 = sbr.rel (0) target = $region21
  $region20: #{_lambda_.39} parent=0 // pred_region
    _
  $region21: #{_lambda_.39} parent=0 // pred_fallthru
    _
  // Predicated region
  $region22: #{_lambda_.39} parent=0 // pred_check
    _
  $region23: #{_lambda_.39} parent=0 // pred_check_branch
    %98 = sbr.rel (0) target = $region25
  $region24: #{_lambda_.39} parent=0 // pred_region
    _
  $region25: #{_lambda_.39} parent=0 // pred_fallthru
    _

// kernel: _lambda_.38
$region0: #{_lambda_.38}
  #allocation0 [shape = 'u32[]', space=smem, size = 0x4, offset = 0x4, fixed_abs, tag = 'smem constant byte address 0x4 - core index']
  #allocation1 [shape = 'u32[72,128]{1,0:T(1,128)}', space=vmem, size = 0x9000, scoped, tag = 'internal scratch']
  %s0 = inlined_call_operand.vmem [shape: bf16[32,144], index: 0, kind: input, shape index: {}]
  %s1 = inlined_call_operand.vmem [shape: bf16[144,16], index: 1, kind: input, shape index: {}]
  %s2 = inlined_call_operand.vmem [shape: f32[1,16], index: 2, kind: input, shape index: {}]
  %s3 = inlined_call_operand.vmem [shape: f32[1,16], index: 3, kind: input, shape index: {}]
  %s4 = inlined_call_operand.vmem [shape: bf16[32,16], index: 4, kind: input, shape index: {}]
  %s5 = inlined_call_operand.vmem [shape: bf16[32,16], index: 5, kind: output, shape index: {}]
  %s6 = sld [smem:[#allocation0]]
  $region30: #{_lambda_.38} parent=0
    _
  %s8 = ssub.s32 1, %s6
  %s9 = scalar_select 0, %s8, %s6
  // Predicated region
  $region2: #{_lambda_.38} parent=0 // pred_check
    _
  $region3: #{_lambda_.38} parent=0 // pred_check_branch
    %11 = sbr.rel (0) target = $region5
  $region4: #{_lambda_.38} parent=0 // pred_region
    _
  $region5: #{_lambda_.38} parent=0 // pred_fallthru
    _
  // Predicated region
  $region6: #{_lambda_.38} parent=0 // pred_check
    _
  $region7: #{_lambda_.38} parent=0 // pred_check_branch
    %13 = sbr.rel (0) target = $region9
  $region8: #{_lambda_.38} parent=0 // pred_region
    _
  $region9: #{_lambda_.38} parent=0 // pred_fallthru
    _
  // Predicated region
  $region10: #{_lambda_.38} parent=0 // pred_check
    _
  $region11: #{_lambda_.38} parent=0 // pred_check_branch
    %15 = sbr.rel (0) target = $region13
  $region12: #{_lambda_.38} parent=0 // pred_region
    _
  $region13: #{_lambda_.38} parent=0 // pred_fallthru
    _
  // Predicated region
  $region14: #{_lambda_.38} parent=0 // pred_check
    _
  $region15: #{_lambda_.38} parent=0 // pred_check_branch
    %17 = sbr.rel (0) target = $region17
  $region16: #{_lambda_.38} parent=0 // pred_region
    _
  $region17: #{_lambda_.38} parent=0 // pred_fallthru
    _
  // Predicated region
  $region18: #{_lambda_.38} parent=0 // pred_check
    _
  $region19: #{_lambda_.38} parent=0 // pred_check_branch
    %19 = sbr.rel (0) target = $region21
  $region20: #{_lambda_.38} parent=0 // pred_region
    _
  $region21: #{_lambda_.38} parent=0 // pred_fallthru
    _
  %v21 = vld [vmem:[%s0] sm:$0xff]
  %v22 = vld [vmem:[%s0 + $0x8] sm:$0xff]
  %v23 = vld [vmem:[%s0 + $0x10] sm:$0xff]
  %v24 = vld [vmem:[%s0 + $0x18] sm:$0xff]
  %v25 = vld [vmem:[%s1] sm:$0xf]
  %v26 = vld [vmem:[%s1 + $0x4] sm:$0xf]
  %v27 = vld [vmem:[%s1 + $0x8] sm:$0xf]
  %v28 = vld [vmem:[%s1 + $0xc] sm:$0xf]
  %v29 = vld [vmem:[%s1 + $0x10] sm:$0xf]
  %v30 = vld [vmem:[%s1 + $0x14] sm:$0xf]
  %v31 = vld [vmem:[%s1 + $0x18] sm:$0xf]
  %v32 = vld [vmem:[%s1 + $0x1c] sm:$0xf]
  %v33 = vld [vmem:[%s1 + $0x20] sm:$0xf]
  %v34 = vld [vmem:[%s1 + $0x24] sm:$0xf]
  %v35 = vld [vmem:[%s1 + $0x28] sm:$0xf]
  %v36 = vld [vmem:[%s1 + $0x2c] sm:$0xf]
  %v37 = vld [vmem:[%s1 + $0x30] sm:$0xf]
  %v38 = vld [vmem:[%s1 + $0x34] sm:$0xf]
  %v39 = vld [vmem:[%s1 + $0x38] sm:$0xf]
  %v40 = vld [vmem:[%s1 + $0x3c] sm:$0xf]
  %v41 = vld [vmem:[%s1 + $0x40] sm:$0xf]
  %v42 = vld [vmem:[%s1 + $0x44] sm:$0xf]
  %v47 = vunpack.c.l.b16 %v21
  %v48 = vunpack.c.h.b16 %v21
  %v49 = vunpack.c.l.b16 %v22
  %v50 = vunpack.c.h.b16 %v22
  %v51 = vunpack.c.l.b16 %v23
  %v52 = vunpack.c.h.b16 %v23
  %v53 = vunpack.c.l.b16 %v24
  %v54 = vunpack.c.h.b16 %v24
  %v55 = vpack.c.b16 %v49, %v47
  %v56 = vpack.c.b16 %v50, %v48
  %v57 = vpack.c.b16 %v53, %v51
  %v58 = vpack.c.b16 %v54, %v52
  %v79 = vunpack.c.l.b16 %v25
  %v80 = vunpack.c.l.b16 %v26
  %v81 = vunpack.c.l.b16 %v27
  %v82 = vunpack.c.l.b16 %v28
  %v83 = vunpack.c.l.b16 %v29
  %v84 = vunpack.c.l.b16 %v30
  %v85 = vunpack.c.l.b16 %v31
  %v86 = vunpack.c.l.b16 %v32
  %v87 = vunpack.c.l.b16 %v33
  %v88 = vunpack.c.l.b16 %v34
  %v89 = vunpack.c.l.b16 %v35
  %v90 = vunpack.c.l.b16 %v36
  %v91 = vunpack.c.l.b16 %v37
  %v92 = vunpack.c.l.b16 %v38
  %v93 = vunpack.c.l.b16 %v39
  %v94 = vunpack.c.l.b16 %v40
  %v95 = vunpack.c.l.b16 %v41
  %v96 = vunpack.c.l.b16 %v42
  %v97 = vpack.c.b16 %v80, %v79
  %v98 = vpack.c.b16 %v82, %v81
  %v99 = vpack.c.b16 %v84, %v83
  %v100 = vpack.c.b16 %v86, %v85
  %v101 = vpack.c.b16 %v88, %v87
  %v102 = vpack.c.b16 %v90, %v89
  %v103 = vpack.c.b16 %v92, %v91
  %v104 = vpack.c.b16 %v94, %v93
  %v105 = vpack.c.b16 %v96, %v95
  %vm115 = vcmask 130048
  %v117 = vsel %vm115, %v56, 0
  %v120 = vsel %vm115, %v58, 0
  %122 = vmatpush.bf16.msra.mxu0 %v104
  %123 = vmatpush.bf16.msra.mxu0 %v103
  %124 = vmatpush.bf16.msra.mxu0 %v102
  %125 = vmatpush.bf16.msra.mxu0 %v101
  %126 = vmatpush.bf16.msra.mxu0 %v100
  %127 = vmatpush.bf16.msra.mxu0 %v99
  %128 = vmatpush.bf16.msra.mxu0 %v98
  %129 = vmatpush.bf16.msra.mxu0 %v97
  %130 = vmatmul.bf16.gmra.mxu0 %v55
  %v131 = vpop.f32.mrf.mxu0
  %v132 = vadd.f32 0.0, %v131
  %v133 = vpop.f32.mrf.mxu0
  %v134 = vadd.f32 0.0, %v133
  %135 = vmatmul.bf16.gmra.mxu0 %v57
  %v136 = vpop.f32.mrf.mxu0
  %v137 = vadd.f32 0.0, %v136
  %v138 = vpop.f32.mrf.mxu0
  %v139 = vadd.f32 0.0, %v138
  %140 = vdwg.mxu0
  %141 = vmatpush.bf16.msra.mxu0 0
  %142 = vmatpush.bf16.msra.mxu0 0
  %143 = vmatpush.bf16.msra.mxu0 0
  %144 = vmatpush.bf16.msra.mxu0 0
  %145 = vmatpush.bf16.msra.mxu0 0
  %146 = vmatpush.bf16.msra.mxu0 0
  %147 = vmatpush.bf16.msra.mxu0 0
  %148 = vmatpush.bf16.msra.mxu0 %v105
  %149 = vmatmul.bf16.gmra.mxu0 %v117
  %v150 = vpop.f32.mrf.mxu0
  %v151 = vadd.f32 %v132, %v150
  %v152 = vpop.f32.mrf.mxu0
  %v153 = vadd.f32 %v134, %v152
  %154 = vmatmul.bf16.gmra.mxu0 %v120
  %v155 = vpop.f32.mrf.mxu0
  %v156 = vadd.f32 %v137, %v155
  %v157 = vpop.f32.mrf.mxu0
  %v158 = vadd.f32 %v139, %v157
  %159 = vdwg.mxu0
  %v160 = vld [vmem:[%s2] sm:$0x1]
  %v162 = vperm.slane %v160, 0
  %v164 = vmul.f32 %v151, %v162
  %v165 = vmul.f32 %v153, %v162
  %v166 = vmul.f32 %v156, %v162
  %v167 = vmul.f32 %v158, %v162
  %v168 = vld [vmem:[%s3] sm:$0x1]
  %v170 = vperm.slane %v168, 0
  %v172 = vadd.f32 %v164, %v170
  %v173 = vadd.f32 %v165, %v170
  %v174 = vadd.f32 %v166, %v170
  %v175 = vadd.f32 %v167, %v170
  %v176 = vld [vmem:[%s4] sm:$0xf]
  %v177 = vld [vmem:[%s4 + $0x4] sm:$0xf]
  %v178 = vld [vmem:[%s4 + $0x8] sm:$0xf]
  %v179 = vld [vmem:[%s4 + $0xc] sm:$0xf]
  %v180 = vunpack.c.l.bf16 %v176
  %v181 = vunpack.c.l.bf16 %v177
  %v182 = vunpack.c.l.bf16 %v178
  %v183 = vunpack.c.l.bf16 %v179
  %v184 = vadd.f32 %v172, %v180
  %v185 = vadd.f32 %v173, %v181
  %v186 = vadd.f32 %v174, %v182
  %v187 = vadd.f32 %v175, %v183
  %v188 = vmax.f32 %v184, 0.0
  %v189 = vmax.f32 %v185, 0.0
  %v190 = vmax.f32 %v186, 0.0
  %v191 = vmax.f32 %v187, 0.0
  %v192 = vpack.c.bf16 %v188, %v188
  %v193 = vpack.c.bf16 %v189, %v189
  %v194 = vpack.c.bf16 %v190, %v190
  %v195 = vpack.c.bf16 %v191, %v191
  %vm196 = vcmask 125952
  %197 = vst.msk [vmem:[%s5] sm:$0xf] %vm196, %v192
  %198 = vst.msk [vmem:[%s5 + $0x4] sm:$0xf] %vm196, %v193
  %199 = vst.msk [vmem:[%s5 + $0x8] sm:$0xf] %vm196, %v194
  %200 = vst.msk [vmem:[%s5 + $0xc] sm:$0xf] %vm196, %v195
  // Predicated region
  $region22: #{_lambda_.38} parent=0 // pred_check
    _
  $region23: #{_lambda_.38} parent=0 // pred_check_branch
    %202 = sbr.rel (0) target = $region25
  $region24: #{_lambda_.38} parent=0 // pred_region
    _
  $region25: #{_lambda_.38} parent=0 // pred_fallthru
    _
  // Predicated region
  $region26: #{_lambda_.38} parent=0 // pred_check
    _
  $region27: #{_lambda_.38} parent=0 // pred_check_branch
    %204 = sbr.rel (0) target = $region29
  $region28: #{_lambda_.38} parent=0 // pred_region
    _
  $region29: #{_lambda_.38} parent=0 // pred_fallthru
    _

// kernel: _lambda_.42
$region0: #{_lambda_.42}
  #allocation0 [shape = 'u32[]', space=smem, size = 0x4, offset = 0x4, fixed_abs, tag = 'smem constant byte address 0x4 - core index']
  #allocation1 [shape = 'u32[72,128]{1,0:T(1,128)}', space=vmem, size = 0x9000, scoped, tag = 'internal scratch']
  %s0 = inlined_call_operand.vmem [shape: bf16[32,16], index: 0, kind: input, shape index: {}]
  %s1 = inlined_call_operand.vmem [shape: bf16[16,32], index: 1, kind: input, shape index: {}]
  %s2 = inlined_call_operand.vmem [shape: f32[1,32], index: 2, kind: input, shape index: {}]
  %s3 = inlined_call_operand.vmem [shape: f32[1,32], index: 3, kind: input, shape index: {}]
  %s4 = inlined_call_operand.vmem [shape: bf16[32,32], index: 4, kind: output, shape index: {}]
  %s5 = sld [smem:[#allocation0]]
  $region26: #{_lambda_.42} parent=0
    _
  %s7 = ssub.s32 1, %s5
  %s8 = scalar_select 0, %s7, %s5
  // Predicated region
  $region2: #{_lambda_.42} parent=0 // pred_check
    _
  $region3: #{_lambda_.42} parent=0 // pred_check_branch
    %10 = sbr.rel (0) target = $region5
  $region4: #{_lambda_.42} parent=0 // pred_region
    _
  $region5: #{_lambda_.42} parent=0 // pred_fallthru
    _
  // Predicated region
  $region6: #{_lambda_.42} parent=0 // pred_check
    _
  $region7: #{_lambda_.42} parent=0 // pred_check_branch
    %12 = sbr.rel (0) target = $region9
  $region8: #{_lambda_.42} parent=0 // pred_region
    _
  $region9: #{_lambda_.42} parent=0 // pred_fallthru
    _
  // Predicated region
  $region10: #{_lambda_.42} parent=0 // pred_check
    _
  $region11: #{_lambda_.42} parent=0 // pred_check_branch
    %14 = sbr.rel (0) target = $region13
  $region12: #{_lambda_.42} parent=0 // pred_region
    _
  $region13: #{_lambda_.42} parent=0 // pred_fallthru
    _
  // Predicated region
  $region14: #{_lambda_.42} parent=0 // pred_check
    _
  $region15: #{_lambda_.42} parent=0 // pred_check_branch
    %16 = sbr.rel (0) target = $region17
  $region16: #{_lambda_.42} parent=0 // pred_region
    _
  $region17: #{_lambda_.42} parent=0 // pred_fallthru
    _
  %v18 = vld [vmem:[%s0] sm:$0xf]
  %v19 = vld [vmem:[%s0 + $0x4] sm:$0xf]
  %v20 = vld [vmem:[%s0 + $0x8] sm:$0xf]
  %v21 = vld [vmem:[%s0 + $0xc] sm:$0xf]
  %v22 = vld [vmem:[%s1] sm:$0xf]
  %v23 = vld [vmem:[%s1 + $0x4] sm:$0xf]
  %v28 = vunpack.c.l.b16 %v18
  %v29 = vunpack.c.l.b16 %v19
  %v30 = vunpack.c.l.b16 %v20
  %v31 = vunpack.c.l.b16 %v21
  %v32 = vpack.c.b16 %v29, %v28
  %v33 = vpack.c.b16 %v31, %v30
  %v36 = vunpack.c.l.b16 %v22
  %v37 = vunpack.c.l.b16 %v23
  %v38 = vpack.c.b16 %v37, %v36
  %vm40 = vcmask 130048
  %v42 = vsel %vm40, %v32, 0
  %v45 = vsel %vm40, %v33, 0
  %47 = vmatpush.bf16.msra.mxu0 0
  %48 = vmatpush.bf16.msra.mxu0 0
  %49 = vmatpush.bf16.msra.mxu0 0
  %50 = vmatpush.bf16.msra.mxu0 0
  %51 = vmatpush.bf16.msra.mxu0 0
  %52 = vmatpush.bf16.msra.mxu0 0
  %53 = vmatpush.bf16.msra.mxu0 0
  %54 = vmatpush.bf16.msra.mxu0 %v38
  %55 = vmatmul.bf16.gmra.mxu0 %v42
  %v56 = vpop.f32.mrf.mxu0
  %v57 = vadd.f32 0.0, %v56
  %v58 = vpop.f32.mrf.mxu0
  %v59 = vadd.f32 0.0, %v58
  %60 = vmatmul.bf16.gmra.mxu0 %v45
  %v61 = vpop.f32.mrf.mxu0
  %v62 = vadd.f32 0.0, %v61
  %v63 = vpop.f32.mrf.mxu0
  %v64 = vadd.f32 0.0, %v63
  %65 = vdwg.mxu0
  %v66 = vld [vmem:[%s2] sm:$0x1]
  %v68 = vperm.slane %v66, 0
  %v70 = vmul.f32 %v57, %v68
  %v71 = vmul.f32 %v59, %v68
  %v72 = vmul.f32 %v62, %v68
  %v73 = vmul.f32 %v64, %v68
  %v74 = vld [vmem:[%s3] sm:$0x1]
  %v76 = vperm.slane %v74, 0
  %v78 = vadd.f32 %v70, %v76
  %v79 = vadd.f32 %v71, %v76
  %v80 = vadd.f32 %v72, %v76
  %v81 = vadd.f32 %v73, %v76
  %v82 = vpack.c.bf16 %v78, %v78
  %v83 = vpack.c.bf16 %v79, %v79
  %v84 = vpack.c.bf16 %v80, %v80
  %v85 = vpack.c.bf16 %v81, %v81
  %vm86 = vcmask 257024
  %87 = vst.msk [vmem:[%s4] sm:$0xf] %vm86, %v82
  %88 = vst.msk [vmem:[%s4 + $0x4] sm:$0xf] %vm86, %v83
  %89 = vst.msk [vmem:[%s4 + $0x8] sm:$0xf] %vm86, %v84
  %90 = vst.msk [vmem:[%s4 + $0xc] sm:$0xf] %vm86, %v85
  // Predicated region
  $region18: #{_lambda_.42} parent=0 // pred_check
    _
  $region19: #{_lambda_.42} parent=0 // pred_check_branch
    %92 = sbr.rel (0) target = $region21
  $region20: #{_lambda_.42} parent=0 // pred_region
    _
  $region21: #{_lambda_.42} parent=0 // pred_fallthru
    _
  // Predicated region
  $region22: #{_lambda_.42} parent=0 // pred_check
    _
  $region23: #{_lambda_.42} parent=0 // pred_check_branch
    %94 = sbr.rel (0) target = $region25
  $region24: #{_lambda_.42} parent=0 // pred_region
    _
  $region25: #{_lambda_.42} parent=0 // pred_fallthru
    _

// kernel: _lambda_.41
$region0: #{_lambda_.41}
  #allocation0 [shape = 'u32[]', space=smem, size = 0x4, offset = 0x4, fixed_abs, tag = 'smem constant byte address 0x4 - core index']
  #allocation1 [shape = 'u32[72,128]{1,0:T(1,128)}', space=vmem, size = 0x9000, scoped, tag = 'internal scratch']
  %s0 = inlined_call_operand.vmem [shape: bf16[32,16], index: 0, kind: input, shape index: {}]
  %s1 = inlined_call_operand.vmem [shape: bf16[16,32], index: 1, kind: input, shape index: {}]
  %s2 = inlined_call_operand.vmem [shape: f32[1,32], index: 2, kind: input, shape index: {}]
  %s3 = inlined_call_operand.vmem [shape: f32[1,32], index: 3, kind: input, shape index: {}]
  %s4 = inlined_call_operand.vmem [shape: bf16[32,32], index: 4, kind: output, shape index: {}]
  %s5 = sld [smem:[#allocation0]]
  $region26: #{_lambda_.41} parent=0
    _
  %s7 = ssub.s32 1, %s5
  %s8 = scalar_select 0, %s7, %s5
  // Predicated region
  $region2: #{_lambda_.41} parent=0 // pred_check
    _
  $region3: #{_lambda_.41} parent=0 // pred_check_branch
    %10 = sbr.rel (0) target = $region5
  $region4: #{_lambda_.41} parent=0 // pred_region
    _
  $region5: #{_lambda_.41} parent=0 // pred_fallthru
    _
  // Predicated region
  $region6: #{_lambda_.41} parent=0 // pred_check
    _
  $region7: #{_lambda_.41} parent=0 // pred_check_branch
    %12 = sbr.rel (0) target = $region9
  $region8: #{_lambda_.41} parent=0 // pred_region
    _
  $region9: #{_lambda_.41} parent=0 // pred_fallthru
    _
  // Predicated region
  $region10: #{_lambda_.41} parent=0 // pred_check
    _
  $region11: #{_lambda_.41} parent=0 // pred_check_branch
    %14 = sbr.rel (0) target = $region13
  $region12: #{_lambda_.41} parent=0 // pred_region
    _
  $region13: #{_lambda_.41} parent=0 // pred_fallthru
    _
  // Predicated region
  $region14: #{_lambda_.41} parent=0 // pred_check
    _
  $region15: #{_lambda_.41} parent=0 // pred_check_branch
    %16 = sbr.rel (0) target = $region17
  $region16: #{_lambda_.41} parent=0 // pred_region
    _
  $region17: #{_lambda_.41} parent=0 // pred_fallthru
    _
  %v18 = vld [vmem:[%s0] sm:$0xf]
  %v19 = vld [vmem:[%s0 + $0x4] sm:$0xf]
  %v20 = vld [vmem:[%s0 + $0x8] sm:$0xf]
  %v21 = vld [vmem:[%s0 + $0xc] sm:$0xf]
  %v22 = vld [vmem:[%s1] sm:$0xf]
  %v23 = vld [vmem:[%s1 + $0x4] sm:$0xf]
  %v28 = vunpack.c.l.b16 %v18
  %v29 = vunpack.c.l.b16 %v19
  %v30 = vunpack.c.l.b16 %v20
  %v31 = vunpack.c.l.b16 %v21
  %v32 = vpack.c.b16 %v29, %v28
  %v33 = vpack.c.b16 %v31, %v30
  %v36 = vunpack.c.l.b16 %v22
  %v37 = vunpack.c.l.b16 %v23
  %v38 = vpack.c.b16 %v37, %v36
  %vm40 = vcmask 130048
  %v42 = vsel %vm40, %v32, 0
  %v45 = vsel %vm40, %v33, 0
  %47 = vmatpush.bf16.msra.mxu0 0
  %48 = vmatpush.bf16.msra.mxu0 0
  %49 = vmatpush.bf16.msra.mxu0 0
  %50 = vmatpush.bf16.msra.mxu0 0
  %51 = vmatpush.bf16.msra.mxu0 0
  %52 = vmatpush.bf16.msra.mxu0 0
  %53 = vmatpush.bf16.msra.mxu0 0
  %54 = vmatpush.bf16.msra.mxu0 %v38
  %55 = vmatmul.bf16.gmra.mxu0 %v42
  %v56 = vpop.f32.mrf.mxu0
  %v57 = vadd.f32 0.0, %v56
  %v58 = vpop.f32.mrf.mxu0
  %v59 = vadd.f32 0.0, %v58
  %60 = vmatmul.bf16.gmra.mxu0 %v45
  %v61 = vpop.f32.mrf.mxu0
  %v62 = vadd.f32 0.0, %v61
  %v63 = vpop.f32.mrf.mxu0
  %v64 = vadd.f32 0.0, %v63
  %65 = vdwg.mxu0
  %v66 = vld [vmem:[%s2] sm:$0x1]
  %v68 = vperm.slane %v66, 0
  %v70 = vmul.f32 %v57, %v68
  %v71 = vmul.f32 %v59, %v68
  %v72 = vmul.f32 %v62, %v68
  %v73 = vmul.f32 %v64, %v68
  %v74 = vld [vmem:[%s3] sm:$0x1]
  %v76 = vperm.slane %v74, 0
  %v78 = vadd.f32 %v70, %v76
  %v79 = vadd.f32 %v71, %v76
  %v80 = vadd.f32 %v72, %v76
  %v81 = vadd.f32 %v73, %v76
  %v82 = vmax.f32 %v78, 0.0
  %v83 = vmax.f32 %v79, 0.0
  %v84 = vmax.f32 %v80, 0.0
  %v85 = vmax.f32 %v81, 0.0
  %v86 = vpack.c.bf16 %v82, %v82
  %v87 = vpack.c.bf16 %v83, %v83
  %v88 = vpack.c.bf16 %v84, %v84
  %v89 = vpack.c.bf16 %v85, %v85
  %vm90 = vcmask 257024
  %91 = vst.msk [vmem:[%s4] sm:$0xf] %vm90, %v86
  %92 = vst.msk [vmem:[%s4 + $0x4] sm:$0xf] %vm90, %v87
  %93 = vst.msk [vmem:[%s4 + $0x8] sm:$0xf] %vm90, %v88
  %94 = vst.msk [vmem:[%s4 + $0xc] sm:$0xf] %vm90, %v89
  // Predicated region
  $region18: #{_lambda_.41} parent=0 // pred_check
    _
  $region19: #{_lambda_.41} parent=0 // pred_check_branch
    %96 = sbr.rel (0) target = $region21
  $region20: #{_lambda_.41} parent=0 // pred_region
    _
  $region21: #{_lambda_.41} parent=0 // pred_fallthru
    _
  // Predicated region
  $region22: #{_lambda_.41} parent=0 // pred_check
    _
  $region23: #{_lambda_.41} parent=0 // pred_check_branch
    %98 = sbr.rel (0) target = $region25
  $region24: #{_lambda_.41} parent=0 // pred_region
    _
  $region25: #{_lambda_.41} parent=0 // pred_fallthru
    _

// kernel: _lambda_.44
$region0: #{_lambda_.44}
  #allocation0 [shape = 'u32[]', space=smem, size = 0x4, offset = 0x4, fixed_abs, tag = 'smem constant byte address 0x4 - core index']
  #allocation1 [shape = 'u32[72,128]{1,0:T(1,128)}', space=vmem, size = 0x9000, scoped, tag = 'internal scratch']
  %s0 = inlined_call_operand.vmem [shape: bf16[2,16,32], index: 0, kind: input, shape index: {}]
  %s1 = inlined_call_operand.vmem [shape: f32[1,16,32], index: 1, kind: input, shape index: {}]
  %s2 = inlined_call_operand.vmem [shape: f32[2,16,32], index: 2, kind: output, shape index: {}]
  %s3 = sld [smem:[#allocation0]]
  $region41: #{_lambda_.44} parent=0
    _
  %s5 = ssub.s32 1, %s3
  %s6 = scalar_select 0, %s5, %s3
  loop: start=0, step=1, limit=4
  $region2: #{_lambda_.44} parent=0 // loop_pre_header
    _
  $region3: #{_lambda_.44} parent=0 // loop_header
    %s8 = sphi 0, %s12
    %p9 = scmp.ge.s32.totalorder %s8, 4
    %s18 = sphi 0, %s20
    %s21 = sphi 0, %s18
    %s22 = sphi 0, %s21
    %s38 = sphi 0, %s22
    %s42 = sphi 0, %s42
    %s44 = sphi 0, %s42
    %s45 = sphi 0, %s44
    %s59 = sphi 0, %s45
    %s65 = sphi 0, %s67
    %s68 = sphi 0, %s65
    %s69 = sphi 0, %s68
    %s85 = sphi 0, %s69
  $region4: #{_lambda_.44} parent=0 // loop_header_branch
    %11 = sbr.rel (%p9) target = $region8
  $region5: #{_lambda_.44} parent=0 // loop_body
    %s13 = ssub.s32 %s8, 1
    %s14 = ssub.s32 %s8, 2
    %s15 = sadd.s32 %s8, 1
    %s16 = ssub.s32 %s8, %s15
    %p17 = scmp.eq.s32.totalorder %s16, 0
    %s19 = sadd.s32 %s18, 1
    %s20 = scalar_select %p17, %s18, %s19
    %p23 = pneg %p17
    %p24 = scmp.eq.s32.totalorder %s8, 1
    %p25 = por %p23, %p24
    %p26 = scmp.ne.s32.totalorder %s18, %s21
    %p27 = scmp.eq.s32.totalorder %s8, 0
    %p28 = por %p26, %p27
    %p29 = scmp.ne.s32.totalorder %s18, %s21
    %p30 = scmp.eq.s32.totalorder %s13, 1
    %p31 = por %p29, %p30
    %p32 = scmp.ne.s32.totalorder %s21, %s22
    %p33 = scmp.eq.s32.totalorder %s13, 0
    %p34 = por %p32, %p33
    %p35 = scmp.ne.s32.totalorder %s21, %s22
    %p36 = scmp.eq.s32.totalorder %s14, 1
    %p37 = por %p35, %p36
    %p39 = scmp.ne.s32.totalorder %s22, %s38
    %p40 = scmp.eq.s32.totalorder %s14, 0
    %p41 = por %p39, %p40
    %s43 = sadd.s32 %s42, 1
    %p46 = scmp.eq.s32.totalorder %s8, 1
    %p47 = scmp.ne.s32.totalorder %s42, %s44
    %p48 = scmp.eq.s32.totalorder %s8, 0
    %p49 = por %p47, %p48
    %p50 = scmp.ne.s32.totalorder %s42, %s44
    %p51 = scmp.eq.s32.totalorder %s13, 1
    %p52 = por %p50, %p51
    %p53 = scmp.ne.s32.totalorder %s44, %s45
    %p54 = scmp.eq.s32.totalorder %s13, 0
    %p55 = por %p53, %p54
    %p56 = scmp.ne.s32.totalorder %s44, %s45
    %p57 = scmp.eq.s32.totalorder %s14, 1
    %p58 = por %p56, %p57
    %p60 = scmp.ne.s32.totalorder %s45, %s59
    %p61 = scmp.eq.s32.totalorder %s14, 0
    %p62 = por %p60, %p61
    %s63 = ssub.s32 %s8, %s15
    %p64 = scmp.eq.s32.totalorder %s63, 0
    %s66 = sadd.s32 %s65, 1
    %s67 = scalar_select %p64, %s65, %s66
    %p70 = pneg %p64
    %p71 = scmp.eq.s32.totalorder %s8, 1
    %p72 = por %p70, %p71
    %p73 = scmp.ne.s32.totalorder %s65, %s68
    %p74 = scmp.eq.s32.totalorder %s8, 0
    %p75 = por %p73, %p74
    %p76 = scmp.ne.s32.totalorder %s65, %s68
    %p77 = scmp.eq.s32.totalorder %s13, 1
    %p78 = por %p76, %p77
    %p79 = scmp.ne.s32.totalorder %s68, %s69
    %p80 = scmp.eq.s32.totalorder %s13, 0
    %p81 = por %p79, %p80
    %p82 = scmp.ne.s32.totalorder %s68, %s69
    %p83 = scmp.eq.s32.totalorder %s14, 1
    %p84 = por %p82, %p83
    %p86 = scmp.ne.s32.totalorder %s69, %s85
    %p87 = scmp.eq.s32.totalorder %s14, 0
    %p88 = por %p86, %p87
    %p89 = scmp.le.s32.totalorder 1, %s8
    %p90 = scmp.lt.s32.totalorder %s8, 3
    %p91 = pnand %p89, %p90
    %p92 = pneg %p91
    // Predicated region
    $region9: #{_lambda_.44} parent=5 // pred_check
      _
    $region10: #{_lambda_.44} parent=5 // pred_check_branch
      %94 = sbr.rel (%p91) target = $region12
    $region11: #{_lambda_.44} parent=5 // pred_region
      %s95 = ssub.s32 %s8, 1
      // Predicated region
      $region13: #{_lambda_.44} parent=11 // pred_check
        %p96 = pneg %p55
      $region14: #{_lambda_.44} parent=11 // pred_check_branch
        %98 = sbr.rel (%p96) target = $region16
      $region15: #{_lambda_.44} parent=11 // pred_region
        _
      $region16: #{_lambda_.44} parent=11 // pred_fallthru
        _
    $region12: #{_lambda_.44} parent=5 // pred_fallthru
      _
    %p99 = scmp.lt.s32.totalorder %s8, 2
    // Predicated region
    $region17: #{_lambda_.44} parent=5 // pred_check
      %p100 = pneg %p99
    $region18: #{_lambda_.44} parent=5 // pred_check_branch
      %102 = sbr.rel (%p100) target = $region20
    $region19: #{_lambda_.44} parent=5 // pred_region
      // Predicated region
      $region21: #{_lambda_.44} parent=19 // pred_check
        %p103 = pneg %p28
      $region22: #{_lambda_.44} parent=19 // pred_check_branch
        %105 = sbr.rel (%p103) target = $region24
      $region23: #{_lambda_.44} parent=19 // pred_region
        %p106 = scmp.lt.s32.totalorder %s8, 1
        %s107 = scalar_select %p106, %s8, 1
        %s108 = smul.addr %s107, 2
        %s109 = smul.addr %s108, 4
        %s110 = scalar_lea.vmem %s0, %s109
      $region24: #{_lambda_.44} parent=19 // pred_fallthru
        _
    $region20: #{_lambda_.44} parent=5 // pred_fallthru
      _
    %p111 = scmp.le.s32.totalorder 1, %s8
    %p112 = scmp.lt.s32.totalorder %s8, 3
    %p113 = pnand %p111, %p112
    %p114 = pneg %p113
    // Predicated region
    $region25: #{_lambda_.44} parent=5 // pred_check
      _
    $region26: #{_lambda_.44} parent=5 // pred_check_branch
      %116 = sbr.rel (%p113) target = $region28
    $region27: #{_lambda_.44} parent=5 // pred_region
      %s117 = ssub.s32 %s8, 1
      %p118 = scmp.lt.s32.totalorder %s13, 1
      %s119 = scalar_select %p118, %s13, 1
      %s120 = smul.addr %s119, 2
      %s121 = smul.addr %s120, 4
      %s122 = scalar_lea.vmem %s0, %s121
      %p123 = pneg %p34
      %p124 = pneg %p31
      %p125 = pneg %p55
      %p126 = pneg %p52
      %p127 = pneg %p81
      %p128 = pneg %p78
      %p129 = scmp.lt.s32.totalorder %s13, 1
      %s130 = scalar_select %p129, %s13, 1
      %s131 = smul.addr %s130, 2
      %s132 = smul.addr %s131, 8
      %s133 = scalar_lea.vmem %s2, %s132
      %p134 = scmp.lt.s32.totalorder %s13, 1
      %s135 = scalar_select %p134, %s13, 1
      %s136 = smul.addr %s135, 2
      %s137 = smul.addr %s136, 4
      %s138 = scalar_lea.vmem %s0, %s137
      %p139 = scmp.lt.s32.totalorder %s13, 1
      %s140 = scalar_select %p139, %s13, 1
      %s141 = smul.addr %s140, 2
      %s142 = smul.addr %s141, 8
      %s143 = scalar_lea.vmem %s2, %s142
      %v144 = vld [vmem:[%s138] sm:$0xf]
      %v145 = vld [vmem:[%s138 + $0x4] sm:$0xf]
      %v146 = vunpack.c.l.bf16 %v144
      %v147 = vunpack.c.l.bf16 %v145
      %v148 = vld [vmem:[%s1] sm:$0xff]
      %v149 = vld [vmem:[%s1 + $0x8] sm:$0xff]
      %v150 = vadd.f32 %v146, %v148
      %v151 = vadd.f32 %v147, %v149
      %vm152 = vcmask 261120
      %153 = vst.msk [vmem:[%s143] sm:$0xff] %vm152, %v150
      %154 = vst.msk [vmem:[%s143 + $0x8] sm:$0xff] %vm152, %v151
      %p155 = scmp.lt.s32.totalorder %s13, 1
      %s156 = scalar_select %p155, %s13, 1
      %s157 = smul.addr %s156, 2
      %s158 = smul.addr %s157, 8
      %s159 = scalar_lea.vmem %s2, %s158
      // Predicated region
      $region29: #{_lambda_.44} parent=27 // pred_check
        %p160 = pneg %p78
      $region30: #{_lambda_.44} parent=27 // pred_check_branch
        %162 = sbr.rel (%p160) target = $region32
      $region31: #{_lambda_.44} parent=27 // pred_region
        _
      $region32: #{_lambda_.44} parent=27 // pred_fallthru
        _
    $region28: #{_lambda_.44} parent=5 // pred_fallthru
      _
    %p163 = scmp.le.s32.totalorder 2, %s8
    // Predicated region
    $region33: #{_lambda_.44} parent=5 // pred_check
      %p164 = pneg %p163
    $region34: #{_lambda_.44} parent=5 // pred_check_branch
      %166 = sbr.rel (%p164) target = $region36
    $region35: #{_lambda_.44} parent=5 // pred_region
      %s167 = ssub.s32 %s8, 2
      // Predicated region
      $region37: #{_lambda_.44} parent=35 // pred_check
        %p168 = pneg %p84
      $region38: #{_lambda_.44} parent=35 // pred_check_branch
        %170 = sbr.rel (%p168) target = $region40
      $region39: #{_lambda_.44} parent=35 // pred_region
        %p171 = scmp.lt.s32.totalorder %s14, 1
        %s172 = scalar_select %p171, %s14, 1
        %s173 = smul.addr %s172, 2
        %s174 = smul.addr %s173, 8
        %s175 = scalar_lea.vmem %s2, %s174
      $region40: #{_lambda_.44} parent=35 // pred_fallthru
        _
    $region36: #{_lambda_.44} parent=5 // pred_fallthru
      _
  $region6: #{_lambda_.44} parent=0 // loop_footer
    %s12 = sadd.s32 1, %s8
  $region7: #{_lambda_.44} parent=0 // loop_footer_branch
    %7 = sbr.rel target = $region3
  $region8: #{_lambda_.44} parent=0 // loop_exit
    _

// kernel: _lambda_.45
$region0: #{_lambda_.45}
  #allocation0 [shape = 'u32[]', space=smem, size = 0x4, offset = 0x4, fixed_abs, tag = 'smem constant byte address 0x4 - core index']
  #allocation1 [shape = 'u32[72,128]{1,0:T(1,128)}', space=vmem, size = 0x9000, scoped, tag = 'internal scratch']
  %s0 = inlined_call_operand.vmem [shape: f32[32,32], index: 0, kind: input, shape index: {}]
  %s1 = inlined_call_operand.vmem [shape: bf16[32,96], index: 1, kind: input, shape index: {}]
  %s2 = inlined_call_operand.vmem [shape: f32[1,96], index: 2, kind: input, shape index: {}]
  %s3 = inlined_call_operand.vmem [shape: bf16[32,96], index: 3, kind: output, shape index: {}]
  %s4 = sld [smem:[#allocation0]]
  $region22: #{_lambda_.45} parent=0
    _
  %s6 = ssub.s32 1, %s4
  %s7 = scalar_select 0, %s6, %s4
  // Predicated region
  $region2: #{_lambda_.45} parent=0 // pred_check
    _
  $region3: #{_lambda_.45} parent=0 // pred_check_branch
    %9 = sbr.rel (0) target = $region5
  $region4: #{_lambda_.45} parent=0 // pred_region
    _
  $region5: #{_lambda_.45} parent=0 // pred_fallthru
    _
  // Predicated region
  $region6: #{_lambda_.45} parent=0 // pred_check
    _
  $region7: #{_lambda_.45} parent=0 // pred_check_branch
    %11 = sbr.rel (0) target = $region9
  $region8: #{_lambda_.45} parent=0 // pred_region
    _
  $region9: #{_lambda_.45} parent=0 // pred_fallthru
    _
  // Predicated region
  $region10: #{_lambda_.45} parent=0 // pred_check
    _
  $region11: #{_lambda_.45} parent=0 // pred_check_branch
    %13 = sbr.rel (0) target = $region13
  $region12: #{_lambda_.45} parent=0 // pred_region
    _
  $region13: #{_lambda_.45} parent=0 // pred_fallthru
    _
  %v15 = vld [vmem:[%s0] sm:$0xff]
  %v16 = vld [vmem:[%s0 + $0x8] sm:$0xff]
  %v17 = vld [vmem:[%s0 + $0x10] sm:$0xff]
  %v18 = vld [vmem:[%s0 + $0x18] sm:$0xff]
  %v19 = vpack.c.bf16 %v16, %v15
  %v20 = vpack.c.bf16 %v18, %v17
  %v21 = vld [vmem:[%s1] sm:$0xf]
  %v22 = vld [vmem:[%s1 + $0x4] sm:$0xf]
  %v23 = vld [vmem:[%s1 + $0x8] sm:$0xf]
  %v24 = vld [vmem:[%s1 + $0xc] sm:$0xf]
  %v25 = vld [vmem:[%s2] sm:$0x1]
  %v27 = vperm.slane %v25, 0
  %v33 = vunpack.c.l.b16 %v21
  %v34 = vunpack.c.l.b16 %v22
  %v35 = vunpack.c.l.b16 %v23
  %v36 = vunpack.c.l.b16 %v24
  %v37 = vpack.c.b16 %v34, %v33
  %v38 = vpack.c.b16 %v36, %v35
  %vm41 = vcmask 261120
  %v43 = vsel %vm41, %v19, 0
  %v46 = vsel %vm41, %v20, 0
  %48 = vmatpush.bf16.msra.mxu0 0
  %49 = vmatpush.bf16.msra.mxu0 0
  %50 = vmatpush.bf16.msra.mxu0 0
  %51 = vmatpush.bf16.msra.mxu0 0
  %52 = vmatpush.bf16.msra.mxu0 0
  %53 = vmatpush.bf16.msra.mxu0 0
  %54 = vmatpush.bf16.msra.mxu0 %v38
  %55 = vmatpush.bf16.msra.mxu0 %v37
  %56 = vmatmul.bf16.gmra.mxu0 %v43
  %v57 = vpop.f32.mrf.mxu0
  %v58 = vadd.f32 %v27, %v57
  %v59 = vpop.f32.mrf.mxu0
  %v60 = vadd.f32 %v27, %v59
  %61 = vmatmul.bf16.gmra.mxu0 %v46
  %v62 = vpop.f32.mrf.mxu0
  %v63 = vadd.f32 %v27, %v62
  %v64 = vpop.f32.mrf.mxu0
  %v65 = vadd.f32 %v27, %v64
  %66 = vdwg.mxu0
  %v67 = vpack.c.bf16 %v58, %v58
  %v68 = vpack.c.bf16 %v60, %v60
  %v69 = vpack.c.bf16 %v63, %v63
  %v70 = vpack.c.bf16 %v65, %v65
  %vm71 = vcmask 781312
  %72 = vst.msk [vmem:[%s3] sm:$0xf] %vm71, %v67
  %73 = vst.msk [vmem:[%s3 + $0x4] sm:$0xf] %vm71, %v68
  %74 = vst.msk [vmem:[%s3 + $0x8] sm:$0xf] %vm71, %v69
  %75 = vst.msk [vmem:[%s3 + $0xc] sm:$0xf] %vm71, %v70
  // Predicated region
  $region14: #{_lambda_.45} parent=0 // pred_check
    _
  $region15: #{_lambda_.45} parent=0 // pred_check_branch
    %77 = sbr.rel (0) target = $region17
  $region16: #{_lambda_.45} parent=0 // pred_region
    _
  $region17: #{_lambda_.45} parent=0 // pred_fallthru
    _
  // Predicated region
  $region18: #{_lambda_.45} parent=0 // pred_check
    _
  $region19: #{_lambda_.45} parent=0 // pred_check_branch
    %79 = sbr.rel (0) target = $region21
  $region20: #{_lambda_.45} parent=0 // pred_region
    _
  $region21: #{_lambda_.45} parent=0 // pred_fallthru
    _

// kernel: _lambda_.43
$region0: #{_lambda_.43}
  #allocation0 [shape = 'u32[]', space=smem, size = 0x4, offset = 0x4, fixed_abs, tag = 'smem constant byte address 0x4 - core index']
  #allocation1 [shape = 'u32[72,128]{1,0:T(1,128)}', space=vmem, size = 0x9000, scoped, tag = 'internal scratch']
  %s0 = inlined_call_operand.vmem [shape: bf16[32,288], index: 0, kind: input, shape index: {}]
  %s1 = inlined_call_operand.vmem [shape: bf16[288,32], index: 1, kind: input, shape index: {}]
  %s2 = inlined_call_operand.vmem [shape: f32[1,32], index: 2, kind: input, shape index: {}]
  %s3 = inlined_call_operand.vmem [shape: f32[1,32], index: 3, kind: input, shape index: {}]
  %s4 = inlined_call_operand.vmem [shape: bf16[32,32], index: 4, kind: input, shape index: {}]
  %s5 = inlined_call_operand.vmem [shape: bf16[32,32], index: 5, kind: output, shape index: {}]
  %s6 = sld [smem:[#allocation0]]
  $region30: #{_lambda_.43} parent=0
    _
  %s8 = ssub.s32 1, %s6
  %s9 = scalar_select 0, %s8, %s6
  // Predicated region
  $region2: #{_lambda_.43} parent=0 // pred_check
    _
  $region3: #{_lambda_.43} parent=0 // pred_check_branch
    %11 = sbr.rel (0) target = $region5
  $region4: #{_lambda_.43} parent=0 // pred_region
    _
  $region5: #{_lambda_.43} parent=0 // pred_fallthru
    _
  // Predicated region
  $region6: #{_lambda_.43} parent=0 // pred_check
    _
  $region7: #{_lambda_.43} parent=0 // pred_check_branch
    %13 = sbr.rel (0) target = $region9
  $region8: #{_lambda_.43} parent=0 // pred_region
    _
  $region9: #{_lambda_.43} parent=0 // pred_fallthru
    _
  // Predicated region
  $region10: #{_lambda_.43} parent=0 // pred_check
    _
  $region11: #{_lambda_.43} parent=0 // pred_check_branch
    %15 = sbr.rel (0) target = $region13
  $region12: #{_lambda_.43} parent=0 // pred_region
    _
  $region13: #{_lambda_.43} parent=0 // pred_fallthru
    _
  // Predicated region
  $region14: #{_lambda_.43} parent=0 // pred_check
    _
  $region15: #{_lambda_.43} parent=0 // pred_check_branch
    %17 = sbr.rel (0) target = $region17
  $region16: #{_lambda_.43} parent=0 // pred_region
    _
  $region17: #{_lambda_.43} parent=0 // pred_fallthru
    _
  // Predicated region
  $region18: #{_lambda_.43} parent=0 // pred_check
    _
  $region19: #{_lambda_.43} parent=0 // pred_check_branch
    %19 = sbr.rel (0) target = $region21
  $region20: #{_lambda_.43} parent=0 // pred_region
    _
  $region21: #{_lambda_.43} parent=0 // pred_fallthru
    _
  %v21 = vld [vmem:[%s0] sm:$0xff]
  %v22 = vld [vmem:[%s0 + $0x8] sm:$0xf]
  %v23 = vld [vmem:[%s0 + $0xc] sm:$0xff]
  %v24 = vld [vmem:[%s0 + $0x14] sm:$0xf]
  %v25 = vld [vmem:[%s0 + $0x18] sm:$0xff]
  %v26 = vld [vmem:[%s0 + $0x20] sm:$0xf]
  %v27 = vld [vmem:[%s0 + $0x24] sm:$0xff]
  %v28 = vld [vmem:[%s0 + $0x2c] sm:$0xf]
  %v29 = vld [vmem:[%s1] sm:$0xf]
  %v30 = vld [vmem:[%s1 + $0x4] sm:$0xf]
  %v31 = vld [vmem:[%s1 + $0x8] sm:$0xf]
  %v32 = vld [vmem:[%s1 + $0xc] sm:$0xf]
  %v33 = vld [vmem:[%s1 + $0x10] sm:$0xf]
  %v34 = vld [vmem:[%s1 + $0x14] sm:$0xf]
  %v35 = vld [vmem:[%s1 + $0x18] sm:$0xf]
  %v36 = vld [vmem:[%s1 + $0x1c] sm:$0xf]
  %v37 = vld [vmem:[%s1 + $0x20] sm:$0xf]
  %v38 = vld [vmem:[%s1 + $0x24] sm:$0xf]
  %v39 = vld [vmem:[%s1 + $0x28] sm:$0xf]
  %v40 = vld [vmem:[%s1 + $0x2c] sm:$0xf]
  %v41 = vld [vmem:[%s1 + $0x30] sm:$0xf]
  %v42 = vld [vmem:[%s1 + $0x34] sm:$0xf]
  %v43 = vld [vmem:[%s1 + $0x38] sm:$0xf]
  %v44 = vld [vmem:[%s1 + $0x3c] sm:$0xf]
  %v45 = vld [vmem:[%s1 + $0x40] sm:$0xf]
  %v46 = vld [vmem:[%s1 + $0x44] sm:$0xf]
  %v47 = vld [vmem:[%s1 + $0x48] sm:$0xf]
  %v48 = vld [vmem:[%s1 + $0x4c] sm:$0xf]
  %v49 = vld [vmem:[%s1 + $0x50] sm:$0xf]
  %v50 = vld [vmem:[%s1 + $0x54] sm:$0xf]
  %v51 = vld [vmem:[%s1 + $0x58] sm:$0xf]
  %v52 = vld [vmem:[%s1 + $0x5c] sm:$0xf]
  %v53 = vld [vmem:[%s1 + $0x60] sm:$0xf]
  %v54 = vld [vmem:[%s1 + $0x64] sm:$0xf]
  %v55 = vld [vmem:[%s1 + $0x68] sm:$0xf]
  %v56 = vld [vmem:[%s1 + $0x6c] sm:$0xf]
  %v57 = vld [vmem:[%s1 + $0x70] sm:$0xf]
  %v58 = vld [vmem:[%s1 + $0x74] sm:$0xf]
  %v59 = vld [vmem:[%s1 + $0x78] sm:$0xf]
  %v60 = vld [vmem:[%s1 + $0x7c] sm:$0xf]
  %v61 = vld [vmem:[%s1 + $0x80] sm:$0xf]
  %v62 = vld [vmem:[%s1 + $0x84] sm:$0xf]
  %v63 = vld [vmem:[%s1 + $0x88] sm:$0xf]
  %v64 = vld [vmem:[%s1 + $0x8c] sm:$0xf]
  %v73 = vunpack.c.l.b16 %v21
  %v74 = vunpack.c.h.b16 %v21
  %v75 = vunpack.c.l.b16 %v22
  %v76 = vunpack.c.l.b16 %v23
  %v77 = vunpack.c.h.b16 %v23
  %v78 = vunpack.c.l.b16 %v24
  %v79 = vunpack.c.l.b16 %v25
  %v80 = vunpack.c.h.b16 %v25
  %v81 = vunpack.c.l.b16 %v26
  %v82 = vunpack.c.l.b16 %v27
  %v83 = vunpack.c.h.b16 %v27
  %v84 = vunpack.c.l.b16 %v28
  %v85 = vpack.c.b16 %v76, %v73
  %v86 = vpack.c.b16 %v77, %v74
  %v87 = vpack.c.b16 %v78, %v75
  %v88 = vpack.c.b16 %v82, %v79
  %v89 = vpack.c.b16 %v83, %v80
  %v90 = vpack.c.b16 %v84, %v81
  %v131 = vunpack.c.l.b16 %v29
  %v132 = vunpack.c.l.b16 %v30
  %v133 = vunpack.c.l.b16 %v31
  %v134 = vunpack.c.l.b16 %v32
  %v135 = vunpack.c.l.b16 %v33
  %v136 = vunpack.c.l.b16 %v34
  %v137 = vunpack.c.l.b16 %v35
  %v138 = vunpack.c.l.b16 %v36
  %v139 = vunpack.c.l.b16 %v37
  %v140 = vunpack.c.l.b16 %v38
  %v141 = vunpack.c.l.b16 %v39
  %v142 = vunpack.c.l.b16 %v40
  %v143 = vunpack.c.l.b16 %v41
  %v144 = vunpack.c.l.b16 %v42
  %v145 = vunpack.c.l.b16 %v43
  %v146 = vunpack.c.l.b16 %v44
  %v147 = vunpack.c.l.b16 %v45
  %v148 = vunpack.c.l.b16 %v46
  %v149 = vunpack.c.l.b16 %v47
  %v150 = vunpack.c.l.b16 %v48
  %v151 = vunpack.c.l.b16 %v49
  %v152 = vunpack.c.l.b16 %v50
  %v153 = vunpack.c.l.b16 %v51
  %v154 = vunpack.c.l.b16 %v52
  %v155 = vunpack.c.l.b16 %v53
  %v156 = vunpack.c.l.b16 %v54
  %v157 = vunpack.c.l.b16 %v55
  %v158 = vunpack.c.l.b16 %v56
  %v159 = vunpack.c.l.b16 %v57
  %v160 = vunpack.c.l.b16 %v58
  %v161 = vunpack.c.l.b16 %v59
  %v162 = vunpack.c.l.b16 %v60
  %v163 = vunpack.c.l.b16 %v61
  %v164 = vunpack.c.l.b16 %v62
  %v165 = vunpack.c.l.b16 %v63
  %v166 = vunpack.c.l.b16 %v64
  %v167 = vpack.c.b16 %v132, %v131
  %v168 = vpack.c.b16 %v134, %v133
  %v169 = vpack.c.b16 %v136, %v135
  %v170 = vpack.c.b16 %v138, %v137
  %v171 = vpack.c.b16 %v140, %v139
  %v172 = vpack.c.b16 %v142, %v141
  %v173 = vpack.c.b16 %v144, %v143
  %v174 = vpack.c.b16 %v146, %v145
  %v175 = vpack.c.b16 %v148, %v147
  %v176 = vpack.c.b16 %v150, %v149
  %v177 = vpack.c.b16 %v152, %v151
  %v178 = vpack.c.b16 %v154, %v153
  %v179 = vpack.c.b16 %v156, %v155
  %v180 = vpack.c.b16 %v158, %v157
  %v181 = vpack.c.b16 %v160, %v159
  %v182 = vpack.c.b16 %v162, %v161
  %v183 = vpack.c.b16 %v164, %v163
  %v184 = vpack.c.b16 %v166, %v165
  %vm203 = vcmask 261120
  %v205 = vsel %vm203, %v87, 0
  %v208 = vsel %vm203, %v90, 0
  %210 = vmatpush.bf16.msra.mxu0 %v174
  %211 = vmatpush.bf16.msra.mxu0 %v173
  %212 = vmatpush.bf16.msra.mxu0 %v172
  %213 = vmatpush.bf16.msra.mxu0 %v171
  %214 = vmatpush.bf16.msra.mxu0 %v170
  %215 = vmatpush.bf16.msra.mxu0 %v169
  %216 = vmatpush.bf16.msra.mxu0 %v168
  %217 = vmatpush.bf16.msra.mxu0 %v167
  %218 = vmatmul.bf16.gmra.mxu0 %v85
  %v219 = vpop.f32.mrf.mxu0
  %v220 = vadd.f32 0.0, %v219
  %v221 = vpop.f32.mrf.mxu0
  %v222 = vadd.f32 0.0, %v221
  %223 = vmatmul.bf16.gmra.mxu0 %v88
  %v224 = vpop.f32.mrf.mxu0
  %v225 = vadd.f32 0.0, %v224
  %v226 = vpop.f32.mrf.mxu0
  %v227 = vadd.f32 0.0, %v226
  %228 = vdwg.mxu0
  %229 = vmatpush.bf16.msra.mxu0 %v182
  %230 = vmatpush.bf16.msra.mxu0 %v181
  %231 = vmatpush.bf16.msra.mxu0 %v180
  %232 = vmatpush.bf16.msra.mxu0 %v179
  %233 = vmatpush.bf16.msra.mxu0 %v178
  %234 = vmatpush.bf16.msra.mxu0 %v177
  %235 = vmatpush.bf16.msra.mxu0 %v176
  %236 = vmatpush.bf16.msra.mxu0 %v175
  %237 = vmatmul.bf16.gmra.mxu0 %v86
  %v238 = vpop.f32.mrf.mxu0
  %v239 = vadd.f32 %v220, %v238
  %v240 = vpop.f32.mrf.mxu0
  %v241 = vadd.f32 %v222, %v240
  %242 = vmatmul.bf16.gmra.mxu0 %v89
  %v243 = vpop.f32.mrf.mxu0
  %v244 = vadd.f32 %v225, %v243
  %v245 = vpop.f32.mrf.mxu0
  %v246 = vadd.f32 %v227, %v245
  %247 = vdwg.mxu0
  %248 = vmatpush.bf16.msra.mxu0 0
  %249 = vmatpush.bf16.msra.mxu0 0
  %250 = vmatpush.bf16.msra.mxu0 0
  %251 = vmatpush.bf16.msra.mxu0 0
  %252 = vmatpush.bf16.msra.mxu0 0
  %253 = vmatpush.bf16.msra.mxu0 0
  %254 = vmatpush.bf16.msra.mxu0 %v184
  %255 = vmatpush.bf16.msra.mxu0 %v183
  %256 = vmatmul.bf16.gmra.mxu0 %v205
  %v257 = vpop.f32.mrf.mxu0
  %v258 = vadd.f32 %v239, %v257
  %v259 = vpop.f32.mrf.mxu0
  %v260 = vadd.f32 %v241, %v259
  %261 = vmatmul.bf16.gmra.mxu0 %v208
  %v262 = vpop.f32.mrf.mxu0
  %v263 = vadd.f32 %v244, %v262
  %v264 = vpop.f32.mrf.mxu0
  %v265 = vadd.f32 %v246, %v264
  %266 = vdwg.mxu0
  %v267 = vld [vmem:[%s2] sm:$0x1]
  %v269 = vperm.slane %v267, 0
  %v271 = vmul.f32 %v258, %v269
  %v272 = vmul.f32 %v260, %v269
  %v273 = vmul.f32 %v263, %v269
  %v274 = vmul.f32 %v265, %v269
  %v275 = vld [vmem:[%s3] sm:$0x1]
  %v277 = vperm.slane %v275, 0
  %v279 = vadd.f32 %v271, %v277
  %v280 = vadd.f32 %v272, %v277
  %v281 = vadd.f32 %v273, %v277
  %v282 = vadd.f32 %v274, %v277
  %v283 = vld [vmem:[%s4] sm:$0xf]
  %v284 = vld [vmem:[%s4 + $0x4] sm:$0xf]
  %v285 = vld [vmem:[%s4 + $0x8] sm:$0xf]
  %v286 = vld [vmem:[%s4 + $0xc] sm:$0xf]
  %v287 = vunpack.c.l.bf16 %v283
  %v288 = vunpack.c.l.bf16 %v284
  %v289 = vunpack.c.l.bf16 %v285
  %v290 = vunpack.c.l.bf16 %v286
  %v291 = vadd.f32 %v279, %v287
  %v292 = vadd.f32 %v280, %v288
  %v293 = vadd.f32 %v281, %v289
  %v294 = vadd.f32 %v282, %v290
  %v295 = vmax.f32 %v291, 0.0
  %v296 = vmax.f32 %v292, 0.0
  %v297 = vmax.f32 %v293, 0.0
  %v298 = vmax.f32 %v294, 0.0
  %v299 = vpack.c.bf16 %v295, %v295
  %v300 = vpack.c.bf16 %v296, %v296
  %v301 = vpack.c.bf16 %v297, %v297
  %v302 = vpack.c.bf16 %v298, %v298
  %vm303 = vcmask 257024
  %304 = vst.msk [vmem:[%s5] sm:$0xf] %vm303, %v299
  %305 = vst.msk [vmem:[%s5 + $0x4] sm:$0xf] %vm303, %v300
  %306 = vst.msk [vmem:[%s5 + $0x8] sm:$0xf] %vm303, %v301
  %307 = vst.msk [vmem:[%s5 + $0xc] sm:$0xf] %vm303, %v302
  // Predicated region
  $region22: #{_lambda_.43} parent=0 // pred_check
    _
  $region23: #{_lambda_.43} parent=0 // pred_check_branch
    %309 = sbr.rel (0) target = $region25
  $region24: #{_lambda_.43} parent=0 // pred_region
    _
  $region25: #{_lambda_.43} parent=0 // pred_fallthru
    _
  // Predicated region
  $region26: #{_lambda_.43} parent=0 // pred_check
    _
  $region27: #{_lambda_.43} parent=0 // pred_check_branch
    %311 = sbr.rel (0) target = $region29
  $region28: #{_lambda_.43} parent=0 // pred_region
    _
  $region29: #{_lambda_.43} parent=0 // pred_fallthru
    _

// kernel: _lambda_.47
$region0: #{_lambda_.47}
  #allocation0 [shape = 'u32[]', space=smem, size = 0x4, offset = 0x4, fixed_abs, tag = 'smem constant byte address 0x4 - core index']
  #allocation1 [shape = 'u32[72,128]{1,0:T(1,128)}', space=vmem, size = 0x9000, scoped, tag = 'internal scratch']
  %s0 = inlined_call_operand.vmem [shape: bf16[32,32], index: 0, kind: input, shape index: {}]
  %s1 = inlined_call_operand.vmem [shape: bf16[32,32], index: 1, kind: input, shape index: {}]
  %s2 = inlined_call_operand.vmem [shape: f32[1,32], index: 2, kind: input, shape index: {}]
  %s3 = inlined_call_operand.vmem [shape: f32[1,32], index: 3, kind: input, shape index: {}]
  %s4 = inlined_call_operand.vmem [shape: f32[1,32], index: 4, kind: input, shape index: {}]
  %s5 = inlined_call_operand.vmem [shape: f32[32,32], index: 5, kind: input, shape index: {}]
  %s6 = inlined_call_operand.vmem [shape: f32[32,32], index: 6, kind: output, shape index: {}]
  %s7 = sld [smem:[#allocation0]]
  $region34: #{_lambda_.47} parent=0
    _
  %s9 = ssub.s32 1, %s7
  %s10 = scalar_select 0, %s9, %s7
  // Predicated region
  $region2: #{_lambda_.47} parent=0 // pred_check
    _
  $region3: #{_lambda_.47} parent=0 // pred_check_branch
    %12 = sbr.rel (0) target = $region5
  $region4: #{_lambda_.47} parent=0 // pred_region
    _
  $region5: #{_lambda_.47} parent=0 // pred_fallthru
    _
  // Predicated region
  $region6: #{_lambda_.47} parent=0 // pred_check
    _
  $region7: #{_lambda_.47} parent=0 // pred_check_branch
    %14 = sbr.rel (0) target = $region9
  $region8: #{_lambda_.47} parent=0 // pred_region
    _
  $region9: #{_lambda_.47} parent=0 // pred_fallthru
    _
  // Predicated region
  $region10: #{_lambda_.47} parent=0 // pred_check
    _
  $region11: #{_lambda_.47} parent=0 // pred_check_branch
    %16 = sbr.rel (0) target = $region13
  $region12: #{_lambda_.47} parent=0 // pred_region
    _
  $region13: #{_lambda_.47} parent=0 // pred_fallthru
    _
  // Predicated region
  $region14: #{_lambda_.47} parent=0 // pred_check
    _
  $region15: #{_lambda_.47} parent=0 // pred_check_branch
    %18 = sbr.rel (0) target = $region17
  $region16: #{_lambda_.47} parent=0 // pred_region
    _
  $region17: #{_lambda_.47} parent=0 // pred_fallthru
    _
  // Predicated region
  $region18: #{_lambda_.47} parent=0 // pred_check
    _
  $region19: #{_lambda_.47} parent=0 // pred_check_branch
    %20 = sbr.rel (0) target = $region21
  $region20: #{_lambda_.47} parent=0 // pred_region
    _
  $region21: #{_lambda_.47} parent=0 // pred_fallthru
    _
  // Predicated region
  $region22: #{_lambda_.47} parent=0 // pred_check
    _
  $region23: #{_lambda_.47} parent=0 // pred_check_branch
    %22 = sbr.rel (0) target = $region25
  $region24: #{_lambda_.47} parent=0 // pred_region
    _
  $region25: #{_lambda_.47} parent=0 // pred_fallthru
    _
  %v24 = vld [vmem:[%s0] sm:$0xf]
  %v25 = vld [vmem:[%s0 + $0x4] sm:$0xf]
  %v26 = vld [vmem:[%s0 + $0x8] sm:$0xf]
  %v27 = vld [vmem:[%s0 + $0xc] sm:$0xf]
  %v28 = vld [vmem:[%s1] sm:$0xf]
  %v29 = vld [vmem:[%s1 + $0x4] sm:$0xf]
  %v30 = vld [vmem:[%s1 + $0x8] sm:$0xf]
  %v31 = vld [vmem:[%s1 + $0xc] sm:$0xf]
  %v32 = vld [vmem:[%s2] sm:$0x1]
  %v34 = vperm.slane %v32, 0
  %v40 = vunpack.c.l.b16 %v24
  %v41 = vunpack.c.l.b16 %v25
  %v42 = vunpack.c.l.b16 %v26
  %v43 = vunpack.c.l.b16 %v27
  %v44 = vpack.c.b16 %v41, %v40
  %v45 = vpack.c.b16 %v43, %v42
  %v50 = vunpack.c.l.b16 %v28
  %v51 = vunpack.c.l.b16 %v29
  %v52 = vunpack.c.l.b16 %v30
  %v53 = vunpack.c.l.b16 %v31
  %v54 = vpack.c.b16 %v51, %v50
  %v55 = vpack.c.b16 %v53, %v52
  %vm58 = vcmask 261120
  %v60 = vsel %vm58, %v44, 0
  %v63 = vsel %vm58, %v45, 0
  %65 = vmatpush.bf16.msra.mxu0 0
  %66 = vmatpush.bf16.msra.mxu0 0
  %67 = vmatpush.bf16.msra.mxu0 0
  %68 = vmatpush.bf16.msra.mxu0 0
  %69 = vmatpush.bf16.msra.mxu0 0
  %70 = vmatpush.bf16.msra.mxu0 0
  %71 = vmatpush.bf16.msra.mxu0 %v55
  %72 = vmatpush.bf16.msra.mxu0 %v54
  %73 = vmatmul.bf16.gmra.mxu0 %v60
  %v74 = vpop.f32.mrf.mxu0
  %v75 = vadd.f32 %v34, %v74
  %v76 = vpop.f32.mrf.mxu0
  %v77 = vadd.f32 %v34, %v76
  %78 = vmatmul.bf16.gmra.mxu0 %v63
  %v79 = vpop.f32.mrf.mxu0
  %v80 = vadd.f32 %v34, %v79
  %v81 = vpop.f32.mrf.mxu0
  %v82 = vadd.f32 %v34, %v81
  %83 = vdwg.mxu0
  %v84 = vld [vmem:[%s3] sm:$0x1]
  %v85 = vld [vmem:[%s4] sm:$0x1]
  %v86 = vld [vmem:[%s5] sm:$0xff]
  %v87 = vld [vmem:[%s5 + $0x8] sm:$0xff]
  %v88 = vld [vmem:[%s5 + $0x10] sm:$0xff]
  %v89 = vld [vmem:[%s5 + $0x18] sm:$0xff]
  %v90 = vadd.f32 %v75, %v86
  %v91 = vadd.f32 %v77, %v87
  %v92 = vadd.f32 %v80, %v88
  %v93 = vadd.f32 %v82, %v89
  %v94 = vsel %vm58, %v90, 0.0
  %95 = vadd.xlane.f32.xlu0 %v94
  %v96 = vpop.xlane.xlu0 %95
  %v97 = vsel %vm58, %v91, 0.0
  %98 = vadd.xlane.f32.xlu0 %v97
  %v99 = vpop.xlane.xlu0 %98
  %v100 = vsel %vm58, %v92, 0.0
  %101 = vadd.xlane.f32.xlu0 %v100
  %v102 = vpop.xlane.xlu0 %101
  %v103 = vsel %vm58, %v93, 0.0
  %104 = vadd.xlane.f32.xlu0 %v103
  %v105 = vpop.xlane.xlu0 %104
  %v106 = vrcp.pop 32.0
  %v107 = vmul.f32 32.0, %v106
  %v108 = vsub.f32 1.0, %v107
  %v109 = vmul.f32 %v106, %v108
  %v110 = vadd.f32 %v106, %v109
  %vm111 = vweird.f32 %v106
  %v112 = vsel %vm111, %v106, %v110
  %v113 = vmul.f32 %v96, %v112
  %v114 = vmul.f32 %v99, %v112
  %v115 = vmul.f32 %v102, %v112
  %v116 = vmul.f32 %v105, %v112
  %v117 = vsub.f32 %v90, %v113
  %v118 = vsub.f32 %v91, %v114
  %v119 = vsub.f32 %v92, %v115
  %v120 = vsub.f32 %v93, %v116
  %v121 = vmul.f32 %v117, %v117
  %v122 = vmul.f32 %v118, %v118
  %v123 = vmul.f32 %v119, %v119
  %v124 = vmul.f32 %v120, %v120
  %v125 = vsel %vm58, %v121, 0.0
  %126 = vadd.xlane.f32.xlu0 %v125
  %v127 = vpop.xlane.xlu0 %126
  %v128 = vsel %vm58, %v122, 0.0
  %129 = vadd.xlane.f32.xlu0 %v128
  %v130 = vpop.xlane.xlu0 %129
  %v131 = vsel %vm58, %v123, 0.0
  %132 = vadd.xlane.f32.xlu0 %v131
  %v133 = vpop.xlane.xlu0 %132
  %v134 = vsel %vm58, %v124, 0.0
  %135 = vadd.xlane.f32.xlu0 %v134
  %v136 = vpop.xlane.xlu0 %135
  %v137 = vmul.f32 %v127, %v112
  %v138 = vmul.f32 %v130, %v112
  %v139 = vmul.f32 %v133, %v112
  %v140 = vmul.f32 %v136, %v112
  %v141 = vadd.f32 %v137, 1e-05
  %v142 = vadd.f32 %v138, 1e-05
  %v143 = vadd.f32 %v139, 1e-05
  %v144 = vadd.f32 %v140, 1e-05
  %v145 = vrsqrt.pop %v141
  %v146 = vmul.f32 %v145, %v141
  %v147 = vmul.f32 %v146, %v145
  %v148 = vmul.f32 0.5, %v147
  %v149 = vsub.f32 1.5, %v148
  %v150 = vmul.f32 %v145, %v149
  %vm151 = vweird.f32 %v141
  %vm152 = vweird.f32 %v145
  %vm153 = vmor %vm151, %vm152
  %v154 = vsel %vm153, %v145, %v150
  %v155 = vrsqrt.pop %v142
  %v156 = vmul.f32 %v155, %v142
  %v157 = vmul.f32 %v156, %v155
  %v158 = vmul.f32 0.5, %v157
  %v159 = vsub.f32 1.5, %v158
  %v160 = vmul.f32 %v155, %v159
  %vm161 = vweird.f32 %v142
  %vm162 = vweird.f32 %v155
  %vm163 = vmor %vm161, %vm162
  %v164 = vsel %vm163, %v155, %v160
  %v165 = vrsqrt.pop %v143
  %v166 = vmul.f32 %v165, %v143
  %v167 = vmul.f32 %v166, %v165
  %v168 = vmul.f32 0.5, %v167
  %v169 = vsub.f32 1.5, %v168
  %v170 = vmul.f32 %v165, %v169
  %vm171 = vweird.f32 %v143
  %vm172 = vweird.f32 %v165
  %vm173 = vmor %vm171, %vm172
  %v174 = vsel %vm173, %v165, %v170
  %v175 = vrsqrt.pop %v144
  %v176 = vmul.f32 %v175, %v144
  %v177 = vmul.f32 %v176, %v175
  %v178 = vmul.f32 0.5, %v177
  %v179 = vsub.f32 1.5, %v178
  %v180 = vmul.f32 %v175, %v179
  %vm181 = vweird.f32 %v144
  %vm182 = vweird.f32 %v175
  %vm183 = vmor %vm181, %vm182
  %v184 = vsel %vm183, %v175, %v180
  %v185 = vmul.f32 %v117, %v154
  %v186 = vmul.f32 %v118, %v164
  %v187 = vmul.f32 %v119, %v174
  %v188 = vmul.f32 %v120, %v184
  %v190 = vperm.slane %v84, 0
  %v192 = vmul.f32 %v185, %v190
  %v193 = vmul.f32 %v186, %v190
  %v194 = vmul.f32 %v187, %v190
  %v195 = vmul.f32 %v188, %v190
  %v197 = vperm.slane %v85, 0
  %v199 = vadd.f32 %v192, %v197
  %v200 = vadd.f32 %v193, %v197
  %v201 = vadd.f32 %v194, %v197
  %v202 = vadd.f32 %v195, %v197
  %203 = vst.msk [vmem:[%s6] sm:$0xff] %vm58, %v199
  %204 = vst.msk [vmem:[%s6 + $0x8] sm:$0xff] %vm58, %v200
  %205 = vst.msk [vmem:[%s6 + $0x10] sm:$0xff] %vm58, %v201
  %206 = vst.msk [vmem:[%s6 + $0x18] sm:$0xff] %vm58, %v202
  // Predicated region
  $region26: #{_lambda_.47} parent=0 // pred_check
    _
  $region27: #{_lambda_.47} parent=0 // pred_check_branch
    %208 = sbr.rel (0) target = $region29
  $region28: #{_lambda_.47} parent=0 // pred_region
    _
  $region29: #{_lambda_.47} parent=0 // pred_fallthru
    _
  // Predicated region
  $region30: #{_lambda_.47} parent=0 // pred_check
    _
  $region31: #{_lambda_.47} parent=0 // pred_check_branch
    %210 = sbr.rel (0) target = $region33
  $region32: #{_lambda_.47} parent=0 // pred_region
    _
  $region33: #{_lambda_.47} parent=0 // pred_fallthru
    _

// kernel: _lambda_.46
$region0: #{_lambda_.46}
  #allocation0 [shape = 'u32[]', space=smem, size = 0x4, offset = 0x4, fixed_abs, tag = 'smem constant byte address 0x4 - core index']
  #allocation1 [shape = 'u32[72,128]{1,0:T(1,128)}', space=vmem, size = 0x9000, scoped, tag = 'internal scratch']
  %s0 = inlined_call_operand.vmem [shape: bf16[2,16,96], index: 0, kind: input, shape index: {}]
  %s1 = inlined_call_operand.vmem [shape: bf16[2,16,32], index: 1, kind: output, shape index: {}]
  %s2 = sld [smem:[#allocation0]]
  $region37: #{_lambda_.46} parent=0
    _
  %s4 = ssub.s32 1, %s2
  %s5 = scalar_select 0, %s4, %s2
  loop: start=0, step=1, limit=4
  $region2: #{_lambda_.46} parent=0 // loop_pre_header
    _
  $region3: #{_lambda_.46} parent=0 // loop_header
    %s7 = sphi 0, %s11
    %p8 = scmp.ge.s32.totalorder %s7, 4
    %s17 = sphi 0, %s19
    %s20 = sphi 0, %s17
    %s21 = sphi 0, %s20
    %s37 = sphi 0, %s21
    %s43 = sphi 0, %s45
    %s46 = sphi 0, %s43
    %s47 = sphi 0, %s46
    %s63 = sphi 0, %s47
  $region4: #{_lambda_.46} parent=0 // loop_header_branch
    %10 = sbr.rel (%p8) target = $region8
  $region5: #{_lambda_.46} parent=0 // loop_body
    %s12 = ssub.s32 %s7, 1
    %s13 = ssub.s32 %s7, 2
    %s14 = sadd.s32 %s7, 1
    %s15 = ssub.s32 %s7, %s14
    %p16 = scmp.eq.s32.totalorder %s15, 0
    %s18 = sadd.s32 %s17, 1
    %s19 = scalar_select %p16, %s17, %s18
    %p22 = pneg %p16
    %p23 = scmp.eq.s32.totalorder %s7, 1
    %p24 = por %p22, %p23
    %p25 = scmp.ne.s32.totalorder %s17, %s20
    %p26 = scmp.eq.s32.totalorder %s7, 0
    %p27 = por %p25, %p26
    %p28 = scmp.ne.s32.totalorder %s17, %s20
    %p29 = scmp.eq.s32.totalorder %s12, 1
    %p30 = por %p28, %p29
    %p31 = scmp.ne.s32.totalorder %s20, %s21
    %p32 = scmp.eq.s32.totalorder %s12, 0
    %p33 = por %p31, %p32
    %p34 = scmp.ne.s32.totalorder %s20, %s21
    %p35 = scmp.eq.s32.totalorder %s13, 1
    %p36 = por %p34, %p35
    %p38 = scmp.ne.s32.totalorder %s21, %s37
    %p39 = scmp.eq.s32.totalorder %s13, 0
    %p40 = por %p38, %p39
    %s41 = ssub.s32 %s7, %s14
    %p42 = scmp.eq.s32.totalorder %s41, 0
    %s44 = sadd.s32 %s43, 1
    %s45 = scalar_select %p42, %s43, %s44
    %p48 = pneg %p42
    %p49 = scmp.eq.s32.totalorder %s7, 1
    %p50 = por %p48, %p49
    %p51 = scmp.ne.s32.totalorder %s43, %s46
    %p52 = scmp.eq.s32.totalorder %s7, 0
    %p53 = por %p51, %p52
    %p54 = scmp.ne.s32.totalorder %s43, %s46
    %p55 = scmp.eq.s32.totalorder %s12, 1
    %p56 = por %p54, %p55
    %p57 = scmp.ne.s32.totalorder %s46, %s47
    %p58 = scmp.eq.s32.totalorder %s12, 0
    %p59 = por %p57, %p58
    %p60 = scmp.ne.s32.totalorder %s46, %s47
    %p61 = scmp.eq.s32.totalorder %s13, 1
    %p62 = por %p60, %p61
    %p64 = scmp.ne.s32.totalorder %s47, %s63
    %p65 = scmp.eq.s32.totalorder %s13, 0
    %p66 = por %p64, %p65
    %p67 = scmp.le.s32.totalorder 1, %s7
    %p68 = scmp.lt.s32.totalorder %s7, 3
    %p69 = pnand %p67, %p68
    %p70 = pneg %p69
    // Predicated region
    $region9: #{_lambda_.46} parent=5 // pred_check
      _
    $region10: #{_lambda_.46} parent=5 // pred_check_branch
      %72 = sbr.rel (%p69) target = $region12
    $region11: #{_lambda_.46} parent=5 // pred_region
      %s73 = ssub.s32 %s7, 1
    $region12: #{_lambda_.46} parent=5 // pred_fallthru
      _
    %p74 = scmp.lt.s32.totalorder %s7, 2
    // Predicated region
    $region13: #{_lambda_.46} parent=5 // pred_check
      %p75 = pneg %p74
    $region14: #{_lambda_.46} parent=5 // pred_check_branch
      %77 = sbr.rel (%p75) target = $region16
    $region15: #{_lambda_.46} parent=5 // pred_region
      // Predicated region
      $region17: #{_lambda_.46} parent=15 // pred_check
        %p78 = pneg %p27
      $region18: #{_lambda_.46} parent=15 // pred_check_branch
        %80 = sbr.rel (%p78) target = $region20
      $region19: #{_lambda_.46} parent=15 // pred_region
        %p81 = scmp.lt.s32.totalorder %s7, 1
        %s82 = scalar_select %p81, %s7, 1
        %s83 = smul.addr %s82, 2
        %s84 = smul.addr %s83, 4
        %s85 = scalar_lea.vmem %s0, %s84
      $region20: #{_lambda_.46} parent=15 // pred_fallthru
        _
    $region16: #{_lambda_.46} parent=5 // pred_fallthru
      _
    %p86 = scmp.le.s32.totalorder 1, %s7
    %p87 = scmp.lt.s32.totalorder %s7, 3
    %p88 = pnand %p86, %p87
    %p89 = pneg %p88
    // Predicated region
    $region21: #{_lambda_.46} parent=5 // pred_check
      _
    $region22: #{_lambda_.46} parent=5 // pred_check_branch
      %91 = sbr.rel (%p88) target = $region24
    $region23: #{_lambda_.46} parent=5 // pred_region
      %s92 = ssub.s32 %s7, 1
      %p93 = scmp.lt.s32.totalorder %s12, 1
      %s94 = scalar_select %p93, %s12, 1
      %s95 = smul.addr %s94, 2
      %s96 = smul.addr %s95, 4
      %s97 = scalar_lea.vmem %s0, %s96
      %p98 = pneg %p33
      %p99 = pneg %p30
      %p100 = pneg %p59
      %p101 = pneg %p56
      %p102 = scmp.lt.s32.totalorder %s12, 1
      %s103 = scalar_select %p102, %s12, 1
      %s104 = smul.addr %s103, 2
      %s105 = smul.addr %s104, 4
      %s106 = scalar_lea.vmem %s1, %s105
      %p107 = scmp.lt.s32.totalorder %s12, 1
      %s108 = scalar_select %p107, %s12, 1
      %s109 = smul.addr %s108, 2
      %s110 = smul.addr %s109, 4
      %s111 = scalar_lea.vmem %s0, %s110
      %p112 = scmp.lt.s32.totalorder %s12, 1
      %s113 = scalar_select %p112, %s12, 1
      %s114 = smul.addr %s113, 2
      %s115 = smul.addr %s114, 4
      %s116 = scalar_lea.vmem %s1, %s115
      %v118 = vld [vmem:[%s111] sm:$0xf]
      %v119 = vld [vmem:[%s111 + $0x4] sm:$0xf]
      %v122 = vunpack.c.l.b16 %v118
      %v123 = vunpack.c.l.b16 %v119
      %v124 = vpack.c.b16 %v123, %v122
      %125 = vrot.lane.b32.xlu0 %v124, 96
      %v126 = vpop.permute.xlu0 %125
      %vm127 = vcmask 64512
      %v129 = vsel %vm127, %v124, 0
      %v132 = vsel %vm127, %v126, 0
      %134 = vmatpush.bf16.xpose.msra.mxu0 0
      %135 = vmatpush.bf16.xpose.msra.mxu0 0
      %136 = vmatpush.bf16.xpose.msra.mxu0 0
      %137 = vmatpush.bf16.xpose.msra.mxu0 0
      %138 = vmatpush.bf16.xpose.msra.mxu0 0
      %139 = vmatpush.bf16.xpose.msra.mxu0 0
      %140 = vmatpush.bf16.xpose.msra.mxu0 0
      %141 = vmatpush.bf16.xpose.msra.mxu0 %v132
      %142 = vmatmul.bf16.gmra.mxu0 %v129
      %v143 = vpop.f32.mrf.mxu0
      %v144 = vadd.f32 0.0, %v143
      %v145 = vpop.f32.mrf.mxu0
      %v146 = vadd.f32 0.0, %v145
      %147 = vdwg.mxu0
      %vm148 = vcmask 130048
      %v149 = vsel %vm148, %v144, -inf
      %150 = vmax.xlane.f32.xlu0 %v149
      %v151 = vpop.xlane.xlu0 %150
      %v152 = vsel %vm148, %v146, -inf
      %153 = vmax.xlane.f32.xlu0 %v152
      %v154 = vpop.xlane.xlu0 %153
      %v155 = vsub.f32 %v144, %v151
      %v156 = vsub.f32 %v146, %v154
      %v157 = vmul.f32 %v155, 1.442695
      %v158 = vpow.pop %v157
      %v159 = vmul.f32 %v156, 1.442695
      %v160 = vpow.pop %v159
      %v161 = vsel %vm148, %v158, 0.0
      %162 = vadd.xlane.f32.xlu0 %v161
      %v163 = vpop.xlane.xlu0 %162
      %v164 = vsel %vm148, %v160, 0.0
      %165 = vadd.xlane.f32.xlu0 %v164
      %v166 = vpop.xlane.xlu0 %165
      %v167 = vrcp.pop %v163
      %v168 = vrcp.pop %v166
      %v169 = vmul.f32 %v158, %v167
      %v170 = vmul.f32 %v160, %v168
      %v171 = vpack.c.bf16 %v170, %v169
      %172 = vrot.lane.b32.xlu0 %v124, 64
      %v173 = vpop.permute.xlu0 %172
      %v176 = vsel %vm148, %v171, 0
      %178 = vmatpush.bf16.msra.mxu0 0
      %179 = vmatpush.bf16.msra.mxu0 0
      %180 = vmatpush.bf16.msra.mxu0 0
      %181 = vmatpush.bf16.msra.mxu0 0
      %182 = vmatpush.bf16.msra.mxu0 0
      %183 = vmatpush.bf16.msra.mxu0 0
      %184 = vmatpush.bf16.msra.mxu0 0
      %185 = vmatpush.bf16.msra.mxu0 %v173
      %186 = vmatmul.bf16.gmra.mxu0 %v176
      %v187 = vpop.f32.mrf.mxu0
      %v188 = vadd.f32 0.0, %v187
      %v189 = vpop.f32.mrf.mxu0
      %v190 = vadd.f32 0.0, %v189
      %191 = vdwg.mxu0
      %v192 = vpack.c.bf16 %v188, %v188
      %v193 = vpack.c.bf16 %v190, %v190
      %vm194 = vcmask 60416
      %195 = vst.msk [vmem:[%s116] sm:$0xf] %vm194, %v192
      %196 = vst.msk [vmem:[%s116 + $0x4] sm:$0xf] %vm194, %v193
      %v197 = vld [vmem:[%s111] sm:$0xf]
      %v198 = vld [vmem:[%s111 + $0x4] sm:$0xf]
      %v201 = vunpack.c.l.b16 %v197
      %v202 = vunpack.c.l.b16 %v198
      %v203 = vpack.c.b16 %v202, %v201
      %204 = vrot.lane.b32.xlu0 %v203, 120
      %v205 = vpop.permute.xlu0 %204
      %206 = vrot.lane.b32.xlu0 %v203, 88
      %v207 = vpop.permute.xlu0 %206
      %v209 = vsel %vm127, %v205, 0
      %v212 = vsel %vm127, %v207, 0
      %214 = vmatpush.bf16.xpose.msra.mxu0 0
      %215 = vmatpush.bf16.xpose.msra.mxu0 0
      %216 = vmatpush.bf16.xpose.msra.mxu0 0
      %217 = vmatpush.bf16.xpose.msra.mxu0 0
      %218 = vmatpush.bf16.xpose.msra.mxu0 0
      %219 = vmatpush.bf16.xpose.msra.mxu0 0
      %220 = vmatpush.bf16.xpose.msra.mxu0 0
      %221 = vmatpush.bf16.xpose.msra.mxu0 %v212
      %222 = vmatmul.bf16.gmra.mxu0 %v209
      %v223 = vpop.f32.mrf.mxu0
      %v224 = vadd.f32 0.0, %v223
      %v225 = vpop.f32.mrf.mxu0
      %v226 = vadd.f32 0.0, %v225
      %227 = vdwg.mxu0
      %v228 = vsel %vm148, %v224, -inf
      %229 = vmax.xlane.f32.xlu0 %v228
      %v230 = vpop.xlane.xlu0 %229
      %v231 = vsel %vm148, %v226, -inf
      %232 = vmax.xlane.f32.xlu0 %v231
      %v233 = vpop.xlane.xlu0 %232
      %v234 = vsub.f32 %v224, %v230
      %v235 = vsub.f32 %v226, %v233
      %v236 = vmul.f32 %v234, 1.442695
      %v237 = vpow.pop %v236
      %v238 = vmul.f32 %v235, 1.442695
      %v239 = vpow.pop %v238
      %v240 = vsel %vm148, %v237, 0.0
      %241 = vadd.xlane.f32.xlu0 %v240
      %v242 = vpop.xlane.xlu0 %241
      %v243 = vsel %vm148, %v239, 0.0
      %244 = vadd.xlane.f32.xlu0 %v243
      %v245 = vpop.xlane.xlu0 %244
      %v246 = vrcp.pop %v242
      %v247 = vrcp.pop %v245
      %v248 = vmul.f32 %v237, %v246
      %v249 = vmul.f32 %v239, %v247
      %v250 = vpack.c.bf16 %v249, %v248
      %251 = vrot.lane.b32.xlu0 %v203, 56
      %v252 = vpop.permute.xlu0 %251
      %v255 = vsel %vm148, %v250, 0
      %257 = vmatpush.bf16.msra.mxu0 0
      %258 = vmatpush.bf16.msra.mxu0 0
      %259 = vmatpush.bf16.msra.mxu0 0
      %260 = vmatpush.bf16.msra.mxu0 0
      %261 = vmatpush.bf16.msra.mxu0 0
      %262 = vmatpush.bf16.msra.mxu0 0
      %263 = vmatpush.bf16.msra.mxu0 0
      %264 = vmatpush.bf16.msra.mxu0 %v252
      %265 = vmatmul.bf16.gmra.mxu0 %v255
      %v266 = vpop.f32.mrf.mxu0
      %v267 = vadd.f32 0.0, %v266
      %v268 = vpop.f32.mrf.mxu0
      %v269 = vadd.f32 0.0, %v268
      %270 = vdwg.mxu0
      %v271 = vpack.c.bf16 %v267, %v267
      %v272 = vpack.c.bf16 %v269, %v269
      %275 = vrot.lane.b32.xlu0 %v271, 8
      %v276 = vpop.permute.xlu0 %275
      %277 = vrot.lane.b32.xlu0 %v272, 8
      %v278 = vpop.permute.xlu0 %277
      %vm281 = vcmask 126016
      %282 = vst.msk [vmem:[%s116] sm:$0xf] %vm281, %v276
      %283 = vst.msk [vmem:[%s116 + $0x4] sm:$0xf] %vm281, %v278
      %v284 = vld [vmem:[%s111] sm:$0xf]
      %v285 = vld [vmem:[%s111 + $0x4] sm:$0xf]
      %v288 = vunpack.c.l.b16 %v284
      %v289 = vunpack.c.l.b16 %v285
      %v290 = vpack.c.b16 %v289, %v288
      %291 = vrot.lane.b32.xlu0 %v290, 112
      %v292 = vpop.permute.xlu0 %291
      %293 = vrot.lane.b32.xlu0 %v290, 80
      %v294 = vpop.permute.xlu0 %293
      %v296 = vsel %vm127, %v292, 0
      %v299 = vsel %vm127, %v294, 0
      %301 = vmatpush.bf16.xpose.msra.mxu0 0
      %302 = vmatpush.bf16.xpose.msra.mxu0 0
      %303 = vmatpush.bf16.xpose.msra.mxu0 0
      %304 = vmatpush.bf16.xpose.msra.mxu0 0
      %305 = vmatpush.bf16.xpose.msra.mxu0 0
      %306 = vmatpush.bf16.xpose.msra.mxu0 0
      %307 = vmatpush.bf16.xpose.msra.mxu0 0
      %308 = vmatpush.bf16.xpose.msra.mxu0 %v299
      %309 = vmatmul.bf16.gmra.mxu0 %v296
      %v310 = vpop.f32.mrf.mxu0
      %v311 = vadd.f32 0.0, %v310
      %v312 = vpop.f32.mrf.mxu0
      %v313 = vadd.f32 0.0, %v312
      %314 = vdwg.mxu0
      %v315 = vsel %vm148, %v311, -inf
      %316 = vmax.xlane.f32.xlu0 %v315
      %v317 = vpop.xlane.xlu0 %316
      %v318 = vsel %vm148, %v313, -inf
      %319 = vmax.xlane.f32.xlu0 %v318
      %v320 = vpop.xlane.xlu0 %319
      %v321 = vsub.f32 %v311, %v317
      %v322 = vsub.f32 %v313, %v320
      %v323 = vmul.f32 %v321, 1.442695
      %v324 = vpow.pop %v323
      %v325 = vmul.f32 %v322, 1.442695
      %v326 = vpow.pop %v325
      %v327 = vsel %vm148, %v324, 0.0
      %328 = vadd.xlane.f32.xlu0 %v327
      %v329 = vpop.xlane.xlu0 %328
      %v330 = vsel %vm148, %v326, 0.0
      %331 = vadd.xlane.f32.xlu0 %v330
      %v332 = vpop.xlane.xlu0 %331
      %v333 = vrcp.pop %v329
      %v334 = vrcp.pop %v332
      %v335 = vmul.f32 %v324, %v333
      %v336 = vmul.f32 %v326, %v334
      %v337 = vpack.c.bf16 %v336, %v335
      %338 = vrot.lane.b32.xlu0 %v290, 48
      %v339 = vpop.permute.xlu0 %338
      %v342 = vsel %vm148, %v337, 0
      %344 = vmatpush.bf16.msra.mxu0 0
      %345 = vmatpush.bf16.msra.mxu0 0
      %346 = vmatpush.bf16.msra.mxu0 0
      %347 = vmatpush.bf16.msra.mxu0 0
      %348 = vmatpush.bf16.msra.mxu0 0
      %349 = vmatpush.bf16.msra.mxu0 0
      %350 = vmatpush.bf16.msra.mxu0 0
      %351 = vmatpush.bf16.msra.mxu0 %v339
      %352 = vmatmul.bf16.gmra.mxu0 %v342
      %v353 = vpop.f32.mrf.mxu0
      %v354 = vadd.f32 0.0, %v353
      %v355 = vpop.f32.mrf.mxu0
      %v356 = vadd.f32 0.0, %v355
      %357 = vdwg.mxu0
      %v358 = vpack.c.bf16 %v354, %v354
      %v359 = vpack.c.bf16 %v356, %v356
      %362 = vrot.lane.b32.xlu0 %v358, 16
      %v363 = vpop.permute.xlu0 %362
      %364 = vrot.lane.b32.xlu0 %v359, 16
      %v365 = vpop.permute.xlu0 %364
      %vm368 = vcmask 191616
      %369 = vst.msk [vmem:[%s116] sm:$0xf] %vm368, %v363
      %370 = vst.msk [vmem:[%s116 + $0x4] sm:$0xf] %vm368, %v365
      %v371 = vld [vmem:[%s111] sm:$0xf]
      %v372 = vld [vmem:[%s111 + $0x4] sm:$0xf]
      %v375 = vunpack.c.l.b16 %v371
      %v376 = vunpack.c.l.b16 %v372
      %v377 = vpack.c.b16 %v376, %v375
      %378 = vrot.lane.b32.xlu0 %v377, 104
      %v379 = vpop.permute.xlu0 %378
      %380 = vrot.lane.b32.xlu0 %v377, 72
      %v381 = vpop.permute.xlu0 %380
      %v383 = vsel %vm127, %v379, 0
      %v386 = vsel %vm127, %v381, 0
      %388 = vmatpush.bf16.xpose.msra.mxu0 0
      %389 = vmatpush.bf16.xpose.msra.mxu0 0
      %390 = vmatpush.bf16.xpose.msra.mxu0 0
      %391 = vmatpush.bf16.xpose.msra.mxu0 0
      %392 = vmatpush.bf16.xpose.msra.mxu0 0
      %393 = vmatpush.bf16.xpose.msra.mxu0 0
      %394 = vmatpush.bf16.xpose.msra.mxu0 0
      %395 = vmatpush.bf16.xpose.msra.mxu0 %v386
      %396 = vmatmul.bf16.gmra.mxu0 %v383
      %v397 = vpop.f32.mrf.mxu0
      %v398 = vadd.f32 0.0, %v397
      %v399 = vpop.f32.mrf.mxu0
      %v400 = vadd.f32 0.0, %v399
      %401 = vdwg.mxu0
      %v402 = vsel %vm148, %v398, -inf
      %403 = vmax.xlane.f32.xlu0 %v402
      %v404 = vpop.xlane.xlu0 %403
      %v405 = vsel %vm148, %v400, -inf
      %406 = vmax.xlane.f32.xlu0 %v405
      %v407 = vpop.xlane.xlu0 %406
      %v408 = vsub.f32 %v398, %v404
      %v409 = vsub.f32 %v400, %v407
      %v410 = vmul.f32 %v408, 1.442695
      %v411 = vpow.pop %v410
      %v412 = vmul.f32 %v409, 1.442695
      %v413 = vpow.pop %v412
      %v414 = vsel %vm148, %v411, 0.0
      %415 = vadd.xlane.f32.xlu0 %v414
      %v416 = vpop.xlane.xlu0 %415
      %v417 = vsel %vm148, %v413, 0.0
      %418 = vadd.xlane.f32.xlu0 %v417
      %v419 = vpop.xlane.xlu0 %418
      %v420 = vrcp.pop %v416
      %v421 = vrcp.pop %v419
      %v422 = vmul.f32 %v411, %v420
      %v423 = vmul.f32 %v413, %v421
      %v424 = vpack.c.bf16 %v423, %v422
      %425 = vrot.lane.b32.xlu0 %v377, 40
      %v426 = vpop.permute.xlu0 %425
      %v429 = vsel %vm148, %v424, 0
      %431 = vmatpush.bf16.msra.mxu0 0
      %432 = vmatpush.bf16.msra.mxu0 0
      %433 = vmatpush.bf16.msra.mxu0 0
      %434 = vmatpush.bf16.msra.mxu0 0
      %435 = vmatpush.bf16.msra.mxu0 0
      %436 = vmatpush.bf16.msra.mxu0 0
      %437 = vmatpush.bf16.msra.mxu0 0
      %438 = vmatpush.bf16.msra.mxu0 %v426
      %439 = vmatmul.bf16.gmra.mxu0 %v429
      %v440 = vpop.f32.mrf.mxu0
      %v441 = vadd.f32 0.0, %v440
      %v442 = vpop.f32.mrf.mxu0
      %v443 = vadd.f32 0.0, %v442
      %444 = vdwg.mxu0
      %v445 = vpack.c.bf16 %v441, %v441
      %v446 = vpack.c.bf16 %v443, %v443
      %449 = vrot.lane.b32.xlu0 %v445, 24
      %v450 = vpop.permute.xlu0 %449
      %451 = vrot.lane.b32.xlu0 %v446, 24
      %v452 = vpop.permute.xlu0 %451
      %vm455 = vcmask 257216
      %456 = vst.msk [vmem:[%s116] sm:$0xf] %vm455, %v450
      %457 = vst.msk [vmem:[%s116 + $0x4] sm:$0xf] %vm455, %v452
      %p458 = scmp.lt.s32.totalorder %s12, 1
      %s459 = scalar_select %p458, %s12, 1
      %s460 = smul.addr %s459, 2
      %s461 = smul.addr %s460, 4
      %s462 = scalar_lea.vmem %s1, %s461
      // Predicated region
      $region25: #{_lambda_.46} parent=23 // pred_check
        %p463 = pneg %p56
      $region26: #{_lambda_.46} parent=23 // pred_check_branch
        %465 = sbr.rel (%p463) target = $region28
      $region27: #{_lambda_.46} parent=23 // pred_region
        _
      $region28: #{_lambda_.46} parent=23 // pred_fallthru
        _
    $region24: #{_lambda_.46} parent=5 // pred_fallthru
      _
    %p466 = scmp.le.s32.totalorder 2, %s7
    // Predicated region
    $region29: #{_lambda_.46} parent=5 // pred_check
      %p467 = pneg %p466
    $region30: #{_lambda_.46} parent=5 // pred_check_branch
      %469 = sbr.rel (%p467) target = $region32
    $region31: #{_lambda_.46} parent=5 // pred_region
      %s470 = ssub.s32 %s7, 2
      // Predicated region
      $region33: #{_lambda_.46} parent=31 // pred_check
        %p471 = pneg %p62
      $region34: #{_lambda_.46} parent=31 // pred_check_branch
        %473 = sbr.rel (%p471) target = $region36
      $region35: #{_lambda_.46} parent=31 // pred_region
        %p474 = scmp.lt.s32.totalorder %s13, 1
        %s475 = scalar_select %p474, %s13, 1
        %s476 = smul.addr %s475, 2
        %s477 = smul.addr %s476, 4
        %s478 = scalar_lea.vmem %s1, %s477
      $region36: #{_lambda_.46} parent=31 // pred_fallthru
        _
    $region32: #{_lambda_.46} parent=5 // pred_fallthru
      _
  $region6: #{_lambda_.46} parent=0 // loop_footer
    %s11 = sadd.s32 1, %s7
  $region7: #{_lambda_.46} parent=0 // loop_footer_branch
    %6 = sbr.rel target = $region3
  $region8: #{_lambda_.46} parent=0 // loop_exit
    _

// kernel: _lambda_.48
$region0: #{_lambda_.48}
  #allocation0 [shape = 'u32[]', space=smem, size = 0x4, offset = 0x4, fixed_abs, tag = 'smem constant byte address 0x4 - core index']
  #allocation1 [shape = 'u32[72,128]{1,0:T(1,128)}', space=vmem, size = 0x9000, scoped, tag = 'internal scratch']
  %s0 = inlined_call_operand.vmem [shape: f32[32,32], index: 0, kind: input, shape index: {}]
  %s1 = inlined_call_operand.vmem [shape: bf16[32,64], index: 1, kind: input, shape index: {}]
  %s2 = inlined_call_operand.vmem [shape: f32[1,64], index: 2, kind: input, shape index: {}]
  %s3 = inlined_call_operand.vmem [shape: bf16[32,64], index: 3, kind: output, shape index: {}]
  %s4 = sld [smem:[#allocation0]]
  $region22: #{_lambda_.48} parent=0
    _
  %s6 = ssub.s32 1, %s4
  %s7 = scalar_select 0, %s6, %s4
  // Predicated region
  $region2: #{_lambda_.48} parent=0 // pred_check
    _
  $region3: #{_lambda_.48} parent=0 // pred_check_branch
    %9 = sbr.rel (0) target = $region5
  $region4: #{_lambda_.48} parent=0 // pred_region
    _
  $region5: #{_lambda_.48} parent=0 // pred_fallthru
    _
  // Predicated region
  $region6: #{_lambda_.48} parent=0 // pred_check
    _
  $region7: #{_lambda_.48} parent=0 // pred_check_branch
    %11 = sbr.rel (0) target = $region9
  $region8: #{_lambda_.48} parent=0 // pred_region
    _
  $region9: #{_lambda_.48} parent=0 // pred_fallthru
    _
  // Predicated region
  $region10: #{_lambda_.48} parent=0 // pred_check
    _
  $region11: #{_lambda_.48} parent=0 // pred_check_branch
    %13 = sbr.rel (0) target = $region13
  $region12: #{_lambda_.48} parent=0 // pred_region
    _
  $region13: #{_lambda_.48} parent=0 // pred_fallthru
    _
  %v15 = vld [vmem:[%s0] sm:$0xff]
  %v16 = vld [vmem:[%s0 + $0x8] sm:$0xff]
  %v17 = vld [vmem:[%s0 + $0x10] sm:$0xff]
  %v18 = vld [vmem:[%s0 + $0x18] sm:$0xff]
  %v19 = vpack.c.bf16 %v16, %v15
  %v20 = vpack.c.bf16 %v18, %v17
  %v21 = vld [vmem:[%s1] sm:$0xf]
  %v22 = vld [vmem:[%s1 + $0x4] sm:$0xf]
  %v23 = vld [vmem:[%s1 + $0x8] sm:$0xf]
  %v24 = vld [vmem:[%s1 + $0xc] sm:$0xf]
  %v25 = vld [vmem:[%s2] sm:$0x1]
  %v27 = vperm.slane %v25, 0
  %v33 = vunpack.c.l.b16 %v21
  %v34 = vunpack.c.l.b16 %v22
  %v35 = vunpack.c.l.b16 %v23
  %v36 = vunpack.c.l.b16 %v24
  %v37 = vpack.c.b16 %v34, %v33
  %v38 = vpack.c.b16 %v36, %v35
  %vm41 = vcmask 261120
  %v43 = vsel %vm41, %v19, 0
  %v46 = vsel %vm41, %v20, 0
  %48 = vmatpush.bf16.msra.mxu0 0
  %49 = vmatpush.bf16.msra.mxu0 0
  %50 = vmatpush.bf16.msra.mxu0 0
  %51 = vmatpush.bf16.msra.mxu0 0
  %52 = vmatpush.bf16.msra.mxu0 0
  %53 = vmatpush.bf16.msra.mxu0 0
  %54 = vmatpush.bf16.msra.mxu0 %v38
  %55 = vmatpush.bf16.msra.mxu0 %v37
  %56 = vmatmul.bf16.gmra.mxu0 %v43
  %v57 = vpop.f32.mrf.mxu0
  %v58 = vadd.f32 %v27, %v57
  %v59 = vpop.f32.mrf.mxu0
  %v60 = vadd.f32 %v27, %v59
  %61 = vmatmul.bf16.gmra.mxu0 %v46
  %v62 = vpop.f32.mrf.mxu0
  %v63 = vadd.f32 %v27, %v62
  %v64 = vpop.f32.mrf.mxu0
  %v65 = vadd.f32 %v27, %v64
  %66 = vdwg.mxu0
  %v67 = vmax.f32 %v58, 0.0
  %v68 = vmax.f32 %v60, 0.0
  %v69 = vmax.f32 %v63, 0.0
  %v70 = vmax.f32 %v65, 0.0
  %v71 = vpack.c.bf16 %v67, %v67
  %v72 = vpack.c.bf16 %v68, %v68
  %v73 = vpack.c.bf16 %v69, %v69
  %v74 = vpack.c.bf16 %v70, %v70
  %vm75 = vcmask 519168
  %76 = vst.msk [vmem:[%s3] sm:$0xf] %vm75, %v71
  %77 = vst.msk [vmem:[%s3 + $0x4] sm:$0xf] %vm75, %v72
  %78 = vst.msk [vmem:[%s3 + $0x8] sm:$0xf] %vm75, %v73
  %79 = vst.msk [vmem:[%s3 + $0xc] sm:$0xf] %vm75, %v74
  // Predicated region
  $region14: #{_lambda_.48} parent=0 // pred_check
    _
  $region15: #{_lambda_.48} parent=0 // pred_check_branch
    %81 = sbr.rel (0) target = $region17
  $region16: #{_lambda_.48} parent=0 // pred_region
    _
  $region17: #{_lambda_.48} parent=0 // pred_fallthru
    _
  // Predicated region
  $region18: #{_lambda_.48} parent=0 // pred_check
    _
  $region19: #{_lambda_.48} parent=0 // pred_check_branch
    %83 = sbr.rel (0) target = $region21
  $region20: #{_lambda_.48} parent=0 // pred_region
    _
  $region21: #{_lambda_.48} parent=0 // pred_fallthru
    _

// kernel: _lambda_.49
$region0: #{_lambda_.49}
  #allocation0 [shape = 'u32[]', space=smem, size = 0x4, offset = 0x4, fixed_abs, tag = 'smem constant byte address 0x4 - core index']
  #allocation1 [shape = 'u32[72,128]{1,0:T(1,128)}', space=vmem, size = 0x9000, scoped, tag = 'internal scratch']
  %s0 = inlined_call_operand.vmem [shape: bf16[32,64], index: 0, kind: input, shape index: {}]
  %s1 = inlined_call_operand.vmem [shape: bf16[64,32], index: 1, kind: input, shape index: {}]
  %s2 = inlined_call_operand.vmem [shape: f32[1,32], index: 2, kind: input, shape index: {}]
  %s3 = inlined_call_operand.vmem [shape: f32[1,32], index: 3, kind: input, shape index: {}]
  %s4 = inlined_call_operand.vmem [shape: f32[1,32], index: 4, kind: input, shape index: {}]
  %s5 = inlined_call_operand.vmem [shape: f32[32,32], index: 5, kind: input, shape index: {}]
  %s6 = inlined_call_operand.vmem [shape: f32[32,32], index: 6, kind: output, shape index: {}]
  %s7 = sld [smem:[#allocation0]]
  $region34: #{_lambda_.49} parent=0
    _
  %s9 = ssub.s32 1, %s7
  %s10 = scalar_select 0, %s9, %s7
  // Predicated region
  $region2: #{_lambda_.49} parent=0 // pred_check
    _
  $region3: #{_lambda_.49} parent=0 // pred_check_branch
    %12 = sbr.rel (0) target = $region5
  $region4: #{_lambda_.49} parent=0 // pred_region
    _
  $region5: #{_lambda_.49} parent=0 // pred_fallthru
    _
  // Predicated region
  $region6: #{_lambda_.49} parent=0 // pred_check
    _
  $region7: #{_lambda_.49} parent=0 // pred_check_branch
    %14 = sbr.rel (0) target = $region9
  $region8: #{_lambda_.49} parent=0 // pred_region
    _
  $region9: #{_lambda_.49} parent=0 // pred_fallthru
    _
  // Predicated region
  $region10: #{_lambda_.49} parent=0 // pred_check
    _
  $region11: #{_lambda_.49} parent=0 // pred_check_branch
    %16 = sbr.rel (0) target = $region13
  $region12: #{_lambda_.49} parent=0 // pred_region
    _
  $region13: #{_lambda_.49} parent=0 // pred_fallthru
    _
  // Predicated region
  $region14: #{_lambda_.49} parent=0 // pred_check
    _
  $region15: #{_lambda_.49} parent=0 // pred_check_branch
    %18 = sbr.rel (0) target = $region17
  $region16: #{_lambda_.49} parent=0 // pred_region
    _
  $region17: #{_lambda_.49} parent=0 // pred_fallthru
    _
  // Predicated region
  $region18: #{_lambda_.49} parent=0 // pred_check
    _
  $region19: #{_lambda_.49} parent=0 // pred_check_branch
    %20 = sbr.rel (0) target = $region21
  $region20: #{_lambda_.49} parent=0 // pred_region
    _
  $region21: #{_lambda_.49} parent=0 // pred_fallthru
    _
  // Predicated region
  $region22: #{_lambda_.49} parent=0 // pred_check
    _
  $region23: #{_lambda_.49} parent=0 // pred_check_branch
    %22 = sbr.rel (0) target = $region25
  $region24: #{_lambda_.49} parent=0 // pred_region
    _
  $region25: #{_lambda_.49} parent=0 // pred_fallthru
    _
  %v24 = vld [vmem:[%s0] sm:$0xf]
  %v25 = vld [vmem:[%s0 + $0x4] sm:$0xf]
  %v26 = vld [vmem:[%s0 + $0x8] sm:$0xf]
  %v27 = vld [vmem:[%s0 + $0xc] sm:$0xf]
  %v28 = vld [vmem:[%s1] sm:$0xf]
  %v29 = vld [vmem:[%s1 + $0x4] sm:$0xf]
  %v30 = vld [vmem:[%s1 + $0x8] sm:$0xf]
  %v31 = vld [vmem:[%s1 + $0xc] sm:$0xf]
  %v32 = vld [vmem:[%s1 + $0x10] sm:$0xf]
  %v33 = vld [vmem:[%s1 + $0x14] sm:$0xf]
  %v34 = vld [vmem:[%s1 + $0x18] sm:$0xf]
  %v35 = vld [vmem:[%s1 + $0x1c] sm:$0xf]
  %v36 = vld [vmem:[%s2] sm:$0x1]
  %v38 = vperm.slane %v36, 0
  %v44 = vunpack.c.l.b16 %v24
  %v45 = vunpack.c.l.b16 %v25
  %v46 = vunpack.c.l.b16 %v26
  %v47 = vunpack.c.l.b16 %v27
  %v48 = vpack.c.b16 %v45, %v44
  %v49 = vpack.c.b16 %v47, %v46
  %v58 = vunpack.c.l.b16 %v28
  %v59 = vunpack.c.l.b16 %v29
  %v60 = vunpack.c.l.b16 %v30
  %v61 = vunpack.c.l.b16 %v31
  %v62 = vunpack.c.l.b16 %v32
  %v63 = vunpack.c.l.b16 %v33
  %v64 = vunpack.c.l.b16 %v34
  %v65 = vunpack.c.l.b16 %v35
  %v66 = vpack.c.b16 %v59, %v58
  %v67 = vpack.c.b16 %v61, %v60
  %v68 = vpack.c.b16 %v63, %v62
  %v69 = vpack.c.b16 %v65, %v64
  %vm74 = vcmask 523264
  %v76 = vsel %vm74, %v48, 0
  %v79 = vsel %vm74, %v49, 0
  %81 = vmatpush.bf16.msra.mxu0 0
  %82 = vmatpush.bf16.msra.mxu0 0
  %83 = vmatpush.bf16.msra.mxu0 0
  %84 = vmatpush.bf16.msra.mxu0 0
  %85 = vmatpush.bf16.msra.mxu0 %v69
  %86 = vmatpush.bf16.msra.mxu0 %v68
  %87 = vmatpush.bf16.msra.mxu0 %v67
  %88 = vmatpush.bf16.msra.mxu0 %v66
  %89 = vmatmul.bf16.gmra.mxu0 %v76
  %v90 = vpop.f32.mrf.mxu0
  %v91 = vadd.f32 %v38, %v90
  %v92 = vpop.f32.mrf.mxu0
  %v93 = vadd.f32 %v38, %v92
  %94 = vmatmul.bf16.gmra.mxu0 %v79
  %v95 = vpop.f32.mrf.mxu0
  %v96 = vadd.f32 %v38, %v95
  %v97 = vpop.f32.mrf.mxu0
  %v98 = vadd.f32 %v38, %v97
  %99 = vdwg.mxu0
  %v100 = vld [vmem:[%s3] sm:$0x1]
  %v101 = vld [vmem:[%s4] sm:$0x1]
  %v102 = vld [vmem:[%s5] sm:$0xff]
  %v103 = vld [vmem:[%s5 + $0x8] sm:$0xff]
  %v104 = vld [vmem:[%s5 + $0x10] sm:$0xff]
  %v105 = vld [vmem:[%s5 + $0x18] sm:$0xff]
  %v106 = vadd.f32 %v91, %v102
  %v107 = vadd.f32 %v93, %v103
  %v108 = vadd.f32 %v96, %v104
  %v109 = vadd.f32 %v98, %v105
  %vm110 = vcmask 261120
  %v111 = vsel %vm110, %v106, 0.0
  %112 = vadd.xlane.f32.xlu0 %v111
  %v113 = vpop.xlane.xlu0 %112
  %v114 = vsel %vm110, %v107, 0.0
  %115 = vadd.xlane.f32.xlu0 %v114
  %v116 = vpop.xlane.xlu0 %115
  %v117 = vsel %vm110, %v108, 0.0
  %118 = vadd.xlane.f32.xlu0 %v117
  %v119 = vpop.xlane.xlu0 %118
  %v120 = vsel %vm110, %v109, 0.0
  %121 = vadd.xlane.f32.xlu0 %v120
  %v122 = vpop.xlane.xlu0 %121
  %v123 = vrcp.pop 32.0
  %v124 = vmul.f32 32.0, %v123
  %v125 = vsub.f32 1.0, %v124
  %v126 = vmul.f32 %v123, %v125
  %v127 = vadd.f32 %v123, %v126
  %vm128 = vweird.f32 %v123
  %v129 = vsel %vm128, %v123, %v127
  %v130 = vmul.f32 %v113, %v129
  %v131 = vmul.f32 %v116, %v129
  %v132 = vmul.f32 %v119, %v129
  %v133 = vmul.f32 %v122, %v129
  %v134 = vsub.f32 %v106, %v130
  %v135 = vsub.f32 %v107, %v131
  %v136 = vsub.f32 %v108, %v132
  %v137 = vsub.f32 %v109, %v133
  %v138 = vmul.f32 %v134, %v134
  %v139 = vmul.f32 %v135, %v135
  %v140 = vmul.f32 %v136, %v136
  %v141 = vmul.f32 %v137, %v137
  %v142 = vsel %vm110, %v138, 0.0
  %143 = vadd.xlane.f32.xlu0 %v142
  %v144 = vpop.xlane.xlu0 %143
  %v145 = vsel %vm110, %v139, 0.0
  %146 = vadd.xlane.f32.xlu0 %v145
  %v147 = vpop.xlane.xlu0 %146
  %v148 = vsel %vm110, %v140, 0.0
  %149 = vadd.xlane.f32.xlu0 %v148
  %v150 = vpop.xlane.xlu0 %149
  %v151 = vsel %vm110, %v141, 0.0
  %152 = vadd.xlane.f32.xlu0 %v151
  %v153 = vpop.xlane.xlu0 %152
  %v154 = vmul.f32 %v144, %v129
  %v155 = vmul.f32 %v147, %v129
  %v156 = vmul.f32 %v150, %v129
  %v157 = vmul.f32 %v153, %v129
  %v158 = vadd.f32 %v154, 1e-05
  %v159 = vadd.f32 %v155, 1e-05
  %v160 = vadd.f32 %v156, 1e-05
  %v161 = vadd.f32 %v157, 1e-05
  %v162 = vrsqrt.pop %v158
  %v163 = vmul.f32 %v162, %v158
  %v164 = vmul.f32 %v163, %v162
  %v165 = vmul.f32 0.5, %v164
  %v166 = vsub.f32 1.5, %v165
  %v167 = vmul.f32 %v162, %v166
  %vm168 = vweird.f32 %v158
  %vm169 = vweird.f32 %v162
  %vm170 = vmor %vm168, %vm169
  %v171 = vsel %vm170, %v162, %v167
  %v172 = vrsqrt.pop %v159
  %v173 = vmul.f32 %v172, %v159
  %v174 = vmul.f32 %v173, %v172
  %v175 = vmul.f32 0.5, %v174
  %v176 = vsub.f32 1.5, %v175
  %v177 = vmul.f32 %v172, %v176
  %vm178 = vweird.f32 %v159
  %vm179 = vweird.f32 %v172
  %vm180 = vmor %vm178, %vm179
  %v181 = vsel %vm180, %v172, %v177
  %v182 = vrsqrt.pop %v160
  %v183 = vmul.f32 %v182, %v160
  %v184 = vmul.f32 %v183, %v182
  %v185 = vmul.f32 0.5, %v184
  %v186 = vsub.f32 1.5, %v185
  %v187 = vmul.f32 %v182, %v186
  %vm188 = vweird.f32 %v160
  %vm189 = vweird.f32 %v182
  %vm190 = vmor %vm188, %vm189
  %v191 = vsel %vm190, %v182, %v187
  %v192 = vrsqrt.pop %v161
  %v193 = vmul.f32 %v192, %v161
  %v194 = vmul.f32 %v193, %v192
  %v195 = vmul.f32 0.5, %v194
  %v196 = vsub.f32 1.5, %v195
  %v197 = vmul.f32 %v192, %v196
  %vm198 = vweird.f32 %v161
  %vm199 = vweird.f32 %v192
  %vm200 = vmor %vm198, %vm199
  %v201 = vsel %vm200, %v192, %v197
  %v202 = vmul.f32 %v134, %v171
  %v203 = vmul.f32 %v135, %v181
  %v204 = vmul.f32 %v136, %v191
  %v205 = vmul.f32 %v137, %v201
  %v207 = vperm.slane %v100, 0
  %v209 = vmul.f32 %v202, %v207
  %v210 = vmul.f32 %v203, %v207
  %v211 = vmul.f32 %v204, %v207
  %v212 = vmul.f32 %v205, %v207
  %v214 = vperm.slane %v101, 0
  %v216 = vadd.f32 %v209, %v214
  %v217 = vadd.f32 %v210, %v214
  %v218 = vadd.f32 %v211, %v214
  %v219 = vadd.f32 %v212, %v214
  %220 = vst.msk [vmem:[%s6] sm:$0xff] %vm110, %v216
  %221 = vst.msk [vmem:[%s6 + $0x8] sm:$0xff] %vm110, %v217
  %222 = vst.msk [vmem:[%s6 + $0x10] sm:$0xff] %vm110, %v218
  %223 = vst.msk [vmem:[%s6 + $0x18] sm:$0xff] %vm110, %v219
  // Predicated region
  $region26: #{_lambda_.49} parent=0 // pred_check
    _
  $region27: #{_lambda_.49} parent=0 // pred_check_branch
    %225 = sbr.rel (0) target = $region29
  $region28: #{_lambda_.49} parent=0 // pred_region
    _
  $region29: #{_lambda_.49} parent=0 // pred_fallthru
    _
  // Predicated region
  $region30: #{_lambda_.49} parent=0 // pred_check
    _
  $region31: #{_lambda_.49} parent=0 // pred_check_branch
    %227 = sbr.rel (0) target = $region33
  $region32: #{_lambda_.49} parent=0 // pred_region
    _
  $region33: #{_lambda_.49} parent=0 // pred_fallthru
    _

// kernel: _lambda_.59
$region0: #{_lambda_.59}
  #allocation0 [shape = 'u32[]', space=smem, size = 0x4, offset = 0x4, fixed_abs, tag = 'smem constant byte address 0x4 - core index']
  #allocation1 [shape = 'u32[72,128]{1,0:T(1,128)}', space=vmem, size = 0x9000, scoped, tag = 'internal scratch']
  %s0 = inlined_call_operand.vmem [shape: bf16[32,64], index: 0, kind: input, shape index: {}]
  %s1 = inlined_call_operand.vmem [shape: bf16[64,32], index: 1, kind: input, shape index: {}]
  %s2 = inlined_call_operand.vmem [shape: f32[1,32], index: 2, kind: input, shape index: {}]
  %s3 = inlined_call_operand.vmem [shape: f32[1,32], index: 3, kind: input, shape index: {}]
  %s4 = inlined_call_operand.vmem [shape: f32[1,32], index: 4, kind: input, shape index: {}]
  %s5 = inlined_call_operand.vmem [shape: f32[32,32], index: 5, kind: input, shape index: {}]
  %s6 = inlined_call_operand.hbm [shape: f32[32,32], index: 6, kind: output, shape index: {}]
  %s7 = sld [smem:[#allocation0]]
  $region34: #{_lambda_.59} parent=0
    _
  %s9 = ssub.s32 1, %s7
  %s10 = scalar_select 0, %s9, %s7
  $region1: #{_lambda_.59} parent=0
    #allocation2 [shape = 'u8[16384]{0}', space=vmem, size = 0x4000, scoped, tag = 'output window, operand 0, single buffered']
    #allocation3 [shape = 's32[1]{0}', space=sflag, size = 0x4, scoped, tag = 'scoped memory for _lambda_.59']
    %11 = vsyncpa [#allocation3], 0
    // Predicated region
    $region2: #{_lambda_.59} parent=1 // pred_check
      _
    $region3: #{_lambda_.59} parent=1 // pred_check_branch
      %13 = sbr.rel (0) target = $region5
    $region4: #{_lambda_.59} parent=1 // pred_region
      _
    $region5: #{_lambda_.59} parent=1 // pred_fallthru
      _
    // Predicated region
    $region6: #{_lambda_.59} parent=1 // pred_check
      _
    $region7: #{_lambda_.59} parent=1 // pred_check_branch
      %15 = sbr.rel (0) target = $region9
    $region8: #{_lambda_.59} parent=1 // pred_region
      _
    $region9: #{_lambda_.59} parent=1 // pred_fallthru
      _
    // Predicated region
    $region10: #{_lambda_.59} parent=1 // pred_check
      _
    $region11: #{_lambda_.59} parent=1 // pred_check_branch
      %17 = sbr.rel (0) target = $region13
    $region12: #{_lambda_.59} parent=1 // pred_region
      _
    $region13: #{_lambda_.59} parent=1 // pred_fallthru
      _
    // Predicated region
    $region14: #{_lambda_.59} parent=1 // pred_check
      _
    $region15: #{_lambda_.59} parent=1 // pred_check_branch
      %19 = sbr.rel (0) target = $region17
    $region16: #{_lambda_.59} parent=1 // pred_region
      _
    $region17: #{_lambda_.59} parent=1 // pred_fallthru
      _
    // Predicated region
    $region18: #{_lambda_.59} parent=1 // pred_check
      _
    $region19: #{_lambda_.59} parent=1 // pred_check_branch
      %21 = sbr.rel (0) target = $region21
    $region20: #{_lambda_.59} parent=1 // pred_region
      _
    $region21: #{_lambda_.59} parent=1 // pred_fallthru
      _
    // Predicated region
    $region22: #{_lambda_.59} parent=1 // pred_check
      _
    $region23: #{_lambda_.59} parent=1 // pred_check_branch
      %23 = sbr.rel (0) target = $region25
    $region24: #{_lambda_.59} parent=1 // pred_region
      _
    $region25: #{_lambda_.59} parent=1 // pred_fallthru
      _
    %v25 = vld [vmem:[%s0] sm:$0xf]
    %v26 = vld [vmem:[%s0 + $0x4] sm:$0xf]
    %v27 = vld [vmem:[%s0 + $0x8] sm:$0xf]
    %v28 = vld [vmem:[%s0 + $0xc] sm:$0xf]
    %v29 = vld [vmem:[%s1] sm:$0xf]
    %v30 = vld [vmem:[%s1 + $0x4] sm:$0xf]
    %v31 = vld [vmem:[%s1 + $0x8] sm:$0xf]
    %v32 = vld [vmem:[%s1 + $0xc] sm:$0xf]
    %v33 = vld [vmem:[%s1 + $0x10] sm:$0xf]
    %v34 = vld [vmem:[%s1 + $0x14] sm:$0xf]
    %v35 = vld [vmem:[%s1 + $0x18] sm:$0xf]
    %v36 = vld [vmem:[%s1 + $0x1c] sm:$0xf]
    %v37 = vld [vmem:[%s2] sm:$0x1]
    %v39 = vperm.slane %v37, 0
    %v45 = vunpack.c.l.b16 %v25
    %v46 = vunpack.c.l.b16 %v26
    %v47 = vunpack.c.l.b16 %v27
    %v48 = vunpack.c.l.b16 %v28
    %v49 = vpack.c.b16 %v46, %v45
    %v50 = vpack.c.b16 %v48, %v47
    %v59 = vunpack.c.l.b16 %v29
    %v60 = vunpack.c.l.b16 %v30
    %v61 = vunpack.c.l.b16 %v31
    %v62 = vunpack.c.l.b16 %v32
    %v63 = vunpack.c.l.b16 %v33
    %v64 = vunpack.c.l.b16 %v34
    %v65 = vunpack.c.l.b16 %v35
    %v66 = vunpack.c.l.b16 %v36
    %v67 = vpack.c.b16 %v60, %v59
    %v68 = vpack.c.b16 %v62, %v61
    %v69 = vpack.c.b16 %v64, %v63
    %v70 = vpack.c.b16 %v66, %v65
    %vm75 = vcmask 523264
    %v77 = vsel %vm75, %v49, 0
    %v80 = vsel %vm75, %v50, 0
    %82 = vmatpush.bf16.msra.mxu0 0
    %83 = vmatpush.bf16.msra.mxu0 0
    %84 = vmatpush.bf16.msra.mxu0 0
    %85 = vmatpush.bf16.msra.mxu0 0
    %86 = vmatpush.bf16.msra.mxu0 %v70
    %87 = vmatpush.bf16.msra.mxu0 %v69
    %88 = vmatpush.bf16.msra.mxu0 %v68
    %89 = vmatpush.bf16.msra.mxu0 %v67
    %90 = vmatmul.bf16.gmra.mxu0 %v77
    %v91 = vpop.f32.mrf.mxu0
    %v92 = vadd.f32 %v39, %v91
    %v93 = vpop.f32.mrf.mxu0
    %v94 = vadd.f32 %v39, %v93
    %95 = vmatmul.bf16.gmra.mxu0 %v80
    %v96 = vpop.f32.mrf.mxu0
    %v97 = vadd.f32 %v39, %v96
    %v98 = vpop.f32.mrf.mxu0
    %v99 = vadd.f32 %v39, %v98
    %100 = vdwg.mxu0
    %v101 = vld [vmem:[%s3] sm:$0x1]
    %v102 = vld [vmem:[%s4] sm:$0x1]
    %v103 = vld [vmem:[%s5] sm:$0xff]
    %v104 = vld [vmem:[%s5 + $0x8] sm:$0xff]
    %v105 = vld [vmem:[%s5 + $0x10] sm:$0xff]
    %v106 = vld [vmem:[%s5 + $0x18] sm:$0xff]
    %v107 = vadd.f32 %v92, %v103
    %v108 = vadd.f32 %v94, %v104
    %v109 = vadd.f32 %v97, %v105
    %v110 = vadd.f32 %v99, %v106
    %vm111 = vcmask 261120
    %v112 = vsel %vm111, %v107, 0.0
    %113 = vadd.xlane.f32.xlu0 %v112
    %v114 = vpop.xlane.xlu0 %113
    %v115 = vsel %vm111, %v108, 0.0
    %116 = vadd.xlane.f32.xlu0 %v115
    %v117 = vpop.xlane.xlu0 %116
    %v118 = vsel %vm111, %v109, 0.0
    %119 = vadd.xlane.f32.xlu0 %v118
    %v120 = vpop.xlane.xlu0 %119
    %v121 = vsel %vm111, %v110, 0.0
    %122 = vadd.xlane.f32.xlu0 %v121
    %v123 = vpop.xlane.xlu0 %122
    %v124 = vrcp.pop 32.0
    %v125 = vmul.f32 32.0, %v124
    %v126 = vsub.f32 1.0, %v125
    %v127 = vmul.f32 %v124, %v126
    %v128 = vadd.f32 %v124, %v127
    %vm129 = vweird.f32 %v124
    %v130 = vsel %vm129, %v124, %v128
    %v131 = vmul.f32 %v114, %v130
    %v132 = vmul.f32 %v117, %v130
    %v133 = vmul.f32 %v120, %v130
    %v134 = vmul.f32 %v123, %v130
    %v135 = vsub.f32 %v107, %v131
    %v136 = vsub.f32 %v108, %v132
    %v137 = vsub.f32 %v109, %v133
    %v138 = vsub.f32 %v110, %v134
    %v139 = vmul.f32 %v135, %v135
    %v140 = vmul.f32 %v136, %v136
    %v141 = vmul.f32 %v137, %v137
    %v142 = vmul.f32 %v138, %v138
    %v143 = vsel %vm111, %v139, 0.0
    %144 = vadd.xlane.f32.xlu0 %v143
    %v145 = vpop.xlane.xlu0 %144
    %v146 = vsel %vm111, %v140, 0.0
    %147 = vadd.xlane.f32.xlu0 %v146
    %v148 = vpop.xlane.xlu0 %147
    %v149 = vsel %vm111, %v141, 0.0
    %150 = vadd.xlane.f32.xlu0 %v149
    %v151 = vpop.xlane.xlu0 %150
    %v152 = vsel %vm111, %v142, 0.0
    %153 = vadd.xlane.f32.xlu0 %v152
    %v154 = vpop.xlane.xlu0 %153
    %v155 = vmul.f32 %v145, %v130
    %v156 = vmul.f32 %v148, %v130
    %v157 = vmul.f32 %v151, %v130
    %v158 = vmul.f32 %v154, %v130
    %v159 = vadd.f32 %v155, 1e-05
    %v160 = vadd.f32 %v156, 1e-05
    %v161 = vadd.f32 %v157, 1e-05
    %v162 = vadd.f32 %v158, 1e-05
    %v163 = vrsqrt.pop %v159
    %v164 = vmul.f32 %v163, %v159
    %v165 = vmul.f32 %v164, %v163
    %v166 = vmul.f32 0.5, %v165
    %v167 = vsub.f32 1.5, %v166
    %v168 = vmul.f32 %v163, %v167
    %vm169 = vweird.f32 %v159
    %vm170 = vweird.f32 %v163
    %vm171 = vmor %vm169, %vm170
    %v172 = vsel %vm171, %v163, %v168
    %v173 = vrsqrt.pop %v160
    %v174 = vmul.f32 %v173, %v160
    %v175 = vmul.f32 %v174, %v173
    %v176 = vmul.f32 0.5, %v175
    %v177 = vsub.f32 1.5, %v176
    %v178 = vmul.f32 %v173, %v177
    %vm179 = vweird.f32 %v160
    %vm180 = vweird.f32 %v173
    %vm181 = vmor %vm179, %vm180
    %v182 = vsel %vm181, %v173, %v178
    %v183 = vrsqrt.pop %v161
    %v184 = vmul.f32 %v183, %v161
    %v185 = vmul.f32 %v184, %v183
    %v186 = vmul.f32 0.5, %v185
    %v187 = vsub.f32 1.5, %v186
    %v188 = vmul.f32 %v183, %v187
    %vm189 = vweird.f32 %v161
    %vm190 = vweird.f32 %v183
    %vm191 = vmor %vm189, %vm190
    %v192 = vsel %vm191, %v183, %v188
    %v193 = vrsqrt.pop %v162
    %v194 = vmul.f32 %v193, %v162
    %v195 = vmul.f32 %v194, %v193
    %v196 = vmul.f32 0.5, %v195
    %v197 = vsub.f32 1.5, %v196
    %v198 = vmul.f32 %v193, %v197
    %vm199 = vweird.f32 %v162
    %vm200 = vweird.f32 %v193
    %vm201 = vmor %vm199, %vm200
    %v202 = vsel %vm201, %v193, %v198
    %v203 = vmul.f32 %v135, %v172
    %v204 = vmul.f32 %v136, %v182
    %v205 = vmul.f32 %v137, %v192
    %v206 = vmul.f32 %v138, %v202
    %v208 = vperm.slane %v101, 0
    %v210 = vmul.f32 %v203, %v208
    %v211 = vmul.f32 %v204, %v208
    %v212 = vmul.f32 %v205, %v208
    %v213 = vmul.f32 %v206, %v208
    %v215 = vperm.slane %v102, 0
    %v217 = vadd.f32 %v210, %v215
    %v218 = vadd.f32 %v211, %v215
    %v219 = vadd.f32 %v212, %v215
    %v220 = vadd.f32 %v213, %v215
    %221 = vst.msk [vmem:[#allocation2] sm:$0xff] %vm111, %v217
    %222 = vst.msk [vmem:[#allocation2 + $0x8] sm:$0xff] %vm111, %v218
    %223 = vst.msk [vmem:[#allocation2 + $0x10] sm:$0xff] %vm111, %v219
    %224 = vst.msk [vmem:[#allocation2 + $0x18] sm:$0xff] %vm111, %v220
    // Predicated region
    $region26: #{_lambda_.59} parent=1 // pred_check
      _
    $region27: #{_lambda_.59} parent=1 // pred_check_branch
      %226 = sbr.rel (0) target = $region29
    $region28: #{_lambda_.59} parent=1 // pred_region
      %228 = vsyncadd [#allocation3], 0
      %s229 = sshll.u32 [#allocation2], 4
      %s230 = int_to_ptr.vmem [resolvable:$true] %s229
      %s231 = sshll.u32 %s6, 4
      %s232 = int_to_ptr.hbm [resolvable:$true] %s231
      %237 = dma.vmem_to_hbm [thread:$0]  %s230, 512, %s232, [#allocation3], 128, 128, 8
    $region29: #{_lambda_.59} parent=1 // pred_fallthru
      _
    // Predicated region
    $region30: #{_lambda_.59} parent=1 // pred_check
      _
    $region31: #{_lambda_.59} parent=1 // pred_check_branch
      %239 = sbr.rel (0) target = $region33
    $region32: #{_lambda_.59} parent=1 // pred_region
      %241 = dma.done [#allocation3], 512
    $region33: #{_lambda_.59} parent=1 // pred_fallthru
      _
    %242 = vsyncpa [#allocation3], 1

</llo_original>
